<compile_context>
chip_gen: v6e
topology: v6e:2x2x1
jax: 0.10.0
libtpu: 0.0.40
codegen_flags: <defaults>
</compile_context>

<pallas_src>
import functools

import jax
import jax.numpy as jnp
from jax.experimental import pallas as pl
from jax.experimental.pallas import tpu as pltpu


# ----------------------------- config (small, module-consistent shapes) -------
B = 2            # batch
DIM_FEAT = 64    # dim_feat (512 in the original defaults; scaled down)
NUM_PC = 128     # num_p0 / num_pc (512 in the original defaults; scaled down)
HID = 128        # SeedGenerator point-splitter channels / MLP width (fixed 128)


# ----------------------------- Pallas kernel ----------------------------------
def seedgen_kernel(feat_ref, ps_w_ref, ps_b_ref, wf_ref, bias_ref, w2_ref,
                   b2_ref, out_ref, *, tile_pc):
    dot = functools.partial(jnp.dot, preferred_element_type=jnp.float32)
    bf16 = jnp.bfloat16
    m = B * tile_pc

    # ConvTranspose1d(dim_feat, 128, num_pc) on a length-1 input, this point
    # tile only.  One dot batched over B (the big RHS is pushed through the MXU
    # once and reused by both batch rows), then one lane->sublane reshape gives
    # batch-major point rows (B*tile_pc, 128).
    f = feat_ref[...].astype(bf16)                         # (B, DIM_FEAT)
    x = dot(f, ps_w_ref[...])                              # (B, tile_pc*128) f32
    x = x.reshape(m, HID) + ps_b_ref[...]                  # (B*tile_pc, 128)

    # Four uniform stages: mlp_1, mlp_2, mlp_3 (MLP_Res) and mlp_4, each lowered
    # to one 256-wide fused dot ([W_hidden | W_shortcut]) + one 128-wide W2 dot.
    # feat projections of the cat-blocks are pre-folded into bias_ref (per-batch).
    for k in range(4):
        z = dot(x.astype(bf16), wf_ref[k])                 # (m, 256)
        z = (z.reshape(B, tile_pc, 2 * HID)
             + bias_ref[k][:, None, :]).reshape(m, 2 * HID)
        h = jnp.maximum(z[:, :HID], 0.0).astype(bf16)      # hidden path (ReLU)
        sc = z[:, HID:]                                    # shortcut path (0 for k=3)
        x = dot(h, w2_ref[k]) + b2_ref[k] + sc             # (m, 128) f32

    # Lane-dense 128-wide store, already in final (B, NUM_PC, 128) layout.
    out_ref[...] = x.reshape(B, tile_pc, HID).astype(out_ref.dtype)


# ----------------------------- parameter setup ---------------------------------
def init_params(key):
    """Deterministic synthetic parameters in PyTorch conventions."""
    ks = jax.random.split(key, 32)
    it = iter(ks)
    w = lambda shape: jax.random.normal(next(it), shape, jnp.float32) * 0.1
    bvec = lambda n: jax.random.normal(next(it), (n,), jnp.float32) * 0.01

    cin_cat = DIM_FEAT + HID
    return {
        # ConvTranspose1d weight: (in, out, kernel) = (DIM_FEAT, 128, NUM_PC)
        "ps_w": w((DIM_FEAT, HID, NUM_PC)),
        "ps_b": bvec(HID),
        # MLP_Res blocks: conv_1 / conv_2 / conv_shortcut, torch Conv1d weight (out, in)
        "m1": {"w1": w((HID, cin_cat)), "b1": bvec(HID),
               "w2": w((HID, HID)), "b2": bvec(HID),
               "ws": w((HID, cin_cat)), "bs": bvec(HID)},
        "m2": {"w1": w((64, HID)), "b1": bvec(64),
               "w2": w((HID, 64)), "b2": bvec(HID),
               "ws": w((HID, HID)), "bs": bvec(HID)},
        "m3": {"w1": w((HID, cin_cat)), "b1": bvec(HID),
               "w2": w((HID, HID)), "b2": bvec(HID),
               "ws": w((HID, cin_cat)), "bs": bvec(HID)},
        "m4w1": w((64, HID)), "m4b1": bvec(64),
        "m4w2": w((3, 64)), "m4b2": bvec(3),
    }


def _kernel_inputs(feat, p, w_dtype=jnp.bfloat16):
    """Torch-convention params -> packed, bf16 kernel operands.

    Grid-invariant feat projections of the cat-blocks are folded into per-batch
    bias slabs here (tiny (B, DIM_FEAT) x (DIM_FEAT, 128) matmuls).
    """
    f32 = jnp.float32
    HID2 = 2 * HID

    def pad_cols(a, n):
        return jnp.zeros((a.shape[0], n), f32).at[:, :a.shape[1]].set(a)

    def pad_rows(a, n):
        return jnp.zeros((n, a.shape[1]), f32).at[:a.shape[0], :].set(a)

    def pad_vec(v, n):
        return jnp.zeros((n,), f32).at[:v.shape[0]].set(v)

    # ConvTranspose1d weight (in, 128, NUM_PC) -> (in, NUM_PC*128),
    # column index = point*128 + channel (point-major, channel-minor).
    ps_w = jnp.transpose(p["ps_w"], (0, 2, 1)).reshape(DIM_FEAT, NUM_PC * HID)
    ps_b = p["ps_b"][None, :].astype(f32)                            # (1, 128)

    # MLP_Res on torch.cat([x, feat], 1): split the weight rows; the feat rows
    # become a per-batch additive bias (computed once, in f32).
    def cat_stage(m):
        w1t, wst = m["w1"].T, m["ws"].T                              # (HID+DIM_FEAT, HID)
        wf = jnp.concatenate([w1t[:HID], wst[:HID]], axis=1)         # (128, 256)
        bias = jnp.concatenate(
            [feat @ w1t[HID:] + m["b1"][None, :],
             feat @ wst[HID:] + m["bs"][None, :]], axis=1)           # (B, 256)
        return wf, bias, m["w2"].T, m["b2"]

    # MLP_Res(128 -> 64 -> 128): hidden zero-padded 64 -> 128 (exact: padded
    # bias lanes are 0 => relu gives 0, padded W2 rows are 0).
    def plain_stage(m):
        wf = jnp.concatenate([pad_cols(m["w1"].T, HID), m["ws"].T], axis=1)
        bias = jnp.broadcast_to(
            jnp.concatenate([pad_vec(m["b1"], HID), m["bs"]])[None, :], (B, HID2))
        return wf, bias, pad_rows(m["w2"].T, HID), m["b2"]

    # mlp_4 = Conv1d(128,64) -> ReLU -> Conv1d(64,3): shortcut path zeroed,
    # output channels padded 3 -> 128 so the final store stays lane-dense.
    def final_stage():
        wf = jnp.concatenate([pad_cols(p["m4w1"].T, HID),
                              jnp.zeros((HID, HID), f32)], axis=1)
        bias = jnp.broadcast_to(
            jnp.concatenate([pad_vec(p["m4b1"], HID),
                             jnp.zeros((HID,), f32)])[None, :], (B, HID2))
        w2p = pad_rows(pad_cols(p["m4w2"].T, HID), HID)
        return wf, bias, w2p, pad_vec(p["m4b2"], HID)

    stages = [cat_stage(p["m1"]), plain_stage(p["m2"]),
              cat_stage(p["m3"]), final_stage()]
    wf_slab = jnp.stack([s[0] for s in stages]).astype(w_dtype)        # (4,128,256)
    bias_slab = jnp.stack([s[1] for s in stages]).astype(f32)          # (4,B,256)
    w2_slab = jnp.stack([s[2] for s in stages]).astype(w_dtype)        # (4,128,128)
    b2_slab = jnp.stack([s[3][None, :] for s in stages]).astype(f32)   # (4,1,128)

    return (feat.astype(f32), ps_w.astype(w_dtype), ps_b,
            wf_slab, bias_slab, w2_slab, b2_slab)


# ----------------------------- pallas_call wrapper ------------------------------
def _num_point_tiles():
    # v7x has 2 TensorCores per chip: give each one tile of the "parallel" point
    # axis (halves per-core ps_w traffic/compute).  Single-TC chips (v5e/v6e)
    # collapse to one tile so the MLP stack runs at M = B*NUM_PC = 256.
    try:
        kind = jax.devices()[0].device_kind.lower()
    except Exception:
        return 1
    return 2 if "7" in kind else 1


@functools.partial(jax.jit, static_argnames=("num_tiles",))
def _decoder_coarse(feat, params, num_tiles):
    assert NUM_PC % num_tiles == 0
    tile_pc = NUM_PC // num_tiles
    inputs = _kernel_inputs(feat, params)
    feat_in, ps_w, ps_b, wf, bias, w2, b2 = inputs

    def const_spec(a):
        nd = a.ndim
        # Full block, index never changes across the point-tile grid -> one DMA.
        return pl.BlockSpec(a.shape, lambda t, nd=nd: (0,) * nd)

    in_specs = [
        const_spec(feat_in),
        # ps_w is the only tiled input: each grid step gets its tile_pc points.
        pl.BlockSpec((DIM_FEAT, tile_pc * HID), lambda t: (0, t)),
        const_spec(ps_b), const_spec(wf), const_spec(bias),
        const_spec(w2), const_spec(b2),
    ]

    out = pl.pallas_call(
        functools.partial(seedgen_kernel, tile_pc=tile_pc),
        out_shape=jax.ShapeDtypeStruct((B, NUM_PC, HID), jnp.float32),
        grid=(num_tiles,),
        in_specs=in_specs,
        out_specs=pl.BlockSpec((B, tile_pc, HID), lambda t: (0, t, 0)),
        compiler_params=pltpu.CompilerParams(
            dimension_semantics=("parallel",)),
    )(*inputs)

    # Only lanes 0:3 are real output channels; the rest are exactly zero.
    return out[:, :, :3]


def decoder_coarse_pallas(feat, params):
    """feat: (B, DIM_FEAT) float32 -> coarse point cloud (B, NUM_PC, 3) float32."""
    return _decoder_coarse(feat, params, _num_point_tiles())


def decoder_forward(feat, params):
    """Pallas equivalent of Decoder.forward (coarse stage only)."""
    arr_pcd = [decoder_coarse_pallas(feat, params)]
    # TODO(synk): append SPD upsampler outputs here once SPD's definition is available.
    return arr_pcd


# ----------------------------- pure-JAX reference (torch NCW layout) ------------
def decoder_coarse_ref(feat, p):
    featc = feat[:, :, None]                                           # (B, C, 1)
    x1 = jnp.einsum("bc,cod->bod", feat, p["ps_w"]) + p["ps_b"][None, :, None]

    def conv1(x, w, b):                                                # Conv1d, k=1
        return jnp.einsum("bin,oi->bon", x, w) + b[None, :, None]

    def mlp_res(x, m):
        sc = conv1(x, m["ws"], m["bs"])
        h = jax.nn.relu(conv1(x, m["w1"], m["b1"]))
        return conv1(h, m["w2"], m["b2"]) + sc

    frep = jnp.repeat(featc, NUM_PC, axis=2)
    y1 = mlp_res(jnp.concatenate([x1, frep], axis=1), p["m1"])
    y2 = mlp_res(y1, p["m2"])
    y3 = mlp_res(jnp.concatenate([y2, frep], axis=1), p["m3"])
    h = jax.nn.relu(conv1(y3, p["m4w1"], p["m4b1"]))
    out = conv1(h, p["m4w2"], p["m4b2"])                               # (B, 3, NUM_PC)
    return jnp.transpose(out, (0, 2, 1))                               # (B, NUM_PC, 3)


# ----------------------------- main ---------------------------------------------
if __name__ == "__main__":
    key = jax.random.PRNGKey(0)
    k_param, k_feat = jax.random.split(key)
    params = init_params(k_param)
    feat = jax.random.normal(k_feat, (B, DIM_FEAT), jnp.float32)

    arr_pcd = decoder_forward(feat, params)
    pcd = jax.block_until_ready(arr_pcd[0])
    assert pcd.shape == (B, NUM_PC, 3), pcd.shape

    ref = jax.block_until_ready(decoder_coarse_ref(feat, params))

    # bf16 weights / bf16 MXU with f32 accumulation: allow a few % of output scale.
    max_err = float(jnp.max(jnp.abs(pcd - ref)))
    scale = float(jnp.max(jnp.abs(ref)))
    assert max_err <= 4e-2 * scale + 1e-3, (max_err, scale)

    print("KERNEL_OK")
</pallas_src>

<mosaic_0001>
module attributes {stable_mosaic.version = 11 : i64} {
  func.func @seedgen_kernel(%arg0: i32, %arg1: memref<2x64xf32, #tpu.memory_space<vmem>>, %arg2: memref<64x16384xbf16, #tpu.memory_space<vmem>>, %arg3: memref<1x128xf32, #tpu.memory_space<vmem>>, %arg4: memref<4x128x256xbf16, #tpu.memory_space<vmem>>, %arg5: memref<4x2x256xf32, #tpu.memory_space<vmem>>, %arg6: memref<4x128x128xbf16, #tpu.memory_space<vmem>>, %arg7: memref<4x1x128xf32, #tpu.memory_space<vmem>>, %arg8: memref<2x128x128xf32, #tpu.memory_space<vmem>>) attributes {dimension_semantics = [#tpu.dimension_semantics<parallel>], iteration_bounds = array<i64: 1>, scalar_prefetch = 0 : i64, scratch_operands = 0 : i64, tpu.core_type = #tpu.core_type<tc>, window_params = [{pipeline_mode = #tpu.pipeline_mode<synchronous>, transform_indices = @transform_0, window_bounds = array<i64: 2, 64>}, {transform_indices = @transform_1, window_bounds = array<i64: 64, 16384>}, {pipeline_mode = #tpu.pipeline_mode<synchronous>, transform_indices = @transform_2, window_bounds = array<i64: 1, 128>}, {pipeline_mode = #tpu.pipeline_mode<synchronous>, transform_indices = @transform_3, window_bounds = array<i64: 4, 128, 256>}, {pipeline_mode = #tpu.pipeline_mode<synchronous>, transform_indices = @transform_4, window_bounds = array<i64: 4, 2, 256>}, {pipeline_mode = #tpu.pipeline_mode<synchronous>, transform_indices = @transform_5, window_bounds = array<i64: 4, 128, 128>}, {pipeline_mode = #tpu.pipeline_mode<synchronous>, transform_indices = @transform_6, window_bounds = array<i64: 4, 1, 128>}, {transform_indices = @transform_7, window_bounds = array<i64: 2, 128, 128>}]} {
    %c0 = arith.constant 0 : index
    %c0_0 = arith.constant 0 : index
    %0 = vector.load %arg1[%c0, %c0_0] : memref<2x64xf32, #tpu.memory_space<vmem>>, vector<2x64xf32>
    %1 = arith.truncf %0 : vector<2x64xf32> to vector<2x64xbf16>
    %c0_1 = arith.constant 0 : index
    %c0_2 = arith.constant 0 : index
    %2 = vector.load %arg2[%c0_1, %c0_2] : memref<64x16384xbf16, #tpu.memory_space<vmem>>, vector<64x16384xbf16>
    %cst = arith.constant dense<0.000000e+00> : vector<2x16384xf32>
    %3 = tpu.matmul %1, %2, %cst {dimension_numbers = #tpu.dot_dimension_numbers<[1], [0], [0], [1], [0, 0, 1, 1], [], []>} : vector<2x64xbf16>, vector<64x16384xbf16>, vector<2x16384xf32> -> vector<2x16384xf32>
    %4 = vector.shape_cast %3 : vector<2x16384xf32> to vector<256x128xf32>
    %c0_3 = arith.constant 0 : index
    %c0_4 = arith.constant 0 : index
    %5 = vector.load %arg3[%c0_3, %c0_4] : memref<1x128xf32, #tpu.memory_space<vmem>>, vector<1x128xf32>
    %6 = vector.broadcast %5 : vector<1x128xf32> to vector<256x128xf32>
    %7 = arith.addf %4, %6 : vector<256x128xf32>
    %8 = arith.truncf %7 : vector<256x128xf32> to vector<256x128xbf16>
    %c0_5 = arith.constant 0 : index
    %c0_6 = arith.constant 0 : index
    %c0_7 = arith.constant 0 : index
    %9 = vector.load %arg4[%c0_5, %c0_6, %c0_7] : memref<4x128x256xbf16, #tpu.memory_space<vmem>>, vector<1x128x256xbf16>
    %10 = vector.shape_cast %9 : vector<1x128x256xbf16> to vector<128x256xbf16>
    %cst_8 = arith.constant dense<0.000000e+00> : vector<256x256xf32>
    %11 = tpu.matmul %8, %10, %cst_8 {dimension_numbers = #tpu.dot_dimension_numbers<[1], [0], [0], [1], [0, 0, 1, 1], [], []>} : vector<256x128xbf16>, vector<128x256xbf16>, vector<256x256xf32> -> vector<256x256xf32>
    %12 = vector.shape_cast %11 : vector<256x256xf32> to vector<2x128x256xf32>
    %c0_9 = arith.constant 0 : index
    %c0_10 = arith.constant 0 : index
    %c0_11 = arith.constant 0 : index
    %13 = vector.load %arg5[%c0_9, %c0_10, %c0_11] : memref<4x2x256xf32, #tpu.memory_space<vmem>>, vector<1x2x256xf32>
    %14 = vector.shape_cast %13 : vector<1x2x256xf32> to vector<2x256xf32>
    %15 = vector.shape_cast %14 : vector<2x256xf32> to vector<2x1x256xf32>
    %16 = vector.broadcast %15 : vector<2x1x256xf32> to vector<2x128x256xf32>
    %17 = arith.addf %12, %16 : vector<2x128x256xf32>
    %18 = vector.shape_cast %17 : vector<2x128x256xf32> to vector<256x256xf32>
    %19 = vector.extract_strided_slice %18 {offsets = [0, 0], sizes = [256, 128], strides = [1, 1]} : vector<256x256xf32> to vector<256x128xf32>
    %cst_12 = arith.constant 0.000000e+00 : f32
    %20 = vector.broadcast %cst_12 : f32 to vector<256x128xf32>
    %21 = arith.maximumf %19, %20 : vector<256x128xf32>
    %22 = arith.truncf %21 : vector<256x128xf32> to vector<256x128xbf16>
    %23 = vector.extract_strided_slice %18 {offsets = [0, 128], sizes = [256, 128], strides = [1, 1]} : vector<256x256xf32> to vector<256x128xf32>
    %c0_13 = arith.constant 0 : index
    %c0_14 = arith.constant 0 : index
    %c0_15 = arith.constant 0 : index
    %24 = vector.load %arg6[%c0_13, %c0_14, %c0_15] : memref<4x128x128xbf16, #tpu.memory_space<vmem>>, vector<1x128x128xbf16>
    %25 = vector.shape_cast %24 : vector<1x128x128xbf16> to vector<128x128xbf16>
    %cst_16 = arith.constant dense<0.000000e+00> : vector<256x128xf32>
    %26 = tpu.matmul %22, %25, %cst_16 {dimension_numbers = #tpu.dot_dimension_numbers<[1], [0], [0], [1], [0, 0, 1, 1], [], []>} : vector<256x128xbf16>, vector<128x128xbf16>, vector<256x128xf32> -> vector<256x128xf32>
    %c0_17 = arith.constant 0 : index
    %c0_18 = arith.constant 0 : index
    %c0_19 = arith.constant 0 : index
    %27 = vector.load %arg7[%c0_17, %c0_18, %c0_19] : memref<4x1x128xf32, #tpu.memory_space<vmem>>, vector<1x1x128xf32>
    %28 = vector.shape_cast %27 : vector<1x1x128xf32> to vector<1x128xf32>
    %29 = vector.broadcast %28 : vector<1x128xf32> to vector<256x128xf32>
    %30 = arith.addf %26, %29 : vector<256x128xf32>
    %31 = arith.addf %30, %23 : vector<256x128xf32>
    %32 = arith.truncf %31 : vector<256x128xf32> to vector<256x128xbf16>
    %c1 = arith.constant 1 : index
    %c0_20 = arith.constant 0 : index
    %c0_21 = arith.constant 0 : index
    %33 = vector.load %arg4[%c1, %c0_20, %c0_21] : memref<4x128x256xbf16, #tpu.memory_space<vmem>>, vector<1x128x256xbf16>
    %34 = vector.shape_cast %33 : vector<1x128x256xbf16> to vector<128x256xbf16>
    %cst_22 = arith.constant dense<0.000000e+00> : vector<256x256xf32>
    %35 = tpu.matmul %32, %34, %cst_22 {dimension_numbers = #tpu.dot_dimension_numbers<[1], [0], [0], [1], [0, 0, 1, 1], [], []>} : vector<256x128xbf16>, vector<128x256xbf16>, vector<256x256xf32> -> vector<256x256xf32>
    %36 = vector.shape_cast %35 : vector<256x256xf32> to vector<2x128x256xf32>
    %c1_23 = arith.constant 1 : index
    %c0_24 = arith.constant 0 : index
    %c0_25 = arith.constant 0 : index
    %37 = vector.load %arg5[%c1_23, %c0_24, %c0_25] : memref<4x2x256xf32, #tpu.memory_space<vmem>>, vector<1x2x256xf32>
    %38 = vector.shape_cast %37 : vector<1x2x256xf32> to vector<2x256xf32>
    %39 = vector.shape_cast %38 : vector<2x256xf32> to vector<2x1x256xf32>
    %40 = vector.broadcast %39 : vector<2x1x256xf32> to vector<2x128x256xf32>
    %41 = arith.addf %36, %40 : vector<2x128x256xf32>
    %42 = vector.shape_cast %41 : vector<2x128x256xf32> to vector<256x256xf32>
    %43 = vector.extract_strided_slice %42 {offsets = [0, 0], sizes = [256, 128], strides = [1, 1]} : vector<256x256xf32> to vector<256x128xf32>
    %cst_26 = arith.constant 0.000000e+00 : f32
    %44 = vector.broadcast %cst_26 : f32 to vector<256x128xf32>
    %45 = arith.maximumf %43, %44 : vector<256x128xf32>
    %46 = arith.truncf %45 : vector<256x128xf32> to vector<256x128xbf16>
    %47 = vector.extract_strided_slice %42 {offsets = [0, 128], sizes = [256, 128], strides = [1, 1]} : vector<256x256xf32> to vector<256x128xf32>
    %c1_27 = arith.constant 1 : index
    %c0_28 = arith.constant 0 : index
    %c0_29 = arith.constant 0 : index
    %48 = vector.load %arg6[%c1_27, %c0_28, %c0_29] : memref<4x128x128xbf16, #tpu.memory_space<vmem>>, vector<1x128x128xbf16>
    %49 = vector.shape_cast %48 : vector<1x128x128xbf16> to vector<128x128xbf16>
    %cst_30 = arith.constant dense<0.000000e+00> : vector<256x128xf32>
    %50 = tpu.matmul %46, %49, %cst_30 {dimension_numbers = #tpu.dot_dimension_numbers<[1], [0], [0], [1], [0, 0, 1, 1], [], []>} : vector<256x128xbf16>, vector<128x128xbf16>, vector<256x128xf32> -> vector<256x128xf32>
    %c1_31 = arith.constant 1 : index
    %c0_32 = arith.constant 0 : index
    %c0_33 = arith.constant 0 : index
    %51 = vector.load %arg7[%c1_31, %c0_32, %c0_33] : memref<4x1x128xf32, #tpu.memory_space<vmem>>, vector<1x1x128xf32>
    %52 = vector.shape_cast %51 : vector<1x1x128xf32> to vector<1x128xf32>
    %53 = vector.broadcast %52 : vector<1x128xf32> to vector<256x128xf32>
    %54 = arith.addf %50, %53 : vector<256x128xf32>
    %55 = arith.addf %54, %47 : vector<256x128xf32>
    %56 = arith.truncf %55 : vector<256x128xf32> to vector<256x128xbf16>
    %c2 = arith.constant 2 : index
    %c0_34 = arith.constant 0 : index
    %c0_35 = arith.constant 0 : index
    %57 = vector.load %arg4[%c2, %c0_34, %c0_35] : memref<4x128x256xbf16, #tpu.memory_space<vmem>>, vector<1x128x256xbf16>
    %58 = vector.shape_cast %57 : vector<1x128x256xbf16> to vector<128x256xbf16>
    %cst_36 = arith.constant dense<0.000000e+00> : vector<256x256xf32>
    %59 = tpu.matmul %56, %58, %cst_36 {dimension_numbers = #tpu.dot_dimension_numbers<[1], [0], [0], [1], [0, 0, 1, 1], [], []>} : vector<256x128xbf16>, vector<128x256xbf16>, vector<256x256xf32> -> vector<256x256xf32>
    %60 = vector.shape_cast %59 : vector<256x256xf32> to vector<2x128x256xf32>
    %c2_37 = arith.constant 2 : index
    %c0_38 = arith.constant 0 : index
    %c0_39 = arith.constant 0 : index
    %61 = vector.load %arg5[%c2_37, %c0_38, %c0_39] : memref<4x2x256xf32, #tpu.memory_space<vmem>>, vector<1x2x256xf32>
    %62 = vector.shape_cast %61 : vector<1x2x256xf32> to vector<2x256xf32>
    %63 = vector.shape_cast %62 : vector<2x256xf32> to vector<2x1x256xf32>
    %64 = vector.broadcast %63 : vector<2x1x256xf32> to vector<2x128x256xf32>
    %65 = arith.addf %60, %64 : vector<2x128x256xf32>
    %66 = vector.shape_cast %65 : vector<2x128x256xf32> to vector<256x256xf32>
    %67 = vector.extract_strided_slice %66 {offsets = [0, 0], sizes = [256, 128], strides = [1, 1]} : vector<256x256xf32> to vector<256x128xf32>
    %cst_40 = arith.constant 0.000000e+00 : f32
    %68 = vector.broadcast %cst_40 : f32 to vector<256x128xf32>
    %69 = arith.maximumf %67, %68 : vector<256x128xf32>
    %70 = arith.truncf %69 : vector<256x128xf32> to vector<256x128xbf16>
    %71 = vector.extract_strided_slice %66 {offsets = [0, 128], sizes = [256, 128], strides = [1, 1]} : vector<256x256xf32> to vector<256x128xf32>
    %c2_41 = arith.constant 2 : index
    %c0_42 = arith.constant 0 : index
    %c0_43 = arith.constant 0 : index
    %72 = vector.load %arg6[%c2_41, %c0_42, %c0_43] : memref<4x128x128xbf16, #tpu.memory_space<vmem>>, vector<1x128x128xbf16>
    %73 = vector.shape_cast %72 : vector<1x128x128xbf16> to vector<128x128xbf16>
    %cst_44 = arith.constant dense<0.000000e+00> : vector<256x128xf32>
    %74 = tpu.matmul %70, %73, %cst_44 {dimension_numbers = #tpu.dot_dimension_numbers<[1], [0], [0], [1], [0, 0, 1, 1], [], []>} : vector<256x128xbf16>, vector<128x128xbf16>, vector<256x128xf32> -> vector<256x128xf32>
    %c2_45 = arith.constant 2 : index
    %c0_46 = arith.constant 0 : index
    %c0_47 = arith.constant 0 : index
    %75 = vector.load %arg7[%c2_45, %c0_46, %c0_47] : memref<4x1x128xf32, #tpu.memory_space<vmem>>, vector<1x1x128xf32>
    %76 = vector.shape_cast %75 : vector<1x1x128xf32> to vector<1x128xf32>
    %77 = vector.broadcast %76 : vector<1x128xf32> to vector<256x128xf32>
    %78 = arith.addf %74, %77 : vector<256x128xf32>
    %79 = arith.addf %78, %71 : vector<256x128xf32>
    %80 = arith.truncf %79 : vector<256x128xf32> to vector<256x128xbf16>
    %c3 = arith.constant 3 : index
    %c0_48 = arith.constant 0 : index
    %c0_49 = arith.constant 0 : index
    %81 = vector.load %arg4[%c3, %c0_48, %c0_49] : memref<4x128x256xbf16, #tpu.memory_space<vmem>>, vector<1x128x256xbf16>
    %82 = vector.shape_cast %81 : vector<1x128x256xbf16> to vector<128x256xbf16>
    %cst_50 = arith.constant dense<0.000000e+00> : vector<256x256xf32>
    %83 = tpu.matmul %80, %82, %cst_50 {dimension_numbers = #tpu.dot_dimension_numbers<[1], [0], [0], [1], [0, 0, 1, 1], [], []>} : vector<256x128xbf16>, vector<128x256xbf16>, vector<256x256xf32> -> vector<256x256xf32>
    %84 = vector.shape_cast %83 : vector<256x256xf32> to vector<2x128x256xf32>
    %c3_51 = arith.constant 3 : index
    %c0_52 = arith.constant 0 : index
    %c0_53 = arith.constant 0 : index
    %85 = vector.load %arg5[%c3_51, %c0_52, %c0_53] : memref<4x2x256xf32, #tpu.memory_space<vmem>>, vector<1x2x256xf32>
    %86 = vector.shape_cast %85 : vector<1x2x256xf32> to vector<2x256xf32>
    %87 = vector.shape_cast %86 : vector<2x256xf32> to vector<2x1x256xf32>
    %88 = vector.broadcast %87 : vector<2x1x256xf32> to vector<2x128x256xf32>
    %89 = arith.addf %84, %88 : vector<2x128x256xf32>
    %90 = vector.shape_cast %89 : vector<2x128x256xf32> to vector<256x256xf32>
    %91 = vector.extract_strided_slice %90 {offsets = [0, 0], sizes = [256, 128], strides = [1, 1]} : vector<256x256xf32> to vector<256x128xf32>
    %cst_54 = arith.constant 0.000000e+00 : f32
    %92 = vector.broadcast %cst_54 : f32 to vector<256x128xf32>
    %93 = arith.maximumf %91, %92 : vector<256x128xf32>
    %94 = arith.truncf %93 : vector<256x128xf32> to vector<256x128xbf16>
    %95 = vector.extract_strided_slice %90 {offsets = [0, 128], sizes = [256, 128], strides = [1, 1]} : vector<256x256xf32> to vector<256x128xf32>
    %c3_55 = arith.constant 3 : index
    %c0_56 = arith.constant 0 : index
    %c0_57 = arith.constant 0 : index
    %96 = vector.load %arg6[%c3_55, %c0_56, %c0_57] : memref<4x128x128xbf16, #tpu.memory_space<vmem>>, vector<1x128x128xbf16>
    %97 = vector.shape_cast %96 : vector<1x128x128xbf16> to vector<128x128xbf16>
    %cst_58 = arith.constant dense<0.000000e+00> : vector<256x128xf32>
    %98 = tpu.matmul %94, %97, %cst_58 {dimension_numbers = #tpu.dot_dimension_numbers<[1], [0], [0], [1], [0, 0, 1, 1], [], []>} : vector<256x128xbf16>, vector<128x128xbf16>, vector<256x128xf32> -> vector<256x128xf32>
    %c3_59 = arith.constant 3 : index
    %c0_60 = arith.constant 0 : index
    %c0_61 = arith.constant 0 : index
    %99 = vector.load %arg7[%c3_59, %c0_60, %c0_61] : memref<4x1x128xf32, #tpu.memory_space<vmem>>, vector<1x1x128xf32>
    %100 = vector.shape_cast %99 : vector<1x1x128xf32> to vector<1x128xf32>
    %101 = vector.broadcast %100 : vector<1x128xf32> to vector<256x128xf32>
    %102 = arith.addf %98, %101 : vector<256x128xf32>
    %103 = arith.addf %102, %95 : vector<256x128xf32>
    %104 = vector.shape_cast %103 : vector<256x128xf32> to vector<2x128x128xf32>
    %c0_62 = arith.constant 0 : index
    %c0_63 = arith.constant 0 : index
    %c0_64 = arith.constant 0 : index
    %105 = vector.load %arg8[%c0_62, %c0_63, %c0_64] : memref<2x128x128xf32, #tpu.memory_space<vmem>>, vector<2x128x128xf32>
    tpu.vector_store %arg8[%c0_62, %c0_63, %c0_64], %104 {strides = array<i32>} : memref<2x128x128xf32, #tpu.memory_space<vmem>>, vector<2x128x128xf32>,
    return
  }
  func.func @transform_0(%arg0: i32) -> (i32, i32) {
    %c0_i32 = arith.constant 0 : i32
    %c0_i32_0 = arith.constant 0 : i32
    %c0_i32_1 = arith.constant 0 : i32
    return %c0_i32, %c0_i32_0 : i32, i32
  }
  func.func @transform_1(%arg0: i32) -> (i32, i32) {
    %c0_i32 = arith.constant 0 : i32
    %c0_i32_0 = arith.constant 0 : i32
    return %c0_i32, %arg0 : i32, i32
  }
  func.func @transform_2(%arg0: i32) -> (i32, i32) {
    %c0_i32 = arith.constant 0 : i32
    %c0_i32_0 = arith.constant 0 : i32
    %c0_i32_1 = arith.constant 0 : i32
    return %c0_i32, %c0_i32_0 : i32, i32
  }
  func.func @transform_3(%arg0: i32) -> (i32, i32, i32) {
    %c0_i32 = arith.constant 0 : i32
    %c0_i32_0 = arith.constant 0 : i32
    %c0_i32_1 = arith.constant 0 : i32
    %c0_i32_2 = arith.constant 0 : i32
    return %c0_i32, %c0_i32_0, %c0_i32_1 : i32, i32, i32
  }
  func.func @transform_4(%arg0: i32) -> (i32, i32, i32) {
    %c0_i32 = arith.constant 0 : i32
    %c0_i32_0 = arith.constant 0 : i32
    %c0_i32_1 = arith.constant 0 : i32
    %c0_i32_2 = arith.constant 0 : i32
    return %c0_i32, %c0_i32_0, %c0_i32_1 : i32, i32, i32
  }
  func.func @transform_5(%arg0: i32) -> (i32, i32, i32) {
    %c0_i32 = arith.constant 0 : i32
    %c0_i32_0 = arith.constant 0 : i32
    %c0_i32_1 = arith.constant 0 : i32
    %c0_i32_2 = arith.constant 0 : i32
    return %c0_i32, %c0_i32_0, %c0_i32_1 : i32, i32, i32
  }
  func.func @transform_6(%arg0: i32) -> (i32, i32, i32) {
    %c0_i32 = arith.constant 0 : i32
    %c0_i32_0 = arith.constant 0 : i32
    %c0_i32_1 = arith.constant 0 : i32
    %c0_i32_2 = arith.constant 0 : i32
    return %c0_i32, %c0_i32_0, %c0_i32_1 : i32, i32, i32
  }
  func.func @transform_7(%arg0: i32) -> (i32, i32, i32) {
    %c0_i32 = arith.constant 0 : i32
    %c0_i32_0 = arith.constant 0 : i32
    %c0_i32_1 = arith.constant 0 : i32
    return %c0_i32, %arg0, %c0_i32_0 : i32, i32, i32
  }
}

</mosaic_0001>

<llo_original>
// kernel: _decoder_coarse.1
$region0: #{_decoder_coarse.1}
  #allocation0 [shape = 'u32[]', space=smem, size = 0x4, offset = 0x4, fixed_abs, tag = 'smem constant byte address 0x4 - core index']
  #allocation1 [shape = 'u32[144,128]{1,0:T(1,128)}', space=vmem, size = 0x12000, scoped, tag = 'internal scratch']
  %s0 = inlined_call_operand.vmem [shape: f32[2,64], index: 0, kind: input, shape index: {}]
  %s1 = inlined_call_operand.vmem [shape: bf16[64,16384], index: 1, kind: input, shape index: {}]
  %s2 = inlined_call_operand.vmem [shape: f32[1,128], index: 2, kind: input, shape index: {}]
  %s3 = inlined_call_operand.vmem [shape: bf16[4,128,256], index: 3, kind: input, shape index: {}]
  %s4 = inlined_call_operand.vmem [shape: f32[4,2,256], index: 4, kind: input, shape index: {}]
  %s5 = inlined_call_operand.vmem [shape: bf16[4,128,128], index: 5, kind: input, shape index: {}]
  %s6 = inlined_call_operand.vmem [shape: f32[4,1,128], index: 6, kind: input, shape index: {}]
  %s7 = inlined_call_operand.vmem [shape: f32[2,128,128], index: 7, kind: output, shape index: {}]
  %s8 = sld [smem:[#allocation0]]
  $region38: #{_decoder_coarse.1} parent=0
    _
  %s10 = ssub.s32 1, %s8
  %s11 = scalar_select 0, %s10, %s8
  // Predicated region
  $region2: #{_decoder_coarse.1} parent=0 // pred_check
    _
  $region3: #{_decoder_coarse.1} parent=0 // pred_check_branch
    %13 = sbr.rel (0) target = $region5
  $region4: #{_decoder_coarse.1} parent=0 // pred_region
    _
  $region5: #{_decoder_coarse.1} parent=0 // pred_fallthru
    _
  // Predicated region
  $region6: #{_decoder_coarse.1} parent=0 // pred_check
    _
  $region7: #{_decoder_coarse.1} parent=0 // pred_check_branch
    %15 = sbr.rel (0) target = $region9
  $region8: #{_decoder_coarse.1} parent=0 // pred_region
    _
  $region9: #{_decoder_coarse.1} parent=0 // pred_fallthru
    _
  // Predicated region
  $region10: #{_decoder_coarse.1} parent=0 // pred_check
    _
  $region11: #{_decoder_coarse.1} parent=0 // pred_check_branch
    %17 = sbr.rel (0) target = $region13
  $region12: #{_decoder_coarse.1} parent=0 // pred_region
    _
  $region13: #{_decoder_coarse.1} parent=0 // pred_fallthru
    _
  // Predicated region
  $region14: #{_decoder_coarse.1} parent=0 // pred_check
    _
  $region15: #{_decoder_coarse.1} parent=0 // pred_check_branch
    %19 = sbr.rel (0) target = $region17
  $region16: #{_decoder_coarse.1} parent=0 // pred_region
    _
  $region17: #{_decoder_coarse.1} parent=0 // pred_fallthru
    _
  // Predicated region
  $region18: #{_decoder_coarse.1} parent=0 // pred_check
    _
  $region19: #{_decoder_coarse.1} parent=0 // pred_check_branch
    %21 = sbr.rel (0) target = $region21
  $region20: #{_decoder_coarse.1} parent=0 // pred_region
    _
  $region21: #{_decoder_coarse.1} parent=0 // pred_fallthru
    _
  // Predicated region
  $region22: #{_decoder_coarse.1} parent=0 // pred_check
    _
  $region23: #{_decoder_coarse.1} parent=0 // pred_check_branch
    %23 = sbr.rel (0) target = $region25
  $region24: #{_decoder_coarse.1} parent=0 // pred_region
    _
  $region25: #{_decoder_coarse.1} parent=0 // pred_fallthru
    _
  // Predicated region
  $region26: #{_decoder_coarse.1} parent=0 // pred_check
    _
  $region27: #{_decoder_coarse.1} parent=0 // pred_check_branch
    %25 = sbr.rel (0) target = $region29
  $region28: #{_decoder_coarse.1} parent=0 // pred_region
    _
  $region29: #{_decoder_coarse.1} parent=0 // pred_fallthru
    _
  %v27 = vld [vmem:[%s0] sm:$0x3]
  %v28 = vpack.c.bf16 %v27, %v27
  %v29 = vld [vmem:[%s1] sm:$0xff]
  %v30 = vld [vmem:[%s1 + $0x8] sm:$0xff]
  %v31 = vld [vmem:[%s1 + $0x10] sm:$0xff]
  %v32 = vld [vmem:[%s1 + $0x18] sm:$0xff]
  %v33 = vld [vmem:[%s1 + $0x20] sm:$0xff]
  %v34 = vld [vmem:[%s1 + $0x28] sm:$0xff]
  %v35 = vld [vmem:[%s1 + $0x30] sm:$0xff]
  %v36 = vld [vmem:[%s1 + $0x38] sm:$0xff]
  %v37 = vld [vmem:[%s1 + $0x40] sm:$0xff]
  %v38 = vld [vmem:[%s1 + $0x48] sm:$0xff]
  %v39 = vld [vmem:[%s1 + $0x50] sm:$0xff]
  %v40 = vld [vmem:[%s1 + $0x58] sm:$0xff]
  %v41 = vld [vmem:[%s1 + $0x60] sm:$0xff]
  %v42 = vld [vmem:[%s1 + $0x68] sm:$0xff]
  %v43 = vld [vmem:[%s1 + $0x70] sm:$0xff]
  %v44 = vld [vmem:[%s1 + $0x78] sm:$0xff]
  %v45 = vld [vmem:[%s1 + $0x80] sm:$0xff]
  %v46 = vld [vmem:[%s1 + $0x88] sm:$0xff]
  %v47 = vld [vmem:[%s1 + $0x90] sm:$0xff]
  %v48 = vld [vmem:[%s1 + $0x98] sm:$0xff]
  %v49 = vld [vmem:[%s1 + $0xa0] sm:$0xff]
  %v50 = vld [vmem:[%s1 + $0xa8] sm:$0xff]
  %v51 = vld [vmem:[%s1 + $0xb0] sm:$0xff]
  %v52 = vld [vmem:[%s1 + $0xb8] sm:$0xff]
  %v53 = vld [vmem:[%s1 + $0xc0] sm:$0xff]
  %v54 = vld [vmem:[%s1 + $0xc8] sm:$0xff]
  %v55 = vld [vmem:[%s1 + $0xd0] sm:$0xff]
  %v56 = vld [vmem:[%s1 + $0xd8] sm:$0xff]
  %v57 = vld [vmem:[%s1 + $0xe0] sm:$0xff]
  %v58 = vld [vmem:[%s1 + $0xe8] sm:$0xff]
  %v59 = vld [vmem:[%s1 + $0xf0] sm:$0xff]
  %v60 = vld [vmem:[%s1 + $0xf8] sm:$0xff]
  %v61 = vld [vmem:[%s1 + $0x100] sm:$0xff]
  %v62 = vld [vmem:[%s1 + $0x108] sm:$0xff]
  %v63 = vld [vmem:[%s1 + $0x110] sm:$0xff]
  %v64 = vld [vmem:[%s1 + $0x118] sm:$0xff]
  %v65 = vld [vmem:[%s1 + $0x120] sm:$0xff]
  %v66 = vld [vmem:[%s1 + $0x128] sm:$0xff]
  %v67 = vld [vmem:[%s1 + $0x130] sm:$0xff]
  %v68 = vld [vmem:[%s1 + $0x138] sm:$0xff]
  %v69 = vld [vmem:[%s1 + $0x140] sm:$0xff]
  %v70 = vld [vmem:[%s1 + $0x148] sm:$0xff]
  %v71 = vld [vmem:[%s1 + $0x150] sm:$0xff]
  %v72 = vld [vmem:[%s1 + $0x158] sm:$0xff]
  %v73 = vld [vmem:[%s1 + $0x160] sm:$0xff]
  %v74 = vld [vmem:[%s1 + $0x168] sm:$0xff]
  %v75 = vld [vmem:[%s1 + $0x170] sm:$0xff]
  %v76 = vld [vmem:[%s1 + $0x178] sm:$0xff]
  %v77 = vld [vmem:[%s1 + $0x180] sm:$0xff]
  %v78 = vld [vmem:[%s1 + $0x188] sm:$0xff]
  %v79 = vld [vmem:[%s1 + $0x190] sm:$0xff]
  %v80 = vld [vmem:[%s1 + $0x198] sm:$0xff]
  %v81 = vld [vmem:[%s1 + $0x1a0] sm:$0xff]
  %v82 = vld [vmem:[%s1 + $0x1a8] sm:$0xff]
  %v83 = vld [vmem:[%s1 + $0x1b0] sm:$0xff]
  %v84 = vld [vmem:[%s1 + $0x1b8] sm:$0xff]
  %v85 = vld [vmem:[%s1 + $0x1c0] sm:$0xff]
  %v86 = vld [vmem:[%s1 + $0x1c8] sm:$0xff]
  %v87 = vld [vmem:[%s1 + $0x1d0] sm:$0xff]
  %v88 = vld [vmem:[%s1 + $0x1d8] sm:$0xff]
  %v89 = vld [vmem:[%s1 + $0x1e0] sm:$0xff]
  %v90 = vld [vmem:[%s1 + $0x1e8] sm:$0xff]
  %v91 = vld [vmem:[%s1 + $0x1f0] sm:$0xff]
  %v92 = vld [vmem:[%s1 + $0x1f8] sm:$0xff]
  %v93 = vld [vmem:[%s1 + $0x200] sm:$0xff]
  %v94 = vld [vmem:[%s1 + $0x208] sm:$0xff]
  %v95 = vld [vmem:[%s1 + $0x210] sm:$0xff]
  %v96 = vld [vmem:[%s1 + $0x218] sm:$0xff]
  %v97 = vld [vmem:[%s1 + $0x220] sm:$0xff]
  %v98 = vld [vmem:[%s1 + $0x228] sm:$0xff]
  %v99 = vld [vmem:[%s1 + $0x230] sm:$0xff]
  %v100 = vld [vmem:[%s1 + $0x238] sm:$0xff]
  %v101 = vld [vmem:[%s1 + $0x240] sm:$0xff]
  %v102 = vld [vmem:[%s1 + $0x248] sm:$0xff]
  %v103 = vld [vmem:[%s1 + $0x250] sm:$0xff]
  %v104 = vld [vmem:[%s1 + $0x258] sm:$0xff]
  %v105 = vld [vmem:[%s1 + $0x260] sm:$0xff]
  %v106 = vld [vmem:[%s1 + $0x268] sm:$0xff]
  %v107 = vld [vmem:[%s1 + $0x270] sm:$0xff]
  %v108 = vld [vmem:[%s1 + $0x278] sm:$0xff]
  %v109 = vld [vmem:[%s1 + $0x280] sm:$0xff]
  %v110 = vld [vmem:[%s1 + $0x288] sm:$0xff]
  %v111 = vld [vmem:[%s1 + $0x290] sm:$0xff]
  %v112 = vld [vmem:[%s1 + $0x298] sm:$0xff]
  %v113 = vld [vmem:[%s1 + $0x2a0] sm:$0xff]
  %v114 = vld [vmem:[%s1 + $0x2a8] sm:$0xff]
  %v115 = vld [vmem:[%s1 + $0x2b0] sm:$0xff]
  %v116 = vld [vmem:[%s1 + $0x2b8] sm:$0xff]
  %v117 = vld [vmem:[%s1 + $0x2c0] sm:$0xff]
  %v118 = vld [vmem:[%s1 + $0x2c8] sm:$0xff]
  %v119 = vld [vmem:[%s1 + $0x2d0] sm:$0xff]
  %v120 = vld [vmem:[%s1 + $0x2d8] sm:$0xff]
  %v121 = vld [vmem:[%s1 + $0x2e0] sm:$0xff]
  %v122 = vld [vmem:[%s1 + $0x2e8] sm:$0xff]
  %v123 = vld [vmem:[%s1 + $0x2f0] sm:$0xff]
  %v124 = vld [vmem:[%s1 + $0x2f8] sm:$0xff]
  %v125 = vld [vmem:[%s1 + $0x300] sm:$0xff]
  %v126 = vld [vmem:[%s1 + $0x308] sm:$0xff]
  %v127 = vld [vmem:[%s1 + $0x310] sm:$0xff]
  %v128 = vld [vmem:[%s1 + $0x318] sm:$0xff]
  %v129 = vld [vmem:[%s1 + $0x320] sm:$0xff]
  %v130 = vld [vmem:[%s1 + $0x328] sm:$0xff]
  %v131 = vld [vmem:[%s1 + $0x330] sm:$0xff]
  %v132 = vld [vmem:[%s1 + $0x338] sm:$0xff]
  %v133 = vld [vmem:[%s1 + $0x340] sm:$0xff]
  %v134 = vld [vmem:[%s1 + $0x348] sm:$0xff]
  %v135 = vld [vmem:[%s1 + $0x350] sm:$0xff]
  %v136 = vld [vmem:[%s1 + $0x358] sm:$0xff]
  %v137 = vld [vmem:[%s1 + $0x360] sm:$0xff]
  %v138 = vld [vmem:[%s1 + $0x368] sm:$0xff]
  %v139 = vld [vmem:[%s1 + $0x370] sm:$0xff]
  %v140 = vld [vmem:[%s1 + $0x378] sm:$0xff]
  %v141 = vld [vmem:[%s1 + $0x380] sm:$0xff]
  %v142 = vld [vmem:[%s1 + $0x388] sm:$0xff]
  %v143 = vld [vmem:[%s1 + $0x390] sm:$0xff]
  %v144 = vld [vmem:[%s1 + $0x398] sm:$0xff]
  %v145 = vld [vmem:[%s1 + $0x3a0] sm:$0xff]
  %v146 = vld [vmem:[%s1 + $0x3a8] sm:$0xff]
  %v147 = vld [vmem:[%s1 + $0x3b0] sm:$0xff]
  %v148 = vld [vmem:[%s1 + $0x3b8] sm:$0xff]
  %v149 = vld [vmem:[%s1 + $0x3c0] sm:$0xff]
  %v150 = vld [vmem:[%s1 + $0x3c8] sm:$0xff]
  %v151 = vld [vmem:[%s1 + $0x3d0] sm:$0xff]
  %v152 = vld [vmem:[%s1 + $0x3d8] sm:$0xff]
  %v153 = vld [vmem:[%s1 + $0x3e0] sm:$0xff]
  %v154 = vld [vmem:[%s1 + $0x3e8] sm:$0xff]
  %v155 = vld [vmem:[%s1 + $0x3f0] sm:$0xff]
  %v156 = vld [vmem:[%s1 + $0x3f8] sm:$0xff]
  %v157 = vld [vmem:[%s1 + $0x400] sm:$0xff]
  %v158 = vld [vmem:[%s1 + $0x408] sm:$0xff]
  %v159 = vld [vmem:[%s1 + $0x410] sm:$0xff]
  %v160 = vld [vmem:[%s1 + $0x418] sm:$0xff]
  %v161 = vld [vmem:[%s1 + $0x420] sm:$0xff]
  %v162 = vld [vmem:[%s1 + $0x428] sm:$0xff]
  %v163 = vld [vmem:[%s1 + $0x430] sm:$0xff]
  %v164 = vld [vmem:[%s1 + $0x438] sm:$0xff]
  %v165 = vld [vmem:[%s1 + $0x440] sm:$0xff]
  %v166 = vld [vmem:[%s1 + $0x448] sm:$0xff]
  %v167 = vld [vmem:[%s1 + $0x450] sm:$0xff]
  %v168 = vld [vmem:[%s1 + $0x458] sm:$0xff]
  %v169 = vld [vmem:[%s1 + $0x460] sm:$0xff]
  %v170 = vld [vmem:[%s1 + $0x468] sm:$0xff]
  %v171 = vld [vmem:[%s1 + $0x470] sm:$0xff]
  %v172 = vld [vmem:[%s1 + $0x478] sm:$0xff]
  %v173 = vld [vmem:[%s1 + $0x480] sm:$0xff]
  %v174 = vld [vmem:[%s1 + $0x488] sm:$0xff]
  %v175 = vld [vmem:[%s1 + $0x490] sm:$0xff]
  %v176 = vld [vmem:[%s1 + $0x498] sm:$0xff]
  %v177 = vld [vmem:[%s1 + $0x4a0] sm:$0xff]
  %v178 = vld [vmem:[%s1 + $0x4a8] sm:$0xff]
  %v179 = vld [vmem:[%s1 + $0x4b0] sm:$0xff]
  %v180 = vld [vmem:[%s1 + $0x4b8] sm:$0xff]
  %v181 = vld [vmem:[%s1 + $0x4c0] sm:$0xff]
  %v182 = vld [vmem:[%s1 + $0x4c8] sm:$0xff]
  %v183 = vld [vmem:[%s1 + $0x4d0] sm:$0xff]
  %v184 = vld [vmem:[%s1 + $0x4d8] sm:$0xff]
  %v185 = vld [vmem:[%s1 + $0x4e0] sm:$0xff]
  %v186 = vld [vmem:[%s1 + $0x4e8] sm:$0xff]
  %v187 = vld [vmem:[%s1 + $0x4f0] sm:$0xff]
  %v188 = vld [vmem:[%s1 + $0x4f8] sm:$0xff]
  %v189 = vld [vmem:[%s1 + $0x500] sm:$0xff]
  %v190 = vld [vmem:[%s1 + $0x508] sm:$0xff]
  %v191 = vld [vmem:[%s1 + $0x510] sm:$0xff]
  %v192 = vld [vmem:[%s1 + $0x518] sm:$0xff]
  %v193 = vld [vmem:[%s1 + $0x520] sm:$0xff]
  %v194 = vld [vmem:[%s1 + $0x528] sm:$0xff]
  %v195 = vld [vmem:[%s1 + $0x530] sm:$0xff]
  %v196 = vld [vmem:[%s1 + $0x538] sm:$0xff]
  %v197 = vld [vmem:[%s1 + $0x540] sm:$0xff]
  %v198 = vld [vmem:[%s1 + $0x548] sm:$0xff]
  %v199 = vld [vmem:[%s1 + $0x550] sm:$0xff]
  %v200 = vld [vmem:[%s1 + $0x558] sm:$0xff]
  %v201 = vld [vmem:[%s1 + $0x560] sm:$0xff]
  %v202 = vld [vmem:[%s1 + $0x568] sm:$0xff]
  %v203 = vld [vmem:[%s1 + $0x570] sm:$0xff]
  %v204 = vld [vmem:[%s1 + $0x578] sm:$0xff]
  %v205 = vld [vmem:[%s1 + $0x580] sm:$0xff]
  %v206 = vld [vmem:[%s1 + $0x588] sm:$0xff]
  %v207 = vld [vmem:[%s1 + $0x590] sm:$0xff]
  %v208 = vld [vmem:[%s1 + $0x598] sm:$0xff]
  %v209 = vld [vmem:[%s1 + $0x5a0] sm:$0xff]
  %v210 = vld [vmem:[%s1 + $0x5a8] sm:$0xff]
  %v211 = vld [vmem:[%s1 + $0x5b0] sm:$0xff]
  %v212 = vld [vmem:[%s1 + $0x5b8] sm:$0xff]
  %v213 = vld [vmem:[%s1 + $0x5c0] sm:$0xff]
  %v214 = vld [vmem:[%s1 + $0x5c8] sm:$0xff]
  %v215 = vld [vmem:[%s1 + $0x5d0] sm:$0xff]
  %v216 = vld [vmem:[%s1 + $0x5d8] sm:$0xff]
  %v217 = vld [vmem:[%s1 + $0x5e0] sm:$0xff]
  %v218 = vld [vmem:[%s1 + $0x5e8] sm:$0xff]
  %v219 = vld [vmem:[%s1 + $0x5f0] sm:$0xff]
  %v220 = vld [vmem:[%s1 + $0x5f8] sm:$0xff]
  %v221 = vld [vmem:[%s1 + $0x600] sm:$0xff]
  %v222 = vld [vmem:[%s1 + $0x608] sm:$0xff]
  %v223 = vld [vmem:[%s1 + $0x610] sm:$0xff]
  %v224 = vld [vmem:[%s1 + $0x618] sm:$0xff]
  %v225 = vld [vmem:[%s1 + $0x620] sm:$0xff]
  %v226 = vld [vmem:[%s1 + $0x628] sm:$0xff]
  %v227 = vld [vmem:[%s1 + $0x630] sm:$0xff]
  %v228 = vld [vmem:[%s1 + $0x638] sm:$0xff]
  %v229 = vld [vmem:[%s1 + $0x640] sm:$0xff]
  %v230 = vld [vmem:[%s1 + $0x648] sm:$0xff]
  %v231 = vld [vmem:[%s1 + $0x650] sm:$0xff]
  %v232 = vld [vmem:[%s1 + $0x658] sm:$0xff]
  %v233 = vld [vmem:[%s1 + $0x660] sm:$0xff]
  %v234 = vld [vmem:[%s1 + $0x668] sm:$0xff]
  %v235 = vld [vmem:[%s1 + $0x670] sm:$0xff]
  %v236 = vld [vmem:[%s1 + $0x678] sm:$0xff]
  %v237 = vld [vmem:[%s1 + $0x680] sm:$0xff]
  %v238 = vld [vmem:[%s1 + $0x688] sm:$0xff]
  %v239 = vld [vmem:[%s1 + $0x690] sm:$0xff]
  %v240 = vld [vmem:[%s1 + $0x698] sm:$0xff]
  %v241 = vld [vmem:[%s1 + $0x6a0] sm:$0xff]
  %v242 = vld [vmem:[%s1 + $0x6a8] sm:$0xff]
  %v243 = vld [vmem:[%s1 + $0x6b0] sm:$0xff]
  %v244 = vld [vmem:[%s1 + $0x6b8] sm:$0xff]
  %v245 = vld [vmem:[%s1 + $0x6c0] sm:$0xff]
  %v246 = vld [vmem:[%s1 + $0x6c8] sm:$0xff]
  %v247 = vld [vmem:[%s1 + $0x6d0] sm:$0xff]
  %v248 = vld [vmem:[%s1 + $0x6d8] sm:$0xff]
  %v249 = vld [vmem:[%s1 + $0x6e0] sm:$0xff]
  %v250 = vld [vmem:[%s1 + $0x6e8] sm:$0xff]
  %v251 = vld [vmem:[%s1 + $0x6f0] sm:$0xff]
  %v252 = vld [vmem:[%s1 + $0x6f8] sm:$0xff]
  %v253 = vld [vmem:[%s1 + $0x700] sm:$0xff]
  %v254 = vld [vmem:[%s1 + $0x708] sm:$0xff]
  %v255 = vld [vmem:[%s1 + $0x710] sm:$0xff]
  %v256 = vld [vmem:[%s1 + $0x718] sm:$0xff]
  %v257 = vld [vmem:[%s1 + $0x720] sm:$0xff]
  %v258 = vld [vmem:[%s1 + $0x728] sm:$0xff]
  %v259 = vld [vmem:[%s1 + $0x730] sm:$0xff]
  %v260 = vld [vmem:[%s1 + $0x738] sm:$0xff]
  %v261 = vld [vmem:[%s1 + $0x740] sm:$0xff]
  %v262 = vld [vmem:[%s1 + $0x748] sm:$0xff]
  %v263 = vld [vmem:[%s1 + $0x750] sm:$0xff]
  %v264 = vld [vmem:[%s1 + $0x758] sm:$0xff]
  %v265 = vld [vmem:[%s1 + $0x760] sm:$0xff]
  %v266 = vld [vmem:[%s1 + $0x768] sm:$0xff]
  %v267 = vld [vmem:[%s1 + $0x770] sm:$0xff]
  %v268 = vld [vmem:[%s1 + $0x778] sm:$0xff]
  %v269 = vld [vmem:[%s1 + $0x780] sm:$0xff]
  %v270 = vld [vmem:[%s1 + $0x788] sm:$0xff]
  %v271 = vld [vmem:[%s1 + $0x790] sm:$0xff]
  %v272 = vld [vmem:[%s1 + $0x798] sm:$0xff]
  %v273 = vld [vmem:[%s1 + $0x7a0] sm:$0xff]
  %v274 = vld [vmem:[%s1 + $0x7a8] sm:$0xff]
  %v275 = vld [vmem:[%s1 + $0x7b0] sm:$0xff]
  %v276 = vld [vmem:[%s1 + $0x7b8] sm:$0xff]
  %v277 = vld [vmem:[%s1 + $0x7c0] sm:$0xff]
  %v278 = vld [vmem:[%s1 + $0x7c8] sm:$0xff]
  %v279 = vld [vmem:[%s1 + $0x7d0] sm:$0xff]
  %v280 = vld [vmem:[%s1 + $0x7d8] sm:$0xff]
  %v281 = vld [vmem:[%s1 + $0x7e0] sm:$0xff]
  %v282 = vld [vmem:[%s1 + $0x7e8] sm:$0xff]
  %v283 = vld [vmem:[%s1 + $0x7f0] sm:$0xff]
  %v284 = vld [vmem:[%s1 + $0x7f8] sm:$0xff]
  %v285 = vld [vmem:[%s1 + $0x800] sm:$0xff]
  %v286 = vld [vmem:[%s1 + $0x808] sm:$0xff]
  %v287 = vld [vmem:[%s1 + $0x810] sm:$0xff]
  %v288 = vld [vmem:[%s1 + $0x818] sm:$0xff]
  %v289 = vld [vmem:[%s1 + $0x820] sm:$0xff]
  %v290 = vld [vmem:[%s1 + $0x828] sm:$0xff]
  %v291 = vld [vmem:[%s1 + $0x830] sm:$0xff]
  %v292 = vld [vmem:[%s1 + $0x838] sm:$0xff]
  %v293 = vld [vmem:[%s1 + $0x840] sm:$0xff]
  %v294 = vld [vmem:[%s1 + $0x848] sm:$0xff]
  %v295 = vld [vmem:[%s1 + $0x850] sm:$0xff]
  %v296 = vld [vmem:[%s1 + $0x858] sm:$0xff]
  %v297 = vld [vmem:[%s1 + $0x860] sm:$0xff]
  %v298 = vld [vmem:[%s1 + $0x868] sm:$0xff]
  %v299 = vld [vmem:[%s1 + $0x870] sm:$0xff]
  %v300 = vld [vmem:[%s1 + $0x878] sm:$0xff]
  %v301 = vld [vmem:[%s1 + $0x880] sm:$0xff]
  %v302 = vld [vmem:[%s1 + $0x888] sm:$0xff]
  %v303 = vld [vmem:[%s1 + $0x890] sm:$0xff]
  %v304 = vld [vmem:[%s1 + $0x898] sm:$0xff]
  %v305 = vld [vmem:[%s1 + $0x8a0] sm:$0xff]
  %v306 = vld [vmem:[%s1 + $0x8a8] sm:$0xff]
  %v307 = vld [vmem:[%s1 + $0x8b0] sm:$0xff]
  %v308 = vld [vmem:[%s1 + $0x8b8] sm:$0xff]
  %v309 = vld [vmem:[%s1 + $0x8c0] sm:$0xff]
  %v310 = vld [vmem:[%s1 + $0x8c8] sm:$0xff]
  %v311 = vld [vmem:[%s1 + $0x8d0] sm:$0xff]
  %v312 = vld [vmem:[%s1 + $0x8d8] sm:$0xff]
  %v313 = vld [vmem:[%s1 + $0x8e0] sm:$0xff]
  %v314 = vld [vmem:[%s1 + $0x8e8] sm:$0xff]
  %v315 = vld [vmem:[%s1 + $0x8f0] sm:$0xff]
  %v316 = vld [vmem:[%s1 + $0x8f8] sm:$0xff]
  %v317 = vld [vmem:[%s1 + $0x900] sm:$0xff]
  %v318 = vld [vmem:[%s1 + $0x908] sm:$0xff]
  %v319 = vld [vmem:[%s1 + $0x910] sm:$0xff]
  %v320 = vld [vmem:[%s1 + $0x918] sm:$0xff]
  %v321 = vld [vmem:[%s1 + $0x920] sm:$0xff]
  %v322 = vld [vmem:[%s1 + $0x928] sm:$0xff]
  %v323 = vld [vmem:[%s1 + $0x930] sm:$0xff]
  %v324 = vld [vmem:[%s1 + $0x938] sm:$0xff]
  %v325 = vld [vmem:[%s1 + $0x940] sm:$0xff]
  %v326 = vld [vmem:[%s1 + $0x948] sm:$0xff]
  %v327 = vld [vmem:[%s1 + $0x950] sm:$0xff]
  %v328 = vld [vmem:[%s1 + $0x958] sm:$0xff]
  %v329 = vld [vmem:[%s1 + $0x960] sm:$0xff]
  %v330 = vld [vmem:[%s1 + $0x968] sm:$0xff]
  %v331 = vld [vmem:[%s1 + $0x970] sm:$0xff]
  %v332 = vld [vmem:[%s1 + $0x978] sm:$0xff]
  %v333 = vld [vmem:[%s1 + $0x980] sm:$0xff]
  %v334 = vld [vmem:[%s1 + $0x988] sm:$0xff]
  %v335 = vld [vmem:[%s1 + $0x990] sm:$0xff]
  %v336 = vld [vmem:[%s1 + $0x998] sm:$0xff]
  %v337 = vld [vmem:[%s1 + $0x9a0] sm:$0xff]
  %v338 = vld [vmem:[%s1 + $0x9a8] sm:$0xff]
  %v339 = vld [vmem:[%s1 + $0x9b0] sm:$0xff]
  %v340 = vld [vmem:[%s1 + $0x9b8] sm:$0xff]
  %v341 = vld [vmem:[%s1 + $0x9c0] sm:$0xff]
  %v342 = vld [vmem:[%s1 + $0x9c8] sm:$0xff]
  %v343 = vld [vmem:[%s1 + $0x9d0] sm:$0xff]
  %v344 = vld [vmem:[%s1 + $0x9d8] sm:$0xff]
  %v345 = vld [vmem:[%s1 + $0x9e0] sm:$0xff]
  %v346 = vld [vmem:[%s1 + $0x9e8] sm:$0xff]
  %v347 = vld [vmem:[%s1 + $0x9f0] sm:$0xff]
  %v348 = vld [vmem:[%s1 + $0x9f8] sm:$0xff]
  %v349 = vld [vmem:[%s1 + $0xa00] sm:$0xff]
  %v350 = vld [vmem:[%s1 + $0xa08] sm:$0xff]
  %v351 = vld [vmem:[%s1 + $0xa10] sm:$0xff]
  %v352 = vld [vmem:[%s1 + $0xa18] sm:$0xff]
  %v353 = vld [vmem:[%s1 + $0xa20] sm:$0xff]
  %v354 = vld [vmem:[%s1 + $0xa28] sm:$0xff]
  %v355 = vld [vmem:[%s1 + $0xa30] sm:$0xff]
  %v356 = vld [vmem:[%s1 + $0xa38] sm:$0xff]
  %v357 = vld [vmem:[%s1 + $0xa40] sm:$0xff]
  %v358 = vld [vmem:[%s1 + $0xa48] sm:$0xff]
  %v359 = vld [vmem:[%s1 + $0xa50] sm:$0xff]
  %v360 = vld [vmem:[%s1 + $0xa58] sm:$0xff]
  %v361 = vld [vmem:[%s1 + $0xa60] sm:$0xff]
  %v362 = vld [vmem:[%s1 + $0xa68] sm:$0xff]
  %v363 = vld [vmem:[%s1 + $0xa70] sm:$0xff]
  %v364 = vld [vmem:[%s1 + $0xa78] sm:$0xff]
  %v365 = vld [vmem:[%s1 + $0xa80] sm:$0xff]
  %v366 = vld [vmem:[%s1 + $0xa88] sm:$0xff]
  %v367 = vld [vmem:[%s1 + $0xa90] sm:$0xff]
  %v368 = vld [vmem:[%s1 + $0xa98] sm:$0xff]
  %v369 = vld [vmem:[%s1 + $0xaa0] sm:$0xff]
  %v370 = vld [vmem:[%s1 + $0xaa8] sm:$0xff]
  %v371 = vld [vmem:[%s1 + $0xab0] sm:$0xff]
  %v372 = vld [vmem:[%s1 + $0xab8] sm:$0xff]
  %v373 = vld [vmem:[%s1 + $0xac0] sm:$0xff]
  %v374 = vld [vmem:[%s1 + $0xac8] sm:$0xff]
  %v375 = vld [vmem:[%s1 + $0xad0] sm:$0xff]
  %v376 = vld [vmem:[%s1 + $0xad8] sm:$0xff]
  %v377 = vld [vmem:[%s1 + $0xae0] sm:$0xff]
  %v378 = vld [vmem:[%s1 + $0xae8] sm:$0xff]
  %v379 = vld [vmem:[%s1 + $0xaf0] sm:$0xff]
  %v380 = vld [vmem:[%s1 + $0xaf8] sm:$0xff]
  %v381 = vld [vmem:[%s1 + $0xb00] sm:$0xff]
  %v382 = vld [vmem:[%s1 + $0xb08] sm:$0xff]
  %v383 = vld [vmem:[%s1 + $0xb10] sm:$0xff]
  %v384 = vld [vmem:[%s1 + $0xb18] sm:$0xff]
  %v385 = vld [vmem:[%s1 + $0xb20] sm:$0xff]
  %v386 = vld [vmem:[%s1 + $0xb28] sm:$0xff]
  %v387 = vld [vmem:[%s1 + $0xb30] sm:$0xff]
  %v388 = vld [vmem:[%s1 + $0xb38] sm:$0xff]
  %v389 = vld [vmem:[%s1 + $0xb40] sm:$0xff]
  %v390 = vld [vmem:[%s1 + $0xb48] sm:$0xff]
  %v391 = vld [vmem:[%s1 + $0xb50] sm:$0xff]
  %v392 = vld [vmem:[%s1 + $0xb58] sm:$0xff]
  %v393 = vld [vmem:[%s1 + $0xb60] sm:$0xff]
  %v394 = vld [vmem:[%s1 + $0xb68] sm:$0xff]
  %v395 = vld [vmem:[%s1 + $0xb70] sm:$0xff]
  %v396 = vld [vmem:[%s1 + $0xb78] sm:$0xff]
  %v397 = vld [vmem:[%s1 + $0xb80] sm:$0xff]
  %v398 = vld [vmem:[%s1 + $0xb88] sm:$0xff]
  %v399 = vld [vmem:[%s1 + $0xb90] sm:$0xff]
  %v400 = vld [vmem:[%s1 + $0xb98] sm:$0xff]
  %v401 = vld [vmem:[%s1 + $0xba0] sm:$0xff]
  %v402 = vld [vmem:[%s1 + $0xba8] sm:$0xff]
  %v403 = vld [vmem:[%s1 + $0xbb0] sm:$0xff]
  %v404 = vld [vmem:[%s1 + $0xbb8] sm:$0xff]
  %v405 = vld [vmem:[%s1 + $0xbc0] sm:$0xff]
  %v406 = vld [vmem:[%s1 + $0xbc8] sm:$0xff]
  %v407 = vld [vmem:[%s1 + $0xbd0] sm:$0xff]
  %v408 = vld [vmem:[%s1 + $0xbd8] sm:$0xff]
  %v409 = vld [vmem:[%s1 + $0xbe0] sm:$0xff]
  %v410 = vld [vmem:[%s1 + $0xbe8] sm:$0xff]
  %v411 = vld [vmem:[%s1 + $0xbf0] sm:$0xff]
  %v412 = vld [vmem:[%s1 + $0xbf8] sm:$0xff]
  %v413 = vld [vmem:[%s1 + $0xc00] sm:$0xff]
  %v414 = vld [vmem:[%s1 + $0xc08] sm:$0xff]
  %v415 = vld [vmem:[%s1 + $0xc10] sm:$0xff]
  %v416 = vld [vmem:[%s1 + $0xc18] sm:$0xff]
  %v417 = vld [vmem:[%s1 + $0xc20] sm:$0xff]
  %v418 = vld [vmem:[%s1 + $0xc28] sm:$0xff]
  %v419 = vld [vmem:[%s1 + $0xc30] sm:$0xff]
  %v420 = vld [vmem:[%s1 + $0xc38] sm:$0xff]
  %v421 = vld [vmem:[%s1 + $0xc40] sm:$0xff]
  %v422 = vld [vmem:[%s1 + $0xc48] sm:$0xff]
  %v423 = vld [vmem:[%s1 + $0xc50] sm:$0xff]
  %v424 = vld [vmem:[%s1 + $0xc58] sm:$0xff]
  %v425 = vld [vmem:[%s1 + $0xc60] sm:$0xff]
  %v426 = vld [vmem:[%s1 + $0xc68] sm:$0xff]
  %v427 = vld [vmem:[%s1 + $0xc70] sm:$0xff]
  %v428 = vld [vmem:[%s1 + $0xc78] sm:$0xff]
  %v429 = vld [vmem:[%s1 + $0xc80] sm:$0xff]
  %v430 = vld [vmem:[%s1 + $0xc88] sm:$0xff]
  %v431 = vld [vmem:[%s1 + $0xc90] sm:$0xff]
  %v432 = vld [vmem:[%s1 + $0xc98] sm:$0xff]
  %v433 = vld [vmem:[%s1 + $0xca0] sm:$0xff]
  %v434 = vld [vmem:[%s1 + $0xca8] sm:$0xff]
  %v435 = vld [vmem:[%s1 + $0xcb0] sm:$0xff]
  %v436 = vld [vmem:[%s1 + $0xcb8] sm:$0xff]
  %v437 = vld [vmem:[%s1 + $0xcc0] sm:$0xff]
  %v438 = vld [vmem:[%s1 + $0xcc8] sm:$0xff]
  %v439 = vld [vmem:[%s1 + $0xcd0] sm:$0xff]
  %v440 = vld [vmem:[%s1 + $0xcd8] sm:$0xff]
  %v441 = vld [vmem:[%s1 + $0xce0] sm:$0xff]
  %v442 = vld [vmem:[%s1 + $0xce8] sm:$0xff]
  %v443 = vld [vmem:[%s1 + $0xcf0] sm:$0xff]
  %v444 = vld [vmem:[%s1 + $0xcf8] sm:$0xff]
  %v445 = vld [vmem:[%s1 + $0xd00] sm:$0xff]
  %v446 = vld [vmem:[%s1 + $0xd08] sm:$0xff]
  %v447 = vld [vmem:[%s1 + $0xd10] sm:$0xff]
  %v448 = vld [vmem:[%s1 + $0xd18] sm:$0xff]
  %v449 = vld [vmem:[%s1 + $0xd20] sm:$0xff]
  %v450 = vld [vmem:[%s1 + $0xd28] sm:$0xff]
  %v451 = vld [vmem:[%s1 + $0xd30] sm:$0xff]
  %v452 = vld [vmem:[%s1 + $0xd38] sm:$0xff]
  %v453 = vld [vmem:[%s1 + $0xd40] sm:$0xff]
  %v454 = vld [vmem:[%s1 + $0xd48] sm:$0xff]
  %v455 = vld [vmem:[%s1 + $0xd50] sm:$0xff]
  %v456 = vld [vmem:[%s1 + $0xd58] sm:$0xff]
  %v457 = vld [vmem:[%s1 + $0xd60] sm:$0xff]
  %v458 = vld [vmem:[%s1 + $0xd68] sm:$0xff]
  %v459 = vld [vmem:[%s1 + $0xd70] sm:$0xff]
  %v460 = vld [vmem:[%s1 + $0xd78] sm:$0xff]
  %v461 = vld [vmem:[%s1 + $0xd80] sm:$0xff]
  %v462 = vld [vmem:[%s1 + $0xd88] sm:$0xff]
  %v463 = vld [vmem:[%s1 + $0xd90] sm:$0xff]
  %v464 = vld [vmem:[%s1 + $0xd98] sm:$0xff]
  %v465 = vld [vmem:[%s1 + $0xda0] sm:$0xff]
  %v466 = vld [vmem:[%s1 + $0xda8] sm:$0xff]
  %v467 = vld [vmem:[%s1 + $0xdb0] sm:$0xff]
  %v468 = vld [vmem:[%s1 + $0xdb8] sm:$0xff]
  %v469 = vld [vmem:[%s1 + $0xdc0] sm:$0xff]
  %v470 = vld [vmem:[%s1 + $0xdc8] sm:$0xff]
  %v471 = vld [vmem:[%s1 + $0xdd0] sm:$0xff]
  %v472 = vld [vmem:[%s1 + $0xdd8] sm:$0xff]
  %v473 = vld [vmem:[%s1 + $0xde0] sm:$0xff]
  %v474 = vld [vmem:[%s1 + $0xde8] sm:$0xff]
  %v475 = vld [vmem:[%s1 + $0xdf0] sm:$0xff]
  %v476 = vld [vmem:[%s1 + $0xdf8] sm:$0xff]
  %v477 = vld [vmem:[%s1 + $0xe00] sm:$0xff]
  %v478 = vld [vmem:[%s1 + $0xe08] sm:$0xff]
  %v479 = vld [vmem:[%s1 + $0xe10] sm:$0xff]
  %v480 = vld [vmem:[%s1 + $0xe18] sm:$0xff]
  %v481 = vld [vmem:[%s1 + $0xe20] sm:$0xff]
  %v482 = vld [vmem:[%s1 + $0xe28] sm:$0xff]
  %v483 = vld [vmem:[%s1 + $0xe30] sm:$0xff]
  %v484 = vld [vmem:[%s1 + $0xe38] sm:$0xff]
  %v485 = vld [vmem:[%s1 + $0xe40] sm:$0xff]
  %v486 = vld [vmem:[%s1 + $0xe48] sm:$0xff]
  %v487 = vld [vmem:[%s1 + $0xe50] sm:$0xff]
  %v488 = vld [vmem:[%s1 + $0xe58] sm:$0xff]
  %v489 = vld [vmem:[%s1 + $0xe60] sm:$0xff]
  %v490 = vld [vmem:[%s1 + $0xe68] sm:$0xff]
  %v491 = vld [vmem:[%s1 + $0xe70] sm:$0xff]
  %v492 = vld [vmem:[%s1 + $0xe78] sm:$0xff]
  %v493 = vld [vmem:[%s1 + $0xe80] sm:$0xff]
  %v494 = vld [vmem:[%s1 + $0xe88] sm:$0xff]
  %v495 = vld [vmem:[%s1 + $0xe90] sm:$0xff]
  %v496 = vld [vmem:[%s1 + $0xe98] sm:$0xff]
  %v497 = vld [vmem:[%s1 + $0xea0] sm:$0xff]
  %v498 = vld [vmem:[%s1 + $0xea8] sm:$0xff]
  %v499 = vld [vmem:[%s1 + $0xeb0] sm:$0xff]
  %v500 = vld [vmem:[%s1 + $0xeb8] sm:$0xff]
  %v501 = vld [vmem:[%s1 + $0xec0] sm:$0xff]
  %v502 = vld [vmem:[%s1 + $0xec8] sm:$0xff]
  %v503 = vld [vmem:[%s1 + $0xed0] sm:$0xff]
  %v504 = vld [vmem:[%s1 + $0xed8] sm:$0xff]
  %v505 = vld [vmem:[%s1 + $0xee0] sm:$0xff]
  %v506 = vld [vmem:[%s1 + $0xee8] sm:$0xff]
  %v507 = vld [vmem:[%s1 + $0xef0] sm:$0xff]
  %v508 = vld [vmem:[%s1 + $0xef8] sm:$0xff]
  %v509 = vld [vmem:[%s1 + $0xf00] sm:$0xff]
  %v510 = vld [vmem:[%s1 + $0xf08] sm:$0xff]
  %v511 = vld [vmem:[%s1 + $0xf10] sm:$0xff]
  %v512 = vld [vmem:[%s1 + $0xf18] sm:$0xff]
  %v513 = vld [vmem:[%s1 + $0xf20] sm:$0xff]
  %v514 = vld [vmem:[%s1 + $0xf28] sm:$0xff]
  %v515 = vld [vmem:[%s1 + $0xf30] sm:$0xff]
  %v516 = vld [vmem:[%s1 + $0xf38] sm:$0xff]
  %v517 = vld [vmem:[%s1 + $0xf40] sm:$0xff]
  %v518 = vld [vmem:[%s1 + $0xf48] sm:$0xff]
  %v519 = vld [vmem:[%s1 + $0xf50] sm:$0xff]
  %v520 = vld [vmem:[%s1 + $0xf58] sm:$0xff]
  %v521 = vld [vmem:[%s1 + $0xf60] sm:$0xff]
  %v522 = vld [vmem:[%s1 + $0xf68] sm:$0xff]
  %v523 = vld [vmem:[%s1 + $0xf70] sm:$0xff]
  %v524 = vld [vmem:[%s1 + $0xf78] sm:$0xff]
  %v525 = vld [vmem:[%s1 + $0xf80] sm:$0xff]
  %v526 = vld [vmem:[%s1 + $0xf88] sm:$0xff]
  %v527 = vld [vmem:[%s1 + $0xf90] sm:$0xff]
  %v528 = vld [vmem:[%s1 + $0xf98] sm:$0xff]
  %v529 = vld [vmem:[%s1 + $0xfa0] sm:$0xff]
  %v530 = vld [vmem:[%s1 + $0xfa8] sm:$0xff]
  %v531 = vld [vmem:[%s1 + $0xfb0] sm:$0xff]
  %v532 = vld [vmem:[%s1 + $0xfb8] sm:$0xff]
  %v533 = vld [vmem:[%s1 + $0xfc0] sm:$0xff]
  %v534 = vld [vmem:[%s1 + $0xfc8] sm:$0xff]
  %v535 = vld [vmem:[%s1 + $0xfd0] sm:$0xff]
  %v536 = vld [vmem:[%s1 + $0xfd8] sm:$0xff]
  %v537 = vld [vmem:[%s1 + $0xfe0] sm:$0xff]
  %v538 = vld [vmem:[%s1 + $0xfe8] sm:$0xff]
  %v539 = vld [vmem:[%s1 + $0xff0] sm:$0xff]
  %v540 = vld [vmem:[%s1 + $0xff8] sm:$0xff]
  %v1053 = vunpack.c.l.b16 %v29
  %v1054 = vunpack.c.h.b16 %v29
  %v1055 = vunpack.c.l.b16 %v30
  %v1056 = vunpack.c.h.b16 %v30
  %v1057 = vunpack.c.l.b16 %v31
  %v1058 = vunpack.c.h.b16 %v31
  %v1059 = vunpack.c.l.b16 %v32
  %v1060 = vunpack.c.h.b16 %v32
  %v1061 = vunpack.c.l.b16 %v33
  %v1062 = vunpack.c.h.b16 %v33
  %v1063 = vunpack.c.l.b16 %v34
  %v1064 = vunpack.c.h.b16 %v34
  %v1065 = vunpack.c.l.b16 %v35
  %v1066 = vunpack.c.h.b16 %v35
  %v1067 = vunpack.c.l.b16 %v36
  %v1068 = vunpack.c.h.b16 %v36
  %v1069 = vunpack.c.l.b16 %v37
  %v1070 = vunpack.c.h.b16 %v37
  %v1071 = vunpack.c.l.b16 %v38
  %v1072 = vunpack.c.h.b16 %v38
  %v1073 = vunpack.c.l.b16 %v39
  %v1074 = vunpack.c.h.b16 %v39
  %v1075 = vunpack.c.l.b16 %v40
  %v1076 = vunpack.c.h.b16 %v40
  %v1077 = vunpack.c.l.b16 %v41
  %v1078 = vunpack.c.h.b16 %v41
  %v1079 = vunpack.c.l.b16 %v42
  %v1080 = vunpack.c.h.b16 %v42
  %v1081 = vunpack.c.l.b16 %v43
  %v1082 = vunpack.c.h.b16 %v43
  %v1083 = vunpack.c.l.b16 %v44
  %v1084 = vunpack.c.h.b16 %v44
  %v1085 = vunpack.c.l.b16 %v45
  %v1086 = vunpack.c.h.b16 %v45
  %v1087 = vunpack.c.l.b16 %v46
  %v1088 = vunpack.c.h.b16 %v46
  %v1089 = vunpack.c.l.b16 %v47
  %v1090 = vunpack.c.h.b16 %v47
  %v1091 = vunpack.c.l.b16 %v48
  %v1092 = vunpack.c.h.b16 %v48
  %v1093 = vunpack.c.l.b16 %v49
  %v1094 = vunpack.c.h.b16 %v49
  %v1095 = vunpack.c.l.b16 %v50
  %v1096 = vunpack.c.h.b16 %v50
  %v1097 = vunpack.c.l.b16 %v51
  %v1098 = vunpack.c.h.b16 %v51
  %v1099 = vunpack.c.l.b16 %v52
  %v1100 = vunpack.c.h.b16 %v52
  %v1101 = vunpack.c.l.b16 %v53
  %v1102 = vunpack.c.h.b16 %v53
  %v1103 = vunpack.c.l.b16 %v54
  %v1104 = vunpack.c.h.b16 %v54
  %v1105 = vunpack.c.l.b16 %v55
  %v1106 = vunpack.c.h.b16 %v55
  %v1107 = vunpack.c.l.b16 %v56
  %v1108 = vunpack.c.h.b16 %v56
  %v1109 = vunpack.c.l.b16 %v57
  %v1110 = vunpack.c.h.b16 %v57
  %v1111 = vunpack.c.l.b16 %v58
  %v1112 = vunpack.c.h.b16 %v58
  %v1113 = vunpack.c.l.b16 %v59
  %v1114 = vunpack.c.h.b16 %v59
  %v1115 = vunpack.c.l.b16 %v60
  %v1116 = vunpack.c.h.b16 %v60
  %v1117 = vunpack.c.l.b16 %v61
  %v1118 = vunpack.c.h.b16 %v61
  %v1119 = vunpack.c.l.b16 %v62
  %v1120 = vunpack.c.h.b16 %v62
  %v1121 = vunpack.c.l.b16 %v63
  %v1122 = vunpack.c.h.b16 %v63
  %v1123 = vunpack.c.l.b16 %v64
  %v1124 = vunpack.c.h.b16 %v64
  %v1125 = vunpack.c.l.b16 %v65
  %v1126 = vunpack.c.h.b16 %v65
  %v1127 = vunpack.c.l.b16 %v66
  %v1128 = vunpack.c.h.b16 %v66
  %v1129 = vunpack.c.l.b16 %v67
  %v1130 = vunpack.c.h.b16 %v67
  %v1131 = vunpack.c.l.b16 %v68
  %v1132 = vunpack.c.h.b16 %v68
  %v1133 = vunpack.c.l.b16 %v69
  %v1134 = vunpack.c.h.b16 %v69
  %v1135 = vunpack.c.l.b16 %v70
  %v1136 = vunpack.c.h.b16 %v70
  %v1137 = vunpack.c.l.b16 %v71
  %v1138 = vunpack.c.h.b16 %v71
  %v1139 = vunpack.c.l.b16 %v72
  %v1140 = vunpack.c.h.b16 %v72
  %v1141 = vunpack.c.l.b16 %v73
  %v1142 = vunpack.c.h.b16 %v73
  %v1143 = vunpack.c.l.b16 %v74
  %v1144 = vunpack.c.h.b16 %v74
  %v1145 = vunpack.c.l.b16 %v75
  %v1146 = vunpack.c.h.b16 %v75
  %v1147 = vunpack.c.l.b16 %v76
  %v1148 = vunpack.c.h.b16 %v76
  %v1149 = vunpack.c.l.b16 %v77
  %v1150 = vunpack.c.h.b16 %v77
  %v1151 = vunpack.c.l.b16 %v78
  %v1152 = vunpack.c.h.b16 %v78
  %v1153 = vunpack.c.l.b16 %v79
  %v1154 = vunpack.c.h.b16 %v79
  %v1155 = vunpack.c.l.b16 %v80
  %v1156 = vunpack.c.h.b16 %v80
  %v1157 = vunpack.c.l.b16 %v81
  %v1158 = vunpack.c.h.b16 %v81
  %v1159 = vunpack.c.l.b16 %v82
  %v1160 = vunpack.c.h.b16 %v82
  %v1161 = vunpack.c.l.b16 %v83
  %v1162 = vunpack.c.h.b16 %v83
  %v1163 = vunpack.c.l.b16 %v84
  %v1164 = vunpack.c.h.b16 %v84
  %v1165 = vunpack.c.l.b16 %v85
  %v1166 = vunpack.c.h.b16 %v85
  %v1167 = vunpack.c.l.b16 %v86
  %v1168 = vunpack.c.h.b16 %v86
  %v1169 = vunpack.c.l.b16 %v87
  %v1170 = vunpack.c.h.b16 %v87
  %v1171 = vunpack.c.l.b16 %v88
  %v1172 = vunpack.c.h.b16 %v88
  %v1173 = vunpack.c.l.b16 %v89
  %v1174 = vunpack.c.h.b16 %v89
  %v1175 = vunpack.c.l.b16 %v90
  %v1176 = vunpack.c.h.b16 %v90
  %v1177 = vunpack.c.l.b16 %v91
  %v1178 = vunpack.c.h.b16 %v91
  %v1179 = vunpack.c.l.b16 %v92
  %v1180 = vunpack.c.h.b16 %v92
  %v1181 = vunpack.c.l.b16 %v93
  %v1182 = vunpack.c.h.b16 %v93
  %v1183 = vunpack.c.l.b16 %v94
  %v1184 = vunpack.c.h.b16 %v94
  %v1185 = vunpack.c.l.b16 %v95
  %v1186 = vunpack.c.h.b16 %v95
  %v1187 = vunpack.c.l.b16 %v96
  %v1188 = vunpack.c.h.b16 %v96
  %v1189 = vunpack.c.l.b16 %v97
  %v1190 = vunpack.c.h.b16 %v97
  %v1191 = vunpack.c.l.b16 %v98
  %v1192 = vunpack.c.h.b16 %v98
  %v1193 = vunpack.c.l.b16 %v99
  %v1194 = vunpack.c.h.b16 %v99
  %v1195 = vunpack.c.l.b16 %v100
  %v1196 = vunpack.c.h.b16 %v100
  %v1197 = vunpack.c.l.b16 %v101
  %v1198 = vunpack.c.h.b16 %v101
  %v1199 = vunpack.c.l.b16 %v102
  %v1200 = vunpack.c.h.b16 %v102
  %v1201 = vunpack.c.l.b16 %v103
  %v1202 = vunpack.c.h.b16 %v103
  %v1203 = vunpack.c.l.b16 %v104
  %v1204 = vunpack.c.h.b16 %v104
  %v1205 = vunpack.c.l.b16 %v105
  %v1206 = vunpack.c.h.b16 %v105
  %v1207 = vunpack.c.l.b16 %v106
  %v1208 = vunpack.c.h.b16 %v106
  %v1209 = vunpack.c.l.b16 %v107
  %v1210 = vunpack.c.h.b16 %v107
  %v1211 = vunpack.c.l.b16 %v108
  %v1212 = vunpack.c.h.b16 %v108
  %v1213 = vunpack.c.l.b16 %v109
  %v1214 = vunpack.c.h.b16 %v109
  %v1215 = vunpack.c.l.b16 %v110
  %v1216 = vunpack.c.h.b16 %v110
  %v1217 = vunpack.c.l.b16 %v111
  %v1218 = vunpack.c.h.b16 %v111
  %v1219 = vunpack.c.l.b16 %v112
  %v1220 = vunpack.c.h.b16 %v112
  %v1221 = vunpack.c.l.b16 %v113
  %v1222 = vunpack.c.h.b16 %v113
  %v1223 = vunpack.c.l.b16 %v114
  %v1224 = vunpack.c.h.b16 %v114
  %v1225 = vunpack.c.l.b16 %v115
  %v1226 = vunpack.c.h.b16 %v115
  %v1227 = vunpack.c.l.b16 %v116
  %v1228 = vunpack.c.h.b16 %v116
  %v1229 = vunpack.c.l.b16 %v117
  %v1230 = vunpack.c.h.b16 %v117
  %v1231 = vunpack.c.l.b16 %v118
  %v1232 = vunpack.c.h.b16 %v118
  %v1233 = vunpack.c.l.b16 %v119
  %v1234 = vunpack.c.h.b16 %v119
  %v1235 = vunpack.c.l.b16 %v120
  %v1236 = vunpack.c.h.b16 %v120
  %v1237 = vunpack.c.l.b16 %v121
  %v1238 = vunpack.c.h.b16 %v121
  %v1239 = vunpack.c.l.b16 %v122
  %v1240 = vunpack.c.h.b16 %v122
  %v1241 = vunpack.c.l.b16 %v123
  %v1242 = vunpack.c.h.b16 %v123
  %v1243 = vunpack.c.l.b16 %v124
  %v1244 = vunpack.c.h.b16 %v124
  %v1245 = vunpack.c.l.b16 %v125
  %v1246 = vunpack.c.h.b16 %v125
  %v1247 = vunpack.c.l.b16 %v126
  %v1248 = vunpack.c.h.b16 %v126
  %v1249 = vunpack.c.l.b16 %v127
  %v1250 = vunpack.c.h.b16 %v127
  %v1251 = vunpack.c.l.b16 %v128
  %v1252 = vunpack.c.h.b16 %v128
  %v1253 = vunpack.c.l.b16 %v129
  %v1254 = vunpack.c.h.b16 %v129
  %v1255 = vunpack.c.l.b16 %v130
  %v1256 = vunpack.c.h.b16 %v130
  %v1257 = vunpack.c.l.b16 %v131
  %v1258 = vunpack.c.h.b16 %v131
  %v1259 = vunpack.c.l.b16 %v132
  %v1260 = vunpack.c.h.b16 %v132
  %v1261 = vunpack.c.l.b16 %v133
  %v1262 = vunpack.c.h.b16 %v133
  %v1263 = vunpack.c.l.b16 %v134
  %v1264 = vunpack.c.h.b16 %v134
  %v1265 = vunpack.c.l.b16 %v135
  %v1266 = vunpack.c.h.b16 %v135
  %v1267 = vunpack.c.l.b16 %v136
  %v1268 = vunpack.c.h.b16 %v136
  %v1269 = vunpack.c.l.b16 %v137
  %v1270 = vunpack.c.h.b16 %v137
  %v1271 = vunpack.c.l.b16 %v138
  %v1272 = vunpack.c.h.b16 %v138
  %v1273 = vunpack.c.l.b16 %v139
  %v1274 = vunpack.c.h.b16 %v139
  %v1275 = vunpack.c.l.b16 %v140
  %v1276 = vunpack.c.h.b16 %v140
  %v1277 = vunpack.c.l.b16 %v141
  %v1278 = vunpack.c.h.b16 %v141
  %v1279 = vunpack.c.l.b16 %v142
  %v1280 = vunpack.c.h.b16 %v142
  %v1281 = vunpack.c.l.b16 %v143
  %v1282 = vunpack.c.h.b16 %v143
  %v1283 = vunpack.c.l.b16 %v144
  %v1284 = vunpack.c.h.b16 %v144
  %v1285 = vunpack.c.l.b16 %v145
  %v1286 = vunpack.c.h.b16 %v145
  %v1287 = vunpack.c.l.b16 %v146
  %v1288 = vunpack.c.h.b16 %v146
  %v1289 = vunpack.c.l.b16 %v147
  %v1290 = vunpack.c.h.b16 %v147
  %v1291 = vunpack.c.l.b16 %v148
  %v1292 = vunpack.c.h.b16 %v148
  %v1293 = vunpack.c.l.b16 %v149
  %v1294 = vunpack.c.h.b16 %v149
  %v1295 = vunpack.c.l.b16 %v150
  %v1296 = vunpack.c.h.b16 %v150
  %v1297 = vunpack.c.l.b16 %v151
  %v1298 = vunpack.c.h.b16 %v151
  %v1299 = vunpack.c.l.b16 %v152
  %v1300 = vunpack.c.h.b16 %v152
  %v1301 = vunpack.c.l.b16 %v153
  %v1302 = vunpack.c.h.b16 %v153
  %v1303 = vunpack.c.l.b16 %v154
  %v1304 = vunpack.c.h.b16 %v154
  %v1305 = vunpack.c.l.b16 %v155
  %v1306 = vunpack.c.h.b16 %v155
  %v1307 = vunpack.c.l.b16 %v156
  %v1308 = vunpack.c.h.b16 %v156
  %v1309 = vunpack.c.l.b16 %v157
  %v1310 = vunpack.c.h.b16 %v157
  %v1311 = vunpack.c.l.b16 %v158
  %v1312 = vunpack.c.h.b16 %v158
  %v1313 = vunpack.c.l.b16 %v159
  %v1314 = vunpack.c.h.b16 %v159
  %v1315 = vunpack.c.l.b16 %v160
  %v1316 = vunpack.c.h.b16 %v160
  %v1317 = vunpack.c.l.b16 %v161
  %v1318 = vunpack.c.h.b16 %v161
  %v1319 = vunpack.c.l.b16 %v162
  %v1320 = vunpack.c.h.b16 %v162
  %v1321 = vunpack.c.l.b16 %v163
  %v1322 = vunpack.c.h.b16 %v163
  %v1323 = vunpack.c.l.b16 %v164
  %v1324 = vunpack.c.h.b16 %v164
  %v1325 = vunpack.c.l.b16 %v165
  %v1326 = vunpack.c.h.b16 %v165
  %v1327 = vunpack.c.l.b16 %v166
  %v1328 = vunpack.c.h.b16 %v166
  %v1329 = vunpack.c.l.b16 %v167
  %v1330 = vunpack.c.h.b16 %v167
  %v1331 = vunpack.c.l.b16 %v168
  %v1332 = vunpack.c.h.b16 %v168
  %v1333 = vunpack.c.l.b16 %v169
  %v1334 = vunpack.c.h.b16 %v169
  %v1335 = vunpack.c.l.b16 %v170
  %v1336 = vunpack.c.h.b16 %v170
  %v1337 = vunpack.c.l.b16 %v171
  %v1338 = vunpack.c.h.b16 %v171
  %v1339 = vunpack.c.l.b16 %v172
  %v1340 = vunpack.c.h.b16 %v172
  %v1341 = vunpack.c.l.b16 %v173
  %v1342 = vunpack.c.h.b16 %v173
  %v1343 = vunpack.c.l.b16 %v174
  %v1344 = vunpack.c.h.b16 %v174
  %v1345 = vunpack.c.l.b16 %v175
  %v1346 = vunpack.c.h.b16 %v175
  %v1347 = vunpack.c.l.b16 %v176
  %v1348 = vunpack.c.h.b16 %v176
  %v1349 = vunpack.c.l.b16 %v177
  %v1350 = vunpack.c.h.b16 %v177
  %v1351 = vunpack.c.l.b16 %v178
  %v1352 = vunpack.c.h.b16 %v178
  %v1353 = vunpack.c.l.b16 %v179
  %v1354 = vunpack.c.h.b16 %v179
  %v1355 = vunpack.c.l.b16 %v180
  %v1356 = vunpack.c.h.b16 %v180
  %v1357 = vunpack.c.l.b16 %v181
  %v1358 = vunpack.c.h.b16 %v181
  %v1359 = vunpack.c.l.b16 %v182
  %v1360 = vunpack.c.h.b16 %v182
  %v1361 = vunpack.c.l.b16 %v183
  %v1362 = vunpack.c.h.b16 %v183
  %v1363 = vunpack.c.l.b16 %v184
  %v1364 = vunpack.c.h.b16 %v184
  %v1365 = vunpack.c.l.b16 %v185
  %v1366 = vunpack.c.h.b16 %v185
  %v1367 = vunpack.c.l.b16 %v186
  %v1368 = vunpack.c.h.b16 %v186
  %v1369 = vunpack.c.l.b16 %v187
  %v1370 = vunpack.c.h.b16 %v187
  %v1371 = vunpack.c.l.b16 %v188
  %v1372 = vunpack.c.h.b16 %v188
  %v1373 = vunpack.c.l.b16 %v189
  %v1374 = vunpack.c.h.b16 %v189
  %v1375 = vunpack.c.l.b16 %v190
  %v1376 = vunpack.c.h.b16 %v190
  %v1377 = vunpack.c.l.b16 %v191
  %v1378 = vunpack.c.h.b16 %v191
  %v1379 = vunpack.c.l.b16 %v192
  %v1380 = vunpack.c.h.b16 %v192
  %v1381 = vunpack.c.l.b16 %v193
  %v1382 = vunpack.c.h.b16 %v193
  %v1383 = vunpack.c.l.b16 %v194
  %v1384 = vunpack.c.h.b16 %v194
  %v1385 = vunpack.c.l.b16 %v195
  %v1386 = vunpack.c.h.b16 %v195
  %v1387 = vunpack.c.l.b16 %v196
  %v1388 = vunpack.c.h.b16 %v196
  %v1389 = vunpack.c.l.b16 %v197
  %v1390 = vunpack.c.h.b16 %v197
  %v1391 = vunpack.c.l.b16 %v198
  %v1392 = vunpack.c.h.b16 %v198
  %v1393 = vunpack.c.l.b16 %v199
  %v1394 = vunpack.c.h.b16 %v199
  %v1395 = vunpack.c.l.b16 %v200
  %v1396 = vunpack.c.h.b16 %v200
  %v1397 = vunpack.c.l.b16 %v201
  %v1398 = vunpack.c.h.b16 %v201
  %v1399 = vunpack.c.l.b16 %v202
  %v1400 = vunpack.c.h.b16 %v202
  %v1401 = vunpack.c.l.b16 %v203
  %v1402 = vunpack.c.h.b16 %v203
  %v1403 = vunpack.c.l.b16 %v204
  %v1404 = vunpack.c.h.b16 %v204
  %v1405 = vunpack.c.l.b16 %v205
  %v1406 = vunpack.c.h.b16 %v205
  %v1407 = vunpack.c.l.b16 %v206
  %v1408 = vunpack.c.h.b16 %v206
  %v1409 = vunpack.c.l.b16 %v207
  %v1410 = vunpack.c.h.b16 %v207
  %v1411 = vunpack.c.l.b16 %v208
  %v1412 = vunpack.c.h.b16 %v208
  %v1413 = vunpack.c.l.b16 %v209
  %v1414 = vunpack.c.h.b16 %v209
  %v1415 = vunpack.c.l.b16 %v210
  %v1416 = vunpack.c.h.b16 %v210
  %v1417 = vunpack.c.l.b16 %v211
  %v1418 = vunpack.c.h.b16 %v211
  %v1419 = vunpack.c.l.b16 %v212
  %v1420 = vunpack.c.h.b16 %v212
  %v1421 = vunpack.c.l.b16 %v213
  %v1422 = vunpack.c.h.b16 %v213
  %v1423 = vunpack.c.l.b16 %v214
  %v1424 = vunpack.c.h.b16 %v214
  %v1425 = vunpack.c.l.b16 %v215
  %v1426 = vunpack.c.h.b16 %v215
  %v1427 = vunpack.c.l.b16 %v216
  %v1428 = vunpack.c.h.b16 %v216
  %v1429 = vunpack.c.l.b16 %v217
  %v1430 = vunpack.c.h.b16 %v217
  %v1431 = vunpack.c.l.b16 %v218
  %v1432 = vunpack.c.h.b16 %v218
  %v1433 = vunpack.c.l.b16 %v219
  %v1434 = vunpack.c.h.b16 %v219
  %v1435 = vunpack.c.l.b16 %v220
  %v1436 = vunpack.c.h.b16 %v220
  %v1437 = vunpack.c.l.b16 %v221
  %v1438 = vunpack.c.h.b16 %v221
  %v1439 = vunpack.c.l.b16 %v222
  %v1440 = vunpack.c.h.b16 %v222
  %v1441 = vunpack.c.l.b16 %v223
  %v1442 = vunpack.c.h.b16 %v223
  %v1443 = vunpack.c.l.b16 %v224
  %v1444 = vunpack.c.h.b16 %v224
  %v1445 = vunpack.c.l.b16 %v225
  %v1446 = vunpack.c.h.b16 %v225
  %v1447 = vunpack.c.l.b16 %v226
  %v1448 = vunpack.c.h.b16 %v226
  %v1449 = vunpack.c.l.b16 %v227
  %v1450 = vunpack.c.h.b16 %v227
  %v1451 = vunpack.c.l.b16 %v228
  %v1452 = vunpack.c.h.b16 %v228
  %v1453 = vunpack.c.l.b16 %v229
  %v1454 = vunpack.c.h.b16 %v229
  %v1455 = vunpack.c.l.b16 %v230
  %v1456 = vunpack.c.h.b16 %v230
  %v1457 = vunpack.c.l.b16 %v231
  %v1458 = vunpack.c.h.b16 %v231
  %v1459 = vunpack.c.l.b16 %v232
  %v1460 = vunpack.c.h.b16 %v232
  %v1461 = vunpack.c.l.b16 %v233
  %v1462 = vunpack.c.h.b16 %v233
  %v1463 = vunpack.c.l.b16 %v234
  %v1464 = vunpack.c.h.b16 %v234
  %v1465 = vunpack.c.l.b16 %v235
  %v1466 = vunpack.c.h.b16 %v235
  %v1467 = vunpack.c.l.b16 %v236
  %v1468 = vunpack.c.h.b16 %v236
  %v1469 = vunpack.c.l.b16 %v237
  %v1470 = vunpack.c.h.b16 %v237
  %v1471 = vunpack.c.l.b16 %v238
  %v1472 = vunpack.c.h.b16 %v238
  %v1473 = vunpack.c.l.b16 %v239
  %v1474 = vunpack.c.h.b16 %v239
  %v1475 = vunpack.c.l.b16 %v240
  %v1476 = vunpack.c.h.b16 %v240
  %v1477 = vunpack.c.l.b16 %v241
  %v1478 = vunpack.c.h.b16 %v241
  %v1479 = vunpack.c.l.b16 %v242
  %v1480 = vunpack.c.h.b16 %v242
  %v1481 = vunpack.c.l.b16 %v243
  %v1482 = vunpack.c.h.b16 %v243
  %v1483 = vunpack.c.l.b16 %v244
  %v1484 = vunpack.c.h.b16 %v244
  %v1485 = vunpack.c.l.b16 %v245
  %v1486 = vunpack.c.h.b16 %v245
  %v1487 = vunpack.c.l.b16 %v246
  %v1488 = vunpack.c.h.b16 %v246
  %v1489 = vunpack.c.l.b16 %v247
  %v1490 = vunpack.c.h.b16 %v247
  %v1491 = vunpack.c.l.b16 %v248
  %v1492 = vunpack.c.h.b16 %v248
  %v1493 = vunpack.c.l.b16 %v249
  %v1494 = vunpack.c.h.b16 %v249
  %v1495 = vunpack.c.l.b16 %v250
  %v1496 = vunpack.c.h.b16 %v250
  %v1497 = vunpack.c.l.b16 %v251
  %v1498 = vunpack.c.h.b16 %v251
  %v1499 = vunpack.c.l.b16 %v252
  %v1500 = vunpack.c.h.b16 %v252
  %v1501 = vunpack.c.l.b16 %v253
  %v1502 = vunpack.c.h.b16 %v253
  %v1503 = vunpack.c.l.b16 %v254
  %v1504 = vunpack.c.h.b16 %v254
  %v1505 = vunpack.c.l.b16 %v255
  %v1506 = vunpack.c.h.b16 %v255
  %v1507 = vunpack.c.l.b16 %v256
  %v1508 = vunpack.c.h.b16 %v256
  %v1509 = vunpack.c.l.b16 %v257
  %v1510 = vunpack.c.h.b16 %v257
  %v1511 = vunpack.c.l.b16 %v258
  %v1512 = vunpack.c.h.b16 %v258
  %v1513 = vunpack.c.l.b16 %v259
  %v1514 = vunpack.c.h.b16 %v259
  %v1515 = vunpack.c.l.b16 %v260
  %v1516 = vunpack.c.h.b16 %v260
  %v1517 = vunpack.c.l.b16 %v261
  %v1518 = vunpack.c.h.b16 %v261
  %v1519 = vunpack.c.l.b16 %v262
  %v1520 = vunpack.c.h.b16 %v262
  %v1521 = vunpack.c.l.b16 %v263
  %v1522 = vunpack.c.h.b16 %v263
  %v1523 = vunpack.c.l.b16 %v264
  %v1524 = vunpack.c.h.b16 %v264
  %v1525 = vunpack.c.l.b16 %v265
  %v1526 = vunpack.c.h.b16 %v265
  %v1527 = vunpack.c.l.b16 %v266
  %v1528 = vunpack.c.h.b16 %v266
  %v1529 = vunpack.c.l.b16 %v267
  %v1530 = vunpack.c.h.b16 %v267
  %v1531 = vunpack.c.l.b16 %v268
  %v1532 = vunpack.c.h.b16 %v268
  %v1533 = vunpack.c.l.b16 %v269
  %v1534 = vunpack.c.h.b16 %v269
  %v1535 = vunpack.c.l.b16 %v270
  %v1536 = vunpack.c.h.b16 %v270
  %v1537 = vunpack.c.l.b16 %v271
  %v1538 = vunpack.c.h.b16 %v271
  %v1539 = vunpack.c.l.b16 %v272
  %v1540 = vunpack.c.h.b16 %v272
  %v1541 = vunpack.c.l.b16 %v273
  %v1542 = vunpack.c.h.b16 %v273
  %v1543 = vunpack.c.l.b16 %v274
  %v1544 = vunpack.c.h.b16 %v274
  %v1545 = vunpack.c.l.b16 %v275
  %v1546 = vunpack.c.h.b16 %v275
  %v1547 = vunpack.c.l.b16 %v276
  %v1548 = vunpack.c.h.b16 %v276
  %v1549 = vunpack.c.l.b16 %v277
  %v1550 = vunpack.c.h.b16 %v277
  %v1551 = vunpack.c.l.b16 %v278
  %v1552 = vunpack.c.h.b16 %v278
  %v1553 = vunpack.c.l.b16 %v279
  %v1554 = vunpack.c.h.b16 %v279
  %v1555 = vunpack.c.l.b16 %v280
  %v1556 = vunpack.c.h.b16 %v280
  %v1557 = vunpack.c.l.b16 %v281
  %v1558 = vunpack.c.h.b16 %v281
  %v1559 = vunpack.c.l.b16 %v282
  %v1560 = vunpack.c.h.b16 %v282
  %v1561 = vunpack.c.l.b16 %v283
  %v1562 = vunpack.c.h.b16 %v283
  %v1563 = vunpack.c.l.b16 %v284
  %v1564 = vunpack.c.h.b16 %v284
  %v1565 = vunpack.c.l.b16 %v285
  %v1566 = vunpack.c.h.b16 %v285
  %v1567 = vunpack.c.l.b16 %v286
  %v1568 = vunpack.c.h.b16 %v286
  %v1569 = vunpack.c.l.b16 %v287
  %v1570 = vunpack.c.h.b16 %v287
  %v1571 = vunpack.c.l.b16 %v288
  %v1572 = vunpack.c.h.b16 %v288
  %v1573 = vunpack.c.l.b16 %v289
  %v1574 = vunpack.c.h.b16 %v289
  %v1575 = vunpack.c.l.b16 %v290
  %v1576 = vunpack.c.h.b16 %v290
  %v1577 = vunpack.c.l.b16 %v291
  %v1578 = vunpack.c.h.b16 %v291
  %v1579 = vunpack.c.l.b16 %v292
  %v1580 = vunpack.c.h.b16 %v292
  %v1581 = vunpack.c.l.b16 %v293
  %v1582 = vunpack.c.h.b16 %v293
  %v1583 = vunpack.c.l.b16 %v294
  %v1584 = vunpack.c.h.b16 %v294
  %v1585 = vunpack.c.l.b16 %v295
  %v1586 = vunpack.c.h.b16 %v295
  %v1587 = vunpack.c.l.b16 %v296
  %v1588 = vunpack.c.h.b16 %v296
  %v1589 = vunpack.c.l.b16 %v297
  %v1590 = vunpack.c.h.b16 %v297
  %v1591 = vunpack.c.l.b16 %v298
  %v1592 = vunpack.c.h.b16 %v298
  %v1593 = vunpack.c.l.b16 %v299
  %v1594 = vunpack.c.h.b16 %v299
  %v1595 = vunpack.c.l.b16 %v300
  %v1596 = vunpack.c.h.b16 %v300
  %v1597 = vunpack.c.l.b16 %v301
  %v1598 = vunpack.c.h.b16 %v301
  %v1599 = vunpack.c.l.b16 %v302
  %v1600 = vunpack.c.h.b16 %v302
  %v1601 = vunpack.c.l.b16 %v303
  %v1602 = vunpack.c.h.b16 %v303
  %v1603 = vunpack.c.l.b16 %v304
  %v1604 = vunpack.c.h.b16 %v304
  %v1605 = vunpack.c.l.b16 %v305
  %v1606 = vunpack.c.h.b16 %v305
  %v1607 = vunpack.c.l.b16 %v306
  %v1608 = vunpack.c.h.b16 %v306
  %v1609 = vunpack.c.l.b16 %v307
  %v1610 = vunpack.c.h.b16 %v307
  %v1611 = vunpack.c.l.b16 %v308
  %v1612 = vunpack.c.h.b16 %v308
  %v1613 = vunpack.c.l.b16 %v309
  %v1614 = vunpack.c.h.b16 %v309
  %v1615 = vunpack.c.l.b16 %v310
  %v1616 = vunpack.c.h.b16 %v310
  %v1617 = vunpack.c.l.b16 %v311
  %v1618 = vunpack.c.h.b16 %v311
  %v1619 = vunpack.c.l.b16 %v312
  %v1620 = vunpack.c.h.b16 %v312
  %v1621 = vunpack.c.l.b16 %v313
  %v1622 = vunpack.c.h.b16 %v313
  %v1623 = vunpack.c.l.b16 %v314
  %v1624 = vunpack.c.h.b16 %v314
  %v1625 = vunpack.c.l.b16 %v315
  %v1626 = vunpack.c.h.b16 %v315
  %v1627 = vunpack.c.l.b16 %v316
  %v1628 = vunpack.c.h.b16 %v316
  %v1629 = vunpack.c.l.b16 %v317
  %v1630 = vunpack.c.h.b16 %v317
  %v1631 = vunpack.c.l.b16 %v318
  %v1632 = vunpack.c.h.b16 %v318
  %v1633 = vunpack.c.l.b16 %v319
  %v1634 = vunpack.c.h.b16 %v319
  %v1635 = vunpack.c.l.b16 %v320
  %v1636 = vunpack.c.h.b16 %v320
  %v1637 = vunpack.c.l.b16 %v321
  %v1638 = vunpack.c.h.b16 %v321
  %v1639 = vunpack.c.l.b16 %v322
  %v1640 = vunpack.c.h.b16 %v322
  %v1641 = vunpack.c.l.b16 %v323
  %v1642 = vunpack.c.h.b16 %v323
  %v1643 = vunpack.c.l.b16 %v324
  %v1644 = vunpack.c.h.b16 %v324
  %v1645 = vunpack.c.l.b16 %v325
  %v1646 = vunpack.c.h.b16 %v325
  %v1647 = vunpack.c.l.b16 %v326
  %v1648 = vunpack.c.h.b16 %v326
  %v1649 = vunpack.c.l.b16 %v327
  %v1650 = vunpack.c.h.b16 %v327
  %v1651 = vunpack.c.l.b16 %v328
  %v1652 = vunpack.c.h.b16 %v328
  %v1653 = vunpack.c.l.b16 %v329
  %v1654 = vunpack.c.h.b16 %v329
  %v1655 = vunpack.c.l.b16 %v330
  %v1656 = vunpack.c.h.b16 %v330
  %v1657 = vunpack.c.l.b16 %v331
  %v1658 = vunpack.c.h.b16 %v331
  %v1659 = vunpack.c.l.b16 %v332
  %v1660 = vunpack.c.h.b16 %v332
  %v1661 = vunpack.c.l.b16 %v333
  %v1662 = vunpack.c.h.b16 %v333
  %v1663 = vunpack.c.l.b16 %v334
  %v1664 = vunpack.c.h.b16 %v334
  %v1665 = vunpack.c.l.b16 %v335
  %v1666 = vunpack.c.h.b16 %v335
  %v1667 = vunpack.c.l.b16 %v336
  %v1668 = vunpack.c.h.b16 %v336
  %v1669 = vunpack.c.l.b16 %v337
  %v1670 = vunpack.c.h.b16 %v337
  %v1671 = vunpack.c.l.b16 %v338
  %v1672 = vunpack.c.h.b16 %v338
  %v1673 = vunpack.c.l.b16 %v339
  %v1674 = vunpack.c.h.b16 %v339
  %v1675 = vunpack.c.l.b16 %v340
  %v1676 = vunpack.c.h.b16 %v340
  %v1677 = vunpack.c.l.b16 %v341
  %v1678 = vunpack.c.h.b16 %v341
  %v1679 = vunpack.c.l.b16 %v342
  %v1680 = vunpack.c.h.b16 %v342
  %v1681 = vunpack.c.l.b16 %v343
  %v1682 = vunpack.c.h.b16 %v343
  %v1683 = vunpack.c.l.b16 %v344
  %v1684 = vunpack.c.h.b16 %v344
  %v1685 = vunpack.c.l.b16 %v345
  %v1686 = vunpack.c.h.b16 %v345
  %v1687 = vunpack.c.l.b16 %v346
  %v1688 = vunpack.c.h.b16 %v346
  %v1689 = vunpack.c.l.b16 %v347
  %v1690 = vunpack.c.h.b16 %v347
  %v1691 = vunpack.c.l.b16 %v348
  %v1692 = vunpack.c.h.b16 %v348
  %v1693 = vunpack.c.l.b16 %v349
  %v1694 = vunpack.c.h.b16 %v349
  %v1695 = vunpack.c.l.b16 %v350
  %v1696 = vunpack.c.h.b16 %v350
  %v1697 = vunpack.c.l.b16 %v351
  %v1698 = vunpack.c.h.b16 %v351
  %v1699 = vunpack.c.l.b16 %v352
  %v1700 = vunpack.c.h.b16 %v352
  %v1701 = vunpack.c.l.b16 %v353
  %v1702 = vunpack.c.h.b16 %v353
  %v1703 = vunpack.c.l.b16 %v354
  %v1704 = vunpack.c.h.b16 %v354
  %v1705 = vunpack.c.l.b16 %v355
  %v1706 = vunpack.c.h.b16 %v355
  %v1707 = vunpack.c.l.b16 %v356
  %v1708 = vunpack.c.h.b16 %v356
  %v1709 = vunpack.c.l.b16 %v357
  %v1710 = vunpack.c.h.b16 %v357
  %v1711 = vunpack.c.l.b16 %v358
  %v1712 = vunpack.c.h.b16 %v358
  %v1713 = vunpack.c.l.b16 %v359
  %v1714 = vunpack.c.h.b16 %v359
  %v1715 = vunpack.c.l.b16 %v360
  %v1716 = vunpack.c.h.b16 %v360
  %v1717 = vunpack.c.l.b16 %v361
  %v1718 = vunpack.c.h.b16 %v361
  %v1719 = vunpack.c.l.b16 %v362
  %v1720 = vunpack.c.h.b16 %v362
  %v1721 = vunpack.c.l.b16 %v363
  %v1722 = vunpack.c.h.b16 %v363
  %v1723 = vunpack.c.l.b16 %v364
  %v1724 = vunpack.c.h.b16 %v364
  %v1725 = vunpack.c.l.b16 %v365
  %v1726 = vunpack.c.h.b16 %v365
  %v1727 = vunpack.c.l.b16 %v366
  %v1728 = vunpack.c.h.b16 %v366
  %v1729 = vunpack.c.l.b16 %v367
  %v1730 = vunpack.c.h.b16 %v367
  %v1731 = vunpack.c.l.b16 %v368
  %v1732 = vunpack.c.h.b16 %v368
  %v1733 = vunpack.c.l.b16 %v369
  %v1734 = vunpack.c.h.b16 %v369
  %v1735 = vunpack.c.l.b16 %v370
  %v1736 = vunpack.c.h.b16 %v370
  %v1737 = vunpack.c.l.b16 %v371
  %v1738 = vunpack.c.h.b16 %v371
  %v1739 = vunpack.c.l.b16 %v372
  %v1740 = vunpack.c.h.b16 %v372
  %v1741 = vunpack.c.l.b16 %v373
  %v1742 = vunpack.c.h.b16 %v373
  %v1743 = vunpack.c.l.b16 %v374
  %v1744 = vunpack.c.h.b16 %v374
  %v1745 = vunpack.c.l.b16 %v375
  %v1746 = vunpack.c.h.b16 %v375
  %v1747 = vunpack.c.l.b16 %v376
  %v1748 = vunpack.c.h.b16 %v376
  %v1749 = vunpack.c.l.b16 %v377
  %v1750 = vunpack.c.h.b16 %v377
  %v1751 = vunpack.c.l.b16 %v378
  %v1752 = vunpack.c.h.b16 %v378
  %v1753 = vunpack.c.l.b16 %v379
  %v1754 = vunpack.c.h.b16 %v379
  %v1755 = vunpack.c.l.b16 %v380
  %v1756 = vunpack.c.h.b16 %v380
  %v1757 = vunpack.c.l.b16 %v381
  %v1758 = vunpack.c.h.b16 %v381
  %v1759 = vunpack.c.l.b16 %v382
  %v1760 = vunpack.c.h.b16 %v382
  %v1761 = vunpack.c.l.b16 %v383
  %v1762 = vunpack.c.h.b16 %v383
  %v1763 = vunpack.c.l.b16 %v384
  %v1764 = vunpack.c.h.b16 %v384
  %v1765 = vunpack.c.l.b16 %v385
  %v1766 = vunpack.c.h.b16 %v385
  %v1767 = vunpack.c.l.b16 %v386
  %v1768 = vunpack.c.h.b16 %v386
  %v1769 = vunpack.c.l.b16 %v387
  %v1770 = vunpack.c.h.b16 %v387
  %v1771 = vunpack.c.l.b16 %v388
  %v1772 = vunpack.c.h.b16 %v388
  %v1773 = vunpack.c.l.b16 %v389
  %v1774 = vunpack.c.h.b16 %v389
  %v1775 = vunpack.c.l.b16 %v390
  %v1776 = vunpack.c.h.b16 %v390
  %v1777 = vunpack.c.l.b16 %v391
  %v1778 = vunpack.c.h.b16 %v391
  %v1779 = vunpack.c.l.b16 %v392
  %v1780 = vunpack.c.h.b16 %v392
  %v1781 = vunpack.c.l.b16 %v393
  %v1782 = vunpack.c.h.b16 %v393
  %v1783 = vunpack.c.l.b16 %v394
  %v1784 = vunpack.c.h.b16 %v394
  %v1785 = vunpack.c.l.b16 %v395
  %v1786 = vunpack.c.h.b16 %v395
  %v1787 = vunpack.c.l.b16 %v396
  %v1788 = vunpack.c.h.b16 %v396
  %v1789 = vunpack.c.l.b16 %v397
  %v1790 = vunpack.c.h.b16 %v397
  %v1791 = vunpack.c.l.b16 %v398
  %v1792 = vunpack.c.h.b16 %v398
  %v1793 = vunpack.c.l.b16 %v399
  %v1794 = vunpack.c.h.b16 %v399
  %v1795 = vunpack.c.l.b16 %v400
  %v1796 = vunpack.c.h.b16 %v400
  %v1797 = vunpack.c.l.b16 %v401
  %v1798 = vunpack.c.h.b16 %v401
  %v1799 = vunpack.c.l.b16 %v402
  %v1800 = vunpack.c.h.b16 %v402
  %v1801 = vunpack.c.l.b16 %v403
  %v1802 = vunpack.c.h.b16 %v403
  %v1803 = vunpack.c.l.b16 %v404
  %v1804 = vunpack.c.h.b16 %v404
  %v1805 = vunpack.c.l.b16 %v405
  %v1806 = vunpack.c.h.b16 %v405
  %v1807 = vunpack.c.l.b16 %v406
  %v1808 = vunpack.c.h.b16 %v406
  %v1809 = vunpack.c.l.b16 %v407
  %v1810 = vunpack.c.h.b16 %v407
  %v1811 = vunpack.c.l.b16 %v408
  %v1812 = vunpack.c.h.b16 %v408
  %v1813 = vunpack.c.l.b16 %v409
  %v1814 = vunpack.c.h.b16 %v409
  %v1815 = vunpack.c.l.b16 %v410
  %v1816 = vunpack.c.h.b16 %v410
  %v1817 = vunpack.c.l.b16 %v411
  %v1818 = vunpack.c.h.b16 %v411
  %v1819 = vunpack.c.l.b16 %v412
  %v1820 = vunpack.c.h.b16 %v412
  %v1821 = vunpack.c.l.b16 %v413
  %v1822 = vunpack.c.h.b16 %v413
  %v1823 = vunpack.c.l.b16 %v414
  %v1824 = vunpack.c.h.b16 %v414
  %v1825 = vunpack.c.l.b16 %v415
  %v1826 = vunpack.c.h.b16 %v415
  %v1827 = vunpack.c.l.b16 %v416
  %v1828 = vunpack.c.h.b16 %v416
  %v1829 = vunpack.c.l.b16 %v417
  %v1830 = vunpack.c.h.b16 %v417
  %v1831 = vunpack.c.l.b16 %v418
  %v1832 = vunpack.c.h.b16 %v418
  %v1833 = vunpack.c.l.b16 %v419
  %v1834 = vunpack.c.h.b16 %v419
  %v1835 = vunpack.c.l.b16 %v420
  %v1836 = vunpack.c.h.b16 %v420
  %v1837 = vunpack.c.l.b16 %v421
  %v1838 = vunpack.c.h.b16 %v421
  %v1839 = vunpack.c.l.b16 %v422
  %v1840 = vunpack.c.h.b16 %v422
  %v1841 = vunpack.c.l.b16 %v423
  %v1842 = vunpack.c.h.b16 %v423
  %v1843 = vunpack.c.l.b16 %v424
  %v1844 = vunpack.c.h.b16 %v424
  %v1845 = vunpack.c.l.b16 %v425
  %v1846 = vunpack.c.h.b16 %v425
  %v1847 = vunpack.c.l.b16 %v426
  %v1848 = vunpack.c.h.b16 %v426
  %v1849 = vunpack.c.l.b16 %v427
  %v1850 = vunpack.c.h.b16 %v427
  %v1851 = vunpack.c.l.b16 %v428
  %v1852 = vunpack.c.h.b16 %v428
  %v1853 = vunpack.c.l.b16 %v429
  %v1854 = vunpack.c.h.b16 %v429
  %v1855 = vunpack.c.l.b16 %v430
  %v1856 = vunpack.c.h.b16 %v430
  %v1857 = vunpack.c.l.b16 %v431
  %v1858 = vunpack.c.h.b16 %v431
  %v1859 = vunpack.c.l.b16 %v432
  %v1860 = vunpack.c.h.b16 %v432
  %v1861 = vunpack.c.l.b16 %v433
  %v1862 = vunpack.c.h.b16 %v433
  %v1863 = vunpack.c.l.b16 %v434
  %v1864 = vunpack.c.h.b16 %v434
  %v1865 = vunpack.c.l.b16 %v435
  %v1866 = vunpack.c.h.b16 %v435
  %v1867 = vunpack.c.l.b16 %v436
  %v1868 = vunpack.c.h.b16 %v436
  %v1869 = vunpack.c.l.b16 %v437
  %v1870 = vunpack.c.h.b16 %v437
  %v1871 = vunpack.c.l.b16 %v438
  %v1872 = vunpack.c.h.b16 %v438
  %v1873 = vunpack.c.l.b16 %v439
  %v1874 = vunpack.c.h.b16 %v439
  %v1875 = vunpack.c.l.b16 %v440
  %v1876 = vunpack.c.h.b16 %v440
  %v1877 = vunpack.c.l.b16 %v441
  %v1878 = vunpack.c.h.b16 %v441
  %v1879 = vunpack.c.l.b16 %v442
  %v1880 = vunpack.c.h.b16 %v442
  %v1881 = vunpack.c.l.b16 %v443
  %v1882 = vunpack.c.h.b16 %v443
  %v1883 = vunpack.c.l.b16 %v444
  %v1884 = vunpack.c.h.b16 %v444
  %v1885 = vunpack.c.l.b16 %v445
  %v1886 = vunpack.c.h.b16 %v445
  %v1887 = vunpack.c.l.b16 %v446
  %v1888 = vunpack.c.h.b16 %v446
  %v1889 = vunpack.c.l.b16 %v447
  %v1890 = vunpack.c.h.b16 %v447
  %v1891 = vunpack.c.l.b16 %v448
  %v1892 = vunpack.c.h.b16 %v448
  %v1893 = vunpack.c.l.b16 %v449
  %v1894 = vunpack.c.h.b16 %v449
  %v1895 = vunpack.c.l.b16 %v450
  %v1896 = vunpack.c.h.b16 %v450
  %v1897 = vunpack.c.l.b16 %v451
  %v1898 = vunpack.c.h.b16 %v451
  %v1899 = vunpack.c.l.b16 %v452
  %v1900 = vunpack.c.h.b16 %v452
  %v1901 = vunpack.c.l.b16 %v453
  %v1902 = vunpack.c.h.b16 %v453
  %v1903 = vunpack.c.l.b16 %v454
  %v1904 = vunpack.c.h.b16 %v454
  %v1905 = vunpack.c.l.b16 %v455
  %v1906 = vunpack.c.h.b16 %v455
  %v1907 = vunpack.c.l.b16 %v456
  %v1908 = vunpack.c.h.b16 %v456
  %v1909 = vunpack.c.l.b16 %v457
  %v1910 = vunpack.c.h.b16 %v457
  %v1911 = vunpack.c.l.b16 %v458
  %v1912 = vunpack.c.h.b16 %v458
  %v1913 = vunpack.c.l.b16 %v459
  %v1914 = vunpack.c.h.b16 %v459
  %v1915 = vunpack.c.l.b16 %v460
  %v1916 = vunpack.c.h.b16 %v460
  %v1917 = vunpack.c.l.b16 %v461
  %v1918 = vunpack.c.h.b16 %v461
  %v1919 = vunpack.c.l.b16 %v462
  %v1920 = vunpack.c.h.b16 %v462
  %v1921 = vunpack.c.l.b16 %v463
  %v1922 = vunpack.c.h.b16 %v463
  %v1923 = vunpack.c.l.b16 %v464
  %v1924 = vunpack.c.h.b16 %v464
  %v1925 = vunpack.c.l.b16 %v465
  %v1926 = vunpack.c.h.b16 %v465
  %v1927 = vunpack.c.l.b16 %v466
  %v1928 = vunpack.c.h.b16 %v466
  %v1929 = vunpack.c.l.b16 %v467
  %v1930 = vunpack.c.h.b16 %v467
  %v1931 = vunpack.c.l.b16 %v468
  %v1932 = vunpack.c.h.b16 %v468
  %v1933 = vunpack.c.l.b16 %v469
  %v1934 = vunpack.c.h.b16 %v469
  %v1935 = vunpack.c.l.b16 %v470
  %v1936 = vunpack.c.h.b16 %v470
  %v1937 = vunpack.c.l.b16 %v471
  %v1938 = vunpack.c.h.b16 %v471
  %v1939 = vunpack.c.l.b16 %v472
  %v1940 = vunpack.c.h.b16 %v472
  %v1941 = vunpack.c.l.b16 %v473
  %v1942 = vunpack.c.h.b16 %v473
  %v1943 = vunpack.c.l.b16 %v474
  %v1944 = vunpack.c.h.b16 %v474
  %v1945 = vunpack.c.l.b16 %v475
  %v1946 = vunpack.c.h.b16 %v475
  %v1947 = vunpack.c.l.b16 %v476
  %v1948 = vunpack.c.h.b16 %v476
  %v1949 = vunpack.c.l.b16 %v477
  %v1950 = vunpack.c.h.b16 %v477
  %v1951 = vunpack.c.l.b16 %v478
  %v1952 = vunpack.c.h.b16 %v478
  %v1953 = vunpack.c.l.b16 %v479
  %v1954 = vunpack.c.h.b16 %v479
  %v1955 = vunpack.c.l.b16 %v480
  %v1956 = vunpack.c.h.b16 %v480
  %v1957 = vunpack.c.l.b16 %v481
  %v1958 = vunpack.c.h.b16 %v481
  %v1959 = vunpack.c.l.b16 %v482
  %v1960 = vunpack.c.h.b16 %v482
  %v1961 = vunpack.c.l.b16 %v483
  %v1962 = vunpack.c.h.b16 %v483
  %v1963 = vunpack.c.l.b16 %v484
  %v1964 = vunpack.c.h.b16 %v484
  %v1965 = vunpack.c.l.b16 %v485
  %v1966 = vunpack.c.h.b16 %v485
  %v1967 = vunpack.c.l.b16 %v486
  %v1968 = vunpack.c.h.b16 %v486
  %v1969 = vunpack.c.l.b16 %v487
  %v1970 = vunpack.c.h.b16 %v487
  %v1971 = vunpack.c.l.b16 %v488
  %v1972 = vunpack.c.h.b16 %v488
  %v1973 = vunpack.c.l.b16 %v489
  %v1974 = vunpack.c.h.b16 %v489
  %v1975 = vunpack.c.l.b16 %v490
  %v1976 = vunpack.c.h.b16 %v490
  %v1977 = vunpack.c.l.b16 %v491
  %v1978 = vunpack.c.h.b16 %v491
  %v1979 = vunpack.c.l.b16 %v492
  %v1980 = vunpack.c.h.b16 %v492
  %v1981 = vunpack.c.l.b16 %v493
  %v1982 = vunpack.c.h.b16 %v493
  %v1983 = vunpack.c.l.b16 %v494
  %v1984 = vunpack.c.h.b16 %v494
  %v1985 = vunpack.c.l.b16 %v495
  %v1986 = vunpack.c.h.b16 %v495
  %v1987 = vunpack.c.l.b16 %v496
  %v1988 = vunpack.c.h.b16 %v496
  %v1989 = vunpack.c.l.b16 %v497
  %v1990 = vunpack.c.h.b16 %v497
  %v1991 = vunpack.c.l.b16 %v498
  %v1992 = vunpack.c.h.b16 %v498
  %v1993 = vunpack.c.l.b16 %v499
  %v1994 = vunpack.c.h.b16 %v499
  %v1995 = vunpack.c.l.b16 %v500
  %v1996 = vunpack.c.h.b16 %v500
  %v1997 = vunpack.c.l.b16 %v501
  %v1998 = vunpack.c.h.b16 %v501
  %v1999 = vunpack.c.l.b16 %v502
  %v2000 = vunpack.c.h.b16 %v502
  %v2001 = vunpack.c.l.b16 %v503
  %v2002 = vunpack.c.h.b16 %v503
  %v2003 = vunpack.c.l.b16 %v504
  %v2004 = vunpack.c.h.b16 %v504
  %v2005 = vunpack.c.l.b16 %v505
  %v2006 = vunpack.c.h.b16 %v505
  %v2007 = vunpack.c.l.b16 %v506
  %v2008 = vunpack.c.h.b16 %v506
  %v2009 = vunpack.c.l.b16 %v507
  %v2010 = vunpack.c.h.b16 %v507
  %v2011 = vunpack.c.l.b16 %v508
  %v2012 = vunpack.c.h.b16 %v508
  %v2013 = vunpack.c.l.b16 %v509
  %v2014 = vunpack.c.h.b16 %v509
  %v2015 = vunpack.c.l.b16 %v510
  %v2016 = vunpack.c.h.b16 %v510
  %v2017 = vunpack.c.l.b16 %v511
  %v2018 = vunpack.c.h.b16 %v511
  %v2019 = vunpack.c.l.b16 %v512
  %v2020 = vunpack.c.h.b16 %v512
  %v2021 = vunpack.c.l.b16 %v513
  %v2022 = vunpack.c.h.b16 %v513
  %v2023 = vunpack.c.l.b16 %v514
  %v2024 = vunpack.c.h.b16 %v514
  %v2025 = vunpack.c.l.b16 %v515
  %v2026 = vunpack.c.h.b16 %v515
  %v2027 = vunpack.c.l.b16 %v516
  %v2028 = vunpack.c.h.b16 %v516
  %v2029 = vunpack.c.l.b16 %v517
  %v2030 = vunpack.c.h.b16 %v517
  %v2031 = vunpack.c.l.b16 %v518
  %v2032 = vunpack.c.h.b16 %v518
  %v2033 = vunpack.c.l.b16 %v519
  %v2034 = vunpack.c.h.b16 %v519
  %v2035 = vunpack.c.l.b16 %v520
  %v2036 = vunpack.c.h.b16 %v520
  %v2037 = vunpack.c.l.b16 %v521
  %v2038 = vunpack.c.h.b16 %v521
  %v2039 = vunpack.c.l.b16 %v522
  %v2040 = vunpack.c.h.b16 %v522
  %v2041 = vunpack.c.l.b16 %v523
  %v2042 = vunpack.c.h.b16 %v523
  %v2043 = vunpack.c.l.b16 %v524
  %v2044 = vunpack.c.h.b16 %v524
  %v2045 = vunpack.c.l.b16 %v525
  %v2046 = vunpack.c.h.b16 %v525
  %v2047 = vunpack.c.l.b16 %v526
  %v2048 = vunpack.c.h.b16 %v526
  %v2049 = vunpack.c.l.b16 %v527
  %v2050 = vunpack.c.h.b16 %v527
  %v2051 = vunpack.c.l.b16 %v528
  %v2052 = vunpack.c.h.b16 %v528
  %v2053 = vunpack.c.l.b16 %v529
  %v2054 = vunpack.c.h.b16 %v529
  %v2055 = vunpack.c.l.b16 %v530
  %v2056 = vunpack.c.h.b16 %v530
  %v2057 = vunpack.c.l.b16 %v531
  %v2058 = vunpack.c.h.b16 %v531
  %v2059 = vunpack.c.l.b16 %v532
  %v2060 = vunpack.c.h.b16 %v532
  %v2061 = vunpack.c.l.b16 %v533
  %v2062 = vunpack.c.h.b16 %v533
  %v2063 = vunpack.c.l.b16 %v534
  %v2064 = vunpack.c.h.b16 %v534
  %v2065 = vunpack.c.l.b16 %v535
  %v2066 = vunpack.c.h.b16 %v535
  %v2067 = vunpack.c.l.b16 %v536
  %v2068 = vunpack.c.h.b16 %v536
  %v2069 = vunpack.c.l.b16 %v537
  %v2070 = vunpack.c.h.b16 %v537
  %v2071 = vunpack.c.l.b16 %v538
  %v2072 = vunpack.c.h.b16 %v538
  %v2073 = vunpack.c.l.b16 %v539
  %v2074 = vunpack.c.h.b16 %v539
  %v2075 = vunpack.c.l.b16 %v540
  %v2076 = vunpack.c.h.b16 %v540
  %v2077 = vpack.c.b16 %v1181, %v1053
  %v2078 = vpack.c.b16 %v1182, %v1054
  %v2079 = vpack.c.b16 %v1183, %v1055
  %v2080 = vpack.c.b16 %v1184, %v1056
  %v2081 = vpack.c.b16 %v1185, %v1057
  %v2082 = vpack.c.b16 %v1186, %v1058
  %v2083 = vpack.c.b16 %v1187, %v1059
  %v2084 = vpack.c.b16 %v1188, %v1060
  %v2085 = vpack.c.b16 %v1189, %v1061
  %v2086 = vpack.c.b16 %v1190, %v1062
  %v2087 = vpack.c.b16 %v1191, %v1063
  %v2088 = vpack.c.b16 %v1192, %v1064
  %v2089 = vpack.c.b16 %v1193, %v1065
  %v2090 = vpack.c.b16 %v1194, %v1066
  %v2091 = vpack.c.b16 %v1195, %v1067
  %v2092 = vpack.c.b16 %v1196, %v1068
  %v2093 = vpack.c.b16 %v1197, %v1069
  %v2094 = vpack.c.b16 %v1198, %v1070
  %v2095 = vpack.c.b16 %v1199, %v1071
  %v2096 = vpack.c.b16 %v1200, %v1072
  %v2097 = vpack.c.b16 %v1201, %v1073
  %v2098 = vpack.c.b16 %v1202, %v1074
  %v2099 = vpack.c.b16 %v1203, %v1075
  %v2100 = vpack.c.b16 %v1204, %v1076
  %v2101 = vpack.c.b16 %v1205, %v1077
  %v2102 = vpack.c.b16 %v1206, %v1078
  %v2103 = vpack.c.b16 %v1207, %v1079
  %v2104 = vpack.c.b16 %v1208, %v1080
  %v2105 = vpack.c.b16 %v1209, %v1081
  %v2106 = vpack.c.b16 %v1210, %v1082
  %v2107 = vpack.c.b16 %v1211, %v1083
  %v2108 = vpack.c.b16 %v1212, %v1084
  %v2109 = vpack.c.b16 %v1213, %v1085
  %v2110 = vpack.c.b16 %v1214, %v1086
  %v2111 = vpack.c.b16 %v1215, %v1087
  %v2112 = vpack.c.b16 %v1216, %v1088
  %v2113 = vpack.c.b16 %v1217, %v1089
  %v2114 = vpack.c.b16 %v1218, %v1090
  %v2115 = vpack.c.b16 %v1219, %v1091
  %v2116 = vpack.c.b16 %v1220, %v1092
  %v2117 = vpack.c.b16 %v1221, %v1093
  %v2118 = vpack.c.b16 %v1222, %v1094
  %v2119 = vpack.c.b16 %v1223, %v1095
  %v2120 = vpack.c.b16 %v1224, %v1096
  %v2121 = vpack.c.b16 %v1225, %v1097
  %v2122 = vpack.c.b16 %v1226, %v1098
  %v2123 = vpack.c.b16 %v1227, %v1099
  %v2124 = vpack.c.b16 %v1228, %v1100
  %v2125 = vpack.c.b16 %v1229, %v1101
  %v2126 = vpack.c.b16 %v1230, %v1102
  %v2127 = vpack.c.b16 %v1231, %v1103
  %v2128 = vpack.c.b16 %v1232, %v1104
  %v2129 = vpack.c.b16 %v1233, %v1105
  %v2130 = vpack.c.b16 %v1234, %v1106
  %v2131 = vpack.c.b16 %v1235, %v1107
  %v2132 = vpack.c.b16 %v1236, %v1108
  %v2133 = vpack.c.b16 %v1237, %v1109
  %v2134 = vpack.c.b16 %v1238, %v1110
  %v2135 = vpack.c.b16 %v1239, %v1111
  %v2136 = vpack.c.b16 %v1240, %v1112
  %v2137 = vpack.c.b16 %v1241, %v1113
  %v2138 = vpack.c.b16 %v1242, %v1114
  %v2139 = vpack.c.b16 %v1243, %v1115
  %v2140 = vpack.c.b16 %v1244, %v1116
  %v2141 = vpack.c.b16 %v1245, %v1117
  %v2142 = vpack.c.b16 %v1246, %v1118
  %v2143 = vpack.c.b16 %v1247, %v1119
  %v2144 = vpack.c.b16 %v1248, %v1120
  %v2145 = vpack.c.b16 %v1249, %v1121
  %v2146 = vpack.c.b16 %v1250, %v1122
  %v2147 = vpack.c.b16 %v1251, %v1123
  %v2148 = vpack.c.b16 %v1252, %v1124
  %v2149 = vpack.c.b16 %v1253, %v1125
  %v2150 = vpack.c.b16 %v1254, %v1126
  %v2151 = vpack.c.b16 %v1255, %v1127
  %v2152 = vpack.c.b16 %v1256, %v1128
  %v2153 = vpack.c.b16 %v1257, %v1129
  %v2154 = vpack.c.b16 %v1258, %v1130
  %v2155 = vpack.c.b16 %v1259, %v1131
  %v2156 = vpack.c.b16 %v1260, %v1132
  %v2157 = vpack.c.b16 %v1261, %v1133
  %v2158 = vpack.c.b16 %v1262, %v1134
  %v2159 = vpack.c.b16 %v1263, %v1135
  %v2160 = vpack.c.b16 %v1264, %v1136
  %v2161 = vpack.c.b16 %v1265, %v1137
  %v2162 = vpack.c.b16 %v1266, %v1138
  %v2163 = vpack.c.b16 %v1267, %v1139
  %v2164 = vpack.c.b16 %v1268, %v1140
  %v2165 = vpack.c.b16 %v1269, %v1141
  %v2166 = vpack.c.b16 %v1270, %v1142
  %v2167 = vpack.c.b16 %v1271, %v1143
  %v2168 = vpack.c.b16 %v1272, %v1144
  %v2169 = vpack.c.b16 %v1273, %v1145
  %v2170 = vpack.c.b16 %v1274, %v1146
  %v2171 = vpack.c.b16 %v1275, %v1147
  %v2172 = vpack.c.b16 %v1276, %v1148
  %v2173 = vpack.c.b16 %v1277, %v1149
  %v2174 = vpack.c.b16 %v1278, %v1150
  %v2175 = vpack.c.b16 %v1279, %v1151
  %v2176 = vpack.c.b16 %v1280, %v1152
  %v2177 = vpack.c.b16 %v1281, %v1153
  %v2178 = vpack.c.b16 %v1282, %v1154
  %v2179 = vpack.c.b16 %v1283, %v1155
  %v2180 = vpack.c.b16 %v1284, %v1156
  %v2181 = vpack.c.b16 %v1285, %v1157
  %v2182 = vpack.c.b16 %v1286, %v1158
  %v2183 = vpack.c.b16 %v1287, %v1159
  %v2184 = vpack.c.b16 %v1288, %v1160
  %v2185 = vpack.c.b16 %v1289, %v1161
  %v2186 = vpack.c.b16 %v1290, %v1162
  %v2187 = vpack.c.b16 %v1291, %v1163
  %v2188 = vpack.c.b16 %v1292, %v1164
  %v2189 = vpack.c.b16 %v1293, %v1165
  %v2190 = vpack.c.b16 %v1294, %v1166
  %v2191 = vpack.c.b16 %v1295, %v1167
  %v2192 = vpack.c.b16 %v1296, %v1168
  %v2193 = vpack.c.b16 %v1297, %v1169
  %v2194 = vpack.c.b16 %v1298, %v1170
  %v2195 = vpack.c.b16 %v1299, %v1171
  %v2196 = vpack.c.b16 %v1300, %v1172
  %v2197 = vpack.c.b16 %v1301, %v1173
  %v2198 = vpack.c.b16 %v1302, %v1174
  %v2199 = vpack.c.b16 %v1303, %v1175
  %v2200 = vpack.c.b16 %v1304, %v1176
  %v2201 = vpack.c.b16 %v1305, %v1177
  %v2202 = vpack.c.b16 %v1306, %v1178
  %v2203 = vpack.c.b16 %v1307, %v1179
  %v2204 = vpack.c.b16 %v1308, %v1180
  %v2205 = vpack.c.b16 %v1437, %v1309
  %v2206 = vpack.c.b16 %v1438, %v1310
  %v2207 = vpack.c.b16 %v1439, %v1311
  %v2208 = vpack.c.b16 %v1440, %v1312
  %v2209 = vpack.c.b16 %v1441, %v1313
  %v2210 = vpack.c.b16 %v1442, %v1314
  %v2211 = vpack.c.b16 %v1443, %v1315
  %v2212 = vpack.c.b16 %v1444, %v1316
  %v2213 = vpack.c.b16 %v1445, %v1317
  %v2214 = vpack.c.b16 %v1446, %v1318
  %v2215 = vpack.c.b16 %v1447, %v1319
  %v2216 = vpack.c.b16 %v1448, %v1320
  %v2217 = vpack.c.b16 %v1449, %v1321
  %v2218 = vpack.c.b16 %v1450, %v1322
  %v2219 = vpack.c.b16 %v1451, %v1323
  %v2220 = vpack.c.b16 %v1452, %v1324
  %v2221 = vpack.c.b16 %v1453, %v1325
  %v2222 = vpack.c.b16 %v1454, %v1326
  %v2223 = vpack.c.b16 %v1455, %v1327
  %v2224 = vpack.c.b16 %v1456, %v1328
  %v2225 = vpack.c.b16 %v1457, %v1329
  %v2226 = vpack.c.b16 %v1458, %v1330
  %v2227 = vpack.c.b16 %v1459, %v1331
  %v2228 = vpack.c.b16 %v1460, %v1332
  %v2229 = vpack.c.b16 %v1461, %v1333
  %v2230 = vpack.c.b16 %v1462, %v1334
  %v2231 = vpack.c.b16 %v1463, %v1335
  %v2232 = vpack.c.b16 %v1464, %v1336
  %v2233 = vpack.c.b16 %v1465, %v1337
  %v2234 = vpack.c.b16 %v1466, %v1338
  %v2235 = vpack.c.b16 %v1467, %v1339
  %v2236 = vpack.c.b16 %v1468, %v1340
  %v2237 = vpack.c.b16 %v1469, %v1341
  %v2238 = vpack.c.b16 %v1470, %v1342
  %v2239 = vpack.c.b16 %v1471, %v1343
  %v2240 = vpack.c.b16 %v1472, %v1344
  %v2241 = vpack.c.b16 %v1473, %v1345
  %v2242 = vpack.c.b16 %v1474, %v1346
  %v2243 = vpack.c.b16 %v1475, %v1347
  %v2244 = vpack.c.b16 %v1476, %v1348
  %v2245 = vpack.c.b16 %v1477, %v1349
  %v2246 = vpack.c.b16 %v1478, %v1350
  %v2247 = vpack.c.b16 %v1479, %v1351
  %v2248 = vpack.c.b16 %v1480, %v1352
  %v2249 = vpack.c.b16 %v1481, %v1353
  %v2250 = vpack.c.b16 %v1482, %v1354
  %v2251 = vpack.c.b16 %v1483, %v1355
  %v2252 = vpack.c.b16 %v1484, %v1356
  %v2253 = vpack.c.b16 %v1485, %v1357
  %v2254 = vpack.c.b16 %v1486, %v1358
  %v2255 = vpack.c.b16 %v1487, %v1359
  %v2256 = vpack.c.b16 %v1488, %v1360
  %v2257 = vpack.c.b16 %v1489, %v1361
  %v2258 = vpack.c.b16 %v1490, %v1362
  %v2259 = vpack.c.b16 %v1491, %v1363
  %v2260 = vpack.c.b16 %v1492, %v1364
  %v2261 = vpack.c.b16 %v1493, %v1365
  %v2262 = vpack.c.b16 %v1494, %v1366
  %v2263 = vpack.c.b16 %v1495, %v1367
  %v2264 = vpack.c.b16 %v1496, %v1368
  %v2265 = vpack.c.b16 %v1497, %v1369
  %v2266 = vpack.c.b16 %v1498, %v1370
  %v2267 = vpack.c.b16 %v1499, %v1371
  %v2268 = vpack.c.b16 %v1500, %v1372
  %v2269 = vpack.c.b16 %v1501, %v1373
  %v2270 = vpack.c.b16 %v1502, %v1374
  %v2271 = vpack.c.b16 %v1503, %v1375
  %v2272 = vpack.c.b16 %v1504, %v1376
  %v2273 = vpack.c.b16 %v1505, %v1377
  %v2274 = vpack.c.b16 %v1506, %v1378
  %v2275 = vpack.c.b16 %v1507, %v1379
  %v2276 = vpack.c.b16 %v1508, %v1380
  %v2277 = vpack.c.b16 %v1509, %v1381
  %v2278 = vpack.c.b16 %v1510, %v1382
  %v2279 = vpack.c.b16 %v1511, %v1383
  %v2280 = vpack.c.b16 %v1512, %v1384
  %v2281 = vpack.c.b16 %v1513, %v1385
  %v2282 = vpack.c.b16 %v1514, %v1386
  %v2283 = vpack.c.b16 %v1515, %v1387
  %v2284 = vpack.c.b16 %v1516, %v1388
  %v2285 = vpack.c.b16 %v1517, %v1389
  %v2286 = vpack.c.b16 %v1518, %v1390
  %v2287 = vpack.c.b16 %v1519, %v1391
  %v2288 = vpack.c.b16 %v1520, %v1392
  %v2289 = vpack.c.b16 %v1521, %v1393
  %v2290 = vpack.c.b16 %v1522, %v1394
  %v2291 = vpack.c.b16 %v1523, %v1395
  %v2292 = vpack.c.b16 %v1524, %v1396
  %v2293 = vpack.c.b16 %v1525, %v1397
  %v2294 = vpack.c.b16 %v1526, %v1398
  %v2295 = vpack.c.b16 %v1527, %v1399
  %v2296 = vpack.c.b16 %v1528, %v1400
  %v2297 = vpack.c.b16 %v1529, %v1401
  %v2298 = vpack.c.b16 %v1530, %v1402
  %v2299 = vpack.c.b16 %v1531, %v1403
  %v2300 = vpack.c.b16 %v1532, %v1404
  %v2301 = vpack.c.b16 %v1533, %v1405
  %v2302 = vpack.c.b16 %v1534, %v1406
  %v2303 = vpack.c.b16 %v1535, %v1407
  %v2304 = vpack.c.b16 %v1536, %v1408
  %v2305 = vpack.c.b16 %v1537, %v1409
  %v2306 = vpack.c.b16 %v1538, %v1410
  %v2307 = vpack.c.b16 %v1539, %v1411
  %v2308 = vpack.c.b16 %v1540, %v1412
  %v2309 = vpack.c.b16 %v1541, %v1413
  %v2310 = vpack.c.b16 %v1542, %v1414
  %v2311 = vpack.c.b16 %v1543, %v1415
  %v2312 = vpack.c.b16 %v1544, %v1416
  %v2313 = vpack.c.b16 %v1545, %v1417
  %v2314 = vpack.c.b16 %v1546, %v1418
  %v2315 = vpack.c.b16 %v1547, %v1419
  %v2316 = vpack.c.b16 %v1548, %v1420
  %v2317 = vpack.c.b16 %v1549, %v1421
  %v2318 = vpack.c.b16 %v1550, %v1422
  %v2319 = vpack.c.b16 %v1551, %v1423
  %v2320 = vpack.c.b16 %v1552, %v1424
  %v2321 = vpack.c.b16 %v1553, %v1425
  %v2322 = vpack.c.b16 %v1554, %v1426
  %v2323 = vpack.c.b16 %v1555, %v1427
  %v2324 = vpack.c.b16 %v1556, %v1428
  %v2325 = vpack.c.b16 %v1557, %v1429
  %v2326 = vpack.c.b16 %v1558, %v1430
  %v2327 = vpack.c.b16 %v1559, %v1431
  %v2328 = vpack.c.b16 %v1560, %v1432
  %v2329 = vpack.c.b16 %v1561, %v1433
  %v2330 = vpack.c.b16 %v1562, %v1434
  %v2331 = vpack.c.b16 %v1563, %v1435
  %v2332 = vpack.c.b16 %v1564, %v1436
  %v2333 = vpack.c.b16 %v1693, %v1565
  %v2334 = vpack.c.b16 %v1694, %v1566
  %v2335 = vpack.c.b16 %v1695, %v1567
  %v2336 = vpack.c.b16 %v1696, %v1568
  %v2337 = vpack.c.b16 %v1697, %v1569
  %v2338 = vpack.c.b16 %v1698, %v1570
  %v2339 = vpack.c.b16 %v1699, %v1571
  %v2340 = vpack.c.b16 %v1700, %v1572
  %v2341 = vpack.c.b16 %v1701, %v1573
  %v2342 = vpack.c.b16 %v1702, %v1574
  %v2343 = vpack.c.b16 %v1703, %v1575
  %v2344 = vpack.c.b16 %v1704, %v1576
  %v2345 = vpack.c.b16 %v1705, %v1577
  %v2346 = vpack.c.b16 %v1706, %v1578
  %v2347 = vpack.c.b16 %v1707, %v1579
  %v2348 = vpack.c.b16 %v1708, %v1580
  %v2349 = vpack.c.b16 %v1709, %v1581
  %v2350 = vpack.c.b16 %v1710, %v1582
  %v2351 = vpack.c.b16 %v1711, %v1583
  %v2352 = vpack.c.b16 %v1712, %v1584
  %v2353 = vpack.c.b16 %v1713, %v1585
  %v2354 = vpack.c.b16 %v1714, %v1586
  %v2355 = vpack.c.b16 %v1715, %v1587
  %v2356 = vpack.c.b16 %v1716, %v1588
  %v2357 = vpack.c.b16 %v1717, %v1589
  %v2358 = vpack.c.b16 %v1718, %v1590
  %v2359 = vpack.c.b16 %v1719, %v1591
  %v2360 = vpack.c.b16 %v1720, %v1592
  %v2361 = vpack.c.b16 %v1721, %v1593
  %v2362 = vpack.c.b16 %v1722, %v1594
  %v2363 = vpack.c.b16 %v1723, %v1595
  %v2364 = vpack.c.b16 %v1724, %v1596
  %v2365 = vpack.c.b16 %v1725, %v1597
  %v2366 = vpack.c.b16 %v1726, %v1598
  %v2367 = vpack.c.b16 %v1727, %v1599
  %v2368 = vpack.c.b16 %v1728, %v1600
  %v2369 = vpack.c.b16 %v1729, %v1601
  %v2370 = vpack.c.b16 %v1730, %v1602
  %v2371 = vpack.c.b16 %v1731, %v1603
  %v2372 = vpack.c.b16 %v1732, %v1604
  %v2373 = vpack.c.b16 %v1733, %v1605
  %v2374 = vpack.c.b16 %v1734, %v1606
  %v2375 = vpack.c.b16 %v1735, %v1607
  %v2376 = vpack.c.b16 %v1736, %v1608
  %v2377 = vpack.c.b16 %v1737, %v1609
  %v2378 = vpack.c.b16 %v1738, %v1610
  %v2379 = vpack.c.b16 %v1739, %v1611
  %v2380 = vpack.c.b16 %v1740, %v1612
  %v2381 = vpack.c.b16 %v1741, %v1613
  %v2382 = vpack.c.b16 %v1742, %v1614
  %v2383 = vpack.c.b16 %v1743, %v1615
  %v2384 = vpack.c.b16 %v1744, %v1616
  %v2385 = vpack.c.b16 %v1745, %v1617
  %v2386 = vpack.c.b16 %v1746, %v1618
  %v2387 = vpack.c.b16 %v1747, %v1619
  %v2388 = vpack.c.b16 %v1748, %v1620
  %v2389 = vpack.c.b16 %v1749, %v1621
  %v2390 = vpack.c.b16 %v1750, %v1622
  %v2391 = vpack.c.b16 %v1751, %v1623
  %v2392 = vpack.c.b16 %v1752, %v1624
  %v2393 = vpack.c.b16 %v1753, %v1625
  %v2394 = vpack.c.b16 %v1754, %v1626
  %v2395 = vpack.c.b16 %v1755, %v1627
  %v2396 = vpack.c.b16 %v1756, %v1628
  %v2397 = vpack.c.b16 %v1757, %v1629
  %v2398 = vpack.c.b16 %v1758, %v1630
  %v2399 = vpack.c.b16 %v1759, %v1631
  %v2400 = vpack.c.b16 %v1760, %v1632
  %v2401 = vpack.c.b16 %v1761, %v1633
  %v2402 = vpack.c.b16 %v1762, %v1634
  %v2403 = vpack.c.b16 %v1763, %v1635
  %v2404 = vpack.c.b16 %v1764, %v1636
  %v2405 = vpack.c.b16 %v1765, %v1637
  %v2406 = vpack.c.b16 %v1766, %v1638
  %v2407 = vpack.c.b16 %v1767, %v1639
  %v2408 = vpack.c.b16 %v1768, %v1640
  %v2409 = vpack.c.b16 %v1769, %v1641
  %v2410 = vpack.c.b16 %v1770, %v1642
  %v2411 = vpack.c.b16 %v1771, %v1643
  %v2412 = vpack.c.b16 %v1772, %v1644
  %v2413 = vpack.c.b16 %v1773, %v1645
  %v2414 = vpack.c.b16 %v1774, %v1646
  %v2415 = vpack.c.b16 %v1775, %v1647
  %v2416 = vpack.c.b16 %v1776, %v1648
  %v2417 = vpack.c.b16 %v1777, %v1649
  %v2418 = vpack.c.b16 %v1778, %v1650
  %v2419 = vpack.c.b16 %v1779, %v1651
  %v2420 = vpack.c.b16 %v1780, %v1652
  %v2421 = vpack.c.b16 %v1781, %v1653
  %v2422 = vpack.c.b16 %v1782, %v1654
  %v2423 = vpack.c.b16 %v1783, %v1655
  %v2424 = vpack.c.b16 %v1784, %v1656
  %v2425 = vpack.c.b16 %v1785, %v1657
  %v2426 = vpack.c.b16 %v1786, %v1658
  %v2427 = vpack.c.b16 %v1787, %v1659
  %v2428 = vpack.c.b16 %v1788, %v1660
  %v2429 = vpack.c.b16 %v1789, %v1661
  %v2430 = vpack.c.b16 %v1790, %v1662
  %v2431 = vpack.c.b16 %v1791, %v1663
  %v2432 = vpack.c.b16 %v1792, %v1664
  %v2433 = vpack.c.b16 %v1793, %v1665
  %v2434 = vpack.c.b16 %v1794, %v1666
  %v2435 = vpack.c.b16 %v1795, %v1667
  %v2436 = vpack.c.b16 %v1796, %v1668
  %v2437 = vpack.c.b16 %v1797, %v1669
  %v2438 = vpack.c.b16 %v1798, %v1670
  %v2439 = vpack.c.b16 %v1799, %v1671
  %v2440 = vpack.c.b16 %v1800, %v1672
  %v2441 = vpack.c.b16 %v1801, %v1673
  %v2442 = vpack.c.b16 %v1802, %v1674
  %v2443 = vpack.c.b16 %v1803, %v1675
  %v2444 = vpack.c.b16 %v1804, %v1676
  %v2445 = vpack.c.b16 %v1805, %v1677
  %v2446 = vpack.c.b16 %v1806, %v1678
  %v2447 = vpack.c.b16 %v1807, %v1679
  %v2448 = vpack.c.b16 %v1808, %v1680
  %v2449 = vpack.c.b16 %v1809, %v1681
  %v2450 = vpack.c.b16 %v1810, %v1682
  %v2451 = vpack.c.b16 %v1811, %v1683
  %v2452 = vpack.c.b16 %v1812, %v1684
  %v2453 = vpack.c.b16 %v1813, %v1685
  %v2454 = vpack.c.b16 %v1814, %v1686
  %v2455 = vpack.c.b16 %v1815, %v1687
  %v2456 = vpack.c.b16 %v1816, %v1688
  %v2457 = vpack.c.b16 %v1817, %v1689
  %v2458 = vpack.c.b16 %v1818, %v1690
  %v2459 = vpack.c.b16 %v1819, %v1691
  %v2460 = vpack.c.b16 %v1820, %v1692
  %v2461 = vpack.c.b16 %v1949, %v1821
  %v2462 = vpack.c.b16 %v1950, %v1822
  %v2463 = vpack.c.b16 %v1951, %v1823
  %v2464 = vpack.c.b16 %v1952, %v1824
  %v2465 = vpack.c.b16 %v1953, %v1825
  %v2466 = vpack.c.b16 %v1954, %v1826
  %v2467 = vpack.c.b16 %v1955, %v1827
  %v2468 = vpack.c.b16 %v1956, %v1828
  %v2469 = vpack.c.b16 %v1957, %v1829
  %v2470 = vpack.c.b16 %v1958, %v1830
  %v2471 = vpack.c.b16 %v1959, %v1831
  %v2472 = vpack.c.b16 %v1960, %v1832
  %v2473 = vpack.c.b16 %v1961, %v1833
  %v2474 = vpack.c.b16 %v1962, %v1834
  %v2475 = vpack.c.b16 %v1963, %v1835
  %v2476 = vpack.c.b16 %v1964, %v1836
  %v2477 = vpack.c.b16 %v1965, %v1837
  %v2478 = vpack.c.b16 %v1966, %v1838
  %v2479 = vpack.c.b16 %v1967, %v1839
  %v2480 = vpack.c.b16 %v1968, %v1840
  %v2481 = vpack.c.b16 %v1969, %v1841
  %v2482 = vpack.c.b16 %v1970, %v1842
  %v2483 = vpack.c.b16 %v1971, %v1843
  %v2484 = vpack.c.b16 %v1972, %v1844
  %v2485 = vpack.c.b16 %v1973, %v1845
  %v2486 = vpack.c.b16 %v1974, %v1846
  %v2487 = vpack.c.b16 %v1975, %v1847
  %v2488 = vpack.c.b16 %v1976, %v1848
  %v2489 = vpack.c.b16 %v1977, %v1849
  %v2490 = vpack.c.b16 %v1978, %v1850
  %v2491 = vpack.c.b16 %v1979, %v1851
  %v2492 = vpack.c.b16 %v1980, %v1852
  %v2493 = vpack.c.b16 %v1981, %v1853
  %v2494 = vpack.c.b16 %v1982, %v1854
  %v2495 = vpack.c.b16 %v1983, %v1855
  %v2496 = vpack.c.b16 %v1984, %v1856
  %v2497 = vpack.c.b16 %v1985, %v1857
  %v2498 = vpack.c.b16 %v1986, %v1858
  %v2499 = vpack.c.b16 %v1987, %v1859
  %v2500 = vpack.c.b16 %v1988, %v1860
  %v2501 = vpack.c.b16 %v1989, %v1861
  %v2502 = vpack.c.b16 %v1990, %v1862
  %v2503 = vpack.c.b16 %v1991, %v1863
  %v2504 = vpack.c.b16 %v1992, %v1864
  %v2505 = vpack.c.b16 %v1993, %v1865
  %v2506 = vpack.c.b16 %v1994, %v1866
  %v2507 = vpack.c.b16 %v1995, %v1867
  %v2508 = vpack.c.b16 %v1996, %v1868
  %v2509 = vpack.c.b16 %v1997, %v1869
  %v2510 = vpack.c.b16 %v1998, %v1870
  %v2511 = vpack.c.b16 %v1999, %v1871
  %v2512 = vpack.c.b16 %v2000, %v1872
  %v2513 = vpack.c.b16 %v2001, %v1873
  %v2514 = vpack.c.b16 %v2002, %v1874
  %v2515 = vpack.c.b16 %v2003, %v1875
  %v2516 = vpack.c.b16 %v2004, %v1876
  %v2517 = vpack.c.b16 %v2005, %v1877
  %v2518 = vpack.c.b16 %v2006, %v1878
  %v2519 = vpack.c.b16 %v2007, %v1879
  %v2520 = vpack.c.b16 %v2008, %v1880
  %v2521 = vpack.c.b16 %v2009, %v1881
  %v2522 = vpack.c.b16 %v2010, %v1882
  %v2523 = vpack.c.b16 %v2011, %v1883
  %v2524 = vpack.c.b16 %v2012, %v1884
  %v2525 = vpack.c.b16 %v2013, %v1885
  %v2526 = vpack.c.b16 %v2014, %v1886
  %v2527 = vpack.c.b16 %v2015, %v1887
  %v2528 = vpack.c.b16 %v2016, %v1888
  %v2529 = vpack.c.b16 %v2017, %v1889
  %v2530 = vpack.c.b16 %v2018, %v1890
  %v2531 = vpack.c.b16 %v2019, %v1891
  %v2532 = vpack.c.b16 %v2020, %v1892
  %v2533 = vpack.c.b16 %v2021, %v1893
  %v2534 = vpack.c.b16 %v2022, %v1894
  %v2535 = vpack.c.b16 %v2023, %v1895
  %v2536 = vpack.c.b16 %v2024, %v1896
  %v2537 = vpack.c.b16 %v2025, %v1897
  %v2538 = vpack.c.b16 %v2026, %v1898
  %v2539 = vpack.c.b16 %v2027, %v1899
  %v2540 = vpack.c.b16 %v2028, %v1900
  %v2541 = vpack.c.b16 %v2029, %v1901
  %v2542 = vpack.c.b16 %v2030, %v1902
  %v2543 = vpack.c.b16 %v2031, %v1903
  %v2544 = vpack.c.b16 %v2032, %v1904
  %v2545 = vpack.c.b16 %v2033, %v1905
  %v2546 = vpack.c.b16 %v2034, %v1906
  %v2547 = vpack.c.b16 %v2035, %v1907
  %v2548 = vpack.c.b16 %v2036, %v1908
  %v2549 = vpack.c.b16 %v2037, %v1909
  %v2550 = vpack.c.b16 %v2038, %v1910
  %v2551 = vpack.c.b16 %v2039, %v1911
  %v2552 = vpack.c.b16 %v2040, %v1912
  %v2553 = vpack.c.b16 %v2041, %v1913
  %v2554 = vpack.c.b16 %v2042, %v1914
  %v2555 = vpack.c.b16 %v2043, %v1915
  %v2556 = vpack.c.b16 %v2044, %v1916
  %v2557 = vpack.c.b16 %v2045, %v1917
  %v2558 = vpack.c.b16 %v2046, %v1918
  %v2559 = vpack.c.b16 %v2047, %v1919
  %v2560 = vpack.c.b16 %v2048, %v1920
  %v2561 = vpack.c.b16 %v2049, %v1921
  %v2562 = vpack.c.b16 %v2050, %v1922
  %v2563 = vpack.c.b16 %v2051, %v1923
  %v2564 = vpack.c.b16 %v2052, %v1924
  %v2565 = vpack.c.b16 %v2053, %v1925
  %v2566 = vpack.c.b16 %v2054, %v1926
  %v2567 = vpack.c.b16 %v2055, %v1927
  %v2568 = vpack.c.b16 %v2056, %v1928
  %v2569 = vpack.c.b16 %v2057, %v1929
  %v2570 = vpack.c.b16 %v2058, %v1930
  %v2571 = vpack.c.b16 %v2059, %v1931
  %v2572 = vpack.c.b16 %v2060, %v1932
  %v2573 = vpack.c.b16 %v2061, %v1933
  %v2574 = vpack.c.b16 %v2062, %v1934
  %v2575 = vpack.c.b16 %v2063, %v1935
  %v2576 = vpack.c.b16 %v2064, %v1936
  %v2577 = vpack.c.b16 %v2065, %v1937
  %v2578 = vpack.c.b16 %v2066, %v1938
  %v2579 = vpack.c.b16 %v2067, %v1939
  %v2580 = vpack.c.b16 %v2068, %v1940
  %v2581 = vpack.c.b16 %v2069, %v1941
  %v2582 = vpack.c.b16 %v2070, %v1942
  %v2583 = vpack.c.b16 %v2071, %v1943
  %v2584 = vpack.c.b16 %v2072, %v1944
  %v2585 = vpack.c.b16 %v2073, %v1945
  %v2586 = vpack.c.b16 %v2074, %v1946
  %v2587 = vpack.c.b16 %v2075, %v1947
  %v2588 = vpack.c.b16 %v2076, %v1948
  %vm3101 = vcmask 523264
  %v3103 = vsel %vm3101, %v28, 0
  %3105 = vmatprep.subr.bf16.mxu0 0
  %3106 = vmatpush1.bf16.msra.mxu0 0
  %3107 = vmatprep.subr.bf16.mxu0 0
  %3108 = vmatpush1.bf16.msra.mxu0 0
  %3109 = vmatprep.subr.bf16.mxu0 0
  %3110 = vmatpush1.bf16.msra.mxu0 0
  %3111 = vmatprep.subr.bf16.mxu0 0
  %3112 = vmatpush1.bf16.msra.mxu0 0
  %3113 = vmatprep.subr.bf16.mxu0 %v2462
  %3114 = vmatpush1.bf16.msra.mxu0 %v2461
  %3115 = vmatprep.subr.bf16.mxu0 %v2334
  %3116 = vmatpush1.bf16.msra.mxu0 %v2333
  %3117 = vmatprep.subr.bf16.mxu0 %v2206
  %3118 = vmatpush1.bf16.msra.mxu0 %v2205
  %3119 = vmatprep.subr.bf16.mxu0 %v2078
  %3120 = vmatpush1.bf16.msra.mxu0 %v2077
  %3121 = vmatprep.subr.bf16.mxu0 0
  %3122 = vmatpush2.bf16.msra.mxu0 0
  %3123 = vmatprep.subr.bf16.mxu0 0
  %3124 = vmatpush2.bf16.msra.mxu0 0
  %3125 = vmatprep.subr.bf16.mxu0 0
  %3126 = vmatpush2.bf16.msra.mxu0 0
  %3127 = vmatprep.subr.bf16.mxu0 0
  %3128 = vmatpush2.bf16.msra.mxu0 0
  %3129 = vmatprep.subr.bf16.mxu0 0
  %3130 = vmatpush2.bf16.msra.mxu0 0
  %3131 = vmatprep.subr.bf16.mxu0 0
  %3132 = vmatpush2.bf16.msra.mxu0 0
  %3133 = vmatprep.subr.bf16.mxu0 0
  %3134 = vmatpush2.bf16.msra.mxu0 0
  %3135 = vmatprep.subr.bf16.mxu0 0
  %3136 = vmatpush2.bf16.msra.mxu0 0
  %3137 = vmatprep.mubr.bf16.mxu0 0
  %3138 = vmatmul.mubr.bf16.gmra.mxu0 %v3103
  %v3139 = vpop.f32.mrf.mxu0
  %v3140 = vadd.f32 0.0, %v3139
  %v3141 = vpop.f32.mrf.mxu0
  %v3142 = vadd.f32 0.0, %v3141
  %v3143 = vpop.f32.mrf.mxu0
  %v3144 = vpop.f32.mrf.mxu0
  %3145 = vdwg.mxu0
  %3146 = vmatprep.subr.bf16.mxu0 0
  %3147 = vmatpush1.bf16.msra.mxu0 0
  %3148 = vmatprep.subr.bf16.mxu0 0
  %3149 = vmatpush1.bf16.msra.mxu0 0
  %3150 = vmatprep.subr.bf16.mxu0 0
  %3151 = vmatpush1.bf16.msra.mxu0 0
  %3152 = vmatprep.subr.bf16.mxu0 0
  %3153 = vmatpush1.bf16.msra.mxu0 0
  %3154 = vmatprep.subr.bf16.mxu0 %v2464
  %3155 = vmatpush1.bf16.msra.mxu0 %v2463
  %3156 = vmatprep.subr.bf16.mxu0 %v2336
  %3157 = vmatpush1.bf16.msra.mxu0 %v2335
  %3158 = vmatprep.subr.bf16.mxu0 %v2208
  %3159 = vmatpush1.bf16.msra.mxu0 %v2207
  %3160 = vmatprep.subr.bf16.mxu0 %v2080
  %3161 = vmatpush1.bf16.msra.mxu0 %v2079
  %3162 = vmatprep.subr.bf16.mxu0 0
  %3163 = vmatpush2.bf16.msra.mxu0 0
  %3164 = vmatprep.subr.bf16.mxu0 0
  %3165 = vmatpush2.bf16.msra.mxu0 0
  %3166 = vmatprep.subr.bf16.mxu0 0
  %3167 = vmatpush2.bf16.msra.mxu0 0
  %3168 = vmatprep.subr.bf16.mxu0 0
  %3169 = vmatpush2.bf16.msra.mxu0 0
  %3170 = vmatprep.subr.bf16.mxu0 0
  %3171 = vmatpush2.bf16.msra.mxu0 0
  %3172 = vmatprep.subr.bf16.mxu0 0
  %3173 = vmatpush2.bf16.msra.mxu0 0
  %3174 = vmatprep.subr.bf16.mxu0 0
  %3175 = vmatpush2.bf16.msra.mxu0 0
  %3176 = vmatprep.subr.bf16.mxu0 0
  %3177 = vmatpush2.bf16.msra.mxu0 0
  %3178 = vmatprep.mubr.bf16.mxu0 0
  %3179 = vmatmul.mubr.bf16.gmra.mxu0 %v3103
  %v3180 = vpop.f32.mrf.mxu0
  %v3181 = vadd.f32 0.0, %v3180
  %v3182 = vpop.f32.mrf.mxu0
  %v3183 = vadd.f32 0.0, %v3182
  %v3184 = vpop.f32.mrf.mxu0
  %v3185 = vpop.f32.mrf.mxu0
  %3186 = vdwg.mxu0
  %3187 = vmatprep.subr.bf16.mxu0 0
  %3188 = vmatpush1.bf16.msra.mxu0 0
  %3189 = vmatprep.subr.bf16.mxu0 0
  %3190 = vmatpush1.bf16.msra.mxu0 0
  %3191 = vmatprep.subr.bf16.mxu0 0
  %3192 = vmatpush1.bf16.msra.mxu0 0
  %3193 = vmatprep.subr.bf16.mxu0 0
  %3194 = vmatpush1.bf16.msra.mxu0 0
  %3195 = vmatprep.subr.bf16.mxu0 %v2466
  %3196 = vmatpush1.bf16.msra.mxu0 %v2465
  %3197 = vmatprep.subr.bf16.mxu0 %v2338
  %3198 = vmatpush1.bf16.msra.mxu0 %v2337
  %3199 = vmatprep.subr.bf16.mxu0 %v2210
  %3200 = vmatpush1.bf16.msra.mxu0 %v2209
  %3201 = vmatprep.subr.bf16.mxu0 %v2082
  %3202 = vmatpush1.bf16.msra.mxu0 %v2081
  %3203 = vmatprep.subr.bf16.mxu0 0
  %3204 = vmatpush2.bf16.msra.mxu0 0
  %3205 = vmatprep.subr.bf16.mxu0 0
  %3206 = vmatpush2.bf16.msra.mxu0 0
  %3207 = vmatprep.subr.bf16.mxu0 0
  %3208 = vmatpush2.bf16.msra.mxu0 0
  %3209 = vmatprep.subr.bf16.mxu0 0
  %3210 = vmatpush2.bf16.msra.mxu0 0
  %3211 = vmatprep.subr.bf16.mxu0 0
  %3212 = vmatpush2.bf16.msra.mxu0 0
  %3213 = vmatprep.subr.bf16.mxu0 0
  %3214 = vmatpush2.bf16.msra.mxu0 0
  %3215 = vmatprep.subr.bf16.mxu0 0
  %3216 = vmatpush2.bf16.msra.mxu0 0
  %3217 = vmatprep.subr.bf16.mxu0 0
  %3218 = vmatpush2.bf16.msra.mxu0 0
  %3219 = vmatprep.mubr.bf16.mxu0 0
  %3220 = vmatmul.mubr.bf16.gmra.mxu0 %v3103
  %v3221 = vpop.f32.mrf.mxu0
  %v3222 = vadd.f32 0.0, %v3221
  %v3223 = vpop.f32.mrf.mxu0
  %v3224 = vadd.f32 0.0, %v3223
  %v3225 = vpop.f32.mrf.mxu0
  %v3226 = vpop.f32.mrf.mxu0
  %3227 = vdwg.mxu0
  %3228 = vmatprep.subr.bf16.mxu0 0
  %3229 = vmatpush1.bf16.msra.mxu0 0
  %3230 = vmatprep.subr.bf16.mxu0 0
  %3231 = vmatpush1.bf16.msra.mxu0 0
  %3232 = vmatprep.subr.bf16.mxu0 0
  %3233 = vmatpush1.bf16.msra.mxu0 0
  %3234 = vmatprep.subr.bf16.mxu0 0
  %3235 = vmatpush1.bf16.msra.mxu0 0
  %3236 = vmatprep.subr.bf16.mxu0 %v2468
  %3237 = vmatpush1.bf16.msra.mxu0 %v2467
  %3238 = vmatprep.subr.bf16.mxu0 %v2340
  %3239 = vmatpush1.bf16.msra.mxu0 %v2339
  %3240 = vmatprep.subr.bf16.mxu0 %v2212
  %3241 = vmatpush1.bf16.msra.mxu0 %v2211
  %3242 = vmatprep.subr.bf16.mxu0 %v2084
  %3243 = vmatpush1.bf16.msra.mxu0 %v2083
  %3244 = vmatprep.subr.bf16.mxu0 0
  %3245 = vmatpush2.bf16.msra.mxu0 0
  %3246 = vmatprep.subr.bf16.mxu0 0
  %3247 = vmatpush2.bf16.msra.mxu0 0
  %3248 = vmatprep.subr.bf16.mxu0 0
  %3249 = vmatpush2.bf16.msra.mxu0 0
  %3250 = vmatprep.subr.bf16.mxu0 0
  %3251 = vmatpush2.bf16.msra.mxu0 0
  %3252 = vmatprep.subr.bf16.mxu0 0
  %3253 = vmatpush2.bf16.msra.mxu0 0
  %3254 = vmatprep.subr.bf16.mxu0 0
  %3255 = vmatpush2.bf16.msra.mxu0 0
  %3256 = vmatprep.subr.bf16.mxu0 0
  %3257 = vmatpush2.bf16.msra.mxu0 0
  %3258 = vmatprep.subr.bf16.mxu0 0
  %3259 = vmatpush2.bf16.msra.mxu0 0
  %3260 = vmatprep.mubr.bf16.mxu0 0
  %3261 = vmatmul.mubr.bf16.gmra.mxu0 %v3103
  %v3262 = vpop.f32.mrf.mxu0
  %v3263 = vadd.f32 0.0, %v3262
  %v3264 = vpop.f32.mrf.mxu0
  %v3265 = vadd.f32 0.0, %v3264
  %v3266 = vpop.f32.mrf.mxu0
  %v3267 = vpop.f32.mrf.mxu0
  %3268 = vdwg.mxu0
  %3269 = vmatprep.subr.bf16.mxu0 0
  %3270 = vmatpush1.bf16.msra.mxu0 0
  %3271 = vmatprep.subr.bf16.mxu0 0
  %3272 = vmatpush1.bf16.msra.mxu0 0
  %3273 = vmatprep.subr.bf16.mxu0 0
  %3274 = vmatpush1.bf16.msra.mxu0 0
  %3275 = vmatprep.subr.bf16.mxu0 0
  %3276 = vmatpush1.bf16.msra.mxu0 0
  %3277 = vmatprep.subr.bf16.mxu0 %v2470
  %3278 = vmatpush1.bf16.msra.mxu0 %v2469
  %3279 = vmatprep.subr.bf16.mxu0 %v2342
  %3280 = vmatpush1.bf16.msra.mxu0 %v2341
  %3281 = vmatprep.subr.bf16.mxu0 %v2214
  %3282 = vmatpush1.bf16.msra.mxu0 %v2213
  %3283 = vmatprep.subr.bf16.mxu0 %v2086
  %3284 = vmatpush1.bf16.msra.mxu0 %v2085
  %3285 = vmatprep.subr.bf16.mxu0 0
  %3286 = vmatpush2.bf16.msra.mxu0 0
  %3287 = vmatprep.subr.bf16.mxu0 0
  %3288 = vmatpush2.bf16.msra.mxu0 0
  %3289 = vmatprep.subr.bf16.mxu0 0
  %3290 = vmatpush2.bf16.msra.mxu0 0
  %3291 = vmatprep.subr.bf16.mxu0 0
  %3292 = vmatpush2.bf16.msra.mxu0 0
  %3293 = vmatprep.subr.bf16.mxu0 0
  %3294 = vmatpush2.bf16.msra.mxu0 0
  %3295 = vmatprep.subr.bf16.mxu0 0
  %3296 = vmatpush2.bf16.msra.mxu0 0
  %3297 = vmatprep.subr.bf16.mxu0 0
  %3298 = vmatpush2.bf16.msra.mxu0 0
  %3299 = vmatprep.subr.bf16.mxu0 0
  %3300 = vmatpush2.bf16.msra.mxu0 0
  %3301 = vmatprep.mubr.bf16.mxu0 0
  %3302 = vmatmul.mubr.bf16.gmra.mxu0 %v3103
  %v3303 = vpop.f32.mrf.mxu0
  %v3304 = vadd.f32 0.0, %v3303
  %v3305 = vpop.f32.mrf.mxu0
  %v3306 = vadd.f32 0.0, %v3305
  %v3307 = vpop.f32.mrf.mxu0
  %v3308 = vpop.f32.mrf.mxu0
  %3309 = vdwg.mxu0
  %3310 = vmatprep.subr.bf16.mxu0 0
  %3311 = vmatpush1.bf16.msra.mxu0 0
  %3312 = vmatprep.subr.bf16.mxu0 0
  %3313 = vmatpush1.bf16.msra.mxu0 0
  %3314 = vmatprep.subr.bf16.mxu0 0
  %3315 = vmatpush1.bf16.msra.mxu0 0
  %3316 = vmatprep.subr.bf16.mxu0 0
  %3317 = vmatpush1.bf16.msra.mxu0 0
  %3318 = vmatprep.subr.bf16.mxu0 %v2472
  %3319 = vmatpush1.bf16.msra.mxu0 %v2471
  %3320 = vmatprep.subr.bf16.mxu0 %v2344
  %3321 = vmatpush1.bf16.msra.mxu0 %v2343
  %3322 = vmatprep.subr.bf16.mxu0 %v2216
  %3323 = vmatpush1.bf16.msra.mxu0 %v2215
  %3324 = vmatprep.subr.bf16.mxu0 %v2088
  %3325 = vmatpush1.bf16.msra.mxu0 %v2087
  %3326 = vmatprep.subr.bf16.mxu0 0
  %3327 = vmatpush2.bf16.msra.mxu0 0
  %3328 = vmatprep.subr.bf16.mxu0 0
  %3329 = vmatpush2.bf16.msra.mxu0 0
  %3330 = vmatprep.subr.bf16.mxu0 0
  %3331 = vmatpush2.bf16.msra.mxu0 0
  %3332 = vmatprep.subr.bf16.mxu0 0
  %3333 = vmatpush2.bf16.msra.mxu0 0
  %3334 = vmatprep.subr.bf16.mxu0 0
  %3335 = vmatpush2.bf16.msra.mxu0 0
  %3336 = vmatprep.subr.bf16.mxu0 0
  %3337 = vmatpush2.bf16.msra.mxu0 0
  %3338 = vmatprep.subr.bf16.mxu0 0
  %3339 = vmatpush2.bf16.msra.mxu0 0
  %3340 = vmatprep.subr.bf16.mxu0 0
  %3341 = vmatpush2.bf16.msra.mxu0 0
  %3342 = vmatprep.mubr.bf16.mxu0 0
  %3343 = vmatmul.mubr.bf16.gmra.mxu0 %v3103
  %v3344 = vpop.f32.mrf.mxu0
  %v3345 = vadd.f32 0.0, %v3344
  %v3346 = vpop.f32.mrf.mxu0
  %v3347 = vadd.f32 0.0, %v3346
  %v3348 = vpop.f32.mrf.mxu0
  %v3349 = vpop.f32.mrf.mxu0
  %3350 = vdwg.mxu0
  %3351 = vmatprep.subr.bf16.mxu0 0
  %3352 = vmatpush1.bf16.msra.mxu0 0
  %3353 = vmatprep.subr.bf16.mxu0 0
  %3354 = vmatpush1.bf16.msra.mxu0 0
  %3355 = vmatprep.subr.bf16.mxu0 0
  %3356 = vmatpush1.bf16.msra.mxu0 0
  %3357 = vmatprep.subr.bf16.mxu0 0
  %3358 = vmatpush1.bf16.msra.mxu0 0
  %3359 = vmatprep.subr.bf16.mxu0 %v2474
  %3360 = vmatpush1.bf16.msra.mxu0 %v2473
  %3361 = vmatprep.subr.bf16.mxu0 %v2346
  %3362 = vmatpush1.bf16.msra.mxu0 %v2345
  %3363 = vmatprep.subr.bf16.mxu0 %v2218
  %3364 = vmatpush1.bf16.msra.mxu0 %v2217
  %3365 = vmatprep.subr.bf16.mxu0 %v2090
  %3366 = vmatpush1.bf16.msra.mxu0 %v2089
  %3367 = vmatprep.subr.bf16.mxu0 0
  %3368 = vmatpush2.bf16.msra.mxu0 0
  %3369 = vmatprep.subr.bf16.mxu0 0
  %3370 = vmatpush2.bf16.msra.mxu0 0
  %3371 = vmatprep.subr.bf16.mxu0 0
  %3372 = vmatpush2.bf16.msra.mxu0 0
  %3373 = vmatprep.subr.bf16.mxu0 0
  %3374 = vmatpush2.bf16.msra.mxu0 0
  %3375 = vmatprep.subr.bf16.mxu0 0
  %3376 = vmatpush2.bf16.msra.mxu0 0
  %3377 = vmatprep.subr.bf16.mxu0 0
  %3378 = vmatpush2.bf16.msra.mxu0 0
  %3379 = vmatprep.subr.bf16.mxu0 0
  %3380 = vmatpush2.bf16.msra.mxu0 0
  %3381 = vmatprep.subr.bf16.mxu0 0
  %3382 = vmatpush2.bf16.msra.mxu0 0
  %3383 = vmatprep.mubr.bf16.mxu0 0
  %3384 = vmatmul.mubr.bf16.gmra.mxu0 %v3103
  %v3385 = vpop.f32.mrf.mxu0
  %v3386 = vadd.f32 0.0, %v3385
  %v3387 = vpop.f32.mrf.mxu0
  %v3388 = vadd.f32 0.0, %v3387
  %v3389 = vpop.f32.mrf.mxu0
  %v3390 = vpop.f32.mrf.mxu0
  %3391 = vdwg.mxu0
  %3392 = vmatprep.subr.bf16.mxu0 0
  %3393 = vmatpush1.bf16.msra.mxu0 0
  %3394 = vmatprep.subr.bf16.mxu0 0
  %3395 = vmatpush1.bf16.msra.mxu0 0
  %3396 = vmatprep.subr.bf16.mxu0 0
  %3397 = vmatpush1.bf16.msra.mxu0 0
  %3398 = vmatprep.subr.bf16.mxu0 0
  %3399 = vmatpush1.bf16.msra.mxu0 0
  %3400 = vmatprep.subr.bf16.mxu0 %v2476
  %3401 = vmatpush1.bf16.msra.mxu0 %v2475
  %3402 = vmatprep.subr.bf16.mxu0 %v2348
  %3403 = vmatpush1.bf16.msra.mxu0 %v2347
  %3404 = vmatprep.subr.bf16.mxu0 %v2220
  %3405 = vmatpush1.bf16.msra.mxu0 %v2219
  %3406 = vmatprep.subr.bf16.mxu0 %v2092
  %3407 = vmatpush1.bf16.msra.mxu0 %v2091
  %3408 = vmatprep.subr.bf16.mxu0 0
  %3409 = vmatpush2.bf16.msra.mxu0 0
  %3410 = vmatprep.subr.bf16.mxu0 0
  %3411 = vmatpush2.bf16.msra.mxu0 0
  %3412 = vmatprep.subr.bf16.mxu0 0
  %3413 = vmatpush2.bf16.msra.mxu0 0
  %3414 = vmatprep.subr.bf16.mxu0 0
  %3415 = vmatpush2.bf16.msra.mxu0 0
  %3416 = vmatprep.subr.bf16.mxu0 0
  %3417 = vmatpush2.bf16.msra.mxu0 0
  %3418 = vmatprep.subr.bf16.mxu0 0
  %3419 = vmatpush2.bf16.msra.mxu0 0
  %3420 = vmatprep.subr.bf16.mxu0 0
  %3421 = vmatpush2.bf16.msra.mxu0 0
  %3422 = vmatprep.subr.bf16.mxu0 0
  %3423 = vmatpush2.bf16.msra.mxu0 0
  %3424 = vmatprep.mubr.bf16.mxu0 0
  %3425 = vmatmul.mubr.bf16.gmra.mxu0 %v3103
  %v3426 = vpop.f32.mrf.mxu0
  %v3427 = vadd.f32 0.0, %v3426
  %v3428 = vpop.f32.mrf.mxu0
  %v3429 = vadd.f32 0.0, %v3428
  %v3430 = vpop.f32.mrf.mxu0
  %v3431 = vpop.f32.mrf.mxu0
  %3432 = vdwg.mxu0
  %3433 = vmatprep.subr.bf16.mxu0 0
  %3434 = vmatpush1.bf16.msra.mxu0 0
  %3435 = vmatprep.subr.bf16.mxu0 0
  %3436 = vmatpush1.bf16.msra.mxu0 0
  %3437 = vmatprep.subr.bf16.mxu0 0
  %3438 = vmatpush1.bf16.msra.mxu0 0
  %3439 = vmatprep.subr.bf16.mxu0 0
  %3440 = vmatpush1.bf16.msra.mxu0 0
  %3441 = vmatprep.subr.bf16.mxu0 %v2478
  %3442 = vmatpush1.bf16.msra.mxu0 %v2477
  %3443 = vmatprep.subr.bf16.mxu0 %v2350
  %3444 = vmatpush1.bf16.msra.mxu0 %v2349
  %3445 = vmatprep.subr.bf16.mxu0 %v2222
  %3446 = vmatpush1.bf16.msra.mxu0 %v2221
  %3447 = vmatprep.subr.bf16.mxu0 %v2094
  %3448 = vmatpush1.bf16.msra.mxu0 %v2093
  %3449 = vmatprep.subr.bf16.mxu0 0
  %3450 = vmatpush2.bf16.msra.mxu0 0
  %3451 = vmatprep.subr.bf16.mxu0 0
  %3452 = vmatpush2.bf16.msra.mxu0 0
  %3453 = vmatprep.subr.bf16.mxu0 0
  %3454 = vmatpush2.bf16.msra.mxu0 0
  %3455 = vmatprep.subr.bf16.mxu0 0
  %3456 = vmatpush2.bf16.msra.mxu0 0
  %3457 = vmatprep.subr.bf16.mxu0 0
  %3458 = vmatpush2.bf16.msra.mxu0 0
  %3459 = vmatprep.subr.bf16.mxu0 0
  %3460 = vmatpush2.bf16.msra.mxu0 0
  %3461 = vmatprep.subr.bf16.mxu0 0
  %3462 = vmatpush2.bf16.msra.mxu0 0
  %3463 = vmatprep.subr.bf16.mxu0 0
  %3464 = vmatpush2.bf16.msra.mxu0 0
  %3465 = vmatprep.mubr.bf16.mxu0 0
  %3466 = vmatmul.mubr.bf16.gmra.mxu0 %v3103
  %v3467 = vpop.f32.mrf.mxu0
  %v3468 = vadd.f32 0.0, %v3467
  %v3469 = vpop.f32.mrf.mxu0
  %v3470 = vadd.f32 0.0, %v3469
  %v3471 = vpop.f32.mrf.mxu0
  %v3472 = vpop.f32.mrf.mxu0
  %3473 = vdwg.mxu0
  %3474 = vmatprep.subr.bf16.mxu0 0
  %3475 = vmatpush1.bf16.msra.mxu0 0
  %3476 = vmatprep.subr.bf16.mxu0 0
  %3477 = vmatpush1.bf16.msra.mxu0 0
  %3478 = vmatprep.subr.bf16.mxu0 0
  %3479 = vmatpush1.bf16.msra.mxu0 0
  %3480 = vmatprep.subr.bf16.mxu0 0
  %3481 = vmatpush1.bf16.msra.mxu0 0
  %3482 = vmatprep.subr.bf16.mxu0 %v2480
  %3483 = vmatpush1.bf16.msra.mxu0 %v2479
  %3484 = vmatprep.subr.bf16.mxu0 %v2352
  %3485 = vmatpush1.bf16.msra.mxu0 %v2351
  %3486 = vmatprep.subr.bf16.mxu0 %v2224
  %3487 = vmatpush1.bf16.msra.mxu0 %v2223
  %3488 = vmatprep.subr.bf16.mxu0 %v2096
  %3489 = vmatpush1.bf16.msra.mxu0 %v2095
  %3490 = vmatprep.subr.bf16.mxu0 0
  %3491 = vmatpush2.bf16.msra.mxu0 0
  %3492 = vmatprep.subr.bf16.mxu0 0
  %3493 = vmatpush2.bf16.msra.mxu0 0
  %3494 = vmatprep.subr.bf16.mxu0 0
  %3495 = vmatpush2.bf16.msra.mxu0 0
  %3496 = vmatprep.subr.bf16.mxu0 0
  %3497 = vmatpush2.bf16.msra.mxu0 0
  %3498 = vmatprep.subr.bf16.mxu0 0
  %3499 = vmatpush2.bf16.msra.mxu0 0
  %3500 = vmatprep.subr.bf16.mxu0 0
  %3501 = vmatpush2.bf16.msra.mxu0 0
  %3502 = vmatprep.subr.bf16.mxu0 0
  %3503 = vmatpush2.bf16.msra.mxu0 0
  %3504 = vmatprep.subr.bf16.mxu0 0
  %3505 = vmatpush2.bf16.msra.mxu0 0
  %3506 = vmatprep.mubr.bf16.mxu0 0
  %3507 = vmatmul.mubr.bf16.gmra.mxu0 %v3103
  %v3508 = vpop.f32.mrf.mxu0
  %v3509 = vadd.f32 0.0, %v3508
  %v3510 = vpop.f32.mrf.mxu0
  %v3511 = vadd.f32 0.0, %v3510
  %v3512 = vpop.f32.mrf.mxu0
  %v3513 = vpop.f32.mrf.mxu0
  %3514 = vdwg.mxu0
  %3515 = vmatprep.subr.bf16.mxu0 0
  %3516 = vmatpush1.bf16.msra.mxu0 0
  %3517 = vmatprep.subr.bf16.mxu0 0
  %3518 = vmatpush1.bf16.msra.mxu0 0
  %3519 = vmatprep.subr.bf16.mxu0 0
  %3520 = vmatpush1.bf16.msra.mxu0 0
  %3521 = vmatprep.subr.bf16.mxu0 0
  %3522 = vmatpush1.bf16.msra.mxu0 0
  %3523 = vmatprep.subr.bf16.mxu0 %v2482
  %3524 = vmatpush1.bf16.msra.mxu0 %v2481
  %3525 = vmatprep.subr.bf16.mxu0 %v2354
  %3526 = vmatpush1.bf16.msra.mxu0 %v2353
  %3527 = vmatprep.subr.bf16.mxu0 %v2226
  %3528 = vmatpush1.bf16.msra.mxu0 %v2225
  %3529 = vmatprep.subr.bf16.mxu0 %v2098
  %3530 = vmatpush1.bf16.msra.mxu0 %v2097
  %3531 = vmatprep.subr.bf16.mxu0 0
  %3532 = vmatpush2.bf16.msra.mxu0 0
  %3533 = vmatprep.subr.bf16.mxu0 0
  %3534 = vmatpush2.bf16.msra.mxu0 0
  %3535 = vmatprep.subr.bf16.mxu0 0
  %3536 = vmatpush2.bf16.msra.mxu0 0
  %3537 = vmatprep.subr.bf16.mxu0 0
  %3538 = vmatpush2.bf16.msra.mxu0 0
  %3539 = vmatprep.subr.bf16.mxu0 0
  %3540 = vmatpush2.bf16.msra.mxu0 0
  %3541 = vmatprep.subr.bf16.mxu0 0
  %3542 = vmatpush2.bf16.msra.mxu0 0
  %3543 = vmatprep.subr.bf16.mxu0 0
  %3544 = vmatpush2.bf16.msra.mxu0 0
  %3545 = vmatprep.subr.bf16.mxu0 0
  %3546 = vmatpush2.bf16.msra.mxu0 0
  %3547 = vmatprep.mubr.bf16.mxu0 0
  %3548 = vmatmul.mubr.bf16.gmra.mxu0 %v3103
  %v3549 = vpop.f32.mrf.mxu0
  %v3550 = vadd.f32 0.0, %v3549
  %v3551 = vpop.f32.mrf.mxu0
  %v3552 = vadd.f32 0.0, %v3551
  %v3553 = vpop.f32.mrf.mxu0
  %v3554 = vpop.f32.mrf.mxu0
  %3555 = vdwg.mxu0
  %3556 = vmatprep.subr.bf16.mxu0 0
  %3557 = vmatpush1.bf16.msra.mxu0 0
  %3558 = vmatprep.subr.bf16.mxu0 0
  %3559 = vmatpush1.bf16.msra.mxu0 0
  %3560 = vmatprep.subr.bf16.mxu0 0
  %3561 = vmatpush1.bf16.msra.mxu0 0
  %3562 = vmatprep.subr.bf16.mxu0 0
  %3563 = vmatpush1.bf16.msra.mxu0 0
  %3564 = vmatprep.subr.bf16.mxu0 %v2484
  %3565 = vmatpush1.bf16.msra.mxu0 %v2483
  %3566 = vmatprep.subr.bf16.mxu0 %v2356
  %3567 = vmatpush1.bf16.msra.mxu0 %v2355
  %3568 = vmatprep.subr.bf16.mxu0 %v2228
  %3569 = vmatpush1.bf16.msra.mxu0 %v2227
  %3570 = vmatprep.subr.bf16.mxu0 %v2100
  %3571 = vmatpush1.bf16.msra.mxu0 %v2099
  %3572 = vmatprep.subr.bf16.mxu0 0
  %3573 = vmatpush2.bf16.msra.mxu0 0
  %3574 = vmatprep.subr.bf16.mxu0 0
  %3575 = vmatpush2.bf16.msra.mxu0 0
  %3576 = vmatprep.subr.bf16.mxu0 0
  %3577 = vmatpush2.bf16.msra.mxu0 0
  %3578 = vmatprep.subr.bf16.mxu0 0
  %3579 = vmatpush2.bf16.msra.mxu0 0
  %3580 = vmatprep.subr.bf16.mxu0 0
  %3581 = vmatpush2.bf16.msra.mxu0 0
  %3582 = vmatprep.subr.bf16.mxu0 0
  %3583 = vmatpush2.bf16.msra.mxu0 0
  %3584 = vmatprep.subr.bf16.mxu0 0
  %3585 = vmatpush2.bf16.msra.mxu0 0
  %3586 = vmatprep.subr.bf16.mxu0 0
  %3587 = vmatpush2.bf16.msra.mxu0 0
  %3588 = vmatprep.mubr.bf16.mxu0 0
  %3589 = vmatmul.mubr.bf16.gmra.mxu0 %v3103
  %v3590 = vpop.f32.mrf.mxu0
  %v3591 = vadd.f32 0.0, %v3590
  %v3592 = vpop.f32.mrf.mxu0
  %v3593 = vadd.f32 0.0, %v3592
  %v3594 = vpop.f32.mrf.mxu0
  %v3595 = vpop.f32.mrf.mxu0
  %3596 = vdwg.mxu0
  %3597 = vmatprep.subr.bf16.mxu0 0
  %3598 = vmatpush1.bf16.msra.mxu0 0
  %3599 = vmatprep.subr.bf16.mxu0 0
  %3600 = vmatpush1.bf16.msra.mxu0 0
  %3601 = vmatprep.subr.bf16.mxu0 0
  %3602 = vmatpush1.bf16.msra.mxu0 0
  %3603 = vmatprep.subr.bf16.mxu0 0
  %3604 = vmatpush1.bf16.msra.mxu0 0
  %3605 = vmatprep.subr.bf16.mxu0 %v2486
  %3606 = vmatpush1.bf16.msra.mxu0 %v2485
  %3607 = vmatprep.subr.bf16.mxu0 %v2358
  %3608 = vmatpush1.bf16.msra.mxu0 %v2357
  %3609 = vmatprep.subr.bf16.mxu0 %v2230
  %3610 = vmatpush1.bf16.msra.mxu0 %v2229
  %3611 = vmatprep.subr.bf16.mxu0 %v2102
  %3612 = vmatpush1.bf16.msra.mxu0 %v2101
  %3613 = vmatprep.subr.bf16.mxu0 0
  %3614 = vmatpush2.bf16.msra.mxu0 0
  %3615 = vmatprep.subr.bf16.mxu0 0
  %3616 = vmatpush2.bf16.msra.mxu0 0
  %3617 = vmatprep.subr.bf16.mxu0 0
  %3618 = vmatpush2.bf16.msra.mxu0 0
  %3619 = vmatprep.subr.bf16.mxu0 0
  %3620 = vmatpush2.bf16.msra.mxu0 0
  %3621 = vmatprep.subr.bf16.mxu0 0
  %3622 = vmatpush2.bf16.msra.mxu0 0
  %3623 = vmatprep.subr.bf16.mxu0 0
  %3624 = vmatpush2.bf16.msra.mxu0 0
  %3625 = vmatprep.subr.bf16.mxu0 0
  %3626 = vmatpush2.bf16.msra.mxu0 0
  %3627 = vmatprep.subr.bf16.mxu0 0
  %3628 = vmatpush2.bf16.msra.mxu0 0
  %3629 = vmatprep.mubr.bf16.mxu0 0
  %3630 = vmatmul.mubr.bf16.gmra.mxu0 %v3103
  %v3631 = vpop.f32.mrf.mxu0
  %v3632 = vadd.f32 0.0, %v3631
  %v3633 = vpop.f32.mrf.mxu0
  %v3634 = vadd.f32 0.0, %v3633
  %v3635 = vpop.f32.mrf.mxu0
  %v3636 = vpop.f32.mrf.mxu0
  %3637 = vdwg.mxu0
  %3638 = vmatprep.subr.bf16.mxu0 0
  %3639 = vmatpush1.bf16.msra.mxu0 0
  %3640 = vmatprep.subr.bf16.mxu0 0
  %3641 = vmatpush1.bf16.msra.mxu0 0
  %3642 = vmatprep.subr.bf16.mxu0 0
  %3643 = vmatpush1.bf16.msra.mxu0 0
  %3644 = vmatprep.subr.bf16.mxu0 0
  %3645 = vmatpush1.bf16.msra.mxu0 0
  %3646 = vmatprep.subr.bf16.mxu0 %v2488
  %3647 = vmatpush1.bf16.msra.mxu0 %v2487
  %3648 = vmatprep.subr.bf16.mxu0 %v2360
  %3649 = vmatpush1.bf16.msra.mxu0 %v2359
  %3650 = vmatprep.subr.bf16.mxu0 %v2232
  %3651 = vmatpush1.bf16.msra.mxu0 %v2231
  %3652 = vmatprep.subr.bf16.mxu0 %v2104
  %3653 = vmatpush1.bf16.msra.mxu0 %v2103
  %3654 = vmatprep.subr.bf16.mxu0 0
  %3655 = vmatpush2.bf16.msra.mxu0 0
  %3656 = vmatprep.subr.bf16.mxu0 0
  %3657 = vmatpush2.bf16.msra.mxu0 0
  %3658 = vmatprep.subr.bf16.mxu0 0
  %3659 = vmatpush2.bf16.msra.mxu0 0
  %3660 = vmatprep.subr.bf16.mxu0 0
  %3661 = vmatpush2.bf16.msra.mxu0 0
  %3662 = vmatprep.subr.bf16.mxu0 0
  %3663 = vmatpush2.bf16.msra.mxu0 0
  %3664 = vmatprep.subr.bf16.mxu0 0
  %3665 = vmatpush2.bf16.msra.mxu0 0
  %3666 = vmatprep.subr.bf16.mxu0 0
  %3667 = vmatpush2.bf16.msra.mxu0 0
  %3668 = vmatprep.subr.bf16.mxu0 0
  %3669 = vmatpush2.bf16.msra.mxu0 0
  %3670 = vmatprep.mubr.bf16.mxu0 0
  %3671 = vmatmul.mubr.bf16.gmra.mxu0 %v3103
  %v3672 = vpop.f32.mrf.mxu0
  %v3673 = vadd.f32 0.0, %v3672
  %v3674 = vpop.f32.mrf.mxu0
  %v3675 = vadd.f32 0.0, %v3674
  %v3676 = vpop.f32.mrf.mxu0
  %v3677 = vpop.f32.mrf.mxu0
  %3678 = vdwg.mxu0
  %3679 = vmatprep.subr.bf16.mxu0 0
  %3680 = vmatpush1.bf16.msra.mxu0 0
  %3681 = vmatprep.subr.bf16.mxu0 0
  %3682 = vmatpush1.bf16.msra.mxu0 0
  %3683 = vmatprep.subr.bf16.mxu0 0
  %3684 = vmatpush1.bf16.msra.mxu0 0
  %3685 = vmatprep.subr.bf16.mxu0 0
  %3686 = vmatpush1.bf16.msra.mxu0 0
  %3687 = vmatprep.subr.bf16.mxu0 %v2490
  %3688 = vmatpush1.bf16.msra.mxu0 %v2489
  %3689 = vmatprep.subr.bf16.mxu0 %v2362
  %3690 = vmatpush1.bf16.msra.mxu0 %v2361
  %3691 = vmatprep.subr.bf16.mxu0 %v2234
  %3692 = vmatpush1.bf16.msra.mxu0 %v2233
  %3693 = vmatprep.subr.bf16.mxu0 %v2106
  %3694 = vmatpush1.bf16.msra.mxu0 %v2105
  %3695 = vmatprep.subr.bf16.mxu0 0
  %3696 = vmatpush2.bf16.msra.mxu0 0
  %3697 = vmatprep.subr.bf16.mxu0 0
  %3698 = vmatpush2.bf16.msra.mxu0 0
  %3699 = vmatprep.subr.bf16.mxu0 0
  %3700 = vmatpush2.bf16.msra.mxu0 0
  %3701 = vmatprep.subr.bf16.mxu0 0
  %3702 = vmatpush2.bf16.msra.mxu0 0
  %3703 = vmatprep.subr.bf16.mxu0 0
  %3704 = vmatpush2.bf16.msra.mxu0 0
  %3705 = vmatprep.subr.bf16.mxu0 0
  %3706 = vmatpush2.bf16.msra.mxu0 0
  %3707 = vmatprep.subr.bf16.mxu0 0
  %3708 = vmatpush2.bf16.msra.mxu0 0
  %3709 = vmatprep.subr.bf16.mxu0 0
  %3710 = vmatpush2.bf16.msra.mxu0 0
  %3711 = vmatprep.mubr.bf16.mxu0 0
  %3712 = vmatmul.mubr.bf16.gmra.mxu0 %v3103
  %v3713 = vpop.f32.mrf.mxu0
  %v3714 = vadd.f32 0.0, %v3713
  %v3715 = vpop.f32.mrf.mxu0
  %v3716 = vadd.f32 0.0, %v3715
  %v3717 = vpop.f32.mrf.mxu0
  %v3718 = vpop.f32.mrf.mxu0
  %3719 = vdwg.mxu0
  %3720 = vmatprep.subr.bf16.mxu0 0
  %3721 = vmatpush1.bf16.msra.mxu0 0
  %3722 = vmatprep.subr.bf16.mxu0 0
  %3723 = vmatpush1.bf16.msra.mxu0 0
  %3724 = vmatprep.subr.bf16.mxu0 0
  %3725 = vmatpush1.bf16.msra.mxu0 0
  %3726 = vmatprep.subr.bf16.mxu0 0
  %3727 = vmatpush1.bf16.msra.mxu0 0
  %3728 = vmatprep.subr.bf16.mxu0 %v2492
  %3729 = vmatpush1.bf16.msra.mxu0 %v2491
  %3730 = vmatprep.subr.bf16.mxu0 %v2364
  %3731 = vmatpush1.bf16.msra.mxu0 %v2363
  %3732 = vmatprep.subr.bf16.mxu0 %v2236
  %3733 = vmatpush1.bf16.msra.mxu0 %v2235
  %3734 = vmatprep.subr.bf16.mxu0 %v2108
  %3735 = vmatpush1.bf16.msra.mxu0 %v2107
  %3736 = vmatprep.subr.bf16.mxu0 0
  %3737 = vmatpush2.bf16.msra.mxu0 0
  %3738 = vmatprep.subr.bf16.mxu0 0
  %3739 = vmatpush2.bf16.msra.mxu0 0
  %3740 = vmatprep.subr.bf16.mxu0 0
  %3741 = vmatpush2.bf16.msra.mxu0 0
  %3742 = vmatprep.subr.bf16.mxu0 0
  %3743 = vmatpush2.bf16.msra.mxu0 0
  %3744 = vmatprep.subr.bf16.mxu0 0
  %3745 = vmatpush2.bf16.msra.mxu0 0
  %3746 = vmatprep.subr.bf16.mxu0 0
  %3747 = vmatpush2.bf16.msra.mxu0 0
  %3748 = vmatprep.subr.bf16.mxu0 0
  %3749 = vmatpush2.bf16.msra.mxu0 0
  %3750 = vmatprep.subr.bf16.mxu0 0
  %3751 = vmatpush2.bf16.msra.mxu0 0
  %3752 = vmatprep.mubr.bf16.mxu0 0
  %3753 = vmatmul.mubr.bf16.gmra.mxu0 %v3103
  %v3754 = vpop.f32.mrf.mxu0
  %v3755 = vadd.f32 0.0, %v3754
  %v3756 = vpop.f32.mrf.mxu0
  %v3757 = vadd.f32 0.0, %v3756
  %v3758 = vpop.f32.mrf.mxu0
  %v3759 = vpop.f32.mrf.mxu0
  %3760 = vdwg.mxu0
  %3761 = vmatprep.subr.bf16.mxu0 0
  %3762 = vmatpush1.bf16.msra.mxu0 0
  %3763 = vmatprep.subr.bf16.mxu0 0
  %3764 = vmatpush1.bf16.msra.mxu0 0
  %3765 = vmatprep.subr.bf16.mxu0 0
  %3766 = vmatpush1.bf16.msra.mxu0 0
  %3767 = vmatprep.subr.bf16.mxu0 0
  %3768 = vmatpush1.bf16.msra.mxu0 0
  %3769 = vmatprep.subr.bf16.mxu0 %v2494
  %3770 = vmatpush1.bf16.msra.mxu0 %v2493
  %3771 = vmatprep.subr.bf16.mxu0 %v2366
  %3772 = vmatpush1.bf16.msra.mxu0 %v2365
  %3773 = vmatprep.subr.bf16.mxu0 %v2238
  %3774 = vmatpush1.bf16.msra.mxu0 %v2237
  %3775 = vmatprep.subr.bf16.mxu0 %v2110
  %3776 = vmatpush1.bf16.msra.mxu0 %v2109
  %3777 = vmatprep.subr.bf16.mxu0 0
  %3778 = vmatpush2.bf16.msra.mxu0 0
  %3779 = vmatprep.subr.bf16.mxu0 0
  %3780 = vmatpush2.bf16.msra.mxu0 0
  %3781 = vmatprep.subr.bf16.mxu0 0
  %3782 = vmatpush2.bf16.msra.mxu0 0
  %3783 = vmatprep.subr.bf16.mxu0 0
  %3784 = vmatpush2.bf16.msra.mxu0 0
  %3785 = vmatprep.subr.bf16.mxu0 0
  %3786 = vmatpush2.bf16.msra.mxu0 0
  %3787 = vmatprep.subr.bf16.mxu0 0
  %3788 = vmatpush2.bf16.msra.mxu0 0
  %3789 = vmatprep.subr.bf16.mxu0 0
  %3790 = vmatpush2.bf16.msra.mxu0 0
  %3791 = vmatprep.subr.bf16.mxu0 0
  %3792 = vmatpush2.bf16.msra.mxu0 0
  %3793 = vmatprep.mubr.bf16.mxu0 0
  %3794 = vmatmul.mubr.bf16.gmra.mxu0 %v3103
  %v3795 = vpop.f32.mrf.mxu0
  %v3796 = vadd.f32 0.0, %v3795
  %v3797 = vpop.f32.mrf.mxu0
  %v3798 = vadd.f32 0.0, %v3797
  %v3799 = vpop.f32.mrf.mxu0
  %v3800 = vpop.f32.mrf.mxu0
  %3801 = vdwg.mxu0
  %3802 = vmatprep.subr.bf16.mxu0 0
  %3803 = vmatpush1.bf16.msra.mxu0 0
  %3804 = vmatprep.subr.bf16.mxu0 0
  %3805 = vmatpush1.bf16.msra.mxu0 0
  %3806 = vmatprep.subr.bf16.mxu0 0
  %3807 = vmatpush1.bf16.msra.mxu0 0
  %3808 = vmatprep.subr.bf16.mxu0 0
  %3809 = vmatpush1.bf16.msra.mxu0 0
  %3810 = vmatprep.subr.bf16.mxu0 %v2496
  %3811 = vmatpush1.bf16.msra.mxu0 %v2495
  %3812 = vmatprep.subr.bf16.mxu0 %v2368
  %3813 = vmatpush1.bf16.msra.mxu0 %v2367
  %3814 = vmatprep.subr.bf16.mxu0 %v2240
  %3815 = vmatpush1.bf16.msra.mxu0 %v2239
  %3816 = vmatprep.subr.bf16.mxu0 %v2112
  %3817 = vmatpush1.bf16.msra.mxu0 %v2111
  %3818 = vmatprep.subr.bf16.mxu0 0
  %3819 = vmatpush2.bf16.msra.mxu0 0
  %3820 = vmatprep.subr.bf16.mxu0 0
  %3821 = vmatpush2.bf16.msra.mxu0 0
  %3822 = vmatprep.subr.bf16.mxu0 0
  %3823 = vmatpush2.bf16.msra.mxu0 0
  %3824 = vmatprep.subr.bf16.mxu0 0
  %3825 = vmatpush2.bf16.msra.mxu0 0
  %3826 = vmatprep.subr.bf16.mxu0 0
  %3827 = vmatpush2.bf16.msra.mxu0 0
  %3828 = vmatprep.subr.bf16.mxu0 0
  %3829 = vmatpush2.bf16.msra.mxu0 0
  %3830 = vmatprep.subr.bf16.mxu0 0
  %3831 = vmatpush2.bf16.msra.mxu0 0
  %3832 = vmatprep.subr.bf16.mxu0 0
  %3833 = vmatpush2.bf16.msra.mxu0 0
  %3834 = vmatprep.mubr.bf16.mxu0 0
  %3835 = vmatmul.mubr.bf16.gmra.mxu0 %v3103
  %v3836 = vpop.f32.mrf.mxu0
  %v3837 = vadd.f32 0.0, %v3836
  %v3838 = vpop.f32.mrf.mxu0
  %v3839 = vadd.f32 0.0, %v3838
  %v3840 = vpop.f32.mrf.mxu0
  %v3841 = vpop.f32.mrf.mxu0
  %3842 = vdwg.mxu0
  %3843 = vmatprep.subr.bf16.mxu0 0
  %3844 = vmatpush1.bf16.msra.mxu0 0
  %3845 = vmatprep.subr.bf16.mxu0 0
  %3846 = vmatpush1.bf16.msra.mxu0 0
  %3847 = vmatprep.subr.bf16.mxu0 0
  %3848 = vmatpush1.bf16.msra.mxu0 0
  %3849 = vmatprep.subr.bf16.mxu0 0
  %3850 = vmatpush1.bf16.msra.mxu0 0
  %3851 = vmatprep.subr.bf16.mxu0 %v2498
  %3852 = vmatpush1.bf16.msra.mxu0 %v2497
  %3853 = vmatprep.subr.bf16.mxu0 %v2370
  %3854 = vmatpush1.bf16.msra.mxu0 %v2369
  %3855 = vmatprep.subr.bf16.mxu0 %v2242
  %3856 = vmatpush1.bf16.msra.mxu0 %v2241
  %3857 = vmatprep.subr.bf16.mxu0 %v2114
  %3858 = vmatpush1.bf16.msra.mxu0 %v2113
  %3859 = vmatprep.subr.bf16.mxu0 0
  %3860 = vmatpush2.bf16.msra.mxu0 0
  %3861 = vmatprep.subr.bf16.mxu0 0
  %3862 = vmatpush2.bf16.msra.mxu0 0
  %3863 = vmatprep.subr.bf16.mxu0 0
  %3864 = vmatpush2.bf16.msra.mxu0 0
  %3865 = vmatprep.subr.bf16.mxu0 0
  %3866 = vmatpush2.bf16.msra.mxu0 0
  %3867 = vmatprep.subr.bf16.mxu0 0
  %3868 = vmatpush2.bf16.msra.mxu0 0
  %3869 = vmatprep.subr.bf16.mxu0 0
  %3870 = vmatpush2.bf16.msra.mxu0 0
  %3871 = vmatprep.subr.bf16.mxu0 0
  %3872 = vmatpush2.bf16.msra.mxu0 0
  %3873 = vmatprep.subr.bf16.mxu0 0
  %3874 = vmatpush2.bf16.msra.mxu0 0
  %3875 = vmatprep.mubr.bf16.mxu0 0
  %3876 = vmatmul.mubr.bf16.gmra.mxu0 %v3103
  %v3877 = vpop.f32.mrf.mxu0
  %v3878 = vadd.f32 0.0, %v3877
  %v3879 = vpop.f32.mrf.mxu0
  %v3880 = vadd.f32 0.0, %v3879
  %v3881 = vpop.f32.mrf.mxu0
  %v3882 = vpop.f32.mrf.mxu0
  %3883 = vdwg.mxu0
  %3884 = vmatprep.subr.bf16.mxu0 0
  %3885 = vmatpush1.bf16.msra.mxu0 0
  %3886 = vmatprep.subr.bf16.mxu0 0
  %3887 = vmatpush1.bf16.msra.mxu0 0
  %3888 = vmatprep.subr.bf16.mxu0 0
  %3889 = vmatpush1.bf16.msra.mxu0 0
  %3890 = vmatprep.subr.bf16.mxu0 0
  %3891 = vmatpush1.bf16.msra.mxu0 0
  %3892 = vmatprep.subr.bf16.mxu0 %v2500
  %3893 = vmatpush1.bf16.msra.mxu0 %v2499
  %3894 = vmatprep.subr.bf16.mxu0 %v2372
  %3895 = vmatpush1.bf16.msra.mxu0 %v2371
  %3896 = vmatprep.subr.bf16.mxu0 %v2244
  %3897 = vmatpush1.bf16.msra.mxu0 %v2243
  %3898 = vmatprep.subr.bf16.mxu0 %v2116
  %3899 = vmatpush1.bf16.msra.mxu0 %v2115
  %3900 = vmatprep.subr.bf16.mxu0 0
  %3901 = vmatpush2.bf16.msra.mxu0 0
  %3902 = vmatprep.subr.bf16.mxu0 0
  %3903 = vmatpush2.bf16.msra.mxu0 0
  %3904 = vmatprep.subr.bf16.mxu0 0
  %3905 = vmatpush2.bf16.msra.mxu0 0
  %3906 = vmatprep.subr.bf16.mxu0 0
  %3907 = vmatpush2.bf16.msra.mxu0 0
  %3908 = vmatprep.subr.bf16.mxu0 0
  %3909 = vmatpush2.bf16.msra.mxu0 0
  %3910 = vmatprep.subr.bf16.mxu0 0
  %3911 = vmatpush2.bf16.msra.mxu0 0
  %3912 = vmatprep.subr.bf16.mxu0 0
  %3913 = vmatpush2.bf16.msra.mxu0 0
  %3914 = vmatprep.subr.bf16.mxu0 0
  %3915 = vmatpush2.bf16.msra.mxu0 0
  %3916 = vmatprep.mubr.bf16.mxu0 0
  %3917 = vmatmul.mubr.bf16.gmra.mxu0 %v3103
  %v3918 = vpop.f32.mrf.mxu0
  %v3919 = vadd.f32 0.0, %v3918
  %v3920 = vpop.f32.mrf.mxu0
  %v3921 = vadd.f32 0.0, %v3920
  %v3922 = vpop.f32.mrf.mxu0
  %v3923 = vpop.f32.mrf.mxu0
  %3924 = vdwg.mxu0
  %3925 = vmatprep.subr.bf16.mxu0 0
  %3926 = vmatpush1.bf16.msra.mxu0 0
  %3927 = vmatprep.subr.bf16.mxu0 0
  %3928 = vmatpush1.bf16.msra.mxu0 0
  %3929 = vmatprep.subr.bf16.mxu0 0
  %3930 = vmatpush1.bf16.msra.mxu0 0
  %3931 = vmatprep.subr.bf16.mxu0 0
  %3932 = vmatpush1.bf16.msra.mxu0 0
  %3933 = vmatprep.subr.bf16.mxu0 %v2502
  %3934 = vmatpush1.bf16.msra.mxu0 %v2501
  %3935 = vmatprep.subr.bf16.mxu0 %v2374
  %3936 = vmatpush1.bf16.msra.mxu0 %v2373
  %3937 = vmatprep.subr.bf16.mxu0 %v2246
  %3938 = vmatpush1.bf16.msra.mxu0 %v2245
  %3939 = vmatprep.subr.bf16.mxu0 %v2118
  %3940 = vmatpush1.bf16.msra.mxu0 %v2117
  %3941 = vmatprep.subr.bf16.mxu0 0
  %3942 = vmatpush2.bf16.msra.mxu0 0
  %3943 = vmatprep.subr.bf16.mxu0 0
  %3944 = vmatpush2.bf16.msra.mxu0 0
  %3945 = vmatprep.subr.bf16.mxu0 0
  %3946 = vmatpush2.bf16.msra.mxu0 0
  %3947 = vmatprep.subr.bf16.mxu0 0
  %3948 = vmatpush2.bf16.msra.mxu0 0
  %3949 = vmatprep.subr.bf16.mxu0 0
  %3950 = vmatpush2.bf16.msra.mxu0 0
  %3951 = vmatprep.subr.bf16.mxu0 0
  %3952 = vmatpush2.bf16.msra.mxu0 0
  %3953 = vmatprep.subr.bf16.mxu0 0
  %3954 = vmatpush2.bf16.msra.mxu0 0
  %3955 = vmatprep.subr.bf16.mxu0 0
  %3956 = vmatpush2.bf16.msra.mxu0 0
  %3957 = vmatprep.mubr.bf16.mxu0 0
  %3958 = vmatmul.mubr.bf16.gmra.mxu0 %v3103
  %v3959 = vpop.f32.mrf.mxu0
  %v3960 = vadd.f32 0.0, %v3959
  %v3961 = vpop.f32.mrf.mxu0
  %v3962 = vadd.f32 0.0, %v3961
  %v3963 = vpop.f32.mrf.mxu0
  %v3964 = vpop.f32.mrf.mxu0
  %3965 = vdwg.mxu0
  %3966 = vmatprep.subr.bf16.mxu0 0
  %3967 = vmatpush1.bf16.msra.mxu0 0
  %3968 = vmatprep.subr.bf16.mxu0 0
  %3969 = vmatpush1.bf16.msra.mxu0 0
  %3970 = vmatprep.subr.bf16.mxu0 0
  %3971 = vmatpush1.bf16.msra.mxu0 0
  %3972 = vmatprep.subr.bf16.mxu0 0
  %3973 = vmatpush1.bf16.msra.mxu0 0
  %3974 = vmatprep.subr.bf16.mxu0 %v2504
  %3975 = vmatpush1.bf16.msra.mxu0 %v2503
  %3976 = vmatprep.subr.bf16.mxu0 %v2376
  %3977 = vmatpush1.bf16.msra.mxu0 %v2375
  %3978 = vmatprep.subr.bf16.mxu0 %v2248
  %3979 = vmatpush1.bf16.msra.mxu0 %v2247
  %3980 = vmatprep.subr.bf16.mxu0 %v2120
  %3981 = vmatpush1.bf16.msra.mxu0 %v2119
  %3982 = vmatprep.subr.bf16.mxu0 0
  %3983 = vmatpush2.bf16.msra.mxu0 0
  %3984 = vmatprep.subr.bf16.mxu0 0
  %3985 = vmatpush2.bf16.msra.mxu0 0
  %3986 = vmatprep.subr.bf16.mxu0 0
  %3987 = vmatpush2.bf16.msra.mxu0 0
  %3988 = vmatprep.subr.bf16.mxu0 0
  %3989 = vmatpush2.bf16.msra.mxu0 0
  %3990 = vmatprep.subr.bf16.mxu0 0
  %3991 = vmatpush2.bf16.msra.mxu0 0
  %3992 = vmatprep.subr.bf16.mxu0 0
  %3993 = vmatpush2.bf16.msra.mxu0 0
  %3994 = vmatprep.subr.bf16.mxu0 0
  %3995 = vmatpush2.bf16.msra.mxu0 0
  %3996 = vmatprep.subr.bf16.mxu0 0
  %3997 = vmatpush2.bf16.msra.mxu0 0
  %3998 = vmatprep.mubr.bf16.mxu0 0
  %3999 = vmatmul.mubr.bf16.gmra.mxu0 %v3103
  %v4000 = vpop.f32.mrf.mxu0
  %v4001 = vadd.f32 0.0, %v4000
  %v4002 = vpop.f32.mrf.mxu0
  %v4003 = vadd.f32 0.0, %v4002
  %v4004 = vpop.f32.mrf.mxu0
  %v4005 = vpop.f32.mrf.mxu0
  %4006 = vdwg.mxu0
  %4007 = vmatprep.subr.bf16.mxu0 0
  %4008 = vmatpush1.bf16.msra.mxu0 0
  %4009 = vmatprep.subr.bf16.mxu0 0
  %4010 = vmatpush1.bf16.msra.mxu0 0
  %4011 = vmatprep.subr.bf16.mxu0 0
  %4012 = vmatpush1.bf16.msra.mxu0 0
  %4013 = vmatprep.subr.bf16.mxu0 0
  %4014 = vmatpush1.bf16.msra.mxu0 0
  %4015 = vmatprep.subr.bf16.mxu0 %v2506
  %4016 = vmatpush1.bf16.msra.mxu0 %v2505
  %4017 = vmatprep.subr.bf16.mxu0 %v2378
  %4018 = vmatpush1.bf16.msra.mxu0 %v2377
  %4019 = vmatprep.subr.bf16.mxu0 %v2250
  %4020 = vmatpush1.bf16.msra.mxu0 %v2249
  %4021 = vmatprep.subr.bf16.mxu0 %v2122
  %4022 = vmatpush1.bf16.msra.mxu0 %v2121
  %4023 = vmatprep.subr.bf16.mxu0 0
  %4024 = vmatpush2.bf16.msra.mxu0 0
  %4025 = vmatprep.subr.bf16.mxu0 0
  %4026 = vmatpush2.bf16.msra.mxu0 0
  %4027 = vmatprep.subr.bf16.mxu0 0
  %4028 = vmatpush2.bf16.msra.mxu0 0
  %4029 = vmatprep.subr.bf16.mxu0 0
  %4030 = vmatpush2.bf16.msra.mxu0 0
  %4031 = vmatprep.subr.bf16.mxu0 0
  %4032 = vmatpush2.bf16.msra.mxu0 0
  %4033 = vmatprep.subr.bf16.mxu0 0
  %4034 = vmatpush2.bf16.msra.mxu0 0
  %4035 = vmatprep.subr.bf16.mxu0 0
  %4036 = vmatpush2.bf16.msra.mxu0 0
  %4037 = vmatprep.subr.bf16.mxu0 0
  %4038 = vmatpush2.bf16.msra.mxu0 0
  %4039 = vmatprep.mubr.bf16.mxu0 0
  %4040 = vmatmul.mubr.bf16.gmra.mxu0 %v3103
  %v4041 = vpop.f32.mrf.mxu0
  %v4042 = vadd.f32 0.0, %v4041
  %v4043 = vpop.f32.mrf.mxu0
  %v4044 = vadd.f32 0.0, %v4043
  %v4045 = vpop.f32.mrf.mxu0
  %v4046 = vpop.f32.mrf.mxu0
  %4047 = vdwg.mxu0
  %4048 = vmatprep.subr.bf16.mxu0 0
  %4049 = vmatpush1.bf16.msra.mxu0 0
  %4050 = vmatprep.subr.bf16.mxu0 0
  %4051 = vmatpush1.bf16.msra.mxu0 0
  %4052 = vmatprep.subr.bf16.mxu0 0
  %4053 = vmatpush1.bf16.msra.mxu0 0
  %4054 = vmatprep.subr.bf16.mxu0 0
  %4055 = vmatpush1.bf16.msra.mxu0 0
  %4056 = vmatprep.subr.bf16.mxu0 %v2508
  %4057 = vmatpush1.bf16.msra.mxu0 %v2507
  %4058 = vmatprep.subr.bf16.mxu0 %v2380
  %4059 = vmatpush1.bf16.msra.mxu0 %v2379
  %4060 = vmatprep.subr.bf16.mxu0 %v2252
  %4061 = vmatpush1.bf16.msra.mxu0 %v2251
  %4062 = vmatprep.subr.bf16.mxu0 %v2124
  %4063 = vmatpush1.bf16.msra.mxu0 %v2123
  %4064 = vmatprep.subr.bf16.mxu0 0
  %4065 = vmatpush2.bf16.msra.mxu0 0
  %4066 = vmatprep.subr.bf16.mxu0 0
  %4067 = vmatpush2.bf16.msra.mxu0 0
  %4068 = vmatprep.subr.bf16.mxu0 0
  %4069 = vmatpush2.bf16.msra.mxu0 0
  %4070 = vmatprep.subr.bf16.mxu0 0
  %4071 = vmatpush2.bf16.msra.mxu0 0
  %4072 = vmatprep.subr.bf16.mxu0 0
  %4073 = vmatpush2.bf16.msra.mxu0 0
  %4074 = vmatprep.subr.bf16.mxu0 0
  %4075 = vmatpush2.bf16.msra.mxu0 0
  %4076 = vmatprep.subr.bf16.mxu0 0
  %4077 = vmatpush2.bf16.msra.mxu0 0
  %4078 = vmatprep.subr.bf16.mxu0 0
  %4079 = vmatpush2.bf16.msra.mxu0 0
  %4080 = vmatprep.mubr.bf16.mxu0 0
  %4081 = vmatmul.mubr.bf16.gmra.mxu0 %v3103
  %v4082 = vpop.f32.mrf.mxu0
  %v4083 = vadd.f32 0.0, %v4082
  %v4084 = vpop.f32.mrf.mxu0
  %v4085 = vadd.f32 0.0, %v4084
  %v4086 = vpop.f32.mrf.mxu0
  %v4087 = vpop.f32.mrf.mxu0
  %4088 = vdwg.mxu0
  %4089 = vmatprep.subr.bf16.mxu0 0
  %4090 = vmatpush1.bf16.msra.mxu0 0
  %4091 = vmatprep.subr.bf16.mxu0 0
  %4092 = vmatpush1.bf16.msra.mxu0 0
  %4093 = vmatprep.subr.bf16.mxu0 0
  %4094 = vmatpush1.bf16.msra.mxu0 0
  %4095 = vmatprep.subr.bf16.mxu0 0
  %4096 = vmatpush1.bf16.msra.mxu0 0
  %4097 = vmatprep.subr.bf16.mxu0 %v2510
  %4098 = vmatpush1.bf16.msra.mxu0 %v2509
  %4099 = vmatprep.subr.bf16.mxu0 %v2382
  %4100 = vmatpush1.bf16.msra.mxu0 %v2381
  %4101 = vmatprep.subr.bf16.mxu0 %v2254
  %4102 = vmatpush1.bf16.msra.mxu0 %v2253
  %4103 = vmatprep.subr.bf16.mxu0 %v2126
  %4104 = vmatpush1.bf16.msra.mxu0 %v2125
  %4105 = vmatprep.subr.bf16.mxu0 0
  %4106 = vmatpush2.bf16.msra.mxu0 0
  %4107 = vmatprep.subr.bf16.mxu0 0
  %4108 = vmatpush2.bf16.msra.mxu0 0
  %4109 = vmatprep.subr.bf16.mxu0 0
  %4110 = vmatpush2.bf16.msra.mxu0 0
  %4111 = vmatprep.subr.bf16.mxu0 0
  %4112 = vmatpush2.bf16.msra.mxu0 0
  %4113 = vmatprep.subr.bf16.mxu0 0
  %4114 = vmatpush2.bf16.msra.mxu0 0
  %4115 = vmatprep.subr.bf16.mxu0 0
  %4116 = vmatpush2.bf16.msra.mxu0 0
  %4117 = vmatprep.subr.bf16.mxu0 0
  %4118 = vmatpush2.bf16.msra.mxu0 0
  %4119 = vmatprep.subr.bf16.mxu0 0
  %4120 = vmatpush2.bf16.msra.mxu0 0
  %4121 = vmatprep.mubr.bf16.mxu0 0
  %4122 = vmatmul.mubr.bf16.gmra.mxu0 %v3103
  %v4123 = vpop.f32.mrf.mxu0
  %v4124 = vadd.f32 0.0, %v4123
  %v4125 = vpop.f32.mrf.mxu0
  %v4126 = vadd.f32 0.0, %v4125
  %v4127 = vpop.f32.mrf.mxu0
  %v4128 = vpop.f32.mrf.mxu0
  %4129 = vdwg.mxu0
  %4130 = vmatprep.subr.bf16.mxu0 0
  %4131 = vmatpush1.bf16.msra.mxu0 0
  %4132 = vmatprep.subr.bf16.mxu0 0
  %4133 = vmatpush1.bf16.msra.mxu0 0
  %4134 = vmatprep.subr.bf16.mxu0 0
  %4135 = vmatpush1.bf16.msra.mxu0 0
  %4136 = vmatprep.subr.bf16.mxu0 0
  %4137 = vmatpush1.bf16.msra.mxu0 0
  %4138 = vmatprep.subr.bf16.mxu0 %v2512
  %4139 = vmatpush1.bf16.msra.mxu0 %v2511
  %4140 = vmatprep.subr.bf16.mxu0 %v2384
  %4141 = vmatpush1.bf16.msra.mxu0 %v2383
  %4142 = vmatprep.subr.bf16.mxu0 %v2256
  %4143 = vmatpush1.bf16.msra.mxu0 %v2255
  %4144 = vmatprep.subr.bf16.mxu0 %v2128
  %4145 = vmatpush1.bf16.msra.mxu0 %v2127
  %4146 = vmatprep.subr.bf16.mxu0 0
  %4147 = vmatpush2.bf16.msra.mxu0 0
  %4148 = vmatprep.subr.bf16.mxu0 0
  %4149 = vmatpush2.bf16.msra.mxu0 0
  %4150 = vmatprep.subr.bf16.mxu0 0
  %4151 = vmatpush2.bf16.msra.mxu0 0
  %4152 = vmatprep.subr.bf16.mxu0 0
  %4153 = vmatpush2.bf16.msra.mxu0 0
  %4154 = vmatprep.subr.bf16.mxu0 0
  %4155 = vmatpush2.bf16.msra.mxu0 0
  %4156 = vmatprep.subr.bf16.mxu0 0
  %4157 = vmatpush2.bf16.msra.mxu0 0
  %4158 = vmatprep.subr.bf16.mxu0 0
  %4159 = vmatpush2.bf16.msra.mxu0 0
  %4160 = vmatprep.subr.bf16.mxu0 0
  %4161 = vmatpush2.bf16.msra.mxu0 0
  %4162 = vmatprep.mubr.bf16.mxu0 0
  %4163 = vmatmul.mubr.bf16.gmra.mxu0 %v3103
  %v4164 = vpop.f32.mrf.mxu0
  %v4165 = vadd.f32 0.0, %v4164
  %v4166 = vpop.f32.mrf.mxu0
  %v4167 = vadd.f32 0.0, %v4166
  %v4168 = vpop.f32.mrf.mxu0
  %v4169 = vpop.f32.mrf.mxu0
  %4170 = vdwg.mxu0
  %4171 = vmatprep.subr.bf16.mxu0 0
  %4172 = vmatpush1.bf16.msra.mxu0 0
  %4173 = vmatprep.subr.bf16.mxu0 0
  %4174 = vmatpush1.bf16.msra.mxu0 0
  %4175 = vmatprep.subr.bf16.mxu0 0
  %4176 = vmatpush1.bf16.msra.mxu0 0
  %4177 = vmatprep.subr.bf16.mxu0 0
  %4178 = vmatpush1.bf16.msra.mxu0 0
  %4179 = vmatprep.subr.bf16.mxu0 %v2514
  %4180 = vmatpush1.bf16.msra.mxu0 %v2513
  %4181 = vmatprep.subr.bf16.mxu0 %v2386
  %4182 = vmatpush1.bf16.msra.mxu0 %v2385
  %4183 = vmatprep.subr.bf16.mxu0 %v2258
  %4184 = vmatpush1.bf16.msra.mxu0 %v2257
  %4185 = vmatprep.subr.bf16.mxu0 %v2130
  %4186 = vmatpush1.bf16.msra.mxu0 %v2129
  %4187 = vmatprep.subr.bf16.mxu0 0
  %4188 = vmatpush2.bf16.msra.mxu0 0
  %4189 = vmatprep.subr.bf16.mxu0 0
  %4190 = vmatpush2.bf16.msra.mxu0 0
  %4191 = vmatprep.subr.bf16.mxu0 0
  %4192 = vmatpush2.bf16.msra.mxu0 0
  %4193 = vmatprep.subr.bf16.mxu0 0
  %4194 = vmatpush2.bf16.msra.mxu0 0
  %4195 = vmatprep.subr.bf16.mxu0 0
  %4196 = vmatpush2.bf16.msra.mxu0 0
  %4197 = vmatprep.subr.bf16.mxu0 0
  %4198 = vmatpush2.bf16.msra.mxu0 0
  %4199 = vmatprep.subr.bf16.mxu0 0
  %4200 = vmatpush2.bf16.msra.mxu0 0
  %4201 = vmatprep.subr.bf16.mxu0 0
  %4202 = vmatpush2.bf16.msra.mxu0 0
  %4203 = vmatprep.mubr.bf16.mxu0 0
  %4204 = vmatmul.mubr.bf16.gmra.mxu0 %v3103
  %v4205 = vpop.f32.mrf.mxu0
  %v4206 = vadd.f32 0.0, %v4205
  %v4207 = vpop.f32.mrf.mxu0
  %v4208 = vadd.f32 0.0, %v4207
  %v4209 = vpop.f32.mrf.mxu0
  %v4210 = vpop.f32.mrf.mxu0
  %4211 = vdwg.mxu0
  %4212 = vmatprep.subr.bf16.mxu0 0
  %4213 = vmatpush1.bf16.msra.mxu0 0
  %4214 = vmatprep.subr.bf16.mxu0 0
  %4215 = vmatpush1.bf16.msra.mxu0 0
  %4216 = vmatprep.subr.bf16.mxu0 0
  %4217 = vmatpush1.bf16.msra.mxu0 0
  %4218 = vmatprep.subr.bf16.mxu0 0
  %4219 = vmatpush1.bf16.msra.mxu0 0
  %4220 = vmatprep.subr.bf16.mxu0 %v2516
  %4221 = vmatpush1.bf16.msra.mxu0 %v2515
  %4222 = vmatprep.subr.bf16.mxu0 %v2388
  %4223 = vmatpush1.bf16.msra.mxu0 %v2387
  %4224 = vmatprep.subr.bf16.mxu0 %v2260
  %4225 = vmatpush1.bf16.msra.mxu0 %v2259
  %4226 = vmatprep.subr.bf16.mxu0 %v2132
  %4227 = vmatpush1.bf16.msra.mxu0 %v2131
  %4228 = vmatprep.subr.bf16.mxu0 0
  %4229 = vmatpush2.bf16.msra.mxu0 0
  %4230 = vmatprep.subr.bf16.mxu0 0
  %4231 = vmatpush2.bf16.msra.mxu0 0
  %4232 = vmatprep.subr.bf16.mxu0 0
  %4233 = vmatpush2.bf16.msra.mxu0 0
  %4234 = vmatprep.subr.bf16.mxu0 0
  %4235 = vmatpush2.bf16.msra.mxu0 0
  %4236 = vmatprep.subr.bf16.mxu0 0
  %4237 = vmatpush2.bf16.msra.mxu0 0
  %4238 = vmatprep.subr.bf16.mxu0 0
  %4239 = vmatpush2.bf16.msra.mxu0 0
  %4240 = vmatprep.subr.bf16.mxu0 0
  %4241 = vmatpush2.bf16.msra.mxu0 0
  %4242 = vmatprep.subr.bf16.mxu0 0
  %4243 = vmatpush2.bf16.msra.mxu0 0
  %4244 = vmatprep.mubr.bf16.mxu0 0
  %4245 = vmatmul.mubr.bf16.gmra.mxu0 %v3103
  %v4246 = vpop.f32.mrf.mxu0
  %v4247 = vadd.f32 0.0, %v4246
  %v4248 = vpop.f32.mrf.mxu0
  %v4249 = vadd.f32 0.0, %v4248
  %v4250 = vpop.f32.mrf.mxu0
  %v4251 = vpop.f32.mrf.mxu0
  %4252 = vdwg.mxu0
  %4253 = vmatprep.subr.bf16.mxu0 0
  %4254 = vmatpush1.bf16.msra.mxu0 0
  %4255 = vmatprep.subr.bf16.mxu0 0
  %4256 = vmatpush1.bf16.msra.mxu0 0
  %4257 = vmatprep.subr.bf16.mxu0 0
  %4258 = vmatpush1.bf16.msra.mxu0 0
  %4259 = vmatprep.subr.bf16.mxu0 0
  %4260 = vmatpush1.bf16.msra.mxu0 0
  %4261 = vmatprep.subr.bf16.mxu0 %v2518
  %4262 = vmatpush1.bf16.msra.mxu0 %v2517
  %4263 = vmatprep.subr.bf16.mxu0 %v2390
  %4264 = vmatpush1.bf16.msra.mxu0 %v2389
  %4265 = vmatprep.subr.bf16.mxu0 %v2262
  %4266 = vmatpush1.bf16.msra.mxu0 %v2261
  %4267 = vmatprep.subr.bf16.mxu0 %v2134
  %4268 = vmatpush1.bf16.msra.mxu0 %v2133
  %4269 = vmatprep.subr.bf16.mxu0 0
  %4270 = vmatpush2.bf16.msra.mxu0 0
  %4271 = vmatprep.subr.bf16.mxu0 0
  %4272 = vmatpush2.bf16.msra.mxu0 0
  %4273 = vmatprep.subr.bf16.mxu0 0
  %4274 = vmatpush2.bf16.msra.mxu0 0
  %4275 = vmatprep.subr.bf16.mxu0 0
  %4276 = vmatpush2.bf16.msra.mxu0 0
  %4277 = vmatprep.subr.bf16.mxu0 0
  %4278 = vmatpush2.bf16.msra.mxu0 0
  %4279 = vmatprep.subr.bf16.mxu0 0
  %4280 = vmatpush2.bf16.msra.mxu0 0
  %4281 = vmatprep.subr.bf16.mxu0 0
  %4282 = vmatpush2.bf16.msra.mxu0 0
  %4283 = vmatprep.subr.bf16.mxu0 0
  %4284 = vmatpush2.bf16.msra.mxu0 0
  %4285 = vmatprep.mubr.bf16.mxu0 0
  %4286 = vmatmul.mubr.bf16.gmra.mxu0 %v3103
  %v4287 = vpop.f32.mrf.mxu0
  %v4288 = vadd.f32 0.0, %v4287
  %v4289 = vpop.f32.mrf.mxu0
  %v4290 = vadd.f32 0.0, %v4289
  %v4291 = vpop.f32.mrf.mxu0
  %v4292 = vpop.f32.mrf.mxu0
  %4293 = vdwg.mxu0
  %4294 = vmatprep.subr.bf16.mxu0 0
  %4295 = vmatpush1.bf16.msra.mxu0 0
  %4296 = vmatprep.subr.bf16.mxu0 0
  %4297 = vmatpush1.bf16.msra.mxu0 0
  %4298 = vmatprep.subr.bf16.mxu0 0
  %4299 = vmatpush1.bf16.msra.mxu0 0
  %4300 = vmatprep.subr.bf16.mxu0 0
  %4301 = vmatpush1.bf16.msra.mxu0 0
  %4302 = vmatprep.subr.bf16.mxu0 %v2520
  %4303 = vmatpush1.bf16.msra.mxu0 %v2519
  %4304 = vmatprep.subr.bf16.mxu0 %v2392
  %4305 = vmatpush1.bf16.msra.mxu0 %v2391
  %4306 = vmatprep.subr.bf16.mxu0 %v2264
  %4307 = vmatpush1.bf16.msra.mxu0 %v2263
  %4308 = vmatprep.subr.bf16.mxu0 %v2136
  %4309 = vmatpush1.bf16.msra.mxu0 %v2135
  %4310 = vmatprep.subr.bf16.mxu0 0
  %4311 = vmatpush2.bf16.msra.mxu0 0
  %4312 = vmatprep.subr.bf16.mxu0 0
  %4313 = vmatpush2.bf16.msra.mxu0 0
  %4314 = vmatprep.subr.bf16.mxu0 0
  %4315 = vmatpush2.bf16.msra.mxu0 0
  %4316 = vmatprep.subr.bf16.mxu0 0
  %4317 = vmatpush2.bf16.msra.mxu0 0
  %4318 = vmatprep.subr.bf16.mxu0 0
  %4319 = vmatpush2.bf16.msra.mxu0 0
  %4320 = vmatprep.subr.bf16.mxu0 0
  %4321 = vmatpush2.bf16.msra.mxu0 0
  %4322 = vmatprep.subr.bf16.mxu0 0
  %4323 = vmatpush2.bf16.msra.mxu0 0
  %4324 = vmatprep.subr.bf16.mxu0 0
  %4325 = vmatpush2.bf16.msra.mxu0 0
  %4326 = vmatprep.mubr.bf16.mxu0 0
  %4327 = vmatmul.mubr.bf16.gmra.mxu0 %v3103
  %v4328 = vpop.f32.mrf.mxu0
  %v4329 = vadd.f32 0.0, %v4328
  %v4330 = vpop.f32.mrf.mxu0
  %v4331 = vadd.f32 0.0, %v4330
  %v4332 = vpop.f32.mrf.mxu0
  %v4333 = vpop.f32.mrf.mxu0
  %4334 = vdwg.mxu0
  %4335 = vmatprep.subr.bf16.mxu0 0
  %4336 = vmatpush1.bf16.msra.mxu0 0
  %4337 = vmatprep.subr.bf16.mxu0 0
  %4338 = vmatpush1.bf16.msra.mxu0 0
  %4339 = vmatprep.subr.bf16.mxu0 0
  %4340 = vmatpush1.bf16.msra.mxu0 0
  %4341 = vmatprep.subr.bf16.mxu0 0
  %4342 = vmatpush1.bf16.msra.mxu0 0
  %4343 = vmatprep.subr.bf16.mxu0 %v2522
  %4344 = vmatpush1.bf16.msra.mxu0 %v2521
  %4345 = vmatprep.subr.bf16.mxu0 %v2394
  %4346 = vmatpush1.bf16.msra.mxu0 %v2393
  %4347 = vmatprep.subr.bf16.mxu0 %v2266
  %4348 = vmatpush1.bf16.msra.mxu0 %v2265
  %4349 = vmatprep.subr.bf16.mxu0 %v2138
  %4350 = vmatpush1.bf16.msra.mxu0 %v2137
  %4351 = vmatprep.subr.bf16.mxu0 0
  %4352 = vmatpush2.bf16.msra.mxu0 0
  %4353 = vmatprep.subr.bf16.mxu0 0
  %4354 = vmatpush2.bf16.msra.mxu0 0
  %4355 = vmatprep.subr.bf16.mxu0 0
  %4356 = vmatpush2.bf16.msra.mxu0 0
  %4357 = vmatprep.subr.bf16.mxu0 0
  %4358 = vmatpush2.bf16.msra.mxu0 0
  %4359 = vmatprep.subr.bf16.mxu0 0
  %4360 = vmatpush2.bf16.msra.mxu0 0
  %4361 = vmatprep.subr.bf16.mxu0 0
  %4362 = vmatpush2.bf16.msra.mxu0 0
  %4363 = vmatprep.subr.bf16.mxu0 0
  %4364 = vmatpush2.bf16.msra.mxu0 0
  %4365 = vmatprep.subr.bf16.mxu0 0
  %4366 = vmatpush2.bf16.msra.mxu0 0
  %4367 = vmatprep.mubr.bf16.mxu0 0
  %4368 = vmatmul.mubr.bf16.gmra.mxu0 %v3103
  %v4369 = vpop.f32.mrf.mxu0
  %v4370 = vadd.f32 0.0, %v4369
  %v4371 = vpop.f32.mrf.mxu0
  %v4372 = vadd.f32 0.0, %v4371
  %v4373 = vpop.f32.mrf.mxu0
  %v4374 = vpop.f32.mrf.mxu0
  %4375 = vdwg.mxu0
  %4376 = vmatprep.subr.bf16.mxu0 0
  %4377 = vmatpush1.bf16.msra.mxu0 0
  %4378 = vmatprep.subr.bf16.mxu0 0
  %4379 = vmatpush1.bf16.msra.mxu0 0
  %4380 = vmatprep.subr.bf16.mxu0 0
  %4381 = vmatpush1.bf16.msra.mxu0 0
  %4382 = vmatprep.subr.bf16.mxu0 0
  %4383 = vmatpush1.bf16.msra.mxu0 0
  %4384 = vmatprep.subr.bf16.mxu0 %v2524
  %4385 = vmatpush1.bf16.msra.mxu0 %v2523
  %4386 = vmatprep.subr.bf16.mxu0 %v2396
  %4387 = vmatpush1.bf16.msra.mxu0 %v2395
  %4388 = vmatprep.subr.bf16.mxu0 %v2268
  %4389 = vmatpush1.bf16.msra.mxu0 %v2267
  %4390 = vmatprep.subr.bf16.mxu0 %v2140
  %4391 = vmatpush1.bf16.msra.mxu0 %v2139
  %4392 = vmatprep.subr.bf16.mxu0 0
  %4393 = vmatpush2.bf16.msra.mxu0 0
  %4394 = vmatprep.subr.bf16.mxu0 0
  %4395 = vmatpush2.bf16.msra.mxu0 0
  %4396 = vmatprep.subr.bf16.mxu0 0
  %4397 = vmatpush2.bf16.msra.mxu0 0
  %4398 = vmatprep.subr.bf16.mxu0 0
  %4399 = vmatpush2.bf16.msra.mxu0 0
  %4400 = vmatprep.subr.bf16.mxu0 0
  %4401 = vmatpush2.bf16.msra.mxu0 0
  %4402 = vmatprep.subr.bf16.mxu0 0
  %4403 = vmatpush2.bf16.msra.mxu0 0
  %4404 = vmatprep.subr.bf16.mxu0 0
  %4405 = vmatpush2.bf16.msra.mxu0 0
  %4406 = vmatprep.subr.bf16.mxu0 0
  %4407 = vmatpush2.bf16.msra.mxu0 0
  %4408 = vmatprep.mubr.bf16.mxu0 0
  %4409 = vmatmul.mubr.bf16.gmra.mxu0 %v3103
  %v4410 = vpop.f32.mrf.mxu0
  %v4411 = vadd.f32 0.0, %v4410
  %v4412 = vpop.f32.mrf.mxu0
  %v4413 = vadd.f32 0.0, %v4412
  %v4414 = vpop.f32.mrf.mxu0
  %v4415 = vpop.f32.mrf.mxu0
  %4416 = vdwg.mxu0
  %4417 = vmatprep.subr.bf16.mxu0 0
  %4418 = vmatpush1.bf16.msra.mxu0 0
  %4419 = vmatprep.subr.bf16.mxu0 0
  %4420 = vmatpush1.bf16.msra.mxu0 0
  %4421 = vmatprep.subr.bf16.mxu0 0
  %4422 = vmatpush1.bf16.msra.mxu0 0
  %4423 = vmatprep.subr.bf16.mxu0 0
  %4424 = vmatpush1.bf16.msra.mxu0 0
  %4425 = vmatprep.subr.bf16.mxu0 %v2526
  %4426 = vmatpush1.bf16.msra.mxu0 %v2525
  %4427 = vmatprep.subr.bf16.mxu0 %v2398
  %4428 = vmatpush1.bf16.msra.mxu0 %v2397
  %4429 = vmatprep.subr.bf16.mxu0 %v2270
  %4430 = vmatpush1.bf16.msra.mxu0 %v2269
  %4431 = vmatprep.subr.bf16.mxu0 %v2142
  %4432 = vmatpush1.bf16.msra.mxu0 %v2141
  %4433 = vmatprep.subr.bf16.mxu0 0
  %4434 = vmatpush2.bf16.msra.mxu0 0
  %4435 = vmatprep.subr.bf16.mxu0 0
  %4436 = vmatpush2.bf16.msra.mxu0 0
  %4437 = vmatprep.subr.bf16.mxu0 0
  %4438 = vmatpush2.bf16.msra.mxu0 0
  %4439 = vmatprep.subr.bf16.mxu0 0
  %4440 = vmatpush2.bf16.msra.mxu0 0
  %4441 = vmatprep.subr.bf16.mxu0 0
  %4442 = vmatpush2.bf16.msra.mxu0 0
  %4443 = vmatprep.subr.bf16.mxu0 0
  %4444 = vmatpush2.bf16.msra.mxu0 0
  %4445 = vmatprep.subr.bf16.mxu0 0
  %4446 = vmatpush2.bf16.msra.mxu0 0
  %4447 = vmatprep.subr.bf16.mxu0 0
  %4448 = vmatpush2.bf16.msra.mxu0 0
  %4449 = vmatprep.mubr.bf16.mxu0 0
  %4450 = vmatmul.mubr.bf16.gmra.mxu0 %v3103
  %v4451 = vpop.f32.mrf.mxu0
  %v4452 = vadd.f32 0.0, %v4451
  %v4453 = vpop.f32.mrf.mxu0
  %v4454 = vadd.f32 0.0, %v4453
  %v4455 = vpop.f32.mrf.mxu0
  %v4456 = vpop.f32.mrf.mxu0
  %4457 = vdwg.mxu0
  %4458 = vmatprep.subr.bf16.mxu0 0
  %4459 = vmatpush1.bf16.msra.mxu0 0
  %4460 = vmatprep.subr.bf16.mxu0 0
  %4461 = vmatpush1.bf16.msra.mxu0 0
  %4462 = vmatprep.subr.bf16.mxu0 0
  %4463 = vmatpush1.bf16.msra.mxu0 0
  %4464 = vmatprep.subr.bf16.mxu0 0
  %4465 = vmatpush1.bf16.msra.mxu0 0
  %4466 = vmatprep.subr.bf16.mxu0 %v2528
  %4467 = vmatpush1.bf16.msra.mxu0 %v2527
  %4468 = vmatprep.subr.bf16.mxu0 %v2400
  %4469 = vmatpush1.bf16.msra.mxu0 %v2399
  %4470 = vmatprep.subr.bf16.mxu0 %v2272
  %4471 = vmatpush1.bf16.msra.mxu0 %v2271
  %4472 = vmatprep.subr.bf16.mxu0 %v2144
  %4473 = vmatpush1.bf16.msra.mxu0 %v2143
  %4474 = vmatprep.subr.bf16.mxu0 0
  %4475 = vmatpush2.bf16.msra.mxu0 0
  %4476 = vmatprep.subr.bf16.mxu0 0
  %4477 = vmatpush2.bf16.msra.mxu0 0
  %4478 = vmatprep.subr.bf16.mxu0 0
  %4479 = vmatpush2.bf16.msra.mxu0 0
  %4480 = vmatprep.subr.bf16.mxu0 0
  %4481 = vmatpush2.bf16.msra.mxu0 0
  %4482 = vmatprep.subr.bf16.mxu0 0
  %4483 = vmatpush2.bf16.msra.mxu0 0
  %4484 = vmatprep.subr.bf16.mxu0 0
  %4485 = vmatpush2.bf16.msra.mxu0 0
  %4486 = vmatprep.subr.bf16.mxu0 0
  %4487 = vmatpush2.bf16.msra.mxu0 0
  %4488 = vmatprep.subr.bf16.mxu0 0
  %4489 = vmatpush2.bf16.msra.mxu0 0
  %4490 = vmatprep.mubr.bf16.mxu0 0
  %4491 = vmatmul.mubr.bf16.gmra.mxu0 %v3103
  %v4492 = vpop.f32.mrf.mxu0
  %v4493 = vadd.f32 0.0, %v4492
  %v4494 = vpop.f32.mrf.mxu0
  %v4495 = vadd.f32 0.0, %v4494
  %v4496 = vpop.f32.mrf.mxu0
  %v4497 = vpop.f32.mrf.mxu0
  %4498 = vdwg.mxu0
  %4499 = vmatprep.subr.bf16.mxu0 0
  %4500 = vmatpush1.bf16.msra.mxu0 0
  %4501 = vmatprep.subr.bf16.mxu0 0
  %4502 = vmatpush1.bf16.msra.mxu0 0
  %4503 = vmatprep.subr.bf16.mxu0 0
  %4504 = vmatpush1.bf16.msra.mxu0 0
  %4505 = vmatprep.subr.bf16.mxu0 0
  %4506 = vmatpush1.bf16.msra.mxu0 0
  %4507 = vmatprep.subr.bf16.mxu0 %v2530
  %4508 = vmatpush1.bf16.msra.mxu0 %v2529
  %4509 = vmatprep.subr.bf16.mxu0 %v2402
  %4510 = vmatpush1.bf16.msra.mxu0 %v2401
  %4511 = vmatprep.subr.bf16.mxu0 %v2274
  %4512 = vmatpush1.bf16.msra.mxu0 %v2273
  %4513 = vmatprep.subr.bf16.mxu0 %v2146
  %4514 = vmatpush1.bf16.msra.mxu0 %v2145
  %4515 = vmatprep.subr.bf16.mxu0 0
  %4516 = vmatpush2.bf16.msra.mxu0 0
  %4517 = vmatprep.subr.bf16.mxu0 0
  %4518 = vmatpush2.bf16.msra.mxu0 0
  %4519 = vmatprep.subr.bf16.mxu0 0
  %4520 = vmatpush2.bf16.msra.mxu0 0
  %4521 = vmatprep.subr.bf16.mxu0 0
  %4522 = vmatpush2.bf16.msra.mxu0 0
  %4523 = vmatprep.subr.bf16.mxu0 0
  %4524 = vmatpush2.bf16.msra.mxu0 0
  %4525 = vmatprep.subr.bf16.mxu0 0
  %4526 = vmatpush2.bf16.msra.mxu0 0
  %4527 = vmatprep.subr.bf16.mxu0 0
  %4528 = vmatpush2.bf16.msra.mxu0 0
  %4529 = vmatprep.subr.bf16.mxu0 0
  %4530 = vmatpush2.bf16.msra.mxu0 0
  %4531 = vmatprep.mubr.bf16.mxu0 0
  %4532 = vmatmul.mubr.bf16.gmra.mxu0 %v3103
  %v4533 = vpop.f32.mrf.mxu0
  %v4534 = vadd.f32 0.0, %v4533
  %v4535 = vpop.f32.mrf.mxu0
  %v4536 = vadd.f32 0.0, %v4535
  %v4537 = vpop.f32.mrf.mxu0
  %v4538 = vpop.f32.mrf.mxu0
  %4539 = vdwg.mxu0
  %4540 = vmatprep.subr.bf16.mxu0 0
  %4541 = vmatpush1.bf16.msra.mxu0 0
  %4542 = vmatprep.subr.bf16.mxu0 0
  %4543 = vmatpush1.bf16.msra.mxu0 0
  %4544 = vmatprep.subr.bf16.mxu0 0
  %4545 = vmatpush1.bf16.msra.mxu0 0
  %4546 = vmatprep.subr.bf16.mxu0 0
  %4547 = vmatpush1.bf16.msra.mxu0 0
  %4548 = vmatprep.subr.bf16.mxu0 %v2532
  %4549 = vmatpush1.bf16.msra.mxu0 %v2531
  %4550 = vmatprep.subr.bf16.mxu0 %v2404
  %4551 = vmatpush1.bf16.msra.mxu0 %v2403
  %4552 = vmatprep.subr.bf16.mxu0 %v2276
  %4553 = vmatpush1.bf16.msra.mxu0 %v2275
  %4554 = vmatprep.subr.bf16.mxu0 %v2148
  %4555 = vmatpush1.bf16.msra.mxu0 %v2147
  %4556 = vmatprep.subr.bf16.mxu0 0
  %4557 = vmatpush2.bf16.msra.mxu0 0
  %4558 = vmatprep.subr.bf16.mxu0 0
  %4559 = vmatpush2.bf16.msra.mxu0 0
  %4560 = vmatprep.subr.bf16.mxu0 0
  %4561 = vmatpush2.bf16.msra.mxu0 0
  %4562 = vmatprep.subr.bf16.mxu0 0
  %4563 = vmatpush2.bf16.msra.mxu0 0
  %4564 = vmatprep.subr.bf16.mxu0 0
  %4565 = vmatpush2.bf16.msra.mxu0 0
  %4566 = vmatprep.subr.bf16.mxu0 0
  %4567 = vmatpush2.bf16.msra.mxu0 0
  %4568 = vmatprep.subr.bf16.mxu0 0
  %4569 = vmatpush2.bf16.msra.mxu0 0
  %4570 = vmatprep.subr.bf16.mxu0 0
  %4571 = vmatpush2.bf16.msra.mxu0 0
  %4572 = vmatprep.mubr.bf16.mxu0 0
  %4573 = vmatmul.mubr.bf16.gmra.mxu0 %v3103
  %v4574 = vpop.f32.mrf.mxu0
  %v4575 = vadd.f32 0.0, %v4574
  %v4576 = vpop.f32.mrf.mxu0
  %v4577 = vadd.f32 0.0, %v4576
  %v4578 = vpop.f32.mrf.mxu0
  %v4579 = vpop.f32.mrf.mxu0
  %4580 = vdwg.mxu0
  %4581 = vmatprep.subr.bf16.mxu0 0
  %4582 = vmatpush1.bf16.msra.mxu0 0
  %4583 = vmatprep.subr.bf16.mxu0 0
  %4584 = vmatpush1.bf16.msra.mxu0 0
  %4585 = vmatprep.subr.bf16.mxu0 0
  %4586 = vmatpush1.bf16.msra.mxu0 0
  %4587 = vmatprep.subr.bf16.mxu0 0
  %4588 = vmatpush1.bf16.msra.mxu0 0
  %4589 = vmatprep.subr.bf16.mxu0 %v2534
  %4590 = vmatpush1.bf16.msra.mxu0 %v2533
  %4591 = vmatprep.subr.bf16.mxu0 %v2406
  %4592 = vmatpush1.bf16.msra.mxu0 %v2405
  %4593 = vmatprep.subr.bf16.mxu0 %v2278
  %4594 = vmatpush1.bf16.msra.mxu0 %v2277
  %4595 = vmatprep.subr.bf16.mxu0 %v2150
  %4596 = vmatpush1.bf16.msra.mxu0 %v2149
  %4597 = vmatprep.subr.bf16.mxu0 0
  %4598 = vmatpush2.bf16.msra.mxu0 0
  %4599 = vmatprep.subr.bf16.mxu0 0
  %4600 = vmatpush2.bf16.msra.mxu0 0
  %4601 = vmatprep.subr.bf16.mxu0 0
  %4602 = vmatpush2.bf16.msra.mxu0 0
  %4603 = vmatprep.subr.bf16.mxu0 0
  %4604 = vmatpush2.bf16.msra.mxu0 0
  %4605 = vmatprep.subr.bf16.mxu0 0
  %4606 = vmatpush2.bf16.msra.mxu0 0
  %4607 = vmatprep.subr.bf16.mxu0 0
  %4608 = vmatpush2.bf16.msra.mxu0 0
  %4609 = vmatprep.subr.bf16.mxu0 0
  %4610 = vmatpush2.bf16.msra.mxu0 0
  %4611 = vmatprep.subr.bf16.mxu0 0
  %4612 = vmatpush2.bf16.msra.mxu0 0
  %4613 = vmatprep.mubr.bf16.mxu0 0
  %4614 = vmatmul.mubr.bf16.gmra.mxu0 %v3103
  %v4615 = vpop.f32.mrf.mxu0
  %v4616 = vadd.f32 0.0, %v4615
  %v4617 = vpop.f32.mrf.mxu0
  %v4618 = vadd.f32 0.0, %v4617
  %v4619 = vpop.f32.mrf.mxu0
  %v4620 = vpop.f32.mrf.mxu0
  %4621 = vdwg.mxu0
  %4622 = vmatprep.subr.bf16.mxu0 0
  %4623 = vmatpush1.bf16.msra.mxu0 0
  %4624 = vmatprep.subr.bf16.mxu0 0
  %4625 = vmatpush1.bf16.msra.mxu0 0
  %4626 = vmatprep.subr.bf16.mxu0 0
  %4627 = vmatpush1.bf16.msra.mxu0 0
  %4628 = vmatprep.subr.bf16.mxu0 0
  %4629 = vmatpush1.bf16.msra.mxu0 0
  %4630 = vmatprep.subr.bf16.mxu0 %v2536
  %4631 = vmatpush1.bf16.msra.mxu0 %v2535
  %4632 = vmatprep.subr.bf16.mxu0 %v2408
  %4633 = vmatpush1.bf16.msra.mxu0 %v2407
  %4634 = vmatprep.subr.bf16.mxu0 %v2280
  %4635 = vmatpush1.bf16.msra.mxu0 %v2279
  %4636 = vmatprep.subr.bf16.mxu0 %v2152
  %4637 = vmatpush1.bf16.msra.mxu0 %v2151
  %4638 = vmatprep.subr.bf16.mxu0 0
  %4639 = vmatpush2.bf16.msra.mxu0 0
  %4640 = vmatprep.subr.bf16.mxu0 0
  %4641 = vmatpush2.bf16.msra.mxu0 0
  %4642 = vmatprep.subr.bf16.mxu0 0
  %4643 = vmatpush2.bf16.msra.mxu0 0
  %4644 = vmatprep.subr.bf16.mxu0 0
  %4645 = vmatpush2.bf16.msra.mxu0 0
  %4646 = vmatprep.subr.bf16.mxu0 0
  %4647 = vmatpush2.bf16.msra.mxu0 0
  %4648 = vmatprep.subr.bf16.mxu0 0
  %4649 = vmatpush2.bf16.msra.mxu0 0
  %4650 = vmatprep.subr.bf16.mxu0 0
  %4651 = vmatpush2.bf16.msra.mxu0 0
  %4652 = vmatprep.subr.bf16.mxu0 0
  %4653 = vmatpush2.bf16.msra.mxu0 0
  %4654 = vmatprep.mubr.bf16.mxu0 0
  %4655 = vmatmul.mubr.bf16.gmra.mxu0 %v3103
  %v4656 = vpop.f32.mrf.mxu0
  %v4657 = vadd.f32 0.0, %v4656
  %v4658 = vpop.f32.mrf.mxu0
  %v4659 = vadd.f32 0.0, %v4658
  %v4660 = vpop.f32.mrf.mxu0
  %v4661 = vpop.f32.mrf.mxu0
  %4662 = vdwg.mxu0
  %4663 = vmatprep.subr.bf16.mxu0 0
  %4664 = vmatpush1.bf16.msra.mxu0 0
  %4665 = vmatprep.subr.bf16.mxu0 0
  %4666 = vmatpush1.bf16.msra.mxu0 0
  %4667 = vmatprep.subr.bf16.mxu0 0
  %4668 = vmatpush1.bf16.msra.mxu0 0
  %4669 = vmatprep.subr.bf16.mxu0 0
  %4670 = vmatpush1.bf16.msra.mxu0 0
  %4671 = vmatprep.subr.bf16.mxu0 %v2538
  %4672 = vmatpush1.bf16.msra.mxu0 %v2537
  %4673 = vmatprep.subr.bf16.mxu0 %v2410
  %4674 = vmatpush1.bf16.msra.mxu0 %v2409
  %4675 = vmatprep.subr.bf16.mxu0 %v2282
  %4676 = vmatpush1.bf16.msra.mxu0 %v2281
  %4677 = vmatprep.subr.bf16.mxu0 %v2154
  %4678 = vmatpush1.bf16.msra.mxu0 %v2153
  %4679 = vmatprep.subr.bf16.mxu0 0
  %4680 = vmatpush2.bf16.msra.mxu0 0
  %4681 = vmatprep.subr.bf16.mxu0 0
  %4682 = vmatpush2.bf16.msra.mxu0 0
  %4683 = vmatprep.subr.bf16.mxu0 0
  %4684 = vmatpush2.bf16.msra.mxu0 0
  %4685 = vmatprep.subr.bf16.mxu0 0
  %4686 = vmatpush2.bf16.msra.mxu0 0
  %4687 = vmatprep.subr.bf16.mxu0 0
  %4688 = vmatpush2.bf16.msra.mxu0 0
  %4689 = vmatprep.subr.bf16.mxu0 0
  %4690 = vmatpush2.bf16.msra.mxu0 0
  %4691 = vmatprep.subr.bf16.mxu0 0
  %4692 = vmatpush2.bf16.msra.mxu0 0
  %4693 = vmatprep.subr.bf16.mxu0 0
  %4694 = vmatpush2.bf16.msra.mxu0 0
  %4695 = vmatprep.mubr.bf16.mxu0 0
  %4696 = vmatmul.mubr.bf16.gmra.mxu0 %v3103
  %v4697 = vpop.f32.mrf.mxu0
  %v4698 = vadd.f32 0.0, %v4697
  %v4699 = vpop.f32.mrf.mxu0
  %v4700 = vadd.f32 0.0, %v4699
  %v4701 = vpop.f32.mrf.mxu0
  %v4702 = vpop.f32.mrf.mxu0
  %4703 = vdwg.mxu0
  %4704 = vmatprep.subr.bf16.mxu0 0
  %4705 = vmatpush1.bf16.msra.mxu0 0
  %4706 = vmatprep.subr.bf16.mxu0 0
  %4707 = vmatpush1.bf16.msra.mxu0 0
  %4708 = vmatprep.subr.bf16.mxu0 0
  %4709 = vmatpush1.bf16.msra.mxu0 0
  %4710 = vmatprep.subr.bf16.mxu0 0
  %4711 = vmatpush1.bf16.msra.mxu0 0
  %4712 = vmatprep.subr.bf16.mxu0 %v2540
  %4713 = vmatpush1.bf16.msra.mxu0 %v2539
  %4714 = vmatprep.subr.bf16.mxu0 %v2412
  %4715 = vmatpush1.bf16.msra.mxu0 %v2411
  %4716 = vmatprep.subr.bf16.mxu0 %v2284
  %4717 = vmatpush1.bf16.msra.mxu0 %v2283
  %4718 = vmatprep.subr.bf16.mxu0 %v2156
  %4719 = vmatpush1.bf16.msra.mxu0 %v2155
  %4720 = vmatprep.subr.bf16.mxu0 0
  %4721 = vmatpush2.bf16.msra.mxu0 0
  %4722 = vmatprep.subr.bf16.mxu0 0
  %4723 = vmatpush2.bf16.msra.mxu0 0
  %4724 = vmatprep.subr.bf16.mxu0 0
  %4725 = vmatpush2.bf16.msra.mxu0 0
  %4726 = vmatprep.subr.bf16.mxu0 0
  %4727 = vmatpush2.bf16.msra.mxu0 0
  %4728 = vmatprep.subr.bf16.mxu0 0
  %4729 = vmatpush2.bf16.msra.mxu0 0
  %4730 = vmatprep.subr.bf16.mxu0 0
  %4731 = vmatpush2.bf16.msra.mxu0 0
  %4732 = vmatprep.subr.bf16.mxu0 0
  %4733 = vmatpush2.bf16.msra.mxu0 0
  %4734 = vmatprep.subr.bf16.mxu0 0
  %4735 = vmatpush2.bf16.msra.mxu0 0
  %4736 = vmatprep.mubr.bf16.mxu0 0
  %4737 = vmatmul.mubr.bf16.gmra.mxu0 %v3103
  %v4738 = vpop.f32.mrf.mxu0
  %v4739 = vadd.f32 0.0, %v4738
  %v4740 = vpop.f32.mrf.mxu0
  %v4741 = vadd.f32 0.0, %v4740
  %v4742 = vpop.f32.mrf.mxu0
  %v4743 = vpop.f32.mrf.mxu0
  %4744 = vdwg.mxu0
  %4745 = vmatprep.subr.bf16.mxu0 0
  %4746 = vmatpush1.bf16.msra.mxu0 0
  %4747 = vmatprep.subr.bf16.mxu0 0
  %4748 = vmatpush1.bf16.msra.mxu0 0
  %4749 = vmatprep.subr.bf16.mxu0 0
  %4750 = vmatpush1.bf16.msra.mxu0 0
  %4751 = vmatprep.subr.bf16.mxu0 0
  %4752 = vmatpush1.bf16.msra.mxu0 0
  %4753 = vmatprep.subr.bf16.mxu0 %v2542
  %4754 = vmatpush1.bf16.msra.mxu0 %v2541
  %4755 = vmatprep.subr.bf16.mxu0 %v2414
  %4756 = vmatpush1.bf16.msra.mxu0 %v2413
  %4757 = vmatprep.subr.bf16.mxu0 %v2286
  %4758 = vmatpush1.bf16.msra.mxu0 %v2285
  %4759 = vmatprep.subr.bf16.mxu0 %v2158
  %4760 = vmatpush1.bf16.msra.mxu0 %v2157
  %4761 = vmatprep.subr.bf16.mxu0 0
  %4762 = vmatpush2.bf16.msra.mxu0 0
  %4763 = vmatprep.subr.bf16.mxu0 0
  %4764 = vmatpush2.bf16.msra.mxu0 0
  %4765 = vmatprep.subr.bf16.mxu0 0
  %4766 = vmatpush2.bf16.msra.mxu0 0
  %4767 = vmatprep.subr.bf16.mxu0 0
  %4768 = vmatpush2.bf16.msra.mxu0 0
  %4769 = vmatprep.subr.bf16.mxu0 0
  %4770 = vmatpush2.bf16.msra.mxu0 0
  %4771 = vmatprep.subr.bf16.mxu0 0
  %4772 = vmatpush2.bf16.msra.mxu0 0
  %4773 = vmatprep.subr.bf16.mxu0 0
  %4774 = vmatpush2.bf16.msra.mxu0 0
  %4775 = vmatprep.subr.bf16.mxu0 0
  %4776 = vmatpush2.bf16.msra.mxu0 0
  %4777 = vmatprep.mubr.bf16.mxu0 0
  %4778 = vmatmul.mubr.bf16.gmra.mxu0 %v3103
  %v4779 = vpop.f32.mrf.mxu0
  %v4780 = vadd.f32 0.0, %v4779
  %v4781 = vpop.f32.mrf.mxu0
  %v4782 = vadd.f32 0.0, %v4781
  %v4783 = vpop.f32.mrf.mxu0
  %v4784 = vpop.f32.mrf.mxu0
  %4785 = vdwg.mxu0
  %4786 = vmatprep.subr.bf16.mxu0 0
  %4787 = vmatpush1.bf16.msra.mxu0 0
  %4788 = vmatprep.subr.bf16.mxu0 0
  %4789 = vmatpush1.bf16.msra.mxu0 0
  %4790 = vmatprep.subr.bf16.mxu0 0
  %4791 = vmatpush1.bf16.msra.mxu0 0
  %4792 = vmatprep.subr.bf16.mxu0 0
  %4793 = vmatpush1.bf16.msra.mxu0 0
  %4794 = vmatprep.subr.bf16.mxu0 %v2544
  %4795 = vmatpush1.bf16.msra.mxu0 %v2543
  %4796 = vmatprep.subr.bf16.mxu0 %v2416
  %4797 = vmatpush1.bf16.msra.mxu0 %v2415
  %4798 = vmatprep.subr.bf16.mxu0 %v2288
  %4799 = vmatpush1.bf16.msra.mxu0 %v2287
  %4800 = vmatprep.subr.bf16.mxu0 %v2160
  %4801 = vmatpush1.bf16.msra.mxu0 %v2159
  %4802 = vmatprep.subr.bf16.mxu0 0
  %4803 = vmatpush2.bf16.msra.mxu0 0
  %4804 = vmatprep.subr.bf16.mxu0 0
  %4805 = vmatpush2.bf16.msra.mxu0 0
  %4806 = vmatprep.subr.bf16.mxu0 0
  %4807 = vmatpush2.bf16.msra.mxu0 0
  %4808 = vmatprep.subr.bf16.mxu0 0
  %4809 = vmatpush2.bf16.msra.mxu0 0
  %4810 = vmatprep.subr.bf16.mxu0 0
  %4811 = vmatpush2.bf16.msra.mxu0 0
  %4812 = vmatprep.subr.bf16.mxu0 0
  %4813 = vmatpush2.bf16.msra.mxu0 0
  %4814 = vmatprep.subr.bf16.mxu0 0
  %4815 = vmatpush2.bf16.msra.mxu0 0
  %4816 = vmatprep.subr.bf16.mxu0 0
  %4817 = vmatpush2.bf16.msra.mxu0 0
  %4818 = vmatprep.mubr.bf16.mxu0 0
  %4819 = vmatmul.mubr.bf16.gmra.mxu0 %v3103
  %v4820 = vpop.f32.mrf.mxu0
  %v4821 = vadd.f32 0.0, %v4820
  %v4822 = vpop.f32.mrf.mxu0
  %v4823 = vadd.f32 0.0, %v4822
  %v4824 = vpop.f32.mrf.mxu0
  %v4825 = vpop.f32.mrf.mxu0
  %4826 = vdwg.mxu0
  %4827 = vmatprep.subr.bf16.mxu0 0
  %4828 = vmatpush1.bf16.msra.mxu0 0
  %4829 = vmatprep.subr.bf16.mxu0 0
  %4830 = vmatpush1.bf16.msra.mxu0 0
  %4831 = vmatprep.subr.bf16.mxu0 0
  %4832 = vmatpush1.bf16.msra.mxu0 0
  %4833 = vmatprep.subr.bf16.mxu0 0
  %4834 = vmatpush1.bf16.msra.mxu0 0
  %4835 = vmatprep.subr.bf16.mxu0 %v2546
  %4836 = vmatpush1.bf16.msra.mxu0 %v2545
  %4837 = vmatprep.subr.bf16.mxu0 %v2418
  %4838 = vmatpush1.bf16.msra.mxu0 %v2417
  %4839 = vmatprep.subr.bf16.mxu0 %v2290
  %4840 = vmatpush1.bf16.msra.mxu0 %v2289
  %4841 = vmatprep.subr.bf16.mxu0 %v2162
  %4842 = vmatpush1.bf16.msra.mxu0 %v2161
  %4843 = vmatprep.subr.bf16.mxu0 0
  %4844 = vmatpush2.bf16.msra.mxu0 0
  %4845 = vmatprep.subr.bf16.mxu0 0
  %4846 = vmatpush2.bf16.msra.mxu0 0
  %4847 = vmatprep.subr.bf16.mxu0 0
  %4848 = vmatpush2.bf16.msra.mxu0 0
  %4849 = vmatprep.subr.bf16.mxu0 0
  %4850 = vmatpush2.bf16.msra.mxu0 0
  %4851 = vmatprep.subr.bf16.mxu0 0
  %4852 = vmatpush2.bf16.msra.mxu0 0
  %4853 = vmatprep.subr.bf16.mxu0 0
  %4854 = vmatpush2.bf16.msra.mxu0 0
  %4855 = vmatprep.subr.bf16.mxu0 0
  %4856 = vmatpush2.bf16.msra.mxu0 0
  %4857 = vmatprep.subr.bf16.mxu0 0
  %4858 = vmatpush2.bf16.msra.mxu0 0
  %4859 = vmatprep.mubr.bf16.mxu0 0
  %4860 = vmatmul.mubr.bf16.gmra.mxu0 %v3103
  %v4861 = vpop.f32.mrf.mxu0
  %v4862 = vadd.f32 0.0, %v4861
  %v4863 = vpop.f32.mrf.mxu0
  %v4864 = vadd.f32 0.0, %v4863
  %v4865 = vpop.f32.mrf.mxu0
  %v4866 = vpop.f32.mrf.mxu0
  %4867 = vdwg.mxu0
  %4868 = vmatprep.subr.bf16.mxu0 0
  %4869 = vmatpush1.bf16.msra.mxu0 0
  %4870 = vmatprep.subr.bf16.mxu0 0
  %4871 = vmatpush1.bf16.msra.mxu0 0
  %4872 = vmatprep.subr.bf16.mxu0 0
  %4873 = vmatpush1.bf16.msra.mxu0 0
  %4874 = vmatprep.subr.bf16.mxu0 0
  %4875 = vmatpush1.bf16.msra.mxu0 0
  %4876 = vmatprep.subr.bf16.mxu0 %v2548
  %4877 = vmatpush1.bf16.msra.mxu0 %v2547
  %4878 = vmatprep.subr.bf16.mxu0 %v2420
  %4879 = vmatpush1.bf16.msra.mxu0 %v2419
  %4880 = vmatprep.subr.bf16.mxu0 %v2292
  %4881 = vmatpush1.bf16.msra.mxu0 %v2291
  %4882 = vmatprep.subr.bf16.mxu0 %v2164
  %4883 = vmatpush1.bf16.msra.mxu0 %v2163
  %4884 = vmatprep.subr.bf16.mxu0 0
  %4885 = vmatpush2.bf16.msra.mxu0 0
  %4886 = vmatprep.subr.bf16.mxu0 0
  %4887 = vmatpush2.bf16.msra.mxu0 0
  %4888 = vmatprep.subr.bf16.mxu0 0
  %4889 = vmatpush2.bf16.msra.mxu0 0
  %4890 = vmatprep.subr.bf16.mxu0 0
  %4891 = vmatpush2.bf16.msra.mxu0 0
  %4892 = vmatprep.subr.bf16.mxu0 0
  %4893 = vmatpush2.bf16.msra.mxu0 0
  %4894 = vmatprep.subr.bf16.mxu0 0
  %4895 = vmatpush2.bf16.msra.mxu0 0
  %4896 = vmatprep.subr.bf16.mxu0 0
  %4897 = vmatpush2.bf16.msra.mxu0 0
  %4898 = vmatprep.subr.bf16.mxu0 0
  %4899 = vmatpush2.bf16.msra.mxu0 0
  %4900 = vmatprep.mubr.bf16.mxu0 0
  %4901 = vmatmul.mubr.bf16.gmra.mxu0 %v3103
  %v4902 = vpop.f32.mrf.mxu0
  %v4903 = vadd.f32 0.0, %v4902
  %v4904 = vpop.f32.mrf.mxu0
  %v4905 = vadd.f32 0.0, %v4904
  %v4906 = vpop.f32.mrf.mxu0
  %v4907 = vpop.f32.mrf.mxu0
  %4908 = vdwg.mxu0
  %4909 = vmatprep.subr.bf16.mxu0 0
  %4910 = vmatpush1.bf16.msra.mxu0 0
  %4911 = vmatprep.subr.bf16.mxu0 0
  %4912 = vmatpush1.bf16.msra.mxu0 0
  %4913 = vmatprep.subr.bf16.mxu0 0
  %4914 = vmatpush1.bf16.msra.mxu0 0
  %4915 = vmatprep.subr.bf16.mxu0 0
  %4916 = vmatpush1.bf16.msra.mxu0 0
  %4917 = vmatprep.subr.bf16.mxu0 %v2550
  %4918 = vmatpush1.bf16.msra.mxu0 %v2549
  %4919 = vmatprep.subr.bf16.mxu0 %v2422
  %4920 = vmatpush1.bf16.msra.mxu0 %v2421
  %4921 = vmatprep.subr.bf16.mxu0 %v2294
  %4922 = vmatpush1.bf16.msra.mxu0 %v2293
  %4923 = vmatprep.subr.bf16.mxu0 %v2166
  %4924 = vmatpush1.bf16.msra.mxu0 %v2165
  %4925 = vmatprep.subr.bf16.mxu0 0
  %4926 = vmatpush2.bf16.msra.mxu0 0
  %4927 = vmatprep.subr.bf16.mxu0 0
  %4928 = vmatpush2.bf16.msra.mxu0 0
  %4929 = vmatprep.subr.bf16.mxu0 0
  %4930 = vmatpush2.bf16.msra.mxu0 0
  %4931 = vmatprep.subr.bf16.mxu0 0
  %4932 = vmatpush2.bf16.msra.mxu0 0
  %4933 = vmatprep.subr.bf16.mxu0 0
  %4934 = vmatpush2.bf16.msra.mxu0 0
  %4935 = vmatprep.subr.bf16.mxu0 0
  %4936 = vmatpush2.bf16.msra.mxu0 0
  %4937 = vmatprep.subr.bf16.mxu0 0
  %4938 = vmatpush2.bf16.msra.mxu0 0
  %4939 = vmatprep.subr.bf16.mxu0 0
  %4940 = vmatpush2.bf16.msra.mxu0 0
  %4941 = vmatprep.mubr.bf16.mxu0 0
  %4942 = vmatmul.mubr.bf16.gmra.mxu0 %v3103
  %v4943 = vpop.f32.mrf.mxu0
  %v4944 = vadd.f32 0.0, %v4943
  %v4945 = vpop.f32.mrf.mxu0
  %v4946 = vadd.f32 0.0, %v4945
  %v4947 = vpop.f32.mrf.mxu0
  %v4948 = vpop.f32.mrf.mxu0
  %4949 = vdwg.mxu0
  %4950 = vmatprep.subr.bf16.mxu0 0
  %4951 = vmatpush1.bf16.msra.mxu0 0
  %4952 = vmatprep.subr.bf16.mxu0 0
  %4953 = vmatpush1.bf16.msra.mxu0 0
  %4954 = vmatprep.subr.bf16.mxu0 0
  %4955 = vmatpush1.bf16.msra.mxu0 0
  %4956 = vmatprep.subr.bf16.mxu0 0
  %4957 = vmatpush1.bf16.msra.mxu0 0
  %4958 = vmatprep.subr.bf16.mxu0 %v2552
  %4959 = vmatpush1.bf16.msra.mxu0 %v2551
  %4960 = vmatprep.subr.bf16.mxu0 %v2424
  %4961 = vmatpush1.bf16.msra.mxu0 %v2423
  %4962 = vmatprep.subr.bf16.mxu0 %v2296
  %4963 = vmatpush1.bf16.msra.mxu0 %v2295
  %4964 = vmatprep.subr.bf16.mxu0 %v2168
  %4965 = vmatpush1.bf16.msra.mxu0 %v2167
  %4966 = vmatprep.subr.bf16.mxu0 0
  %4967 = vmatpush2.bf16.msra.mxu0 0
  %4968 = vmatprep.subr.bf16.mxu0 0
  %4969 = vmatpush2.bf16.msra.mxu0 0
  %4970 = vmatprep.subr.bf16.mxu0 0
  %4971 = vmatpush2.bf16.msra.mxu0 0
  %4972 = vmatprep.subr.bf16.mxu0 0
  %4973 = vmatpush2.bf16.msra.mxu0 0
  %4974 = vmatprep.subr.bf16.mxu0 0
  %4975 = vmatpush2.bf16.msra.mxu0 0
  %4976 = vmatprep.subr.bf16.mxu0 0
  %4977 = vmatpush2.bf16.msra.mxu0 0
  %4978 = vmatprep.subr.bf16.mxu0 0
  %4979 = vmatpush2.bf16.msra.mxu0 0
  %4980 = vmatprep.subr.bf16.mxu0 0
  %4981 = vmatpush2.bf16.msra.mxu0 0
  %4982 = vmatprep.mubr.bf16.mxu0 0
  %4983 = vmatmul.mubr.bf16.gmra.mxu0 %v3103
  %v4984 = vpop.f32.mrf.mxu0
  %v4985 = vadd.f32 0.0, %v4984
  %v4986 = vpop.f32.mrf.mxu0
  %v4987 = vadd.f32 0.0, %v4986
  %v4988 = vpop.f32.mrf.mxu0
  %v4989 = vpop.f32.mrf.mxu0
  %4990 = vdwg.mxu0
  %4991 = vmatprep.subr.bf16.mxu0 0
  %4992 = vmatpush1.bf16.msra.mxu0 0
  %4993 = vmatprep.subr.bf16.mxu0 0
  %4994 = vmatpush1.bf16.msra.mxu0 0
  %4995 = vmatprep.subr.bf16.mxu0 0
  %4996 = vmatpush1.bf16.msra.mxu0 0
  %4997 = vmatprep.subr.bf16.mxu0 0
  %4998 = vmatpush1.bf16.msra.mxu0 0
  %4999 = vmatprep.subr.bf16.mxu0 %v2554
  %5000 = vmatpush1.bf16.msra.mxu0 %v2553
  %5001 = vmatprep.subr.bf16.mxu0 %v2426
  %5002 = vmatpush1.bf16.msra.mxu0 %v2425
  %5003 = vmatprep.subr.bf16.mxu0 %v2298
  %5004 = vmatpush1.bf16.msra.mxu0 %v2297
  %5005 = vmatprep.subr.bf16.mxu0 %v2170
  %5006 = vmatpush1.bf16.msra.mxu0 %v2169
  %5007 = vmatprep.subr.bf16.mxu0 0
  %5008 = vmatpush2.bf16.msra.mxu0 0
  %5009 = vmatprep.subr.bf16.mxu0 0
  %5010 = vmatpush2.bf16.msra.mxu0 0
  %5011 = vmatprep.subr.bf16.mxu0 0
  %5012 = vmatpush2.bf16.msra.mxu0 0
  %5013 = vmatprep.subr.bf16.mxu0 0
  %5014 = vmatpush2.bf16.msra.mxu0 0
  %5015 = vmatprep.subr.bf16.mxu0 0
  %5016 = vmatpush2.bf16.msra.mxu0 0
  %5017 = vmatprep.subr.bf16.mxu0 0
  %5018 = vmatpush2.bf16.msra.mxu0 0
  %5019 = vmatprep.subr.bf16.mxu0 0
  %5020 = vmatpush2.bf16.msra.mxu0 0
  %5021 = vmatprep.subr.bf16.mxu0 0
  %5022 = vmatpush2.bf16.msra.mxu0 0
  %5023 = vmatprep.mubr.bf16.mxu0 0
  %5024 = vmatmul.mubr.bf16.gmra.mxu0 %v3103
  %v5025 = vpop.f32.mrf.mxu0
  %v5026 = vadd.f32 0.0, %v5025
  %v5027 = vpop.f32.mrf.mxu0
  %v5028 = vadd.f32 0.0, %v5027
  %v5029 = vpop.f32.mrf.mxu0
  %v5030 = vpop.f32.mrf.mxu0
  %5031 = vdwg.mxu0
  %5032 = vmatprep.subr.bf16.mxu0 0
  %5033 = vmatpush1.bf16.msra.mxu0 0
  %5034 = vmatprep.subr.bf16.mxu0 0
  %5035 = vmatpush1.bf16.msra.mxu0 0
  %5036 = vmatprep.subr.bf16.mxu0 0
  %5037 = vmatpush1.bf16.msra.mxu0 0
  %5038 = vmatprep.subr.bf16.mxu0 0
  %5039 = vmatpush1.bf16.msra.mxu0 0
  %5040 = vmatprep.subr.bf16.mxu0 %v2556
  %5041 = vmatpush1.bf16.msra.mxu0 %v2555
  %5042 = vmatprep.subr.bf16.mxu0 %v2428
  %5043 = vmatpush1.bf16.msra.mxu0 %v2427
  %5044 = vmatprep.subr.bf16.mxu0 %v2300
  %5045 = vmatpush1.bf16.msra.mxu0 %v2299
  %5046 = vmatprep.subr.bf16.mxu0 %v2172
  %5047 = vmatpush1.bf16.msra.mxu0 %v2171
  %5048 = vmatprep.subr.bf16.mxu0 0
  %5049 = vmatpush2.bf16.msra.mxu0 0
  %5050 = vmatprep.subr.bf16.mxu0 0
  %5051 = vmatpush2.bf16.msra.mxu0 0
  %5052 = vmatprep.subr.bf16.mxu0 0
  %5053 = vmatpush2.bf16.msra.mxu0 0
  %5054 = vmatprep.subr.bf16.mxu0 0
  %5055 = vmatpush2.bf16.msra.mxu0 0
  %5056 = vmatprep.subr.bf16.mxu0 0
  %5057 = vmatpush2.bf16.msra.mxu0 0
  %5058 = vmatprep.subr.bf16.mxu0 0
  %5059 = vmatpush2.bf16.msra.mxu0 0
  %5060 = vmatprep.subr.bf16.mxu0 0
  %5061 = vmatpush2.bf16.msra.mxu0 0
  %5062 = vmatprep.subr.bf16.mxu0 0
  %5063 = vmatpush2.bf16.msra.mxu0 0
  %5064 = vmatprep.mubr.bf16.mxu0 0
  %5065 = vmatmul.mubr.bf16.gmra.mxu0 %v3103
  %v5066 = vpop.f32.mrf.mxu0
  %v5067 = vadd.f32 0.0, %v5066
  %v5068 = vpop.f32.mrf.mxu0
  %v5069 = vadd.f32 0.0, %v5068
  %v5070 = vpop.f32.mrf.mxu0
  %v5071 = vpop.f32.mrf.mxu0
  %5072 = vdwg.mxu0
  %5073 = vmatprep.subr.bf16.mxu0 0
  %5074 = vmatpush1.bf16.msra.mxu0 0
  %5075 = vmatprep.subr.bf16.mxu0 0
  %5076 = vmatpush1.bf16.msra.mxu0 0
  %5077 = vmatprep.subr.bf16.mxu0 0
  %5078 = vmatpush1.bf16.msra.mxu0 0
  %5079 = vmatprep.subr.bf16.mxu0 0
  %5080 = vmatpush1.bf16.msra.mxu0 0
  %5081 = vmatprep.subr.bf16.mxu0 %v2558
  %5082 = vmatpush1.bf16.msra.mxu0 %v2557
  %5083 = vmatprep.subr.bf16.mxu0 %v2430
  %5084 = vmatpush1.bf16.msra.mxu0 %v2429
  %5085 = vmatprep.subr.bf16.mxu0 %v2302
  %5086 = vmatpush1.bf16.msra.mxu0 %v2301
  %5087 = vmatprep.subr.bf16.mxu0 %v2174
  %5088 = vmatpush1.bf16.msra.mxu0 %v2173
  %5089 = vmatprep.subr.bf16.mxu0 0
  %5090 = vmatpush2.bf16.msra.mxu0 0
  %5091 = vmatprep.subr.bf16.mxu0 0
  %5092 = vmatpush2.bf16.msra.mxu0 0
  %5093 = vmatprep.subr.bf16.mxu0 0
  %5094 = vmatpush2.bf16.msra.mxu0 0
  %5095 = vmatprep.subr.bf16.mxu0 0
  %5096 = vmatpush2.bf16.msra.mxu0 0
  %5097 = vmatprep.subr.bf16.mxu0 0
  %5098 = vmatpush2.bf16.msra.mxu0 0
  %5099 = vmatprep.subr.bf16.mxu0 0
  %5100 = vmatpush2.bf16.msra.mxu0 0
  %5101 = vmatprep.subr.bf16.mxu0 0
  %5102 = vmatpush2.bf16.msra.mxu0 0
  %5103 = vmatprep.subr.bf16.mxu0 0
  %5104 = vmatpush2.bf16.msra.mxu0 0
  %5105 = vmatprep.mubr.bf16.mxu0 0
  %5106 = vmatmul.mubr.bf16.gmra.mxu0 %v3103
  %v5107 = vpop.f32.mrf.mxu0
  %v5108 = vadd.f32 0.0, %v5107
  %v5109 = vpop.f32.mrf.mxu0
  %v5110 = vadd.f32 0.0, %v5109
  %v5111 = vpop.f32.mrf.mxu0
  %v5112 = vpop.f32.mrf.mxu0
  %5113 = vdwg.mxu0
  %5114 = vmatprep.subr.bf16.mxu0 0
  %5115 = vmatpush1.bf16.msra.mxu0 0
  %5116 = vmatprep.subr.bf16.mxu0 0
  %5117 = vmatpush1.bf16.msra.mxu0 0
  %5118 = vmatprep.subr.bf16.mxu0 0
  %5119 = vmatpush1.bf16.msra.mxu0 0
  %5120 = vmatprep.subr.bf16.mxu0 0
  %5121 = vmatpush1.bf16.msra.mxu0 0
  %5122 = vmatprep.subr.bf16.mxu0 %v2560
  %5123 = vmatpush1.bf16.msra.mxu0 %v2559
  %5124 = vmatprep.subr.bf16.mxu0 %v2432
  %5125 = vmatpush1.bf16.msra.mxu0 %v2431
  %5126 = vmatprep.subr.bf16.mxu0 %v2304
  %5127 = vmatpush1.bf16.msra.mxu0 %v2303
  %5128 = vmatprep.subr.bf16.mxu0 %v2176
  %5129 = vmatpush1.bf16.msra.mxu0 %v2175
  %5130 = vmatprep.subr.bf16.mxu0 0
  %5131 = vmatpush2.bf16.msra.mxu0 0
  %5132 = vmatprep.subr.bf16.mxu0 0
  %5133 = vmatpush2.bf16.msra.mxu0 0
  %5134 = vmatprep.subr.bf16.mxu0 0
  %5135 = vmatpush2.bf16.msra.mxu0 0
  %5136 = vmatprep.subr.bf16.mxu0 0
  %5137 = vmatpush2.bf16.msra.mxu0 0
  %5138 = vmatprep.subr.bf16.mxu0 0
  %5139 = vmatpush2.bf16.msra.mxu0 0
  %5140 = vmatprep.subr.bf16.mxu0 0
  %5141 = vmatpush2.bf16.msra.mxu0 0
  %5142 = vmatprep.subr.bf16.mxu0 0
  %5143 = vmatpush2.bf16.msra.mxu0 0
  %5144 = vmatprep.subr.bf16.mxu0 0
  %5145 = vmatpush2.bf16.msra.mxu0 0
  %5146 = vmatprep.mubr.bf16.mxu0 0
  %5147 = vmatmul.mubr.bf16.gmra.mxu0 %v3103
  %v5148 = vpop.f32.mrf.mxu0
  %v5149 = vadd.f32 0.0, %v5148
  %v5150 = vpop.f32.mrf.mxu0
  %v5151 = vadd.f32 0.0, %v5150
  %v5152 = vpop.f32.mrf.mxu0
  %v5153 = vpop.f32.mrf.mxu0
  %5154 = vdwg.mxu0
  %5155 = vmatprep.subr.bf16.mxu0 0
  %5156 = vmatpush1.bf16.msra.mxu0 0
  %5157 = vmatprep.subr.bf16.mxu0 0
  %5158 = vmatpush1.bf16.msra.mxu0 0
  %5159 = vmatprep.subr.bf16.mxu0 0
  %5160 = vmatpush1.bf16.msra.mxu0 0
  %5161 = vmatprep.subr.bf16.mxu0 0
  %5162 = vmatpush1.bf16.msra.mxu0 0
  %5163 = vmatprep.subr.bf16.mxu0 %v2562
  %5164 = vmatpush1.bf16.msra.mxu0 %v2561
  %5165 = vmatprep.subr.bf16.mxu0 %v2434
  %5166 = vmatpush1.bf16.msra.mxu0 %v2433
  %5167 = vmatprep.subr.bf16.mxu0 %v2306
  %5168 = vmatpush1.bf16.msra.mxu0 %v2305
  %5169 = vmatprep.subr.bf16.mxu0 %v2178
  %5170 = vmatpush1.bf16.msra.mxu0 %v2177
  %5171 = vmatprep.subr.bf16.mxu0 0
  %5172 = vmatpush2.bf16.msra.mxu0 0
  %5173 = vmatprep.subr.bf16.mxu0 0
  %5174 = vmatpush2.bf16.msra.mxu0 0
  %5175 = vmatprep.subr.bf16.mxu0 0
  %5176 = vmatpush2.bf16.msra.mxu0 0
  %5177 = vmatprep.subr.bf16.mxu0 0
  %5178 = vmatpush2.bf16.msra.mxu0 0
  %5179 = vmatprep.subr.bf16.mxu0 0
  %5180 = vmatpush2.bf16.msra.mxu0 0
  %5181 = vmatprep.subr.bf16.mxu0 0
  %5182 = vmatpush2.bf16.msra.mxu0 0
  %5183 = vmatprep.subr.bf16.mxu0 0
  %5184 = vmatpush2.bf16.msra.mxu0 0
  %5185 = vmatprep.subr.bf16.mxu0 0
  %5186 = vmatpush2.bf16.msra.mxu0 0
  %5187 = vmatprep.mubr.bf16.mxu0 0
  %5188 = vmatmul.mubr.bf16.gmra.mxu0 %v3103
  %v5189 = vpop.f32.mrf.mxu0
  %v5190 = vadd.f32 0.0, %v5189
  %v5191 = vpop.f32.mrf.mxu0
  %v5192 = vadd.f32 0.0, %v5191
  %v5193 = vpop.f32.mrf.mxu0
  %v5194 = vpop.f32.mrf.mxu0
  %5195 = vdwg.mxu0
  %5196 = vmatprep.subr.bf16.mxu0 0
  %5197 = vmatpush1.bf16.msra.mxu0 0
  %5198 = vmatprep.subr.bf16.mxu0 0
  %5199 = vmatpush1.bf16.msra.mxu0 0
  %5200 = vmatprep.subr.bf16.mxu0 0
  %5201 = vmatpush1.bf16.msra.mxu0 0
  %5202 = vmatprep.subr.bf16.mxu0 0
  %5203 = vmatpush1.bf16.msra.mxu0 0
  %5204 = vmatprep.subr.bf16.mxu0 %v2564
  %5205 = vmatpush1.bf16.msra.mxu0 %v2563
  %5206 = vmatprep.subr.bf16.mxu0 %v2436
  %5207 = vmatpush1.bf16.msra.mxu0 %v2435
  %5208 = vmatprep.subr.bf16.mxu0 %v2308
  %5209 = vmatpush1.bf16.msra.mxu0 %v2307
  %5210 = vmatprep.subr.bf16.mxu0 %v2180
  %5211 = vmatpush1.bf16.msra.mxu0 %v2179
  %5212 = vmatprep.subr.bf16.mxu0 0
  %5213 = vmatpush2.bf16.msra.mxu0 0
  %5214 = vmatprep.subr.bf16.mxu0 0
  %5215 = vmatpush2.bf16.msra.mxu0 0
  %5216 = vmatprep.subr.bf16.mxu0 0
  %5217 = vmatpush2.bf16.msra.mxu0 0
  %5218 = vmatprep.subr.bf16.mxu0 0
  %5219 = vmatpush2.bf16.msra.mxu0 0
  %5220 = vmatprep.subr.bf16.mxu0 0
  %5221 = vmatpush2.bf16.msra.mxu0 0
  %5222 = vmatprep.subr.bf16.mxu0 0
  %5223 = vmatpush2.bf16.msra.mxu0 0
  %5224 = vmatprep.subr.bf16.mxu0 0
  %5225 = vmatpush2.bf16.msra.mxu0 0
  %5226 = vmatprep.subr.bf16.mxu0 0
  %5227 = vmatpush2.bf16.msra.mxu0 0
  %5228 = vmatprep.mubr.bf16.mxu0 0
  %5229 = vmatmul.mubr.bf16.gmra.mxu0 %v3103
  %v5230 = vpop.f32.mrf.mxu0
  %v5231 = vadd.f32 0.0, %v5230
  %v5232 = vpop.f32.mrf.mxu0
  %v5233 = vadd.f32 0.0, %v5232
  %v5234 = vpop.f32.mrf.mxu0
  %v5235 = vpop.f32.mrf.mxu0
  %5236 = vdwg.mxu0
  %5237 = vmatprep.subr.bf16.mxu0 0
  %5238 = vmatpush1.bf16.msra.mxu0 0
  %5239 = vmatprep.subr.bf16.mxu0 0
  %5240 = vmatpush1.bf16.msra.mxu0 0
  %5241 = vmatprep.subr.bf16.mxu0 0
  %5242 = vmatpush1.bf16.msra.mxu0 0
  %5243 = vmatprep.subr.bf16.mxu0 0
  %5244 = vmatpush1.bf16.msra.mxu0 0
  %5245 = vmatprep.subr.bf16.mxu0 %v2566
  %5246 = vmatpush1.bf16.msra.mxu0 %v2565
  %5247 = vmatprep.subr.bf16.mxu0 %v2438
  %5248 = vmatpush1.bf16.msra.mxu0 %v2437
  %5249 = vmatprep.subr.bf16.mxu0 %v2310
  %5250 = vmatpush1.bf16.msra.mxu0 %v2309
  %5251 = vmatprep.subr.bf16.mxu0 %v2182
  %5252 = vmatpush1.bf16.msra.mxu0 %v2181
  %5253 = vmatprep.subr.bf16.mxu0 0
  %5254 = vmatpush2.bf16.msra.mxu0 0
  %5255 = vmatprep.subr.bf16.mxu0 0
  %5256 = vmatpush2.bf16.msra.mxu0 0
  %5257 = vmatprep.subr.bf16.mxu0 0
  %5258 = vmatpush2.bf16.msra.mxu0 0
  %5259 = vmatprep.subr.bf16.mxu0 0
  %5260 = vmatpush2.bf16.msra.mxu0 0
  %5261 = vmatprep.subr.bf16.mxu0 0
  %5262 = vmatpush2.bf16.msra.mxu0 0
  %5263 = vmatprep.subr.bf16.mxu0 0
  %5264 = vmatpush2.bf16.msra.mxu0 0
  %5265 = vmatprep.subr.bf16.mxu0 0
  %5266 = vmatpush2.bf16.msra.mxu0 0
  %5267 = vmatprep.subr.bf16.mxu0 0
  %5268 = vmatpush2.bf16.msra.mxu0 0
  %5269 = vmatprep.mubr.bf16.mxu0 0
  %5270 = vmatmul.mubr.bf16.gmra.mxu0 %v3103
  %v5271 = vpop.f32.mrf.mxu0
  %v5272 = vadd.f32 0.0, %v5271
  %v5273 = vpop.f32.mrf.mxu0
  %v5274 = vadd.f32 0.0, %v5273
  %v5275 = vpop.f32.mrf.mxu0
  %v5276 = vpop.f32.mrf.mxu0
  %5277 = vdwg.mxu0
  %5278 = vmatprep.subr.bf16.mxu0 0
  %5279 = vmatpush1.bf16.msra.mxu0 0
  %5280 = vmatprep.subr.bf16.mxu0 0
  %5281 = vmatpush1.bf16.msra.mxu0 0
  %5282 = vmatprep.subr.bf16.mxu0 0
  %5283 = vmatpush1.bf16.msra.mxu0 0
  %5284 = vmatprep.subr.bf16.mxu0 0
  %5285 = vmatpush1.bf16.msra.mxu0 0
  %5286 = vmatprep.subr.bf16.mxu0 %v2568
  %5287 = vmatpush1.bf16.msra.mxu0 %v2567
  %5288 = vmatprep.subr.bf16.mxu0 %v2440
  %5289 = vmatpush1.bf16.msra.mxu0 %v2439
  %5290 = vmatprep.subr.bf16.mxu0 %v2312
  %5291 = vmatpush1.bf16.msra.mxu0 %v2311
  %5292 = vmatprep.subr.bf16.mxu0 %v2184
  %5293 = vmatpush1.bf16.msra.mxu0 %v2183
  %5294 = vmatprep.subr.bf16.mxu0 0
  %5295 = vmatpush2.bf16.msra.mxu0 0
  %5296 = vmatprep.subr.bf16.mxu0 0
  %5297 = vmatpush2.bf16.msra.mxu0 0
  %5298 = vmatprep.subr.bf16.mxu0 0
  %5299 = vmatpush2.bf16.msra.mxu0 0
  %5300 = vmatprep.subr.bf16.mxu0 0
  %5301 = vmatpush2.bf16.msra.mxu0 0
  %5302 = vmatprep.subr.bf16.mxu0 0
  %5303 = vmatpush2.bf16.msra.mxu0 0
  %5304 = vmatprep.subr.bf16.mxu0 0
  %5305 = vmatpush2.bf16.msra.mxu0 0
  %5306 = vmatprep.subr.bf16.mxu0 0
  %5307 = vmatpush2.bf16.msra.mxu0 0
  %5308 = vmatprep.subr.bf16.mxu0 0
  %5309 = vmatpush2.bf16.msra.mxu0 0
  %5310 = vmatprep.mubr.bf16.mxu0 0
  %5311 = vmatmul.mubr.bf16.gmra.mxu0 %v3103
  %v5312 = vpop.f32.mrf.mxu0
  %v5313 = vadd.f32 0.0, %v5312
  %v5314 = vpop.f32.mrf.mxu0
  %v5315 = vadd.f32 0.0, %v5314
  %v5316 = vpop.f32.mrf.mxu0
  %v5317 = vpop.f32.mrf.mxu0
  %5318 = vdwg.mxu0
  %5319 = vmatprep.subr.bf16.mxu0 0
  %5320 = vmatpush1.bf16.msra.mxu0 0
  %5321 = vmatprep.subr.bf16.mxu0 0
  %5322 = vmatpush1.bf16.msra.mxu0 0
  %5323 = vmatprep.subr.bf16.mxu0 0
  %5324 = vmatpush1.bf16.msra.mxu0 0
  %5325 = vmatprep.subr.bf16.mxu0 0
  %5326 = vmatpush1.bf16.msra.mxu0 0
  %5327 = vmatprep.subr.bf16.mxu0 %v2570
  %5328 = vmatpush1.bf16.msra.mxu0 %v2569
  %5329 = vmatprep.subr.bf16.mxu0 %v2442
  %5330 = vmatpush1.bf16.msra.mxu0 %v2441
  %5331 = vmatprep.subr.bf16.mxu0 %v2314
  %5332 = vmatpush1.bf16.msra.mxu0 %v2313
  %5333 = vmatprep.subr.bf16.mxu0 %v2186
  %5334 = vmatpush1.bf16.msra.mxu0 %v2185
  %5335 = vmatprep.subr.bf16.mxu0 0
  %5336 = vmatpush2.bf16.msra.mxu0 0
  %5337 = vmatprep.subr.bf16.mxu0 0
  %5338 = vmatpush2.bf16.msra.mxu0 0
  %5339 = vmatprep.subr.bf16.mxu0 0
  %5340 = vmatpush2.bf16.msra.mxu0 0
  %5341 = vmatprep.subr.bf16.mxu0 0
  %5342 = vmatpush2.bf16.msra.mxu0 0
  %5343 = vmatprep.subr.bf16.mxu0 0
  %5344 = vmatpush2.bf16.msra.mxu0 0
  %5345 = vmatprep.subr.bf16.mxu0 0
  %5346 = vmatpush2.bf16.msra.mxu0 0
  %5347 = vmatprep.subr.bf16.mxu0 0
  %5348 = vmatpush2.bf16.msra.mxu0 0
  %5349 = vmatprep.subr.bf16.mxu0 0
  %5350 = vmatpush2.bf16.msra.mxu0 0
  %5351 = vmatprep.mubr.bf16.mxu0 0
  %5352 = vmatmul.mubr.bf16.gmra.mxu0 %v3103
  %v5353 = vpop.f32.mrf.mxu0
  %v5354 = vadd.f32 0.0, %v5353
  %v5355 = vpop.f32.mrf.mxu0
  %v5356 = vadd.f32 0.0, %v5355
  %v5357 = vpop.f32.mrf.mxu0
  %v5358 = vpop.f32.mrf.mxu0
  %5359 = vdwg.mxu0
  %5360 = vmatprep.subr.bf16.mxu0 0
  %5361 = vmatpush1.bf16.msra.mxu0 0
  %5362 = vmatprep.subr.bf16.mxu0 0
  %5363 = vmatpush1.bf16.msra.mxu0 0
  %5364 = vmatprep.subr.bf16.mxu0 0
  %5365 = vmatpush1.bf16.msra.mxu0 0
  %5366 = vmatprep.subr.bf16.mxu0 0
  %5367 = vmatpush1.bf16.msra.mxu0 0
  %5368 = vmatprep.subr.bf16.mxu0 %v2572
  %5369 = vmatpush1.bf16.msra.mxu0 %v2571
  %5370 = vmatprep.subr.bf16.mxu0 %v2444
  %5371 = vmatpush1.bf16.msra.mxu0 %v2443
  %5372 = vmatprep.subr.bf16.mxu0 %v2316
  %5373 = vmatpush1.bf16.msra.mxu0 %v2315
  %5374 = vmatprep.subr.bf16.mxu0 %v2188
  %5375 = vmatpush1.bf16.msra.mxu0 %v2187
  %5376 = vmatprep.subr.bf16.mxu0 0
  %5377 = vmatpush2.bf16.msra.mxu0 0
  %5378 = vmatprep.subr.bf16.mxu0 0
  %5379 = vmatpush2.bf16.msra.mxu0 0
  %5380 = vmatprep.subr.bf16.mxu0 0
  %5381 = vmatpush2.bf16.msra.mxu0 0
  %5382 = vmatprep.subr.bf16.mxu0 0
  %5383 = vmatpush2.bf16.msra.mxu0 0
  %5384 = vmatprep.subr.bf16.mxu0 0
  %5385 = vmatpush2.bf16.msra.mxu0 0
  %5386 = vmatprep.subr.bf16.mxu0 0
  %5387 = vmatpush2.bf16.msra.mxu0 0
  %5388 = vmatprep.subr.bf16.mxu0 0
  %5389 = vmatpush2.bf16.msra.mxu0 0
  %5390 = vmatprep.subr.bf16.mxu0 0
  %5391 = vmatpush2.bf16.msra.mxu0 0
  %5392 = vmatprep.mubr.bf16.mxu0 0
  %5393 = vmatmul.mubr.bf16.gmra.mxu0 %v3103
  %v5394 = vpop.f32.mrf.mxu0
  %v5395 = vadd.f32 0.0, %v5394
  %v5396 = vpop.f32.mrf.mxu0
  %v5397 = vadd.f32 0.0, %v5396
  %v5398 = vpop.f32.mrf.mxu0
  %v5399 = vpop.f32.mrf.mxu0
  %5400 = vdwg.mxu0
  %5401 = vmatprep.subr.bf16.mxu0 0
  %5402 = vmatpush1.bf16.msra.mxu0 0
  %5403 = vmatprep.subr.bf16.mxu0 0
  %5404 = vmatpush1.bf16.msra.mxu0 0
  %5405 = vmatprep.subr.bf16.mxu0 0
  %5406 = vmatpush1.bf16.msra.mxu0 0
  %5407 = vmatprep.subr.bf16.mxu0 0
  %5408 = vmatpush1.bf16.msra.mxu0 0
  %5409 = vmatprep.subr.bf16.mxu0 %v2574
  %5410 = vmatpush1.bf16.msra.mxu0 %v2573
  %5411 = vmatprep.subr.bf16.mxu0 %v2446
  %5412 = vmatpush1.bf16.msra.mxu0 %v2445
  %5413 = vmatprep.subr.bf16.mxu0 %v2318
  %5414 = vmatpush1.bf16.msra.mxu0 %v2317
  %5415 = vmatprep.subr.bf16.mxu0 %v2190
  %5416 = vmatpush1.bf16.msra.mxu0 %v2189
  %5417 = vmatprep.subr.bf16.mxu0 0
  %5418 = vmatpush2.bf16.msra.mxu0 0
  %5419 = vmatprep.subr.bf16.mxu0 0
  %5420 = vmatpush2.bf16.msra.mxu0 0
  %5421 = vmatprep.subr.bf16.mxu0 0
  %5422 = vmatpush2.bf16.msra.mxu0 0
  %5423 = vmatprep.subr.bf16.mxu0 0
  %5424 = vmatpush2.bf16.msra.mxu0 0
  %5425 = vmatprep.subr.bf16.mxu0 0
  %5426 = vmatpush2.bf16.msra.mxu0 0
  %5427 = vmatprep.subr.bf16.mxu0 0
  %5428 = vmatpush2.bf16.msra.mxu0 0
  %5429 = vmatprep.subr.bf16.mxu0 0
  %5430 = vmatpush2.bf16.msra.mxu0 0
  %5431 = vmatprep.subr.bf16.mxu0 0
  %5432 = vmatpush2.bf16.msra.mxu0 0
  %5433 = vmatprep.mubr.bf16.mxu0 0
  %5434 = vmatmul.mubr.bf16.gmra.mxu0 %v3103
  %v5435 = vpop.f32.mrf.mxu0
  %v5436 = vadd.f32 0.0, %v5435
  %v5437 = vpop.f32.mrf.mxu0
  %v5438 = vadd.f32 0.0, %v5437
  %v5439 = vpop.f32.mrf.mxu0
  %v5440 = vpop.f32.mrf.mxu0
  %5441 = vdwg.mxu0
  %5442 = vmatprep.subr.bf16.mxu0 0
  %5443 = vmatpush1.bf16.msra.mxu0 0
  %5444 = vmatprep.subr.bf16.mxu0 0
  %5445 = vmatpush1.bf16.msra.mxu0 0
  %5446 = vmatprep.subr.bf16.mxu0 0
  %5447 = vmatpush1.bf16.msra.mxu0 0
  %5448 = vmatprep.subr.bf16.mxu0 0
  %5449 = vmatpush1.bf16.msra.mxu0 0
  %5450 = vmatprep.subr.bf16.mxu0 %v2576
  %5451 = vmatpush1.bf16.msra.mxu0 %v2575
  %5452 = vmatprep.subr.bf16.mxu0 %v2448
  %5453 = vmatpush1.bf16.msra.mxu0 %v2447
  %5454 = vmatprep.subr.bf16.mxu0 %v2320
  %5455 = vmatpush1.bf16.msra.mxu0 %v2319
  %5456 = vmatprep.subr.bf16.mxu0 %v2192
  %5457 = vmatpush1.bf16.msra.mxu0 %v2191
  %5458 = vmatprep.subr.bf16.mxu0 0
  %5459 = vmatpush2.bf16.msra.mxu0 0
  %5460 = vmatprep.subr.bf16.mxu0 0
  %5461 = vmatpush2.bf16.msra.mxu0 0
  %5462 = vmatprep.subr.bf16.mxu0 0
  %5463 = vmatpush2.bf16.msra.mxu0 0
  %5464 = vmatprep.subr.bf16.mxu0 0
  %5465 = vmatpush2.bf16.msra.mxu0 0
  %5466 = vmatprep.subr.bf16.mxu0 0
  %5467 = vmatpush2.bf16.msra.mxu0 0
  %5468 = vmatprep.subr.bf16.mxu0 0
  %5469 = vmatpush2.bf16.msra.mxu0 0
  %5470 = vmatprep.subr.bf16.mxu0 0
  %5471 = vmatpush2.bf16.msra.mxu0 0
  %5472 = vmatprep.subr.bf16.mxu0 0
  %5473 = vmatpush2.bf16.msra.mxu0 0
  %5474 = vmatprep.mubr.bf16.mxu0 0
  %5475 = vmatmul.mubr.bf16.gmra.mxu0 %v3103
  %v5476 = vpop.f32.mrf.mxu0
  %v5477 = vadd.f32 0.0, %v5476
  %v5478 = vpop.f32.mrf.mxu0
  %v5479 = vadd.f32 0.0, %v5478
  %v5480 = vpop.f32.mrf.mxu0
  %v5481 = vpop.f32.mrf.mxu0
  %5482 = vdwg.mxu0
  %5483 = vmatprep.subr.bf16.mxu0 0
  %5484 = vmatpush1.bf16.msra.mxu0 0
  %5485 = vmatprep.subr.bf16.mxu0 0
  %5486 = vmatpush1.bf16.msra.mxu0 0
  %5487 = vmatprep.subr.bf16.mxu0 0
  %5488 = vmatpush1.bf16.msra.mxu0 0
  %5489 = vmatprep.subr.bf16.mxu0 0
  %5490 = vmatpush1.bf16.msra.mxu0 0
  %5491 = vmatprep.subr.bf16.mxu0 %v2578
  %5492 = vmatpush1.bf16.msra.mxu0 %v2577
  %5493 = vmatprep.subr.bf16.mxu0 %v2450
  %5494 = vmatpush1.bf16.msra.mxu0 %v2449
  %5495 = vmatprep.subr.bf16.mxu0 %v2322
  %5496 = vmatpush1.bf16.msra.mxu0 %v2321
  %5497 = vmatprep.subr.bf16.mxu0 %v2194
  %5498 = vmatpush1.bf16.msra.mxu0 %v2193
  %5499 = vmatprep.subr.bf16.mxu0 0
  %5500 = vmatpush2.bf16.msra.mxu0 0
  %5501 = vmatprep.subr.bf16.mxu0 0
  %5502 = vmatpush2.bf16.msra.mxu0 0
  %5503 = vmatprep.subr.bf16.mxu0 0
  %5504 = vmatpush2.bf16.msra.mxu0 0
  %5505 = vmatprep.subr.bf16.mxu0 0
  %5506 = vmatpush2.bf16.msra.mxu0 0
  %5507 = vmatprep.subr.bf16.mxu0 0
  %5508 = vmatpush2.bf16.msra.mxu0 0
  %5509 = vmatprep.subr.bf16.mxu0 0
  %5510 = vmatpush2.bf16.msra.mxu0 0
  %5511 = vmatprep.subr.bf16.mxu0 0
  %5512 = vmatpush2.bf16.msra.mxu0 0
  %5513 = vmatprep.subr.bf16.mxu0 0
  %5514 = vmatpush2.bf16.msra.mxu0 0
  %5515 = vmatprep.mubr.bf16.mxu0 0
  %5516 = vmatmul.mubr.bf16.gmra.mxu0 %v3103
  %v5517 = vpop.f32.mrf.mxu0
  %v5518 = vadd.f32 0.0, %v5517
  %v5519 = vpop.f32.mrf.mxu0
  %v5520 = vadd.f32 0.0, %v5519
  %v5521 = vpop.f32.mrf.mxu0
  %v5522 = vpop.f32.mrf.mxu0
  %5523 = vdwg.mxu0
  %5524 = vmatprep.subr.bf16.mxu0 0
  %5525 = vmatpush1.bf16.msra.mxu0 0
  %5526 = vmatprep.subr.bf16.mxu0 0
  %5527 = vmatpush1.bf16.msra.mxu0 0
  %5528 = vmatprep.subr.bf16.mxu0 0
  %5529 = vmatpush1.bf16.msra.mxu0 0
  %5530 = vmatprep.subr.bf16.mxu0 0
  %5531 = vmatpush1.bf16.msra.mxu0 0
  %5532 = vmatprep.subr.bf16.mxu0 %v2580
  %5533 = vmatpush1.bf16.msra.mxu0 %v2579
  %5534 = vmatprep.subr.bf16.mxu0 %v2452
  %5535 = vmatpush1.bf16.msra.mxu0 %v2451
  %5536 = vmatprep.subr.bf16.mxu0 %v2324
  %5537 = vmatpush1.bf16.msra.mxu0 %v2323
  %5538 = vmatprep.subr.bf16.mxu0 %v2196
  %5539 = vmatpush1.bf16.msra.mxu0 %v2195
  %5540 = vmatprep.subr.bf16.mxu0 0
  %5541 = vmatpush2.bf16.msra.mxu0 0
  %5542 = vmatprep.subr.bf16.mxu0 0
  %5543 = vmatpush2.bf16.msra.mxu0 0
  %5544 = vmatprep.subr.bf16.mxu0 0
  %5545 = vmatpush2.bf16.msra.mxu0 0
  %5546 = vmatprep.subr.bf16.mxu0 0
  %5547 = vmatpush2.bf16.msra.mxu0 0
  %5548 = vmatprep.subr.bf16.mxu0 0
  %5549 = vmatpush2.bf16.msra.mxu0 0
  %5550 = vmatprep.subr.bf16.mxu0 0
  %5551 = vmatpush2.bf16.msra.mxu0 0
  %5552 = vmatprep.subr.bf16.mxu0 0
  %5553 = vmatpush2.bf16.msra.mxu0 0
  %5554 = vmatprep.subr.bf16.mxu0 0
  %5555 = vmatpush2.bf16.msra.mxu0 0
  %5556 = vmatprep.mubr.bf16.mxu0 0
  %5557 = vmatmul.mubr.bf16.gmra.mxu0 %v3103
  %v5558 = vpop.f32.mrf.mxu0
  %v5559 = vadd.f32 0.0, %v5558
  %v5560 = vpop.f32.mrf.mxu0
  %v5561 = vadd.f32 0.0, %v5560
  %v5562 = vpop.f32.mrf.mxu0
  %v5563 = vpop.f32.mrf.mxu0
  %5564 = vdwg.mxu0
  %5565 = vmatprep.subr.bf16.mxu0 0
  %5566 = vmatpush1.bf16.msra.mxu0 0
  %5567 = vmatprep.subr.bf16.mxu0 0
  %5568 = vmatpush1.bf16.msra.mxu0 0
  %5569 = vmatprep.subr.bf16.mxu0 0
  %5570 = vmatpush1.bf16.msra.mxu0 0
  %5571 = vmatprep.subr.bf16.mxu0 0
  %5572 = vmatpush1.bf16.msra.mxu0 0
  %5573 = vmatprep.subr.bf16.mxu0 %v2582
  %5574 = vmatpush1.bf16.msra.mxu0 %v2581
  %5575 = vmatprep.subr.bf16.mxu0 %v2454
  %5576 = vmatpush1.bf16.msra.mxu0 %v2453
  %5577 = vmatprep.subr.bf16.mxu0 %v2326
  %5578 = vmatpush1.bf16.msra.mxu0 %v2325
  %5579 = vmatprep.subr.bf16.mxu0 %v2198
  %5580 = vmatpush1.bf16.msra.mxu0 %v2197
  %5581 = vmatprep.subr.bf16.mxu0 0
  %5582 = vmatpush2.bf16.msra.mxu0 0
  %5583 = vmatprep.subr.bf16.mxu0 0
  %5584 = vmatpush2.bf16.msra.mxu0 0
  %5585 = vmatprep.subr.bf16.mxu0 0
  %5586 = vmatpush2.bf16.msra.mxu0 0
  %5587 = vmatprep.subr.bf16.mxu0 0
  %5588 = vmatpush2.bf16.msra.mxu0 0
  %5589 = vmatprep.subr.bf16.mxu0 0
  %5590 = vmatpush2.bf16.msra.mxu0 0
  %5591 = vmatprep.subr.bf16.mxu0 0
  %5592 = vmatpush2.bf16.msra.mxu0 0
  %5593 = vmatprep.subr.bf16.mxu0 0
  %5594 = vmatpush2.bf16.msra.mxu0 0
  %5595 = vmatprep.subr.bf16.mxu0 0
  %5596 = vmatpush2.bf16.msra.mxu0 0
  %5597 = vmatprep.mubr.bf16.mxu0 0
  %5598 = vmatmul.mubr.bf16.gmra.mxu0 %v3103
  %v5599 = vpop.f32.mrf.mxu0
  %v5600 = vadd.f32 0.0, %v5599
  %v5601 = vpop.f32.mrf.mxu0
  %v5602 = vadd.f32 0.0, %v5601
  %v5603 = vpop.f32.mrf.mxu0
  %v5604 = vpop.f32.mrf.mxu0
  %5605 = vdwg.mxu0
  %5606 = vmatprep.subr.bf16.mxu0 0
  %5607 = vmatpush1.bf16.msra.mxu0 0
  %5608 = vmatprep.subr.bf16.mxu0 0
  %5609 = vmatpush1.bf16.msra.mxu0 0
  %5610 = vmatprep.subr.bf16.mxu0 0
  %5611 = vmatpush1.bf16.msra.mxu0 0
  %5612 = vmatprep.subr.bf16.mxu0 0
  %5613 = vmatpush1.bf16.msra.mxu0 0
  %5614 = vmatprep.subr.bf16.mxu0 %v2584
  %5615 = vmatpush1.bf16.msra.mxu0 %v2583
  %5616 = vmatprep.subr.bf16.mxu0 %v2456
  %5617 = vmatpush1.bf16.msra.mxu0 %v2455
  %5618 = vmatprep.subr.bf16.mxu0 %v2328
  %5619 = vmatpush1.bf16.msra.mxu0 %v2327
  %5620 = vmatprep.subr.bf16.mxu0 %v2200
  %5621 = vmatpush1.bf16.msra.mxu0 %v2199
  %5622 = vmatprep.subr.bf16.mxu0 0
  %5623 = vmatpush2.bf16.msra.mxu0 0
  %5624 = vmatprep.subr.bf16.mxu0 0
  %5625 = vmatpush2.bf16.msra.mxu0 0
  %5626 = vmatprep.subr.bf16.mxu0 0
  %5627 = vmatpush2.bf16.msra.mxu0 0
  %5628 = vmatprep.subr.bf16.mxu0 0
  %5629 = vmatpush2.bf16.msra.mxu0 0
  %5630 = vmatprep.subr.bf16.mxu0 0
  %5631 = vmatpush2.bf16.msra.mxu0 0
  %5632 = vmatprep.subr.bf16.mxu0 0
  %5633 = vmatpush2.bf16.msra.mxu0 0
  %5634 = vmatprep.subr.bf16.mxu0 0
  %5635 = vmatpush2.bf16.msra.mxu0 0
  %5636 = vmatprep.subr.bf16.mxu0 0
  %5637 = vmatpush2.bf16.msra.mxu0 0
  %5638 = vmatprep.mubr.bf16.mxu0 0
  %5639 = vmatmul.mubr.bf16.gmra.mxu0 %v3103
  %v5640 = vpop.f32.mrf.mxu0
  %v5641 = vadd.f32 0.0, %v5640
  %v5642 = vpop.f32.mrf.mxu0
  %v5643 = vadd.f32 0.0, %v5642
  %v5644 = vpop.f32.mrf.mxu0
  %v5645 = vpop.f32.mrf.mxu0
  %5646 = vdwg.mxu0
  %5647 = vmatprep.subr.bf16.mxu0 0
  %5648 = vmatpush1.bf16.msra.mxu0 0
  %5649 = vmatprep.subr.bf16.mxu0 0
  %5650 = vmatpush1.bf16.msra.mxu0 0
  %5651 = vmatprep.subr.bf16.mxu0 0
  %5652 = vmatpush1.bf16.msra.mxu0 0
  %5653 = vmatprep.subr.bf16.mxu0 0
  %5654 = vmatpush1.bf16.msra.mxu0 0
  %5655 = vmatprep.subr.bf16.mxu0 %v2586
  %5656 = vmatpush1.bf16.msra.mxu0 %v2585
  %5657 = vmatprep.subr.bf16.mxu0 %v2458
  %5658 = vmatpush1.bf16.msra.mxu0 %v2457
  %5659 = vmatprep.subr.bf16.mxu0 %v2330
  %5660 = vmatpush1.bf16.msra.mxu0 %v2329
  %5661 = vmatprep.subr.bf16.mxu0 %v2202
  %5662 = vmatpush1.bf16.msra.mxu0 %v2201
  %5663 = vmatprep.subr.bf16.mxu0 0
  %5664 = vmatpush2.bf16.msra.mxu0 0
  %5665 = vmatprep.subr.bf16.mxu0 0
  %5666 = vmatpush2.bf16.msra.mxu0 0
  %5667 = vmatprep.subr.bf16.mxu0 0
  %5668 = vmatpush2.bf16.msra.mxu0 0
  %5669 = vmatprep.subr.bf16.mxu0 0
  %5670 = vmatpush2.bf16.msra.mxu0 0
  %5671 = vmatprep.subr.bf16.mxu0 0
  %5672 = vmatpush2.bf16.msra.mxu0 0
  %5673 = vmatprep.subr.bf16.mxu0 0
  %5674 = vmatpush2.bf16.msra.mxu0 0
  %5675 = vmatprep.subr.bf16.mxu0 0
  %5676 = vmatpush2.bf16.msra.mxu0 0
  %5677 = vmatprep.subr.bf16.mxu0 0
  %5678 = vmatpush2.bf16.msra.mxu0 0
  %5679 = vmatprep.mubr.bf16.mxu0 0
  %5680 = vmatmul.mubr.bf16.gmra.mxu0 %v3103
  %v5681 = vpop.f32.mrf.mxu0
  %v5682 = vadd.f32 0.0, %v5681
  %v5683 = vpop.f32.mrf.mxu0
  %v5684 = vadd.f32 0.0, %v5683
  %v5685 = vpop.f32.mrf.mxu0
  %v5686 = vpop.f32.mrf.mxu0
  %5687 = vdwg.mxu0
  %5688 = vmatprep.subr.bf16.mxu0 0
  %5689 = vmatpush1.bf16.msra.mxu0 0
  %5690 = vmatprep.subr.bf16.mxu0 0
  %5691 = vmatpush1.bf16.msra.mxu0 0
  %5692 = vmatprep.subr.bf16.mxu0 0
  %5693 = vmatpush1.bf16.msra.mxu0 0
  %5694 = vmatprep.subr.bf16.mxu0 0
  %5695 = vmatpush1.bf16.msra.mxu0 0
  %5696 = vmatprep.subr.bf16.mxu0 %v2588
  %5697 = vmatpush1.bf16.msra.mxu0 %v2587
  %5698 = vmatprep.subr.bf16.mxu0 %v2460
  %5699 = vmatpush1.bf16.msra.mxu0 %v2459
  %5700 = vmatprep.subr.bf16.mxu0 %v2332
  %5701 = vmatpush1.bf16.msra.mxu0 %v2331
  %5702 = vmatprep.subr.bf16.mxu0 %v2204
  %5703 = vmatpush1.bf16.msra.mxu0 %v2203
  %5704 = vmatprep.subr.bf16.mxu0 0
  %5705 = vmatpush2.bf16.msra.mxu0 0
  %5706 = vmatprep.subr.bf16.mxu0 0
  %5707 = vmatpush2.bf16.msra.mxu0 0
  %5708 = vmatprep.subr.bf16.mxu0 0
  %5709 = vmatpush2.bf16.msra.mxu0 0
  %5710 = vmatprep.subr.bf16.mxu0 0
  %5711 = vmatpush2.bf16.msra.mxu0 0
  %5712 = vmatprep.subr.bf16.mxu0 0
  %5713 = vmatpush2.bf16.msra.mxu0 0
  %5714 = vmatprep.subr.bf16.mxu0 0
  %5715 = vmatpush2.bf16.msra.mxu0 0
  %5716 = vmatprep.subr.bf16.mxu0 0
  %5717 = vmatpush2.bf16.msra.mxu0 0
  %5718 = vmatprep.subr.bf16.mxu0 0
  %5719 = vmatpush2.bf16.msra.mxu0 0
  %5720 = vmatprep.mubr.bf16.mxu0 0
  %5721 = vmatmul.mubr.bf16.gmra.mxu0 %v3103
  %v5722 = vpop.f32.mrf.mxu0
  %v5723 = vadd.f32 0.0, %v5722
  %v5724 = vpop.f32.mrf.mxu0
  %v5725 = vadd.f32 0.0, %v5724
  %v5726 = vpop.f32.mrf.mxu0
  %v5727 = vpop.f32.mrf.mxu0
  %5728 = vdwg.mxu0
  %v5857 = vcombine.low %v3140, %v3142
  %v5858 = vcombine.low %v3181, %v3183
  %v5859 = vcombine.low %v3222, %v3224
  %v5860 = vcombine.low %v3263, %v3265
  %v5862 = vunpack.c.l.s4 1966171168
  %v5863 = vunpack.c.0.s8 %v5862
  %v5864 = vlaneseq
  %v5865 = vshrl.u32 %v5864, 7
  %v5866 = vsub.s32 %v5863, %v5865
  %v5867 = vrot.slane %v5857, %v5866
  %v5869 = vunpack.c.l.s4 1966171168
  %v5870 = vunpack.c.0.s8 %v5869
  %v5871 = vlaneseq
  %v5872 = vshrl.u32 %v5871, 7
  %v5873 = vsub.s32 %v5870, %v5872
  %v5874 = vrot.slane %v5858, %v5873
  %v5876 = vunpack.c.l.s4 1966171168
  %v5877 = vunpack.c.0.s8 %v5876
  %v5878 = vlaneseq
  %v5879 = vshrl.u32 %v5878, 7
  %v5880 = vsub.s32 %v5877, %v5879
  %v5881 = vrot.slane %v5859, %v5880
  %v5883 = vunpack.c.l.s4 1966171168
  %v5884 = vunpack.c.0.s8 %v5883
  %v5885 = vlaneseq
  %v5886 = vshrl.u32 %v5885, 7
  %v5887 = vsub.s32 %v5884, %v5886
  %v5888 = vrot.slane %v5860, %v5887
  %v5889 = vcombine.low %v5867, %v5874
  %v5890 = vcombine.high %v5867, %v5874
  %v5891 = vcombine.low %v5881, %v5888
  %v5892 = vcombine.high %v5881, %v5888
  %v5894 = vunpack.c.l.s4 1966171168
  %v5895 = vunpack.c.0.s8 %v5894
  %v5896 = vlaneseq
  %v5897 = vshrl.u32 %v5896, 7
  %v5898 = vsub.s32 %v5895, %v5897
  %v5899 = vrot.slane %v5889, %v5898
  %v5901 = vunpack.c.l.s4 1966171168
  %v5902 = vunpack.c.0.s8 %v5901
  %v5903 = vlaneseq
  %v5904 = vshrl.u32 %v5903, 7
  %v5905 = vsub.s32 %v5902, %v5904
  %v5906 = vrot.slane %v5890, %v5905
  %v5908 = vunpack.c.l.s4 1966171168
  %v5909 = vunpack.c.0.s8 %v5908
  %v5910 = vlaneseq
  %v5911 = vshrl.u32 %v5910, 7
  %v5912 = vsub.s32 %v5909, %v5911
  %v5913 = vrot.slane %v5891, %v5912
  %v5915 = vunpack.c.l.s4 1966171168
  %v5916 = vunpack.c.0.s8 %v5915
  %v5917 = vlaneseq
  %v5918 = vshrl.u32 %v5917, 7
  %v5919 = vsub.s32 %v5916, %v5918
  %v5920 = vrot.slane %v5892, %v5919
  %v5921 = vcombine.low %v5899, %v5913
  %v5922 = vcombine.low %v5906, %v5920
  %v5923 = vcombine.low %v3304, %v3306
  %v5924 = vcombine.low %v3345, %v3347
  %v5925 = vcombine.low %v3386, %v3388
  %v5926 = vcombine.low %v3427, %v3429
  %v5928 = vunpack.c.l.s4 1966171168
  %v5929 = vunpack.c.0.s8 %v5928
  %v5930 = vlaneseq
  %v5931 = vshrl.u32 %v5930, 7
  %v5932 = vsub.s32 %v5929, %v5931
  %v5933 = vrot.slane %v5923, %v5932
  %v5935 = vunpack.c.l.s4 1966171168
  %v5936 = vunpack.c.0.s8 %v5935
  %v5937 = vlaneseq
  %v5938 = vshrl.u32 %v5937, 7
  %v5939 = vsub.s32 %v5936, %v5938
  %v5940 = vrot.slane %v5924, %v5939
  %v5942 = vunpack.c.l.s4 1966171168
  %v5943 = vunpack.c.0.s8 %v5942
  %v5944 = vlaneseq
  %v5945 = vshrl.u32 %v5944, 7
  %v5946 = vsub.s32 %v5943, %v5945
  %v5947 = vrot.slane %v5925, %v5946
  %v5949 = vunpack.c.l.s4 1966171168
  %v5950 = vunpack.c.0.s8 %v5949
  %v5951 = vlaneseq
  %v5952 = vshrl.u32 %v5951, 7
  %v5953 = vsub.s32 %v5950, %v5952
  %v5954 = vrot.slane %v5926, %v5953
  %v5955 = vcombine.low %v5933, %v5940
  %v5956 = vcombine.high %v5933, %v5940
  %v5957 = vcombine.low %v5947, %v5954
  %v5958 = vcombine.high %v5947, %v5954
  %v5960 = vunpack.c.l.s4 1966171168
  %v5961 = vunpack.c.0.s8 %v5960
  %v5962 = vlaneseq
  %v5963 = vshrl.u32 %v5962, 7
  %v5964 = vsub.s32 %v5961, %v5963
  %v5965 = vrot.slane %v5955, %v5964
  %v5967 = vunpack.c.l.s4 1966171168
  %v5968 = vunpack.c.0.s8 %v5967
  %v5969 = vlaneseq
  %v5970 = vshrl.u32 %v5969, 7
  %v5971 = vsub.s32 %v5968, %v5970
  %v5972 = vrot.slane %v5956, %v5971
  %v5974 = vunpack.c.l.s4 1966171168
  %v5975 = vunpack.c.0.s8 %v5974
  %v5976 = vlaneseq
  %v5977 = vshrl.u32 %v5976, 7
  %v5978 = vsub.s32 %v5975, %v5977
  %v5979 = vrot.slane %v5957, %v5978
  %v5981 = vunpack.c.l.s4 1966171168
  %v5982 = vunpack.c.0.s8 %v5981
  %v5983 = vlaneseq
  %v5984 = vshrl.u32 %v5983, 7
  %v5985 = vsub.s32 %v5982, %v5984
  %v5986 = vrot.slane %v5958, %v5985
  %v5987 = vcombine.low %v5965, %v5979
  %v5988 = vcombine.low %v5972, %v5986
  %v5989 = vcombine.low %v3468, %v3470
  %v5990 = vcombine.low %v3509, %v3511
  %v5991 = vcombine.low %v3550, %v3552
  %v5992 = vcombine.low %v3591, %v3593
  %v5994 = vunpack.c.l.s4 1966171168
  %v5995 = vunpack.c.0.s8 %v5994
  %v5996 = vlaneseq
  %v5997 = vshrl.u32 %v5996, 7
  %v5998 = vsub.s32 %v5995, %v5997
  %v5999 = vrot.slane %v5989, %v5998
  %v6001 = vunpack.c.l.s4 1966171168
  %v6002 = vunpack.c.0.s8 %v6001
  %v6003 = vlaneseq
  %v6004 = vshrl.u32 %v6003, 7
  %v6005 = vsub.s32 %v6002, %v6004
  %v6006 = vrot.slane %v5990, %v6005
  %v6008 = vunpack.c.l.s4 1966171168
  %v6009 = vunpack.c.0.s8 %v6008
  %v6010 = vlaneseq
  %v6011 = vshrl.u32 %v6010, 7
  %v6012 = vsub.s32 %v6009, %v6011
  %v6013 = vrot.slane %v5991, %v6012
  %v6015 = vunpack.c.l.s4 1966171168
  %v6016 = vunpack.c.0.s8 %v6015
  %v6017 = vlaneseq
  %v6018 = vshrl.u32 %v6017, 7
  %v6019 = vsub.s32 %v6016, %v6018
  %v6020 = vrot.slane %v5992, %v6019
  %v6021 = vcombine.low %v5999, %v6006
  %v6022 = vcombine.high %v5999, %v6006
  %v6023 = vcombine.low %v6013, %v6020
  %v6024 = vcombine.high %v6013, %v6020
  %v6026 = vunpack.c.l.s4 1966171168
  %v6027 = vunpack.c.0.s8 %v6026
  %v6028 = vlaneseq
  %v6029 = vshrl.u32 %v6028, 7
  %v6030 = vsub.s32 %v6027, %v6029
  %v6031 = vrot.slane %v6021, %v6030
  %v6033 = vunpack.c.l.s4 1966171168
  %v6034 = vunpack.c.0.s8 %v6033
  %v6035 = vlaneseq
  %v6036 = vshrl.u32 %v6035, 7
  %v6037 = vsub.s32 %v6034, %v6036
  %v6038 = vrot.slane %v6022, %v6037
  %v6040 = vunpack.c.l.s4 1966171168
  %v6041 = vunpack.c.0.s8 %v6040
  %v6042 = vlaneseq
  %v6043 = vshrl.u32 %v6042, 7
  %v6044 = vsub.s32 %v6041, %v6043
  %v6045 = vrot.slane %v6023, %v6044
  %v6047 = vunpack.c.l.s4 1966171168
  %v6048 = vunpack.c.0.s8 %v6047
  %v6049 = vlaneseq
  %v6050 = vshrl.u32 %v6049, 7
  %v6051 = vsub.s32 %v6048, %v6050
  %v6052 = vrot.slane %v6024, %v6051
  %v6053 = vcombine.low %v6031, %v6045
  %v6054 = vcombine.low %v6038, %v6052
  %v6055 = vcombine.low %v3632, %v3634
  %v6056 = vcombine.low %v3673, %v3675
  %v6057 = vcombine.low %v3714, %v3716
  %v6058 = vcombine.low %v3755, %v3757
  %v6060 = vunpack.c.l.s4 1966171168
  %v6061 = vunpack.c.0.s8 %v6060
  %v6062 = vlaneseq
  %v6063 = vshrl.u32 %v6062, 7
  %v6064 = vsub.s32 %v6061, %v6063
  %v6065 = vrot.slane %v6055, %v6064
  %v6067 = vunpack.c.l.s4 1966171168
  %v6068 = vunpack.c.0.s8 %v6067
  %v6069 = vlaneseq
  %v6070 = vshrl.u32 %v6069, 7
  %v6071 = vsub.s32 %v6068, %v6070
  %v6072 = vrot.slane %v6056, %v6071
  %v6074 = vunpack.c.l.s4 1966171168
  %v6075 = vunpack.c.0.s8 %v6074
  %v6076 = vlaneseq
  %v6077 = vshrl.u32 %v6076, 7
  %v6078 = vsub.s32 %v6075, %v6077
  %v6079 = vrot.slane %v6057, %v6078
  %v6081 = vunpack.c.l.s4 1966171168
  %v6082 = vunpack.c.0.s8 %v6081
  %v6083 = vlaneseq
  %v6084 = vshrl.u32 %v6083, 7
  %v6085 = vsub.s32 %v6082, %v6084
  %v6086 = vrot.slane %v6058, %v6085
  %v6087 = vcombine.low %v6065, %v6072
  %v6088 = vcombine.high %v6065, %v6072
  %v6089 = vcombine.low %v6079, %v6086
  %v6090 = vcombine.high %v6079, %v6086
  %v6092 = vunpack.c.l.s4 1966171168
  %v6093 = vunpack.c.0.s8 %v6092
  %v6094 = vlaneseq
  %v6095 = vshrl.u32 %v6094, 7
  %v6096 = vsub.s32 %v6093, %v6095
  %v6097 = vrot.slane %v6087, %v6096
  %v6099 = vunpack.c.l.s4 1966171168
  %v6100 = vunpack.c.0.s8 %v6099
  %v6101 = vlaneseq
  %v6102 = vshrl.u32 %v6101, 7
  %v6103 = vsub.s32 %v6100, %v6102
  %v6104 = vrot.slane %v6088, %v6103
  %v6106 = vunpack.c.l.s4 1966171168
  %v6107 = vunpack.c.0.s8 %v6106
  %v6108 = vlaneseq
  %v6109 = vshrl.u32 %v6108, 7
  %v6110 = vsub.s32 %v6107, %v6109
  %v6111 = vrot.slane %v6089, %v6110
  %v6113 = vunpack.c.l.s4 1966171168
  %v6114 = vunpack.c.0.s8 %v6113
  %v6115 = vlaneseq
  %v6116 = vshrl.u32 %v6115, 7
  %v6117 = vsub.s32 %v6114, %v6116
  %v6118 = vrot.slane %v6090, %v6117
  %v6119 = vcombine.low %v6097, %v6111
  %v6120 = vcombine.low %v6104, %v6118
  %v6121 = vcombine.low %v3796, %v3798
  %v6122 = vcombine.low %v3837, %v3839
  %v6123 = vcombine.low %v3878, %v3880
  %v6124 = vcombine.low %v3919, %v3921
  %v6126 = vunpack.c.l.s4 1966171168
  %v6127 = vunpack.c.0.s8 %v6126
  %v6128 = vlaneseq
  %v6129 = vshrl.u32 %v6128, 7
  %v6130 = vsub.s32 %v6127, %v6129
  %v6131 = vrot.slane %v6121, %v6130
  %v6133 = vunpack.c.l.s4 1966171168
  %v6134 = vunpack.c.0.s8 %v6133
  %v6135 = vlaneseq
  %v6136 = vshrl.u32 %v6135, 7
  %v6137 = vsub.s32 %v6134, %v6136
  %v6138 = vrot.slane %v6122, %v6137
  %v6140 = vunpack.c.l.s4 1966171168
  %v6141 = vunpack.c.0.s8 %v6140
  %v6142 = vlaneseq
  %v6143 = vshrl.u32 %v6142, 7
  %v6144 = vsub.s32 %v6141, %v6143
  %v6145 = vrot.slane %v6123, %v6144
  %v6147 = vunpack.c.l.s4 1966171168
  %v6148 = vunpack.c.0.s8 %v6147
  %v6149 = vlaneseq
  %v6150 = vshrl.u32 %v6149, 7
  %v6151 = vsub.s32 %v6148, %v6150
  %v6152 = vrot.slane %v6124, %v6151
  %v6153 = vcombine.low %v6131, %v6138
  %v6154 = vcombine.high %v6131, %v6138
  %v6155 = vcombine.low %v6145, %v6152
  %v6156 = vcombine.high %v6145, %v6152
  %v6158 = vunpack.c.l.s4 1966171168
  %v6159 = vunpack.c.0.s8 %v6158
  %v6160 = vlaneseq
  %v6161 = vshrl.u32 %v6160, 7
  %v6162 = vsub.s32 %v6159, %v6161
  %v6163 = vrot.slane %v6153, %v6162
  %v6165 = vunpack.c.l.s4 1966171168
  %v6166 = vunpack.c.0.s8 %v6165
  %v6167 = vlaneseq
  %v6168 = vshrl.u32 %v6167, 7
  %v6169 = vsub.s32 %v6166, %v6168
  %v6170 = vrot.slane %v6154, %v6169
  %v6172 = vunpack.c.l.s4 1966171168
  %v6173 = vunpack.c.0.s8 %v6172
  %v6174 = vlaneseq
  %v6175 = vshrl.u32 %v6174, 7
  %v6176 = vsub.s32 %v6173, %v6175
  %v6177 = vrot.slane %v6155, %v6176
  %v6179 = vunpack.c.l.s4 1966171168
  %v6180 = vunpack.c.0.s8 %v6179
  %v6181 = vlaneseq
  %v6182 = vshrl.u32 %v6181, 7
  %v6183 = vsub.s32 %v6180, %v6182
  %v6184 = vrot.slane %v6156, %v6183
  %v6185 = vcombine.low %v6163, %v6177
  %v6186 = vcombine.low %v6170, %v6184
  %v6187 = vcombine.low %v3960, %v3962
  %v6188 = vcombine.low %v4001, %v4003
  %v6189 = vcombine.low %v4042, %v4044
  %v6190 = vcombine.low %v4083, %v4085
  %v6192 = vunpack.c.l.s4 1966171168
  %v6193 = vunpack.c.0.s8 %v6192
  %v6194 = vlaneseq
  %v6195 = vshrl.u32 %v6194, 7
  %v6196 = vsub.s32 %v6193, %v6195
  %v6197 = vrot.slane %v6187, %v6196
  %v6199 = vunpack.c.l.s4 1966171168
  %v6200 = vunpack.c.0.s8 %v6199
  %v6201 = vlaneseq
  %v6202 = vshrl.u32 %v6201, 7
  %v6203 = vsub.s32 %v6200, %v6202
  %v6204 = vrot.slane %v6188, %v6203
  %v6206 = vunpack.c.l.s4 1966171168
  %v6207 = vunpack.c.0.s8 %v6206
  %v6208 = vlaneseq
  %v6209 = vshrl.u32 %v6208, 7
  %v6210 = vsub.s32 %v6207, %v6209
  %v6211 = vrot.slane %v6189, %v6210
  %v6213 = vunpack.c.l.s4 1966171168
  %v6214 = vunpack.c.0.s8 %v6213
  %v6215 = vlaneseq
  %v6216 = vshrl.u32 %v6215, 7
  %v6217 = vsub.s32 %v6214, %v6216
  %v6218 = vrot.slane %v6190, %v6217
  %v6219 = vcombine.low %v6197, %v6204
  %v6220 = vcombine.high %v6197, %v6204
  %v6221 = vcombine.low %v6211, %v6218
  %v6222 = vcombine.high %v6211, %v6218
  %v6224 = vunpack.c.l.s4 1966171168
  %v6225 = vunpack.c.0.s8 %v6224
  %v6226 = vlaneseq
  %v6227 = vshrl.u32 %v6226, 7
  %v6228 = vsub.s32 %v6225, %v6227
  %v6229 = vrot.slane %v6219, %v6228
  %v6231 = vunpack.c.l.s4 1966171168
  %v6232 = vunpack.c.0.s8 %v6231
  %v6233 = vlaneseq
  %v6234 = vshrl.u32 %v6233, 7
  %v6235 = vsub.s32 %v6232, %v6234
  %v6236 = vrot.slane %v6220, %v6235
  %v6238 = vunpack.c.l.s4 1966171168
  %v6239 = vunpack.c.0.s8 %v6238
  %v6240 = vlaneseq
  %v6241 = vshrl.u32 %v6240, 7
  %v6242 = vsub.s32 %v6239, %v6241
  %v6243 = vrot.slane %v6221, %v6242
  %v6245 = vunpack.c.l.s4 1966171168
  %v6246 = vunpack.c.0.s8 %v6245
  %v6247 = vlaneseq
  %v6248 = vshrl.u32 %v6247, 7
  %v6249 = vsub.s32 %v6246, %v6248
  %v6250 = vrot.slane %v6222, %v6249
  %v6251 = vcombine.low %v6229, %v6243
  %v6252 = vcombine.low %v6236, %v6250
  %v6253 = vcombine.low %v4124, %v4126
  %v6254 = vcombine.low %v4165, %v4167
  %v6255 = vcombine.low %v4206, %v4208
  %v6256 = vcombine.low %v4247, %v4249
  %v6258 = vunpack.c.l.s4 1966171168
  %v6259 = vunpack.c.0.s8 %v6258
  %v6260 = vlaneseq
  %v6261 = vshrl.u32 %v6260, 7
  %v6262 = vsub.s32 %v6259, %v6261
  %v6263 = vrot.slane %v6253, %v6262
  %v6265 = vunpack.c.l.s4 1966171168
  %v6266 = vunpack.c.0.s8 %v6265
  %v6267 = vlaneseq
  %v6268 = vshrl.u32 %v6267, 7
  %v6269 = vsub.s32 %v6266, %v6268
  %v6270 = vrot.slane %v6254, %v6269
  %v6272 = vunpack.c.l.s4 1966171168
  %v6273 = vunpack.c.0.s8 %v6272
  %v6274 = vlaneseq
  %v6275 = vshrl.u32 %v6274, 7
  %v6276 = vsub.s32 %v6273, %v6275
  %v6277 = vrot.slane %v6255, %v6276
  %v6279 = vunpack.c.l.s4 1966171168
  %v6280 = vunpack.c.0.s8 %v6279
  %v6281 = vlaneseq
  %v6282 = vshrl.u32 %v6281, 7
  %v6283 = vsub.s32 %v6280, %v6282
  %v6284 = vrot.slane %v6256, %v6283
  %v6285 = vcombine.low %v6263, %v6270
  %v6286 = vcombine.high %v6263, %v6270
  %v6287 = vcombine.low %v6277, %v6284
  %v6288 = vcombine.high %v6277, %v6284
  %v6290 = vunpack.c.l.s4 1966171168
  %v6291 = vunpack.c.0.s8 %v6290
  %v6292 = vlaneseq
  %v6293 = vshrl.u32 %v6292, 7
  %v6294 = vsub.s32 %v6291, %v6293
  %v6295 = vrot.slane %v6285, %v6294
  %v6297 = vunpack.c.l.s4 1966171168
  %v6298 = vunpack.c.0.s8 %v6297
  %v6299 = vlaneseq
  %v6300 = vshrl.u32 %v6299, 7
  %v6301 = vsub.s32 %v6298, %v6300
  %v6302 = vrot.slane %v6286, %v6301
  %v6304 = vunpack.c.l.s4 1966171168
  %v6305 = vunpack.c.0.s8 %v6304
  %v6306 = vlaneseq
  %v6307 = vshrl.u32 %v6306, 7
  %v6308 = vsub.s32 %v6305, %v6307
  %v6309 = vrot.slane %v6287, %v6308
  %v6311 = vunpack.c.l.s4 1966171168
  %v6312 = vunpack.c.0.s8 %v6311
  %v6313 = vlaneseq
  %v6314 = vshrl.u32 %v6313, 7
  %v6315 = vsub.s32 %v6312, %v6314
  %v6316 = vrot.slane %v6288, %v6315
  %v6317 = vcombine.low %v6295, %v6309
  %v6318 = vcombine.low %v6302, %v6316
  %v6319 = vcombine.low %v4288, %v4290
  %v6320 = vcombine.low %v4329, %v4331
  %v6321 = vcombine.low %v4370, %v4372
  %v6322 = vcombine.low %v4411, %v4413
  %v6324 = vunpack.c.l.s4 1966171168
  %v6325 = vunpack.c.0.s8 %v6324
  %v6326 = vlaneseq
  %v6327 = vshrl.u32 %v6326, 7
  %v6328 = vsub.s32 %v6325, %v6327
  %v6329 = vrot.slane %v6319, %v6328
  %v6331 = vunpack.c.l.s4 1966171168
  %v6332 = vunpack.c.0.s8 %v6331
  %v6333 = vlaneseq
  %v6334 = vshrl.u32 %v6333, 7
  %v6335 = vsub.s32 %v6332, %v6334
  %v6336 = vrot.slane %v6320, %v6335
  %v6338 = vunpack.c.l.s4 1966171168
  %v6339 = vunpack.c.0.s8 %v6338
  %v6340 = vlaneseq
  %v6341 = vshrl.u32 %v6340, 7
  %v6342 = vsub.s32 %v6339, %v6341
  %v6343 = vrot.slane %v6321, %v6342
  %v6345 = vunpack.c.l.s4 1966171168
  %v6346 = vunpack.c.0.s8 %v6345
  %v6347 = vlaneseq
  %v6348 = vshrl.u32 %v6347, 7
  %v6349 = vsub.s32 %v6346, %v6348
  %v6350 = vrot.slane %v6322, %v6349
  %v6351 = vcombine.low %v6329, %v6336
  %v6352 = vcombine.high %v6329, %v6336
  %v6353 = vcombine.low %v6343, %v6350
  %v6354 = vcombine.high %v6343, %v6350
  %v6356 = vunpack.c.l.s4 1966171168
  %v6357 = vunpack.c.0.s8 %v6356
  %v6358 = vlaneseq
  %v6359 = vshrl.u32 %v6358, 7
  %v6360 = vsub.s32 %v6357, %v6359
  %v6361 = vrot.slane %v6351, %v6360
  %v6363 = vunpack.c.l.s4 1966171168
  %v6364 = vunpack.c.0.s8 %v6363
  %v6365 = vlaneseq
  %v6366 = vshrl.u32 %v6365, 7
  %v6367 = vsub.s32 %v6364, %v6366
  %v6368 = vrot.slane %v6352, %v6367
  %v6370 = vunpack.c.l.s4 1966171168
  %v6371 = vunpack.c.0.s8 %v6370
  %v6372 = vlaneseq
  %v6373 = vshrl.u32 %v6372, 7
  %v6374 = vsub.s32 %v6371, %v6373
  %v6375 = vrot.slane %v6353, %v6374
  %v6377 = vunpack.c.l.s4 1966171168
  %v6378 = vunpack.c.0.s8 %v6377
  %v6379 = vlaneseq
  %v6380 = vshrl.u32 %v6379, 7
  %v6381 = vsub.s32 %v6378, %v6380
  %v6382 = vrot.slane %v6354, %v6381
  %v6383 = vcombine.low %v6361, %v6375
  %v6384 = vcombine.low %v6368, %v6382
  %v6385 = vcombine.low %v4452, %v4454
  %v6386 = vcombine.low %v4493, %v4495
  %v6387 = vcombine.low %v4534, %v4536
  %v6388 = vcombine.low %v4575, %v4577
  %v6390 = vunpack.c.l.s4 1966171168
  %v6391 = vunpack.c.0.s8 %v6390
  %v6392 = vlaneseq
  %v6393 = vshrl.u32 %v6392, 7
  %v6394 = vsub.s32 %v6391, %v6393
  %v6395 = vrot.slane %v6385, %v6394
  %v6397 = vunpack.c.l.s4 1966171168
  %v6398 = vunpack.c.0.s8 %v6397
  %v6399 = vlaneseq
  %v6400 = vshrl.u32 %v6399, 7
  %v6401 = vsub.s32 %v6398, %v6400
  %v6402 = vrot.slane %v6386, %v6401
  %v6404 = vunpack.c.l.s4 1966171168
  %v6405 = vunpack.c.0.s8 %v6404
  %v6406 = vlaneseq
  %v6407 = vshrl.u32 %v6406, 7
  %v6408 = vsub.s32 %v6405, %v6407
  %v6409 = vrot.slane %v6387, %v6408
  %v6411 = vunpack.c.l.s4 1966171168
  %v6412 = vunpack.c.0.s8 %v6411
  %v6413 = vlaneseq
  %v6414 = vshrl.u32 %v6413, 7
  %v6415 = vsub.s32 %v6412, %v6414
  %v6416 = vrot.slane %v6388, %v6415
  %v6417 = vcombine.low %v6395, %v6402
  %v6418 = vcombine.high %v6395, %v6402
  %v6419 = vcombine.low %v6409, %v6416
  %v6420 = vcombine.high %v6409, %v6416
  %v6422 = vunpack.c.l.s4 1966171168
  %v6423 = vunpack.c.0.s8 %v6422
  %v6424 = vlaneseq
  %v6425 = vshrl.u32 %v6424, 7
  %v6426 = vsub.s32 %v6423, %v6425
  %v6427 = vrot.slane %v6417, %v6426
  %v6429 = vunpack.c.l.s4 1966171168
  %v6430 = vunpack.c.0.s8 %v6429
  %v6431 = vlaneseq
  %v6432 = vshrl.u32 %v6431, 7
  %v6433 = vsub.s32 %v6430, %v6432
  %v6434 = vrot.slane %v6418, %v6433
  %v6436 = vunpack.c.l.s4 1966171168
  %v6437 = vunpack.c.0.s8 %v6436
  %v6438 = vlaneseq
  %v6439 = vshrl.u32 %v6438, 7
  %v6440 = vsub.s32 %v6437, %v6439
  %v6441 = vrot.slane %v6419, %v6440
  %v6443 = vunpack.c.l.s4 1966171168
  %v6444 = vunpack.c.0.s8 %v6443
  %v6445 = vlaneseq
  %v6446 = vshrl.u32 %v6445, 7
  %v6447 = vsub.s32 %v6444, %v6446
  %v6448 = vrot.slane %v6420, %v6447
  %v6449 = vcombine.low %v6427, %v6441
  %v6450 = vcombine.low %v6434, %v6448
  %v6451 = vcombine.low %v4616, %v4618
  %v6452 = vcombine.low %v4657, %v4659
  %v6453 = vcombine.low %v4698, %v4700
  %v6454 = vcombine.low %v4739, %v4741
  %v6456 = vunpack.c.l.s4 1966171168
  %v6457 = vunpack.c.0.s8 %v6456
  %v6458 = vlaneseq
  %v6459 = vshrl.u32 %v6458, 7
  %v6460 = vsub.s32 %v6457, %v6459
  %v6461 = vrot.slane %v6451, %v6460
  %v6463 = vunpack.c.l.s4 1966171168
  %v6464 = vunpack.c.0.s8 %v6463
  %v6465 = vlaneseq
  %v6466 = vshrl.u32 %v6465, 7
  %v6467 = vsub.s32 %v6464, %v6466
  %v6468 = vrot.slane %v6452, %v6467
  %v6470 = vunpack.c.l.s4 1966171168
  %v6471 = vunpack.c.0.s8 %v6470
  %v6472 = vlaneseq
  %v6473 = vshrl.u32 %v6472, 7
  %v6474 = vsub.s32 %v6471, %v6473
  %v6475 = vrot.slane %v6453, %v6474
  %v6477 = vunpack.c.l.s4 1966171168
  %v6478 = vunpack.c.0.s8 %v6477
  %v6479 = vlaneseq
  %v6480 = vshrl.u32 %v6479, 7
  %v6481 = vsub.s32 %v6478, %v6480
  %v6482 = vrot.slane %v6454, %v6481
  %v6483 = vcombine.low %v6461, %v6468
  %v6484 = vcombine.high %v6461, %v6468
  %v6485 = vcombine.low %v6475, %v6482
  %v6486 = vcombine.high %v6475, %v6482
  %v6488 = vunpack.c.l.s4 1966171168
  %v6489 = vunpack.c.0.s8 %v6488
  %v6490 = vlaneseq
  %v6491 = vshrl.u32 %v6490, 7
  %v6492 = vsub.s32 %v6489, %v6491
  %v6493 = vrot.slane %v6483, %v6492
  %v6495 = vunpack.c.l.s4 1966171168
  %v6496 = vunpack.c.0.s8 %v6495
  %v6497 = vlaneseq
  %v6498 = vshrl.u32 %v6497, 7
  %v6499 = vsub.s32 %v6496, %v6498
  %v6500 = vrot.slane %v6484, %v6499
  %v6502 = vunpack.c.l.s4 1966171168
  %v6503 = vunpack.c.0.s8 %v6502
  %v6504 = vlaneseq
  %v6505 = vshrl.u32 %v6504, 7
  %v6506 = vsub.s32 %v6503, %v6505
  %v6507 = vrot.slane %v6485, %v6506
  %v6509 = vunpack.c.l.s4 1966171168
  %v6510 = vunpack.c.0.s8 %v6509
  %v6511 = vlaneseq
  %v6512 = vshrl.u32 %v6511, 7
  %v6513 = vsub.s32 %v6510, %v6512
  %v6514 = vrot.slane %v6486, %v6513
  %v6515 = vcombine.low %v6493, %v6507
  %v6516 = vcombine.low %v6500, %v6514
  %v6517 = vcombine.low %v4780, %v4782
  %v6518 = vcombine.low %v4821, %v4823
  %v6519 = vcombine.low %v4862, %v4864
  %v6520 = vcombine.low %v4903, %v4905
  %v6522 = vunpack.c.l.s4 1966171168
  %v6523 = vunpack.c.0.s8 %v6522
  %v6524 = vlaneseq
  %v6525 = vshrl.u32 %v6524, 7
  %v6526 = vsub.s32 %v6523, %v6525
  %v6527 = vrot.slane %v6517, %v6526
  %v6529 = vunpack.c.l.s4 1966171168
  %v6530 = vunpack.c.0.s8 %v6529
  %v6531 = vlaneseq
  %v6532 = vshrl.u32 %v6531, 7
  %v6533 = vsub.s32 %v6530, %v6532
  %v6534 = vrot.slane %v6518, %v6533
  %v6536 = vunpack.c.l.s4 1966171168
  %v6537 = vunpack.c.0.s8 %v6536
  %v6538 = vlaneseq
  %v6539 = vshrl.u32 %v6538, 7
  %v6540 = vsub.s32 %v6537, %v6539
  %v6541 = vrot.slane %v6519, %v6540
  %v6543 = vunpack.c.l.s4 1966171168
  %v6544 = vunpack.c.0.s8 %v6543
  %v6545 = vlaneseq
  %v6546 = vshrl.u32 %v6545, 7
  %v6547 = vsub.s32 %v6544, %v6546
  %v6548 = vrot.slane %v6520, %v6547
  %v6549 = vcombine.low %v6527, %v6534
  %v6550 = vcombine.high %v6527, %v6534
  %v6551 = vcombine.low %v6541, %v6548
  %v6552 = vcombine.high %v6541, %v6548
  %v6554 = vunpack.c.l.s4 1966171168
  %v6555 = vunpack.c.0.s8 %v6554
  %v6556 = vlaneseq
  %v6557 = vshrl.u32 %v6556, 7
  %v6558 = vsub.s32 %v6555, %v6557
  %v6559 = vrot.slane %v6549, %v6558
  %v6561 = vunpack.c.l.s4 1966171168
  %v6562 = vunpack.c.0.s8 %v6561
  %v6563 = vlaneseq
  %v6564 = vshrl.u32 %v6563, 7
  %v6565 = vsub.s32 %v6562, %v6564
  %v6566 = vrot.slane %v6550, %v6565
  %v6568 = vunpack.c.l.s4 1966171168
  %v6569 = vunpack.c.0.s8 %v6568
  %v6570 = vlaneseq
  %v6571 = vshrl.u32 %v6570, 7
  %v6572 = vsub.s32 %v6569, %v6571
  %v6573 = vrot.slane %v6551, %v6572
  %v6575 = vunpack.c.l.s4 1966171168
  %v6576 = vunpack.c.0.s8 %v6575
  %v6577 = vlaneseq
  %v6578 = vshrl.u32 %v6577, 7
  %v6579 = vsub.s32 %v6576, %v6578
  %v6580 = vrot.slane %v6552, %v6579
  %v6581 = vcombine.low %v6559, %v6573
  %v6582 = vcombine.low %v6566, %v6580
  %v6583 = vcombine.low %v4944, %v4946
  %v6584 = vcombine.low %v4985, %v4987
  %v6585 = vcombine.low %v5026, %v5028
  %v6586 = vcombine.low %v5067, %v5069
  %v6588 = vunpack.c.l.s4 1966171168
  %v6589 = vunpack.c.0.s8 %v6588
  %v6590 = vlaneseq
  %v6591 = vshrl.u32 %v6590, 7
  %v6592 = vsub.s32 %v6589, %v6591
  %v6593 = vrot.slane %v6583, %v6592
  %v6595 = vunpack.c.l.s4 1966171168
  %v6596 = vunpack.c.0.s8 %v6595
  %v6597 = vlaneseq
  %v6598 = vshrl.u32 %v6597, 7
  %v6599 = vsub.s32 %v6596, %v6598
  %v6600 = vrot.slane %v6584, %v6599
  %v6602 = vunpack.c.l.s4 1966171168
  %v6603 = vunpack.c.0.s8 %v6602
  %v6604 = vlaneseq
  %v6605 = vshrl.u32 %v6604, 7
  %v6606 = vsub.s32 %v6603, %v6605
  %v6607 = vrot.slane %v6585, %v6606
  %v6609 = vunpack.c.l.s4 1966171168
  %v6610 = vunpack.c.0.s8 %v6609
  %v6611 = vlaneseq
  %v6612 = vshrl.u32 %v6611, 7
  %v6613 = vsub.s32 %v6610, %v6612
  %v6614 = vrot.slane %v6586, %v6613
  %v6615 = vcombine.low %v6593, %v6600
  %v6616 = vcombine.high %v6593, %v6600
  %v6617 = vcombine.low %v6607, %v6614
  %v6618 = vcombine.high %v6607, %v6614
  %v6620 = vunpack.c.l.s4 1966171168
  %v6621 = vunpack.c.0.s8 %v6620
  %v6622 = vlaneseq
  %v6623 = vshrl.u32 %v6622, 7
  %v6624 = vsub.s32 %v6621, %v6623
  %v6625 = vrot.slane %v6615, %v6624
  %v6627 = vunpack.c.l.s4 1966171168
  %v6628 = vunpack.c.0.s8 %v6627
  %v6629 = vlaneseq
  %v6630 = vshrl.u32 %v6629, 7
  %v6631 = vsub.s32 %v6628, %v6630
  %v6632 = vrot.slane %v6616, %v6631
  %v6634 = vunpack.c.l.s4 1966171168
  %v6635 = vunpack.c.0.s8 %v6634
  %v6636 = vlaneseq
  %v6637 = vshrl.u32 %v6636, 7
  %v6638 = vsub.s32 %v6635, %v6637
  %v6639 = vrot.slane %v6617, %v6638
  %v6641 = vunpack.c.l.s4 1966171168
  %v6642 = vunpack.c.0.s8 %v6641
  %v6643 = vlaneseq
  %v6644 = vshrl.u32 %v6643, 7
  %v6645 = vsub.s32 %v6642, %v6644
  %v6646 = vrot.slane %v6618, %v6645
  %v6647 = vcombine.low %v6625, %v6639
  %v6648 = vcombine.low %v6632, %v6646
  %v6649 = vcombine.low %v5108, %v5110
  %v6650 = vcombine.low %v5149, %v5151
  %v6651 = vcombine.low %v5190, %v5192
  %v6652 = vcombine.low %v5231, %v5233
  %v6654 = vunpack.c.l.s4 1966171168
  %v6655 = vunpack.c.0.s8 %v6654
  %v6656 = vlaneseq
  %v6657 = vshrl.u32 %v6656, 7
  %v6658 = vsub.s32 %v6655, %v6657
  %v6659 = vrot.slane %v6649, %v6658
  %v6661 = vunpack.c.l.s4 1966171168
  %v6662 = vunpack.c.0.s8 %v6661
  %v6663 = vlaneseq
  %v6664 = vshrl.u32 %v6663, 7
  %v6665 = vsub.s32 %v6662, %v6664
  %v6666 = vrot.slane %v6650, %v6665
  %v6668 = vunpack.c.l.s4 1966171168
  %v6669 = vunpack.c.0.s8 %v6668
  %v6670 = vlaneseq
  %v6671 = vshrl.u32 %v6670, 7
  %v6672 = vsub.s32 %v6669, %v6671
  %v6673 = vrot.slane %v6651, %v6672
  %v6675 = vunpack.c.l.s4 1966171168
  %v6676 = vunpack.c.0.s8 %v6675
  %v6677 = vlaneseq
  %v6678 = vshrl.u32 %v6677, 7
  %v6679 = vsub.s32 %v6676, %v6678
  %v6680 = vrot.slane %v6652, %v6679
  %v6681 = vcombine.low %v6659, %v6666
  %v6682 = vcombine.high %v6659, %v6666
  %v6683 = vcombine.low %v6673, %v6680
  %v6684 = vcombine.high %v6673, %v6680
  %v6686 = vunpack.c.l.s4 1966171168
  %v6687 = vunpack.c.0.s8 %v6686
  %v6688 = vlaneseq
  %v6689 = vshrl.u32 %v6688, 7
  %v6690 = vsub.s32 %v6687, %v6689
  %v6691 = vrot.slane %v6681, %v6690
  %v6693 = vunpack.c.l.s4 1966171168
  %v6694 = vunpack.c.0.s8 %v6693
  %v6695 = vlaneseq
  %v6696 = vshrl.u32 %v6695, 7
  %v6697 = vsub.s32 %v6694, %v6696
  %v6698 = vrot.slane %v6682, %v6697
  %v6700 = vunpack.c.l.s4 1966171168
  %v6701 = vunpack.c.0.s8 %v6700
  %v6702 = vlaneseq
  %v6703 = vshrl.u32 %v6702, 7
  %v6704 = vsub.s32 %v6701, %v6703
  %v6705 = vrot.slane %v6683, %v6704
  %v6707 = vunpack.c.l.s4 1966171168
  %v6708 = vunpack.c.0.s8 %v6707
  %v6709 = vlaneseq
  %v6710 = vshrl.u32 %v6709, 7
  %v6711 = vsub.s32 %v6708, %v6710
  %v6712 = vrot.slane %v6684, %v6711
  %v6713 = vcombine.low %v6691, %v6705
  %v6714 = vcombine.low %v6698, %v6712
  %v6715 = vcombine.low %v5272, %v5274
  %v6716 = vcombine.low %v5313, %v5315
  %v6717 = vcombine.low %v5354, %v5356
  %v6718 = vcombine.low %v5395, %v5397
  %v6720 = vunpack.c.l.s4 1966171168
  %v6721 = vunpack.c.0.s8 %v6720
  %v6722 = vlaneseq
  %v6723 = vshrl.u32 %v6722, 7
  %v6724 = vsub.s32 %v6721, %v6723
  %v6725 = vrot.slane %v6715, %v6724
  %v6727 = vunpack.c.l.s4 1966171168
  %v6728 = vunpack.c.0.s8 %v6727
  %v6729 = vlaneseq
  %v6730 = vshrl.u32 %v6729, 7
  %v6731 = vsub.s32 %v6728, %v6730
  %v6732 = vrot.slane %v6716, %v6731
  %v6734 = vunpack.c.l.s4 1966171168
  %v6735 = vunpack.c.0.s8 %v6734
  %v6736 = vlaneseq
  %v6737 = vshrl.u32 %v6736, 7
  %v6738 = vsub.s32 %v6735, %v6737
  %v6739 = vrot.slane %v6717, %v6738
  %v6741 = vunpack.c.l.s4 1966171168
  %v6742 = vunpack.c.0.s8 %v6741
  %v6743 = vlaneseq
  %v6744 = vshrl.u32 %v6743, 7
  %v6745 = vsub.s32 %v6742, %v6744
  %v6746 = vrot.slane %v6718, %v6745
  %v6747 = vcombine.low %v6725, %v6732
  %v6748 = vcombine.high %v6725, %v6732
  %v6749 = vcombine.low %v6739, %v6746
  %v6750 = vcombine.high %v6739, %v6746
  %v6752 = vunpack.c.l.s4 1966171168
  %v6753 = vunpack.c.0.s8 %v6752
  %v6754 = vlaneseq
  %v6755 = vshrl.u32 %v6754, 7
  %v6756 = vsub.s32 %v6753, %v6755
  %v6757 = vrot.slane %v6747, %v6756
  %v6759 = vunpack.c.l.s4 1966171168
  %v6760 = vunpack.c.0.s8 %v6759
  %v6761 = vlaneseq
  %v6762 = vshrl.u32 %v6761, 7
  %v6763 = vsub.s32 %v6760, %v6762
  %v6764 = vrot.slane %v6748, %v6763
  %v6766 = vunpack.c.l.s4 1966171168
  %v6767 = vunpack.c.0.s8 %v6766
  %v6768 = vlaneseq
  %v6769 = vshrl.u32 %v6768, 7
  %v6770 = vsub.s32 %v6767, %v6769
  %v6771 = vrot.slane %v6749, %v6770
  %v6773 = vunpack.c.l.s4 1966171168
  %v6774 = vunpack.c.0.s8 %v6773
  %v6775 = vlaneseq
  %v6776 = vshrl.u32 %v6775, 7
  %v6777 = vsub.s32 %v6774, %v6776
  %v6778 = vrot.slane %v6750, %v6777
  %v6779 = vcombine.low %v6757, %v6771
  %v6780 = vcombine.low %v6764, %v6778
  %v6781 = vcombine.low %v5436, %v5438
  %v6782 = vcombine.low %v5477, %v5479
  %v6783 = vcombine.low %v5518, %v5520
  %v6784 = vcombine.low %v5559, %v5561
  %v6786 = vunpack.c.l.s4 1966171168
  %v6787 = vunpack.c.0.s8 %v6786
  %v6788 = vlaneseq
  %v6789 = vshrl.u32 %v6788, 7
  %v6790 = vsub.s32 %v6787, %v6789
  %v6791 = vrot.slane %v6781, %v6790
  %v6793 = vunpack.c.l.s4 1966171168
  %v6794 = vunpack.c.0.s8 %v6793
  %v6795 = vlaneseq
  %v6796 = vshrl.u32 %v6795, 7
  %v6797 = vsub.s32 %v6794, %v6796
  %v6798 = vrot.slane %v6782, %v6797
  %v6800 = vunpack.c.l.s4 1966171168
  %v6801 = vunpack.c.0.s8 %v6800
  %v6802 = vlaneseq
  %v6803 = vshrl.u32 %v6802, 7
  %v6804 = vsub.s32 %v6801, %v6803
  %v6805 = vrot.slane %v6783, %v6804
  %v6807 = vunpack.c.l.s4 1966171168
  %v6808 = vunpack.c.0.s8 %v6807
  %v6809 = vlaneseq
  %v6810 = vshrl.u32 %v6809, 7
  %v6811 = vsub.s32 %v6808, %v6810
  %v6812 = vrot.slane %v6784, %v6811
  %v6813 = vcombine.low %v6791, %v6798
  %v6814 = vcombine.high %v6791, %v6798
  %v6815 = vcombine.low %v6805, %v6812
  %v6816 = vcombine.high %v6805, %v6812
  %v6818 = vunpack.c.l.s4 1966171168
  %v6819 = vunpack.c.0.s8 %v6818
  %v6820 = vlaneseq
  %v6821 = vshrl.u32 %v6820, 7
  %v6822 = vsub.s32 %v6819, %v6821
  %v6823 = vrot.slane %v6813, %v6822
  %v6825 = vunpack.c.l.s4 1966171168
  %v6826 = vunpack.c.0.s8 %v6825
  %v6827 = vlaneseq
  %v6828 = vshrl.u32 %v6827, 7
  %v6829 = vsub.s32 %v6826, %v6828
  %v6830 = vrot.slane %v6814, %v6829
  %v6832 = vunpack.c.l.s4 1966171168
  %v6833 = vunpack.c.0.s8 %v6832
  %v6834 = vlaneseq
  %v6835 = vshrl.u32 %v6834, 7
  %v6836 = vsub.s32 %v6833, %v6835
  %v6837 = vrot.slane %v6815, %v6836
  %v6839 = vunpack.c.l.s4 1966171168
  %v6840 = vunpack.c.0.s8 %v6839
  %v6841 = vlaneseq
  %v6842 = vshrl.u32 %v6841, 7
  %v6843 = vsub.s32 %v6840, %v6842
  %v6844 = vrot.slane %v6816, %v6843
  %v6845 = vcombine.low %v6823, %v6837
  %v6846 = vcombine.low %v6830, %v6844
  %v6847 = vcombine.low %v5600, %v5602
  %v6848 = vcombine.low %v5641, %v5643
  %v6849 = vcombine.low %v5682, %v5684
  %v6850 = vcombine.low %v5723, %v5725
  %v6852 = vunpack.c.l.s4 1966171168
  %v6853 = vunpack.c.0.s8 %v6852
  %v6854 = vlaneseq
  %v6855 = vshrl.u32 %v6854, 7
  %v6856 = vsub.s32 %v6853, %v6855
  %v6857 = vrot.slane %v6847, %v6856
  %v6859 = vunpack.c.l.s4 1966171168
  %v6860 = vunpack.c.0.s8 %v6859
  %v6861 = vlaneseq
  %v6862 = vshrl.u32 %v6861, 7
  %v6863 = vsub.s32 %v6860, %v6862
  %v6864 = vrot.slane %v6848, %v6863
  %v6866 = vunpack.c.l.s4 1966171168
  %v6867 = vunpack.c.0.s8 %v6866
  %v6868 = vlaneseq
  %v6869 = vshrl.u32 %v6868, 7
  %v6870 = vsub.s32 %v6867, %v6869
  %v6871 = vrot.slane %v6849, %v6870
  %v6873 = vunpack.c.l.s4 1966171168
  %v6874 = vunpack.c.0.s8 %v6873
  %v6875 = vlaneseq
  %v6876 = vshrl.u32 %v6875, 7
  %v6877 = vsub.s32 %v6874, %v6876
  %v6878 = vrot.slane %v6850, %v6877
  %v6879 = vcombine.low %v6857, %v6864
  %v6880 = vcombine.high %v6857, %v6864
  %v6881 = vcombine.low %v6871, %v6878
  %v6882 = vcombine.high %v6871, %v6878
  %v6884 = vunpack.c.l.s4 1966171168
  %v6885 = vunpack.c.0.s8 %v6884
  %v6886 = vlaneseq
  %v6887 = vshrl.u32 %v6886, 7
  %v6888 = vsub.s32 %v6885, %v6887
  %v6889 = vrot.slane %v6879, %v6888
  %v6891 = vunpack.c.l.s4 1966171168
  %v6892 = vunpack.c.0.s8 %v6891
  %v6893 = vlaneseq
  %v6894 = vshrl.u32 %v6893, 7
  %v6895 = vsub.s32 %v6892, %v6894
  %v6896 = vrot.slane %v6880, %v6895
  %v6898 = vunpack.c.l.s4 1966171168
  %v6899 = vunpack.c.0.s8 %v6898
  %v6900 = vlaneseq
  %v6901 = vshrl.u32 %v6900, 7
  %v6902 = vsub.s32 %v6899, %v6901
  %v6903 = vrot.slane %v6881, %v6902
  %v6905 = vunpack.c.l.s4 1966171168
  %v6906 = vunpack.c.0.s8 %v6905
  %v6907 = vlaneseq
  %v6908 = vshrl.u32 %v6907, 7
  %v6909 = vsub.s32 %v6906, %v6908
  %v6910 = vrot.slane %v6882, %v6909
  %v6911 = vcombine.low %v6889, %v6903
  %v6912 = vcombine.low %v6896, %v6910
  %v6945 = vld [vmem:[%s2] sm:$0x1]
  %v6947 = vlaneseq
  %v6948 = vshrl.u32 %v6947, 7
  %v6949 = vsub.s32 0, %v6948
  %v6950 = vrot.slane %v6945, %v6949
  %v6952 = vadd.f32 %v5921, %v6950
  %v6953 = vadd.f32 %v5987, %v6950
  %v6954 = vadd.f32 %v6053, %v6950
  %v6955 = vadd.f32 %v6119, %v6950
  %v6956 = vadd.f32 %v6185, %v6950
  %v6957 = vadd.f32 %v6251, %v6950
  %v6958 = vadd.f32 %v6317, %v6950
  %v6959 = vadd.f32 %v6383, %v6950
  %v6960 = vadd.f32 %v6449, %v6950
  %v6961 = vadd.f32 %v6515, %v6950
  %v6962 = vadd.f32 %v6581, %v6950
  %v6963 = vadd.f32 %v6647, %v6950
  %v6964 = vadd.f32 %v6713, %v6950
  %v6965 = vadd.f32 %v6779, %v6950
  %v6966 = vadd.f32 %v6845, %v6950
  %v6967 = vadd.f32 %v6911, %v6950
  %v6968 = vadd.f32 %v5922, %v6950
  %v6969 = vadd.f32 %v5988, %v6950
  %v6970 = vadd.f32 %v6054, %v6950
  %v6971 = vadd.f32 %v6120, %v6950
  %v6972 = vadd.f32 %v6186, %v6950
  %v6973 = vadd.f32 %v6252, %v6950
  %v6974 = vadd.f32 %v6318, %v6950
  %v6975 = vadd.f32 %v6384, %v6950
  %v6976 = vadd.f32 %v6450, %v6950
  %v6977 = vadd.f32 %v6516, %v6950
  %v6978 = vadd.f32 %v6582, %v6950
  %v6979 = vadd.f32 %v6648, %v6950
  %v6980 = vadd.f32 %v6714, %v6950
  %v6981 = vadd.f32 %v6780, %v6950
  %v6982 = vadd.f32 %v6846, %v6950
  %v6983 = vadd.f32 %v6912, %v6950
  %v6984 = vpack.c.bf16 %v6953, %v6952
  %v6985 = vpack.c.bf16 %v6955, %v6954
  %v6986 = vpack.c.bf16 %v6957, %v6956
  %v6987 = vpack.c.bf16 %v6959, %v6958
  %v6988 = vpack.c.bf16 %v6961, %v6960
  %v6989 = vpack.c.bf16 %v6963, %v6962
  %v6990 = vpack.c.bf16 %v6965, %v6964
  %v6991 = vpack.c.bf16 %v6967, %v6966
  %v6992 = vpack.c.bf16 %v6969, %v6968
  %v6993 = vpack.c.bf16 %v6971, %v6970
  %v6994 = vpack.c.bf16 %v6973, %v6972
  %v6995 = vpack.c.bf16 %v6975, %v6974
  %v6996 = vpack.c.bf16 %v6977, %v6976
  %v6997 = vpack.c.bf16 %v6979, %v6978
  %v6998 = vpack.c.bf16 %v6981, %v6980
  %v6999 = vpack.c.bf16 %v6983, %v6982
  %v7000 = vld [vmem:[%s3] sm:$0xff]
  %v7001 = vld [vmem:[%s3 + $0x8] sm:$0xff]
  %v7002 = vld [vmem:[%s3 + $0x10] sm:$0xff]
  %v7003 = vld [vmem:[%s3 + $0x18] sm:$0xff]
  %v7004 = vld [vmem:[%s3 + $0x20] sm:$0xff]
  %v7005 = vld [vmem:[%s3 + $0x28] sm:$0xff]
  %v7006 = vld [vmem:[%s3 + $0x30] sm:$0xff]
  %v7007 = vld [vmem:[%s3 + $0x38] sm:$0xff]
  %v7008 = vld [vmem:[%s3 + $0x40] sm:$0xff]
  %v7009 = vld [vmem:[%s3 + $0x48] sm:$0xff]
  %v7010 = vld [vmem:[%s3 + $0x50] sm:$0xff]
  %v7011 = vld [vmem:[%s3 + $0x58] sm:$0xff]
  %v7012 = vld [vmem:[%s3 + $0x60] sm:$0xff]
  %v7013 = vld [vmem:[%s3 + $0x68] sm:$0xff]
  %v7014 = vld [vmem:[%s3 + $0x70] sm:$0xff]
  %v7015 = vld [vmem:[%s3 + $0x78] sm:$0xff]
  %v7032 = vunpack.c.l.b16 %v7000
  %v7033 = vunpack.c.h.b16 %v7000
  %v7034 = vunpack.c.l.b16 %v7001
  %v7035 = vunpack.c.h.b16 %v7001
  %v7036 = vunpack.c.l.b16 %v7002
  %v7037 = vunpack.c.h.b16 %v7002
  %v7038 = vunpack.c.l.b16 %v7003
  %v7039 = vunpack.c.h.b16 %v7003
  %v7040 = vunpack.c.l.b16 %v7004
  %v7041 = vunpack.c.h.b16 %v7004
  %v7042 = vunpack.c.l.b16 %v7005
  %v7043 = vunpack.c.h.b16 %v7005
  %v7044 = vunpack.c.l.b16 %v7006
  %v7045 = vunpack.c.h.b16 %v7006
  %v7046 = vunpack.c.l.b16 %v7007
  %v7047 = vunpack.c.h.b16 %v7007
  %v7048 = vunpack.c.l.b16 %v7008
  %v7049 = vunpack.c.h.b16 %v7008
  %v7050 = vunpack.c.l.b16 %v7009
  %v7051 = vunpack.c.h.b16 %v7009
  %v7052 = vunpack.c.l.b16 %v7010
  %v7053 = vunpack.c.h.b16 %v7010
  %v7054 = vunpack.c.l.b16 %v7011
  %v7055 = vunpack.c.h.b16 %v7011
  %v7056 = vunpack.c.l.b16 %v7012
  %v7057 = vunpack.c.h.b16 %v7012
  %v7058 = vunpack.c.l.b16 %v7013
  %v7059 = vunpack.c.h.b16 %v7013
  %v7060 = vunpack.c.l.b16 %v7014
  %v7061 = vunpack.c.h.b16 %v7014
  %v7062 = vunpack.c.l.b16 %v7015
  %v7063 = vunpack.c.h.b16 %v7015
  %v7064 = vpack.c.b16 %v7034, %v7032
  %v7065 = vpack.c.b16 %v7035, %v7033
  %v7066 = vpack.c.b16 %v7038, %v7036
  %v7067 = vpack.c.b16 %v7039, %v7037
  %v7068 = vpack.c.b16 %v7042, %v7040
  %v7069 = vpack.c.b16 %v7043, %v7041
  %v7070 = vpack.c.b16 %v7046, %v7044
  %v7071 = vpack.c.b16 %v7047, %v7045
  %v7072 = vpack.c.b16 %v7050, %v7048
  %v7073 = vpack.c.b16 %v7051, %v7049
  %v7074 = vpack.c.b16 %v7054, %v7052
  %v7075 = vpack.c.b16 %v7055, %v7053
  %v7076 = vpack.c.b16 %v7058, %v7056
  %v7077 = vpack.c.b16 %v7059, %v7057
  %v7078 = vpack.c.b16 %v7062, %v7060
  %v7079 = vpack.c.b16 %v7063, %v7061
  %7096 = vmatprep.subr.bf16.mxu0 %v7079
  %7097 = vmatpush1.bf16.msra.mxu0 %v7078
  %7098 = vmatprep.subr.bf16.mxu0 %v7077
  %7099 = vmatpush1.bf16.msra.mxu0 %v7076
  %7100 = vmatprep.subr.bf16.mxu0 %v7075
  %7101 = vmatpush1.bf16.msra.mxu0 %v7074
  %7102 = vmatprep.subr.bf16.mxu0 %v7073
  %7103 = vmatpush1.bf16.msra.mxu0 %v7072
  %7104 = vmatprep.subr.bf16.mxu0 %v7071
  %7105 = vmatpush1.bf16.msra.mxu0 %v7070
  %7106 = vmatprep.subr.bf16.mxu0 %v7069
  %7107 = vmatpush1.bf16.msra.mxu0 %v7068
  %7108 = vmatprep.subr.bf16.mxu0 %v7067
  %7109 = vmatpush1.bf16.msra.mxu0 %v7066
  %7110 = vmatprep.subr.bf16.mxu0 %v7065
  %7111 = vmatpush1.bf16.msra.mxu0 %v7064
  %7112 = vmatprep.subr.bf16.mxu0 0
  %7113 = vmatpush2.bf16.msra.mxu0 0
  %7114 = vmatprep.subr.bf16.mxu0 0
  %7115 = vmatpush2.bf16.msra.mxu0 0
  %7116 = vmatprep.subr.bf16.mxu0 0
  %7117 = vmatpush2.bf16.msra.mxu0 0
  %7118 = vmatprep.subr.bf16.mxu0 0
  %7119 = vmatpush2.bf16.msra.mxu0 0
  %7120 = vmatprep.subr.bf16.mxu0 0
  %7121 = vmatpush2.bf16.msra.mxu0 0
  %7122 = vmatprep.subr.bf16.mxu0 0
  %7123 = vmatpush2.bf16.msra.mxu0 0
  %7124 = vmatprep.subr.bf16.mxu0 0
  %7125 = vmatpush2.bf16.msra.mxu0 0
  %7126 = vmatprep.subr.bf16.mxu0 0
  %7127 = vmatpush2.bf16.msra.mxu0 0
  %7128 = vmatprep.mubr.bf16.mxu0 0
  %7129 = vmatmul.mubr.bf16.gmra.mxu0 %v6984
  %v7130 = vpop.f32.mrf.mxu0
  %v7131 = vadd.f32 0.0, %v7130
  %v7132 = vpop.f32.mrf.mxu0
  %v7133 = vadd.f32 0.0, %v7132
  %v7134 = vpop.f32.mrf.mxu0
  %v7135 = vadd.f32 0.0, %v7134
  %v7136 = vpop.f32.mrf.mxu0
  %v7137 = vadd.f32 0.0, %v7136
  %7138 = vmatprep.mubr.bf16.mxu0 0
  %7139 = vmatmul.mubr.bf16.gmra.mxu0 %v6985
  %v7140 = vpop.f32.mrf.mxu0
  %v7141 = vadd.f32 0.0, %v7140
  %v7142 = vpop.f32.mrf.mxu0
  %v7143 = vadd.f32 0.0, %v7142
  %v7144 = vpop.f32.mrf.mxu0
  %v7145 = vadd.f32 0.0, %v7144
  %v7146 = vpop.f32.mrf.mxu0
  %v7147 = vadd.f32 0.0, %v7146
  %7148 = vmatprep.mubr.bf16.mxu0 0
  %7149 = vmatmul.mubr.bf16.gmra.mxu0 %v6986
  %v7150 = vpop.f32.mrf.mxu0
  %v7151 = vadd.f32 0.0, %v7150
  %v7152 = vpop.f32.mrf.mxu0
  %v7153 = vadd.f32 0.0, %v7152
  %v7154 = vpop.f32.mrf.mxu0
  %v7155 = vadd.f32 0.0, %v7154
  %v7156 = vpop.f32.mrf.mxu0
  %v7157 = vadd.f32 0.0, %v7156
  %7158 = vmatprep.mubr.bf16.mxu0 0
  %7159 = vmatmul.mubr.bf16.gmra.mxu0 %v6987
  %v7160 = vpop.f32.mrf.mxu0
  %v7161 = vadd.f32 0.0, %v7160
  %v7162 = vpop.f32.mrf.mxu0
  %v7163 = vadd.f32 0.0, %v7162
  %v7164 = vpop.f32.mrf.mxu0
  %v7165 = vadd.f32 0.0, %v7164
  %v7166 = vpop.f32.mrf.mxu0
  %v7167 = vadd.f32 0.0, %v7166
  %7168 = vmatprep.mubr.bf16.mxu0 0
  %7169 = vmatmul.mubr.bf16.gmra.mxu0 %v6988
  %v7170 = vpop.f32.mrf.mxu0
  %v7171 = vadd.f32 0.0, %v7170
  %v7172 = vpop.f32.mrf.mxu0
  %v7173 = vadd.f32 0.0, %v7172
  %v7174 = vpop.f32.mrf.mxu0
  %v7175 = vadd.f32 0.0, %v7174
  %v7176 = vpop.f32.mrf.mxu0
  %v7177 = vadd.f32 0.0, %v7176
  %7178 = vmatprep.mubr.bf16.mxu0 0
  %7179 = vmatmul.mubr.bf16.gmra.mxu0 %v6989
  %v7180 = vpop.f32.mrf.mxu0
  %v7181 = vadd.f32 0.0, %v7180
  %v7182 = vpop.f32.mrf.mxu0
  %v7183 = vadd.f32 0.0, %v7182
  %v7184 = vpop.f32.mrf.mxu0
  %v7185 = vadd.f32 0.0, %v7184
  %v7186 = vpop.f32.mrf.mxu0
  %v7187 = vadd.f32 0.0, %v7186
  %7188 = vmatprep.mubr.bf16.mxu0 0
  %7189 = vmatmul.mubr.bf16.gmra.mxu0 %v6990
  %v7190 = vpop.f32.mrf.mxu0
  %v7191 = vadd.f32 0.0, %v7190
  %v7192 = vpop.f32.mrf.mxu0
  %v7193 = vadd.f32 0.0, %v7192
  %v7194 = vpop.f32.mrf.mxu0
  %v7195 = vadd.f32 0.0, %v7194
  %v7196 = vpop.f32.mrf.mxu0
  %v7197 = vadd.f32 0.0, %v7196
  %7198 = vmatprep.mubr.bf16.mxu0 0
  %7199 = vmatmul.mubr.bf16.gmra.mxu0 %v6991
  %v7200 = vpop.f32.mrf.mxu0
  %v7201 = vadd.f32 0.0, %v7200
  %v7202 = vpop.f32.mrf.mxu0
  %v7203 = vadd.f32 0.0, %v7202
  %v7204 = vpop.f32.mrf.mxu0
  %v7205 = vadd.f32 0.0, %v7204
  %v7206 = vpop.f32.mrf.mxu0
  %v7207 = vadd.f32 0.0, %v7206
  %7208 = vmatprep.mubr.bf16.mxu0 0
  %7209 = vmatmul.mubr.bf16.gmra.mxu0 %v6992
  %v7210 = vpop.f32.mrf.mxu0
  %v7211 = vadd.f32 0.0, %v7210
  %v7212 = vpop.f32.mrf.mxu0
  %v7213 = vadd.f32 0.0, %v7212
  %v7214 = vpop.f32.mrf.mxu0
  %v7215 = vadd.f32 0.0, %v7214
  %v7216 = vpop.f32.mrf.mxu0
  %v7217 = vadd.f32 0.0, %v7216
  %7218 = vmatprep.mubr.bf16.mxu0 0
  %7219 = vmatmul.mubr.bf16.gmra.mxu0 %v6993
  %v7220 = vpop.f32.mrf.mxu0
  %v7221 = vadd.f32 0.0, %v7220
  %v7222 = vpop.f32.mrf.mxu0
  %v7223 = vadd.f32 0.0, %v7222
  %v7224 = vpop.f32.mrf.mxu0
  %v7225 = vadd.f32 0.0, %v7224
  %v7226 = vpop.f32.mrf.mxu0
  %v7227 = vadd.f32 0.0, %v7226
  %7228 = vmatprep.mubr.bf16.mxu0 0
  %7229 = vmatmul.mubr.bf16.gmra.mxu0 %v6994
  %v7230 = vpop.f32.mrf.mxu0
  %v7231 = vadd.f32 0.0, %v7230
  %v7232 = vpop.f32.mrf.mxu0
  %v7233 = vadd.f32 0.0, %v7232
  %v7234 = vpop.f32.mrf.mxu0
  %v7235 = vadd.f32 0.0, %v7234
  %v7236 = vpop.f32.mrf.mxu0
  %v7237 = vadd.f32 0.0, %v7236
  %7238 = vmatprep.mubr.bf16.mxu0 0
  %7239 = vmatmul.mubr.bf16.gmra.mxu0 %v6995
  %v7240 = vpop.f32.mrf.mxu0
  %v7241 = vadd.f32 0.0, %v7240
  %v7242 = vpop.f32.mrf.mxu0
  %v7243 = vadd.f32 0.0, %v7242
  %v7244 = vpop.f32.mrf.mxu0
  %v7245 = vadd.f32 0.0, %v7244
  %v7246 = vpop.f32.mrf.mxu0
  %v7247 = vadd.f32 0.0, %v7246
  %7248 = vmatprep.mubr.bf16.mxu0 0
  %7249 = vmatmul.mubr.bf16.gmra.mxu0 %v6996
  %v7250 = vpop.f32.mrf.mxu0
  %v7251 = vadd.f32 0.0, %v7250
  %v7252 = vpop.f32.mrf.mxu0
  %v7253 = vadd.f32 0.0, %v7252
  %v7254 = vpop.f32.mrf.mxu0
  %v7255 = vadd.f32 0.0, %v7254
  %v7256 = vpop.f32.mrf.mxu0
  %v7257 = vadd.f32 0.0, %v7256
  %7258 = vmatprep.mubr.bf16.mxu0 0
  %7259 = vmatmul.mubr.bf16.gmra.mxu0 %v6997
  %v7260 = vpop.f32.mrf.mxu0
  %v7261 = vadd.f32 0.0, %v7260
  %v7262 = vpop.f32.mrf.mxu0
  %v7263 = vadd.f32 0.0, %v7262
  %v7264 = vpop.f32.mrf.mxu0
  %v7265 = vadd.f32 0.0, %v7264
  %v7266 = vpop.f32.mrf.mxu0
  %v7267 = vadd.f32 0.0, %v7266
  %7268 = vmatprep.mubr.bf16.mxu0 0
  %7269 = vmatmul.mubr.bf16.gmra.mxu0 %v6998
  %v7270 = vpop.f32.mrf.mxu0
  %v7271 = vadd.f32 0.0, %v7270
  %v7272 = vpop.f32.mrf.mxu0
  %v7273 = vadd.f32 0.0, %v7272
  %v7274 = vpop.f32.mrf.mxu0
  %v7275 = vadd.f32 0.0, %v7274
  %v7276 = vpop.f32.mrf.mxu0
  %v7277 = vadd.f32 0.0, %v7276
  %7278 = vmatprep.mubr.bf16.mxu0 0
  %7279 = vmatmul.mubr.bf16.gmra.mxu0 %v6999
  %v7280 = vpop.f32.mrf.mxu0
  %v7281 = vadd.f32 0.0, %v7280
  %v7282 = vpop.f32.mrf.mxu0
  %v7283 = vadd.f32 0.0, %v7282
  %v7284 = vpop.f32.mrf.mxu0
  %v7285 = vadd.f32 0.0, %v7284
  %v7286 = vpop.f32.mrf.mxu0
  %v7287 = vadd.f32 0.0, %v7286
  %7288 = vdwg.mxu0
  %v7289 = vld [vmem:[%s4] sm:$0xf]
  %v7292 = vunpack.c.l.s4 1966171168
  %v7293 = vunpack.c.0.s8 %v7292
  %v7294 = vlaneseq
  %v7295 = vshrl.u32 %v7294, 7
  %v7296 = vsub.s32 %v7293, %v7295
  %v7297 = vrot.slane %v7289, %v7296
  %v7298 = vcombine.high %v7297, %v7297
  %v7299 = vlaneseq
  %v7300 = vshrl.u32 %v7299, 7
  %v7301 = vsub.s32 0, %v7300
  %v7302 = vrot.slane %v7297, %v7301
  %v7303 = vlaneseq
  %v7304 = vshrl.u32 %v7303, 7
  %v7305 = vsub.s32 1, %v7304
  %v7306 = vrot.slane %v7297, %v7305
  %v7307 = vlaneseq
  %v7308 = vshrl.u32 %v7307, 7
  %v7309 = vsub.s32 0, %v7308
  %v7310 = vrot.slane %v7298, %v7309
  %v7311 = vlaneseq
  %v7312 = vshrl.u32 %v7311, 7
  %v7313 = vsub.s32 1, %v7312
  %v7314 = vrot.slane %v7298, %v7313
  %v7319 = vadd.f32 %v7131, %v7302
  %v7320 = vadd.f32 %v7133, %v7306
  %v7321 = vadd.f32 %v7135, %v7302
  %v7322 = vadd.f32 %v7137, %v7306
  %v7323 = vadd.f32 %v7141, %v7302
  %v7324 = vadd.f32 %v7143, %v7306
  %v7325 = vadd.f32 %v7145, %v7302
  %v7326 = vadd.f32 %v7147, %v7306
  %v7327 = vadd.f32 %v7151, %v7302
  %v7328 = vadd.f32 %v7153, %v7306
  %v7329 = vadd.f32 %v7155, %v7302
  %v7330 = vadd.f32 %v7157, %v7306
  %v7331 = vadd.f32 %v7161, %v7302
  %v7332 = vadd.f32 %v7163, %v7306
  %v7333 = vadd.f32 %v7165, %v7302
  %v7334 = vadd.f32 %v7167, %v7306
  %v7335 = vadd.f32 %v7171, %v7302
  %v7336 = vadd.f32 %v7173, %v7306
  %v7337 = vadd.f32 %v7175, %v7302
  %v7338 = vadd.f32 %v7177, %v7306
  %v7339 = vadd.f32 %v7181, %v7302
  %v7340 = vadd.f32 %v7183, %v7306
  %v7341 = vadd.f32 %v7185, %v7302
  %v7342 = vadd.f32 %v7187, %v7306
  %v7343 = vadd.f32 %v7191, %v7302
  %v7344 = vadd.f32 %v7193, %v7306
  %v7345 = vadd.f32 %v7195, %v7302
  %v7346 = vadd.f32 %v7197, %v7306
  %v7347 = vadd.f32 %v7201, %v7302
  %v7348 = vadd.f32 %v7203, %v7306
  %v7349 = vadd.f32 %v7205, %v7302
  %v7350 = vadd.f32 %v7207, %v7306
  %v7351 = vadd.f32 %v7211, %v7310
  %v7352 = vadd.f32 %v7213, %v7314
  %v7353 = vadd.f32 %v7215, %v7310
  %v7354 = vadd.f32 %v7217, %v7314
  %v7355 = vadd.f32 %v7221, %v7310
  %v7356 = vadd.f32 %v7223, %v7314
  %v7357 = vadd.f32 %v7225, %v7310
  %v7358 = vadd.f32 %v7227, %v7314
  %v7359 = vadd.f32 %v7231, %v7310
  %v7360 = vadd.f32 %v7233, %v7314
  %v7361 = vadd.f32 %v7235, %v7310
  %v7362 = vadd.f32 %v7237, %v7314
  %v7363 = vadd.f32 %v7241, %v7310
  %v7364 = vadd.f32 %v7243, %v7314
  %v7365 = vadd.f32 %v7245, %v7310
  %v7366 = vadd.f32 %v7247, %v7314
  %v7367 = vadd.f32 %v7251, %v7310
  %v7368 = vadd.f32 %v7253, %v7314
  %v7369 = vadd.f32 %v7255, %v7310
  %v7370 = vadd.f32 %v7257, %v7314
  %v7371 = vadd.f32 %v7261, %v7310
  %v7372 = vadd.f32 %v7263, %v7314
  %v7373 = vadd.f32 %v7265, %v7310
  %v7374 = vadd.f32 %v7267, %v7314
  %v7375 = vadd.f32 %v7271, %v7310
  %v7376 = vadd.f32 %v7273, %v7314
  %v7377 = vadd.f32 %v7275, %v7310
  %v7378 = vadd.f32 %v7277, %v7314
  %v7379 = vadd.f32 %v7281, %v7310
  %v7380 = vadd.f32 %v7283, %v7314
  %v7381 = vadd.f32 %v7285, %v7310
  %v7382 = vadd.f32 %v7287, %v7314
  %v7383 = vmax.f32 %v7319, 0.0
  %v7384 = vmax.f32 %v7321, 0.0
  %v7385 = vmax.f32 %v7323, 0.0
  %v7386 = vmax.f32 %v7325, 0.0
  %v7387 = vmax.f32 %v7327, 0.0
  %v7388 = vmax.f32 %v7329, 0.0
  %v7389 = vmax.f32 %v7331, 0.0
  %v7390 = vmax.f32 %v7333, 0.0
  %v7391 = vmax.f32 %v7335, 0.0
  %v7392 = vmax.f32 %v7337, 0.0
  %v7393 = vmax.f32 %v7339, 0.0
  %v7394 = vmax.f32 %v7341, 0.0
  %v7395 = vmax.f32 %v7343, 0.0
  %v7396 = vmax.f32 %v7345, 0.0
  %v7397 = vmax.f32 %v7347, 0.0
  %v7398 = vmax.f32 %v7349, 0.0
  %v7399 = vmax.f32 %v7351, 0.0
  %v7400 = vmax.f32 %v7353, 0.0
  %v7401 = vmax.f32 %v7355, 0.0
  %v7402 = vmax.f32 %v7357, 0.0
  %v7403 = vmax.f32 %v7359, 0.0
  %v7404 = vmax.f32 %v7361, 0.0
  %v7405 = vmax.f32 %v7363, 0.0
  %v7406 = vmax.f32 %v7365, 0.0
  %v7407 = vmax.f32 %v7367, 0.0
  %v7408 = vmax.f32 %v7369, 0.0
  %v7409 = vmax.f32 %v7371, 0.0
  %v7410 = vmax.f32 %v7373, 0.0
  %v7411 = vmax.f32 %v7375, 0.0
  %v7412 = vmax.f32 %v7377, 0.0
  %v7413 = vmax.f32 %v7379, 0.0
  %v7414 = vmax.f32 %v7381, 0.0
  %v7415 = vpack.c.bf16 %v7384, %v7383
  %v7416 = vpack.c.bf16 %v7386, %v7385
  %v7417 = vpack.c.bf16 %v7388, %v7387
  %v7418 = vpack.c.bf16 %v7390, %v7389
  %v7419 = vpack.c.bf16 %v7392, %v7391
  %v7420 = vpack.c.bf16 %v7394, %v7393
  %v7421 = vpack.c.bf16 %v7396, %v7395
  %v7422 = vpack.c.bf16 %v7398, %v7397
  %v7423 = vpack.c.bf16 %v7400, %v7399
  %v7424 = vpack.c.bf16 %v7402, %v7401
  %v7425 = vpack.c.bf16 %v7404, %v7403
  %v7426 = vpack.c.bf16 %v7406, %v7405
  %v7427 = vpack.c.bf16 %v7408, %v7407
  %v7428 = vpack.c.bf16 %v7410, %v7409
  %v7429 = vpack.c.bf16 %v7412, %v7411
  %v7430 = vpack.c.bf16 %v7414, %v7413
  %v7431 = vld [vmem:[%s5] sm:$0xf]
  %v7432 = vld [vmem:[%s5 + $0x4] sm:$0xf]
  %v7433 = vld [vmem:[%s5 + $0x8] sm:$0xf]
  %v7434 = vld [vmem:[%s5 + $0xc] sm:$0xf]
  %v7435 = vld [vmem:[%s5 + $0x10] sm:$0xf]
  %v7436 = vld [vmem:[%s5 + $0x14] sm:$0xf]
  %v7437 = vld [vmem:[%s5 + $0x18] sm:$0xf]
  %v7438 = vld [vmem:[%s5 + $0x1c] sm:$0xf]
  %v7439 = vld [vmem:[%s5 + $0x20] sm:$0xf]
  %v7440 = vld [vmem:[%s5 + $0x24] sm:$0xf]
  %v7441 = vld [vmem:[%s5 + $0x28] sm:$0xf]
  %v7442 = vld [vmem:[%s5 + $0x2c] sm:$0xf]
  %v7443 = vld [vmem:[%s5 + $0x30] sm:$0xf]
  %v7444 = vld [vmem:[%s5 + $0x34] sm:$0xf]
  %v7445 = vld [vmem:[%s5 + $0x38] sm:$0xf]
  %v7446 = vld [vmem:[%s5 + $0x3c] sm:$0xf]
  %v7447 = vld [vmem:[%s6] sm:$0x1]
  %v7449 = vlaneseq
  %v7450 = vshrl.u32 %v7449, 7
  %v7451 = vsub.s32 0, %v7450
  %v7452 = vrot.slane %v7447, %v7451
  %v7470 = vunpack.c.l.b16 %v7431
  %v7471 = vunpack.c.l.b16 %v7432
  %v7472 = vunpack.c.l.b16 %v7433
  %v7473 = vunpack.c.l.b16 %v7434
  %v7474 = vunpack.c.l.b16 %v7435
  %v7475 = vunpack.c.l.b16 %v7436
  %v7476 = vunpack.c.l.b16 %v7437
  %v7477 = vunpack.c.l.b16 %v7438
  %v7478 = vunpack.c.l.b16 %v7439
  %v7479 = vunpack.c.l.b16 %v7440
  %v7480 = vunpack.c.l.b16 %v7441
  %v7481 = vunpack.c.l.b16 %v7442
  %v7482 = vunpack.c.l.b16 %v7443
  %v7483 = vunpack.c.l.b16 %v7444
  %v7484 = vunpack.c.l.b16 %v7445
  %v7485 = vunpack.c.l.b16 %v7446
  %v7486 = vpack.c.b16 %v7471, %v7470
  %v7487 = vpack.c.b16 %v7473, %v7472
  %v7488 = vpack.c.b16 %v7475, %v7474
  %v7489 = vpack.c.b16 %v7477, %v7476
  %v7490 = vpack.c.b16 %v7479, %v7478
  %v7491 = vpack.c.b16 %v7481, %v7480
  %v7492 = vpack.c.b16 %v7483, %v7482
  %v7493 = vpack.c.b16 %v7485, %v7484
  %7502 = vmatprep.subr.bf16.mxu0 0
  %7503 = vmatpush1.bf16.msra.mxu0 %v7493
  %7504 = vmatprep.subr.bf16.mxu0 0
  %7505 = vmatpush1.bf16.msra.mxu0 %v7492
  %7506 = vmatprep.subr.bf16.mxu0 0
  %7507 = vmatpush1.bf16.msra.mxu0 %v7491
  %7508 = vmatprep.subr.bf16.mxu0 0
  %7509 = vmatpush1.bf16.msra.mxu0 %v7490
  %7510 = vmatprep.subr.bf16.mxu0 0
  %7511 = vmatpush1.bf16.msra.mxu0 %v7489
  %7512 = vmatprep.subr.bf16.mxu0 0
  %7513 = vmatpush1.bf16.msra.mxu0 %v7488
  %7514 = vmatprep.subr.bf16.mxu0 0
  %7515 = vmatpush1.bf16.msra.mxu0 %v7487
  %7516 = vmatprep.subr.bf16.mxu0 0
  %7517 = vmatpush1.bf16.msra.mxu0 %v7486
  %7518 = vmatprep.subr.bf16.mxu0 0
  %7519 = vmatpush2.bf16.msra.mxu0 0
  %7520 = vmatprep.subr.bf16.mxu0 0
  %7521 = vmatpush2.bf16.msra.mxu0 0
  %7522 = vmatprep.subr.bf16.mxu0 0
  %7523 = vmatpush2.bf16.msra.mxu0 0
  %7524 = vmatprep.subr.bf16.mxu0 0
  %7525 = vmatpush2.bf16.msra.mxu0 0
  %7526 = vmatprep.subr.bf16.mxu0 0
  %7527 = vmatpush2.bf16.msra.mxu0 0
  %7528 = vmatprep.subr.bf16.mxu0 0
  %7529 = vmatpush2.bf16.msra.mxu0 0
  %7530 = vmatprep.subr.bf16.mxu0 0
  %7531 = vmatpush2.bf16.msra.mxu0 0
  %7532 = vmatprep.subr.bf16.mxu0 0
  %7533 = vmatpush2.bf16.msra.mxu0 0
  %7534 = vmatprep.mubr.bf16.mxu0 0
  %7535 = vmatmul.mubr.bf16.gmra.mxu0 %v7415
  %v7536 = vpop.f32.mrf.mxu0
  %v7537 = vadd.f32 %v7452, %v7536
  %v7538 = vpop.f32.mrf.mxu0
  %v7539 = vpop.f32.mrf.mxu0
  %v7540 = vadd.f32 %v7452, %v7539
  %v7541 = vpop.f32.mrf.mxu0
  %7542 = vmatprep.mubr.bf16.mxu0 0
  %7543 = vmatmul.mubr.bf16.gmra.mxu0 %v7416
  %v7544 = vpop.f32.mrf.mxu0
  %v7545 = vadd.f32 %v7452, %v7544
  %v7546 = vpop.f32.mrf.mxu0
  %v7547 = vpop.f32.mrf.mxu0
  %v7548 = vadd.f32 %v7452, %v7547
  %v7549 = vpop.f32.mrf.mxu0
  %7550 = vmatprep.mubr.bf16.mxu0 0
  %7551 = vmatmul.mubr.bf16.gmra.mxu0 %v7417
  %v7552 = vpop.f32.mrf.mxu0
  %v7553 = vadd.f32 %v7452, %v7552
  %v7554 = vpop.f32.mrf.mxu0
  %v7555 = vpop.f32.mrf.mxu0
  %v7556 = vadd.f32 %v7452, %v7555
  %v7557 = vpop.f32.mrf.mxu0
  %7558 = vmatprep.mubr.bf16.mxu0 0
  %7559 = vmatmul.mubr.bf16.gmra.mxu0 %v7418
  %v7560 = vpop.f32.mrf.mxu0
  %v7561 = vadd.f32 %v7452, %v7560
  %v7562 = vpop.f32.mrf.mxu0
  %v7563 = vpop.f32.mrf.mxu0
  %v7564 = vadd.f32 %v7452, %v7563
  %v7565 = vpop.f32.mrf.mxu0
  %7566 = vmatprep.mubr.bf16.mxu0 0
  %7567 = vmatmul.mubr.bf16.gmra.mxu0 %v7419
  %v7568 = vpop.f32.mrf.mxu0
  %v7569 = vadd.f32 %v7452, %v7568
  %v7570 = vpop.f32.mrf.mxu0
  %v7571 = vpop.f32.mrf.mxu0
  %v7572 = vadd.f32 %v7452, %v7571
  %v7573 = vpop.f32.mrf.mxu0
  %7574 = vmatprep.mubr.bf16.mxu0 0
  %7575 = vmatmul.mubr.bf16.gmra.mxu0 %v7420
  %v7576 = vpop.f32.mrf.mxu0
  %v7577 = vadd.f32 %v7452, %v7576
  %v7578 = vpop.f32.mrf.mxu0
  %v7579 = vpop.f32.mrf.mxu0
  %v7580 = vadd.f32 %v7452, %v7579
  %v7581 = vpop.f32.mrf.mxu0
  %7582 = vmatprep.mubr.bf16.mxu0 0
  %7583 = vmatmul.mubr.bf16.gmra.mxu0 %v7421
  %v7584 = vpop.f32.mrf.mxu0
  %v7585 = vadd.f32 %v7452, %v7584
  %v7586 = vpop.f32.mrf.mxu0
  %v7587 = vpop.f32.mrf.mxu0
  %v7588 = vadd.f32 %v7452, %v7587
  %v7589 = vpop.f32.mrf.mxu0
  %7590 = vmatprep.mubr.bf16.mxu0 0
  %7591 = vmatmul.mubr.bf16.gmra.mxu0 %v7422
  %v7592 = vpop.f32.mrf.mxu0
  %v7593 = vadd.f32 %v7452, %v7592
  %v7594 = vpop.f32.mrf.mxu0
  %v7595 = vpop.f32.mrf.mxu0
  %v7596 = vadd.f32 %v7452, %v7595
  %v7597 = vpop.f32.mrf.mxu0
  %7598 = vmatprep.mubr.bf16.mxu0 0
  %7599 = vmatmul.mubr.bf16.gmra.mxu0 %v7423
  %v7600 = vpop.f32.mrf.mxu0
  %v7601 = vadd.f32 %v7452, %v7600
  %v7602 = vpop.f32.mrf.mxu0
  %v7603 = vpop.f32.mrf.mxu0
  %v7604 = vadd.f32 %v7452, %v7603
  %v7605 = vpop.f32.mrf.mxu0
  %7606 = vmatprep.mubr.bf16.mxu0 0
  %7607 = vmatmul.mubr.bf16.gmra.mxu0 %v7424
  %v7608 = vpop.f32.mrf.mxu0
  %v7609 = vadd.f32 %v7452, %v7608
  %v7610 = vpop.f32.mrf.mxu0
  %v7611 = vpop.f32.mrf.mxu0
  %v7612 = vadd.f32 %v7452, %v7611
  %v7613 = vpop.f32.mrf.mxu0
  %7614 = vmatprep.mubr.bf16.mxu0 0
  %7615 = vmatmul.mubr.bf16.gmra.mxu0 %v7425
  %v7616 = vpop.f32.mrf.mxu0
  %v7617 = vadd.f32 %v7452, %v7616
  %v7618 = vpop.f32.mrf.mxu0
  %v7619 = vpop.f32.mrf.mxu0
  %v7620 = vadd.f32 %v7452, %v7619
  %v7621 = vpop.f32.mrf.mxu0
  %7622 = vmatprep.mubr.bf16.mxu0 0
  %7623 = vmatmul.mubr.bf16.gmra.mxu0 %v7426
  %v7624 = vpop.f32.mrf.mxu0
  %v7625 = vadd.f32 %v7452, %v7624
  %v7626 = vpop.f32.mrf.mxu0
  %v7627 = vpop.f32.mrf.mxu0
  %v7628 = vadd.f32 %v7452, %v7627
  %v7629 = vpop.f32.mrf.mxu0
  %7630 = vmatprep.mubr.bf16.mxu0 0
  %7631 = vmatmul.mubr.bf16.gmra.mxu0 %v7427
  %v7632 = vpop.f32.mrf.mxu0
  %v7633 = vadd.f32 %v7452, %v7632
  %v7634 = vpop.f32.mrf.mxu0
  %v7635 = vpop.f32.mrf.mxu0
  %v7636 = vadd.f32 %v7452, %v7635
  %v7637 = vpop.f32.mrf.mxu0
  %7638 = vmatprep.mubr.bf16.mxu0 0
  %7639 = vmatmul.mubr.bf16.gmra.mxu0 %v7428
  %v7640 = vpop.f32.mrf.mxu0
  %v7641 = vadd.f32 %v7452, %v7640
  %v7642 = vpop.f32.mrf.mxu0
  %v7643 = vpop.f32.mrf.mxu0
  %v7644 = vadd.f32 %v7452, %v7643
  %v7645 = vpop.f32.mrf.mxu0
  %7646 = vmatprep.mubr.bf16.mxu0 0
  %7647 = vmatmul.mubr.bf16.gmra.mxu0 %v7429
  %v7648 = vpop.f32.mrf.mxu0
  %v7649 = vadd.f32 %v7452, %v7648
  %v7650 = vpop.f32.mrf.mxu0
  %v7651 = vpop.f32.mrf.mxu0
  %v7652 = vadd.f32 %v7452, %v7651
  %v7653 = vpop.f32.mrf.mxu0
  %7654 = vmatprep.mubr.bf16.mxu0 0
  %7655 = vmatmul.mubr.bf16.gmra.mxu0 %v7430
  %v7656 = vpop.f32.mrf.mxu0
  %v7657 = vadd.f32 %v7452, %v7656
  %v7658 = vpop.f32.mrf.mxu0
  %v7659 = vpop.f32.mrf.mxu0
  %v7660 = vadd.f32 %v7452, %v7659
  %v7661 = vpop.f32.mrf.mxu0
  %7662 = vdwg.mxu0
  %v7663 = vadd.f32 %v7537, %v7320
  %v7664 = vadd.f32 %v7540, %v7322
  %v7665 = vadd.f32 %v7545, %v7324
  %v7666 = vadd.f32 %v7548, %v7326
  %v7667 = vadd.f32 %v7553, %v7328
  %v7668 = vadd.f32 %v7556, %v7330
  %v7669 = vadd.f32 %v7561, %v7332
  %v7670 = vadd.f32 %v7564, %v7334
  %v7671 = vadd.f32 %v7569, %v7336
  %v7672 = vadd.f32 %v7572, %v7338
  %v7673 = vadd.f32 %v7577, %v7340
  %v7674 = vadd.f32 %v7580, %v7342
  %v7675 = vadd.f32 %v7585, %v7344
  %v7676 = vadd.f32 %v7588, %v7346
  %v7677 = vadd.f32 %v7593, %v7348
  %v7678 = vadd.f32 %v7596, %v7350
  %v7679 = vadd.f32 %v7601, %v7352
  %v7680 = vadd.f32 %v7604, %v7354
  %v7681 = vadd.f32 %v7609, %v7356
  %v7682 = vadd.f32 %v7612, %v7358
  %v7683 = vadd.f32 %v7617, %v7360
  %v7684 = vadd.f32 %v7620, %v7362
  %v7685 = vadd.f32 %v7625, %v7364
  %v7686 = vadd.f32 %v7628, %v7366
  %v7687 = vadd.f32 %v7633, %v7368
  %v7688 = vadd.f32 %v7636, %v7370
  %v7689 = vadd.f32 %v7641, %v7372
  %v7690 = vadd.f32 %v7644, %v7374
  %v7691 = vadd.f32 %v7649, %v7376
  %v7692 = vadd.f32 %v7652, %v7378
  %v7693 = vadd.f32 %v7657, %v7380
  %v7694 = vadd.f32 %v7660, %v7382
  %v7695 = vpack.c.bf16 %v7664, %v7663
  %v7696 = vpack.c.bf16 %v7666, %v7665
  %v7697 = vpack.c.bf16 %v7668, %v7667
  %v7698 = vpack.c.bf16 %v7670, %v7669
  %v7699 = vpack.c.bf16 %v7672, %v7671
  %v7700 = vpack.c.bf16 %v7674, %v7673
  %v7701 = vpack.c.bf16 %v7676, %v7675
  %v7702 = vpack.c.bf16 %v7678, %v7677
  %v7703 = vpack.c.bf16 %v7680, %v7679
  %v7704 = vpack.c.bf16 %v7682, %v7681
  %v7705 = vpack.c.bf16 %v7684, %v7683
  %v7706 = vpack.c.bf16 %v7686, %v7685
  %v7707 = vpack.c.bf16 %v7688, %v7687
  %v7708 = vpack.c.bf16 %v7690, %v7689
  %v7709 = vpack.c.bf16 %v7692, %v7691
  %v7710 = vpack.c.bf16 %v7694, %v7693
  %s7711 = scalar_lea.vmem %s3, 128
  %v7712 = vld [vmem:[%s7711] sm:$0xff]
  %v7713 = vld [vmem:[%s7711 + $0x8] sm:$0xff]
  %v7714 = vld [vmem:[%s7711 + $0x10] sm:$0xff]
  %v7715 = vld [vmem:[%s7711 + $0x18] sm:$0xff]
  %v7716 = vld [vmem:[%s7711 + $0x20] sm:$0xff]
  %v7717 = vld [vmem:[%s7711 + $0x28] sm:$0xff]
  %v7718 = vld [vmem:[%s7711 + $0x30] sm:$0xff]
  %v7719 = vld [vmem:[%s7711 + $0x38] sm:$0xff]
  %v7720 = vld [vmem:[%s7711 + $0x40] sm:$0xff]
  %v7721 = vld [vmem:[%s7711 + $0x48] sm:$0xff]
  %v7722 = vld [vmem:[%s7711 + $0x50] sm:$0xff]
  %v7723 = vld [vmem:[%s7711 + $0x58] sm:$0xff]
  %v7724 = vld [vmem:[%s7711 + $0x60] sm:$0xff]
  %v7725 = vld [vmem:[%s7711 + $0x68] sm:$0xff]
  %v7726 = vld [vmem:[%s7711 + $0x70] sm:$0xff]
  %v7727 = vld [vmem:[%s7711 + $0x78] sm:$0xff]
  %v7744 = vunpack.c.l.b16 %v7712
  %v7745 = vunpack.c.h.b16 %v7712
  %v7746 = vunpack.c.l.b16 %v7713
  %v7747 = vunpack.c.h.b16 %v7713
  %v7748 = vunpack.c.l.b16 %v7714
  %v7749 = vunpack.c.h.b16 %v7714
  %v7750 = vunpack.c.l.b16 %v7715
  %v7751 = vunpack.c.h.b16 %v7715
  %v7752 = vunpack.c.l.b16 %v7716
  %v7753 = vunpack.c.h.b16 %v7716
  %v7754 = vunpack.c.l.b16 %v7717
  %v7755 = vunpack.c.h.b16 %v7717
  %v7756 = vunpack.c.l.b16 %v7718
  %v7757 = vunpack.c.h.b16 %v7718
  %v7758 = vunpack.c.l.b16 %v7719
  %v7759 = vunpack.c.h.b16 %v7719
  %v7760 = vunpack.c.l.b16 %v7720
  %v7761 = vunpack.c.h.b16 %v7720
  %v7762 = vunpack.c.l.b16 %v7721
  %v7763 = vunpack.c.h.b16 %v7721
  %v7764 = vunpack.c.l.b16 %v7722
  %v7765 = vunpack.c.h.b16 %v7722
  %v7766 = vunpack.c.l.b16 %v7723
  %v7767 = vunpack.c.h.b16 %v7723
  %v7768 = vunpack.c.l.b16 %v7724
  %v7769 = vunpack.c.h.b16 %v7724
  %v7770 = vunpack.c.l.b16 %v7725
  %v7771 = vunpack.c.h.b16 %v7725
  %v7772 = vunpack.c.l.b16 %v7726
  %v7773 = vunpack.c.h.b16 %v7726
  %v7774 = vunpack.c.l.b16 %v7727
  %v7775 = vunpack.c.h.b16 %v7727
  %v7776 = vpack.c.b16 %v7746, %v7744
  %v7777 = vpack.c.b16 %v7747, %v7745
  %v7778 = vpack.c.b16 %v7750, %v7748
  %v7779 = vpack.c.b16 %v7751, %v7749
  %v7780 = vpack.c.b16 %v7754, %v7752
  %v7781 = vpack.c.b16 %v7755, %v7753
  %v7782 = vpack.c.b16 %v7758, %v7756
  %v7783 = vpack.c.b16 %v7759, %v7757
  %v7784 = vpack.c.b16 %v7762, %v7760
  %v7785 = vpack.c.b16 %v7763, %v7761
  %v7786 = vpack.c.b16 %v7766, %v7764
  %v7787 = vpack.c.b16 %v7767, %v7765
  %v7788 = vpack.c.b16 %v7770, %v7768
  %v7789 = vpack.c.b16 %v7771, %v7769
  %v7790 = vpack.c.b16 %v7774, %v7772
  %v7791 = vpack.c.b16 %v7775, %v7773
  %7808 = vmatprep.subr.bf16.mxu0 %v7791
  %7809 = vmatpush1.bf16.msra.mxu0 %v7790
  %7810 = vmatprep.subr.bf16.mxu0 %v7789
  %7811 = vmatpush1.bf16.msra.mxu0 %v7788
  %7812 = vmatprep.subr.bf16.mxu0 %v7787
  %7813 = vmatpush1.bf16.msra.mxu0 %v7786
  %7814 = vmatprep.subr.bf16.mxu0 %v7785
  %7815 = vmatpush1.bf16.msra.mxu0 %v7784
  %7816 = vmatprep.subr.bf16.mxu0 %v7783
  %7817 = vmatpush1.bf16.msra.mxu0 %v7782
  %7818 = vmatprep.subr.bf16.mxu0 %v7781
  %7819 = vmatpush1.bf16.msra.mxu0 %v7780
  %7820 = vmatprep.subr.bf16.mxu0 %v7779
  %7821 = vmatpush1.bf16.msra.mxu0 %v7778
  %7822 = vmatprep.subr.bf16.mxu0 %v7777
  %7823 = vmatpush1.bf16.msra.mxu0 %v7776
  %7824 = vmatprep.subr.bf16.mxu0 0
  %7825 = vmatpush2.bf16.msra.mxu0 0
  %7826 = vmatprep.subr.bf16.mxu0 0
  %7827 = vmatpush2.bf16.msra.mxu0 0
  %7828 = vmatprep.subr.bf16.mxu0 0
  %7829 = vmatpush2.bf16.msra.mxu0 0
  %7830 = vmatprep.subr.bf16.mxu0 0
  %7831 = vmatpush2.bf16.msra.mxu0 0
  %7832 = vmatprep.subr.bf16.mxu0 0
  %7833 = vmatpush2.bf16.msra.mxu0 0
  %7834 = vmatprep.subr.bf16.mxu0 0
  %7835 = vmatpush2.bf16.msra.mxu0 0
  %7836 = vmatprep.subr.bf16.mxu0 0
  %7837 = vmatpush2.bf16.msra.mxu0 0
  %7838 = vmatprep.subr.bf16.mxu0 0
  %7839 = vmatpush2.bf16.msra.mxu0 0
  %7840 = vmatprep.mubr.bf16.mxu0 0
  %7841 = vmatmul.mubr.bf16.gmra.mxu0 %v7695
  %v7842 = vpop.f32.mrf.mxu0
  %v7843 = vadd.f32 0.0, %v7842
  %v7844 = vpop.f32.mrf.mxu0
  %v7845 = vadd.f32 0.0, %v7844
  %v7846 = vpop.f32.mrf.mxu0
  %v7847 = vadd.f32 0.0, %v7846
  %v7848 = vpop.f32.mrf.mxu0
  %v7849 = vadd.f32 0.0, %v7848
  %7850 = vmatprep.mubr.bf16.mxu0 0
  %7851 = vmatmul.mubr.bf16.gmra.mxu0 %v7696
  %v7852 = vpop.f32.mrf.mxu0
  %v7853 = vadd.f32 0.0, %v7852
  %v7854 = vpop.f32.mrf.mxu0
  %v7855 = vadd.f32 0.0, %v7854
  %v7856 = vpop.f32.mrf.mxu0
  %v7857 = vadd.f32 0.0, %v7856
  %v7858 = vpop.f32.mrf.mxu0
  %v7859 = vadd.f32 0.0, %v7858
  %7860 = vmatprep.mubr.bf16.mxu0 0
  %7861 = vmatmul.mubr.bf16.gmra.mxu0 %v7697
  %v7862 = vpop.f32.mrf.mxu0
  %v7863 = vadd.f32 0.0, %v7862
  %v7864 = vpop.f32.mrf.mxu0
  %v7865 = vadd.f32 0.0, %v7864
  %v7866 = vpop.f32.mrf.mxu0
  %v7867 = vadd.f32 0.0, %v7866
  %v7868 = vpop.f32.mrf.mxu0
  %v7869 = vadd.f32 0.0, %v7868
  %7870 = vmatprep.mubr.bf16.mxu0 0
  %7871 = vmatmul.mubr.bf16.gmra.mxu0 %v7698
  %v7872 = vpop.f32.mrf.mxu0
  %v7873 = vadd.f32 0.0, %v7872
  %v7874 = vpop.f32.mrf.mxu0
  %v7875 = vadd.f32 0.0, %v7874
  %v7876 = vpop.f32.mrf.mxu0
  %v7877 = vadd.f32 0.0, %v7876
  %v7878 = vpop.f32.mrf.mxu0
  %v7879 = vadd.f32 0.0, %v7878
  %7880 = vmatprep.mubr.bf16.mxu0 0
  %7881 = vmatmul.mubr.bf16.gmra.mxu0 %v7699
  %v7882 = vpop.f32.mrf.mxu0
  %v7883 = vadd.f32 0.0, %v7882
  %v7884 = vpop.f32.mrf.mxu0
  %v7885 = vadd.f32 0.0, %v7884
  %v7886 = vpop.f32.mrf.mxu0
  %v7887 = vadd.f32 0.0, %v7886
  %v7888 = vpop.f32.mrf.mxu0
  %v7889 = vadd.f32 0.0, %v7888
  %7890 = vmatprep.mubr.bf16.mxu0 0
  %7891 = vmatmul.mubr.bf16.gmra.mxu0 %v7700
  %v7892 = vpop.f32.mrf.mxu0
  %v7893 = vadd.f32 0.0, %v7892
  %v7894 = vpop.f32.mrf.mxu0
  %v7895 = vadd.f32 0.0, %v7894
  %v7896 = vpop.f32.mrf.mxu0
  %v7897 = vadd.f32 0.0, %v7896
  %v7898 = vpop.f32.mrf.mxu0
  %v7899 = vadd.f32 0.0, %v7898
  %7900 = vmatprep.mubr.bf16.mxu0 0
  %7901 = vmatmul.mubr.bf16.gmra.mxu0 %v7701
  %v7902 = vpop.f32.mrf.mxu0
  %v7903 = vadd.f32 0.0, %v7902
  %v7904 = vpop.f32.mrf.mxu0
  %v7905 = vadd.f32 0.0, %v7904
  %v7906 = vpop.f32.mrf.mxu0
  %v7907 = vadd.f32 0.0, %v7906
  %v7908 = vpop.f32.mrf.mxu0
  %v7909 = vadd.f32 0.0, %v7908
  %7910 = vmatprep.mubr.bf16.mxu0 0
  %7911 = vmatmul.mubr.bf16.gmra.mxu0 %v7702
  %v7912 = vpop.f32.mrf.mxu0
  %v7913 = vadd.f32 0.0, %v7912
  %v7914 = vpop.f32.mrf.mxu0
  %v7915 = vadd.f32 0.0, %v7914
  %v7916 = vpop.f32.mrf.mxu0
  %v7917 = vadd.f32 0.0, %v7916
  %v7918 = vpop.f32.mrf.mxu0
  %v7919 = vadd.f32 0.0, %v7918
  %7920 = vmatprep.mubr.bf16.mxu0 0
  %7921 = vmatmul.mubr.bf16.gmra.mxu0 %v7703
  %v7922 = vpop.f32.mrf.mxu0
  %v7923 = vadd.f32 0.0, %v7922
  %v7924 = vpop.f32.mrf.mxu0
  %v7925 = vadd.f32 0.0, %v7924
  %v7926 = vpop.f32.mrf.mxu0
  %v7927 = vadd.f32 0.0, %v7926
  %v7928 = vpop.f32.mrf.mxu0
  %v7929 = vadd.f32 0.0, %v7928
  %7930 = vmatprep.mubr.bf16.mxu0 0
  %7931 = vmatmul.mubr.bf16.gmra.mxu0 %v7704
  %v7932 = vpop.f32.mrf.mxu0
  %v7933 = vadd.f32 0.0, %v7932
  %v7934 = vpop.f32.mrf.mxu0
  %v7935 = vadd.f32 0.0, %v7934
  %v7936 = vpop.f32.mrf.mxu0
  %v7937 = vadd.f32 0.0, %v7936
  %v7938 = vpop.f32.mrf.mxu0
  %v7939 = vadd.f32 0.0, %v7938
  %7940 = vmatprep.mubr.bf16.mxu0 0
  %7941 = vmatmul.mubr.bf16.gmra.mxu0 %v7705
  %v7942 = vpop.f32.mrf.mxu0
  %v7943 = vadd.f32 0.0, %v7942
  %v7944 = vpop.f32.mrf.mxu0
  %v7945 = vadd.f32 0.0, %v7944
  %v7946 = vpop.f32.mrf.mxu0
  %v7947 = vadd.f32 0.0, %v7946
  %v7948 = vpop.f32.mrf.mxu0
  %v7949 = vadd.f32 0.0, %v7948
  %7950 = vmatprep.mubr.bf16.mxu0 0
  %7951 = vmatmul.mubr.bf16.gmra.mxu0 %v7706
  %v7952 = vpop.f32.mrf.mxu0
  %v7953 = vadd.f32 0.0, %v7952
  %v7954 = vpop.f32.mrf.mxu0
  %v7955 = vadd.f32 0.0, %v7954
  %v7956 = vpop.f32.mrf.mxu0
  %v7957 = vadd.f32 0.0, %v7956
  %v7958 = vpop.f32.mrf.mxu0
  %v7959 = vadd.f32 0.0, %v7958
  %7960 = vmatprep.mubr.bf16.mxu0 0
  %7961 = vmatmul.mubr.bf16.gmra.mxu0 %v7707
  %v7962 = vpop.f32.mrf.mxu0
  %v7963 = vadd.f32 0.0, %v7962
  %v7964 = vpop.f32.mrf.mxu0
  %v7965 = vadd.f32 0.0, %v7964
  %v7966 = vpop.f32.mrf.mxu0
  %v7967 = vadd.f32 0.0, %v7966
  %v7968 = vpop.f32.mrf.mxu0
  %v7969 = vadd.f32 0.0, %v7968
  %7970 = vmatprep.mubr.bf16.mxu0 0
  %7971 = vmatmul.mubr.bf16.gmra.mxu0 %v7708
  %v7972 = vpop.f32.mrf.mxu0
  %v7973 = vadd.f32 0.0, %v7972
  %v7974 = vpop.f32.mrf.mxu0
  %v7975 = vadd.f32 0.0, %v7974
  %v7976 = vpop.f32.mrf.mxu0
  %v7977 = vadd.f32 0.0, %v7976
  %v7978 = vpop.f32.mrf.mxu0
  %v7979 = vadd.f32 0.0, %v7978
  %7980 = vmatprep.mubr.bf16.mxu0 0
  %7981 = vmatmul.mubr.bf16.gmra.mxu0 %v7709
  %v7982 = vpop.f32.mrf.mxu0
  %v7983 = vadd.f32 0.0, %v7982
  %v7984 = vpop.f32.mrf.mxu0
  %v7985 = vadd.f32 0.0, %v7984
  %v7986 = vpop.f32.mrf.mxu0
  %v7987 = vadd.f32 0.0, %v7986
  %v7988 = vpop.f32.mrf.mxu0
  %v7989 = vadd.f32 0.0, %v7988
  %7990 = vmatprep.mubr.bf16.mxu0 0
  %7991 = vmatmul.mubr.bf16.gmra.mxu0 %v7710
  %v7992 = vpop.f32.mrf.mxu0
  %v7993 = vadd.f32 0.0, %v7992
  %v7994 = vpop.f32.mrf.mxu0
  %v7995 = vadd.f32 0.0, %v7994
  %v7996 = vpop.f32.mrf.mxu0
  %v7997 = vadd.f32 0.0, %v7996
  %v7998 = vpop.f32.mrf.mxu0
  %v7999 = vadd.f32 0.0, %v7998
  %8000 = vdwg.mxu0
  %s8001 = scalar_lea.vmem %s4, 4
  %v8002 = vld [vmem:[%s8001] sm:$0xf]
  %v8005 = vunpack.c.l.s4 1966171168
  %v8006 = vunpack.c.0.s8 %v8005
  %v8007 = vlaneseq
  %v8008 = vshrl.u32 %v8007, 7
  %v8009 = vsub.s32 %v8006, %v8008
  %v8010 = vrot.slane %v8002, %v8009
  %v8011 = vcombine.high %v8010, %v8010
  %v8012 = vlaneseq
  %v8013 = vshrl.u32 %v8012, 7
  %v8014 = vsub.s32 0, %v8013
  %v8015 = vrot.slane %v8010, %v8014
  %v8016 = vlaneseq
  %v8017 = vshrl.u32 %v8016, 7
  %v8018 = vsub.s32 1, %v8017
  %v8019 = vrot.slane %v8010, %v8018
  %v8020 = vlaneseq
  %v8021 = vshrl.u32 %v8020, 7
  %v8022 = vsub.s32 0, %v8021
  %v8023 = vrot.slane %v8011, %v8022
  %v8024 = vlaneseq
  %v8025 = vshrl.u32 %v8024, 7
  %v8026 = vsub.s32 1, %v8025
  %v8027 = vrot.slane %v8011, %v8026
  %v8032 = vadd.f32 %v7843, %v8015
  %v8033 = vadd.f32 %v7845, %v8019
  %v8034 = vadd.f32 %v7847, %v8015
  %v8035 = vadd.f32 %v7849, %v8019
  %v8036 = vadd.f32 %v7853, %v8015
  %v8037 = vadd.f32 %v7855, %v8019
  %v8038 = vadd.f32 %v7857, %v8015
  %v8039 = vadd.f32 %v7859, %v8019
  %v8040 = vadd.f32 %v7863, %v8015
  %v8041 = vadd.f32 %v7865, %v8019
  %v8042 = vadd.f32 %v7867, %v8015
  %v8043 = vadd.f32 %v7869, %v8019
  %v8044 = vadd.f32 %v7873, %v8015
  %v8045 = vadd.f32 %v7875, %v8019
  %v8046 = vadd.f32 %v7877, %v8015
  %v8047 = vadd.f32 %v7879, %v8019
  %v8048 = vadd.f32 %v7883, %v8015
  %v8049 = vadd.f32 %v7885, %v8019
  %v8050 = vadd.f32 %v7887, %v8015
  %v8051 = vadd.f32 %v7889, %v8019
  %v8052 = vadd.f32 %v7893, %v8015
  %v8053 = vadd.f32 %v7895, %v8019
  %v8054 = vadd.f32 %v7897, %v8015
  %v8055 = vadd.f32 %v7899, %v8019
  %v8056 = vadd.f32 %v7903, %v8015
  %v8057 = vadd.f32 %v7905, %v8019
  %v8058 = vadd.f32 %v7907, %v8015
  %v8059 = vadd.f32 %v7909, %v8019
  %v8060 = vadd.f32 %v7913, %v8015
  %v8061 = vadd.f32 %v7915, %v8019
  %v8062 = vadd.f32 %v7917, %v8015
  %v8063 = vadd.f32 %v7919, %v8019
  %v8064 = vadd.f32 %v7923, %v8023
  %v8065 = vadd.f32 %v7925, %v8027
  %v8066 = vadd.f32 %v7927, %v8023
  %v8067 = vadd.f32 %v7929, %v8027
  %v8068 = vadd.f32 %v7933, %v8023
  %v8069 = vadd.f32 %v7935, %v8027
  %v8070 = vadd.f32 %v7937, %v8023
  %v8071 = vadd.f32 %v7939, %v8027
  %v8072 = vadd.f32 %v7943, %v8023
  %v8073 = vadd.f32 %v7945, %v8027
  %v8074 = vadd.f32 %v7947, %v8023
  %v8075 = vadd.f32 %v7949, %v8027
  %v8076 = vadd.f32 %v7953, %v8023
  %v8077 = vadd.f32 %v7955, %v8027
  %v8078 = vadd.f32 %v7957, %v8023
  %v8079 = vadd.f32 %v7959, %v8027
  %v8080 = vadd.f32 %v7963, %v8023
  %v8081 = vadd.f32 %v7965, %v8027
  %v8082 = vadd.f32 %v7967, %v8023
  %v8083 = vadd.f32 %v7969, %v8027
  %v8084 = vadd.f32 %v7973, %v8023
  %v8085 = vadd.f32 %v7975, %v8027
  %v8086 = vadd.f32 %v7977, %v8023
  %v8087 = vadd.f32 %v7979, %v8027
  %v8088 = vadd.f32 %v7983, %v8023
  %v8089 = vadd.f32 %v7985, %v8027
  %v8090 = vadd.f32 %v7987, %v8023
  %v8091 = vadd.f32 %v7989, %v8027
  %v8092 = vadd.f32 %v7993, %v8023
  %v8093 = vadd.f32 %v7995, %v8027
  %v8094 = vadd.f32 %v7997, %v8023
  %v8095 = vadd.f32 %v7999, %v8027
  %v8096 = vmax.f32 %v8032, 0.0
  %v8097 = vmax.f32 %v8034, 0.0
  %v8098 = vmax.f32 %v8036, 0.0
  %v8099 = vmax.f32 %v8038, 0.0
  %v8100 = vmax.f32 %v8040, 0.0
  %v8101 = vmax.f32 %v8042, 0.0
  %v8102 = vmax.f32 %v8044, 0.0
  %v8103 = vmax.f32 %v8046, 0.0
  %v8104 = vmax.f32 %v8048, 0.0
  %v8105 = vmax.f32 %v8050, 0.0
  %v8106 = vmax.f32 %v8052, 0.0
  %v8107 = vmax.f32 %v8054, 0.0
  %v8108 = vmax.f32 %v8056, 0.0
  %v8109 = vmax.f32 %v8058, 0.0
  %v8110 = vmax.f32 %v8060, 0.0
  %v8111 = vmax.f32 %v8062, 0.0
  %v8112 = vmax.f32 %v8064, 0.0
  %v8113 = vmax.f32 %v8066, 0.0
  %v8114 = vmax.f32 %v8068, 0.0
  %v8115 = vmax.f32 %v8070, 0.0
  %v8116 = vmax.f32 %v8072, 0.0
  %v8117 = vmax.f32 %v8074, 0.0
  %v8118 = vmax.f32 %v8076, 0.0
  %v8119 = vmax.f32 %v8078, 0.0
  %v8120 = vmax.f32 %v8080, 0.0
  %v8121 = vmax.f32 %v8082, 0.0
  %v8122 = vmax.f32 %v8084, 0.0
  %v8123 = vmax.f32 %v8086, 0.0
  %v8124 = vmax.f32 %v8088, 0.0
  %v8125 = vmax.f32 %v8090, 0.0
  %v8126 = vmax.f32 %v8092, 0.0
  %v8127 = vmax.f32 %v8094, 0.0
  %v8128 = vpack.c.bf16 %v8097, %v8096
  %v8129 = vpack.c.bf16 %v8099, %v8098
  %v8130 = vpack.c.bf16 %v8101, %v8100
  %v8131 = vpack.c.bf16 %v8103, %v8102
  %v8132 = vpack.c.bf16 %v8105, %v8104
  %v8133 = vpack.c.bf16 %v8107, %v8106
  %v8134 = vpack.c.bf16 %v8109, %v8108
  %v8135 = vpack.c.bf16 %v8111, %v8110
  %v8136 = vpack.c.bf16 %v8113, %v8112
  %v8137 = vpack.c.bf16 %v8115, %v8114
  %v8138 = vpack.c.bf16 %v8117, %v8116
  %v8139 = vpack.c.bf16 %v8119, %v8118
  %v8140 = vpack.c.bf16 %v8121, %v8120
  %v8141 = vpack.c.bf16 %v8123, %v8122
  %v8142 = vpack.c.bf16 %v8125, %v8124
  %v8143 = vpack.c.bf16 %v8127, %v8126
  %s8144 = scalar_lea.vmem %s5, 64
  %v8145 = vld [vmem:[%s8144] sm:$0xf]
  %v8146 = vld [vmem:[%s8144 + $0x4] sm:$0xf]
  %v8147 = vld [vmem:[%s8144 + $0x8] sm:$0xf]
  %v8148 = vld [vmem:[%s8144 + $0xc] sm:$0xf]
  %v8149 = vld [vmem:[%s8144 + $0x10] sm:$0xf]
  %v8150 = vld [vmem:[%s8144 + $0x14] sm:$0xf]
  %v8151 = vld [vmem:[%s8144 + $0x18] sm:$0xf]
  %v8152 = vld [vmem:[%s8144 + $0x1c] sm:$0xf]
  %v8153 = vld [vmem:[%s8144 + $0x20] sm:$0xf]
  %v8154 = vld [vmem:[%s8144 + $0x24] sm:$0xf]
  %v8155 = vld [vmem:[%s8144 + $0x28] sm:$0xf]
  %v8156 = vld [vmem:[%s8144 + $0x2c] sm:$0xf]
  %v8157 = vld [vmem:[%s8144 + $0x30] sm:$0xf]
  %v8158 = vld [vmem:[%s8144 + $0x34] sm:$0xf]
  %v8159 = vld [vmem:[%s8144 + $0x38] sm:$0xf]
  %v8160 = vld [vmem:[%s8144 + $0x3c] sm:$0xf]
  %s8161 = scalar_lea.vmem %s6, 1
  %v8162 = vld [vmem:[%s8161] sm:$0x1]
  %v8164 = vlaneseq
  %v8165 = vshrl.u32 %v8164, 7
  %v8166 = vsub.s32 0, %v8165
  %v8167 = vrot.slane %v8162, %v8166
  %v8185 = vunpack.c.l.b16 %v8145
  %v8186 = vunpack.c.l.b16 %v8146
  %v8187 = vunpack.c.l.b16 %v8147
  %v8188 = vunpack.c.l.b16 %v8148
  %v8189 = vunpack.c.l.b16 %v8149
  %v8190 = vunpack.c.l.b16 %v8150
  %v8191 = vunpack.c.l.b16 %v8151
  %v8192 = vunpack.c.l.b16 %v8152
  %v8193 = vunpack.c.l.b16 %v8153
  %v8194 = vunpack.c.l.b16 %v8154
  %v8195 = vunpack.c.l.b16 %v8155
  %v8196 = vunpack.c.l.b16 %v8156
  %v8197 = vunpack.c.l.b16 %v8157
  %v8198 = vunpack.c.l.b16 %v8158
  %v8199 = vunpack.c.l.b16 %v8159
  %v8200 = vunpack.c.l.b16 %v8160
  %v8201 = vpack.c.b16 %v8186, %v8185
  %v8202 = vpack.c.b16 %v8188, %v8187
  %v8203 = vpack.c.b16 %v8190, %v8189
  %v8204 = vpack.c.b16 %v8192, %v8191
  %v8205 = vpack.c.b16 %v8194, %v8193
  %v8206 = vpack.c.b16 %v8196, %v8195
  %v8207 = vpack.c.b16 %v8198, %v8197
  %v8208 = vpack.c.b16 %v8200, %v8199
  %8217 = vmatprep.subr.bf16.mxu0 0
  %8218 = vmatpush1.bf16.msra.mxu0 %v8208
  %8219 = vmatprep.subr.bf16.mxu0 0
  %8220 = vmatpush1.bf16.msra.mxu0 %v8207
  %8221 = vmatprep.subr.bf16.mxu0 0
  %8222 = vmatpush1.bf16.msra.mxu0 %v8206
  %8223 = vmatprep.subr.bf16.mxu0 0
  %8224 = vmatpush1.bf16.msra.mxu0 %v8205
  %8225 = vmatprep.subr.bf16.mxu0 0
  %8226 = vmatpush1.bf16.msra.mxu0 %v8204
  %8227 = vmatprep.subr.bf16.mxu0 0
  %8228 = vmatpush1.bf16.msra.mxu0 %v8203
  %8229 = vmatprep.subr.bf16.mxu0 0
  %8230 = vmatpush1.bf16.msra.mxu0 %v8202
  %8231 = vmatprep.subr.bf16.mxu0 0
  %8232 = vmatpush1.bf16.msra.mxu0 %v8201
  %8233 = vmatprep.subr.bf16.mxu0 0
  %8234 = vmatpush2.bf16.msra.mxu0 0
  %8235 = vmatprep.subr.bf16.mxu0 0
  %8236 = vmatpush2.bf16.msra.mxu0 0
  %8237 = vmatprep.subr.bf16.mxu0 0
  %8238 = vmatpush2.bf16.msra.mxu0 0
  %8239 = vmatprep.subr.bf16.mxu0 0
  %8240 = vmatpush2.bf16.msra.mxu0 0
  %8241 = vmatprep.subr.bf16.mxu0 0
  %8242 = vmatpush2.bf16.msra.mxu0 0
  %8243 = vmatprep.subr.bf16.mxu0 0
  %8244 = vmatpush2.bf16.msra.mxu0 0
  %8245 = vmatprep.subr.bf16.mxu0 0
  %8246 = vmatpush2.bf16.msra.mxu0 0
  %8247 = vmatprep.subr.bf16.mxu0 0
  %8248 = vmatpush2.bf16.msra.mxu0 0
  %8249 = vmatprep.mubr.bf16.mxu0 0
  %8250 = vmatmul.mubr.bf16.gmra.mxu0 %v8128
  %v8251 = vpop.f32.mrf.mxu0
  %v8252 = vadd.f32 %v8167, %v8251
  %v8253 = vpop.f32.mrf.mxu0
  %v8254 = vpop.f32.mrf.mxu0
  %v8255 = vadd.f32 %v8167, %v8254
  %v8256 = vpop.f32.mrf.mxu0
  %8257 = vmatprep.mubr.bf16.mxu0 0
  %8258 = vmatmul.mubr.bf16.gmra.mxu0 %v8129
  %v8259 = vpop.f32.mrf.mxu0
  %v8260 = vadd.f32 %v8167, %v8259
  %v8261 = vpop.f32.mrf.mxu0
  %v8262 = vpop.f32.mrf.mxu0
  %v8263 = vadd.f32 %v8167, %v8262
  %v8264 = vpop.f32.mrf.mxu0
  %8265 = vmatprep.mubr.bf16.mxu0 0
  %8266 = vmatmul.mubr.bf16.gmra.mxu0 %v8130
  %v8267 = vpop.f32.mrf.mxu0
  %v8268 = vadd.f32 %v8167, %v8267
  %v8269 = vpop.f32.mrf.mxu0
  %v8270 = vpop.f32.mrf.mxu0
  %v8271 = vadd.f32 %v8167, %v8270
  %v8272 = vpop.f32.mrf.mxu0
  %8273 = vmatprep.mubr.bf16.mxu0 0
  %8274 = vmatmul.mubr.bf16.gmra.mxu0 %v8131
  %v8275 = vpop.f32.mrf.mxu0
  %v8276 = vadd.f32 %v8167, %v8275
  %v8277 = vpop.f32.mrf.mxu0
  %v8278 = vpop.f32.mrf.mxu0
  %v8279 = vadd.f32 %v8167, %v8278
  %v8280 = vpop.f32.mrf.mxu0
  %8281 = vmatprep.mubr.bf16.mxu0 0
  %8282 = vmatmul.mubr.bf16.gmra.mxu0 %v8132
  %v8283 = vpop.f32.mrf.mxu0
  %v8284 = vadd.f32 %v8167, %v8283
  %v8285 = vpop.f32.mrf.mxu0
  %v8286 = vpop.f32.mrf.mxu0
  %v8287 = vadd.f32 %v8167, %v8286
  %v8288 = vpop.f32.mrf.mxu0
  %8289 = vmatprep.mubr.bf16.mxu0 0
  %8290 = vmatmul.mubr.bf16.gmra.mxu0 %v8133
  %v8291 = vpop.f32.mrf.mxu0
  %v8292 = vadd.f32 %v8167, %v8291
  %v8293 = vpop.f32.mrf.mxu0
  %v8294 = vpop.f32.mrf.mxu0
  %v8295 = vadd.f32 %v8167, %v8294
  %v8296 = vpop.f32.mrf.mxu0
  %8297 = vmatprep.mubr.bf16.mxu0 0
  %8298 = vmatmul.mubr.bf16.gmra.mxu0 %v8134
  %v8299 = vpop.f32.mrf.mxu0
  %v8300 = vadd.f32 %v8167, %v8299
  %v8301 = vpop.f32.mrf.mxu0
  %v8302 = vpop.f32.mrf.mxu0
  %v8303 = vadd.f32 %v8167, %v8302
  %v8304 = vpop.f32.mrf.mxu0
  %8305 = vmatprep.mubr.bf16.mxu0 0
  %8306 = vmatmul.mubr.bf16.gmra.mxu0 %v8135
  %v8307 = vpop.f32.mrf.mxu0
  %v8308 = vadd.f32 %v8167, %v8307
  %v8309 = vpop.f32.mrf.mxu0
  %v8310 = vpop.f32.mrf.mxu0
  %v8311 = vadd.f32 %v8167, %v8310
  %v8312 = vpop.f32.mrf.mxu0
  %8313 = vmatprep.mubr.bf16.mxu0 0
  %8314 = vmatmul.mubr.bf16.gmra.mxu0 %v8136
  %v8315 = vpop.f32.mrf.mxu0
  %v8316 = vadd.f32 %v8167, %v8315
  %v8317 = vpop.f32.mrf.mxu0
  %v8318 = vpop.f32.mrf.mxu0
  %v8319 = vadd.f32 %v8167, %v8318
  %v8320 = vpop.f32.mrf.mxu0
  %8321 = vmatprep.mubr.bf16.mxu0 0
  %8322 = vmatmul.mubr.bf16.gmra.mxu0 %v8137
  %v8323 = vpop.f32.mrf.mxu0
  %v8324 = vadd.f32 %v8167, %v8323
  %v8325 = vpop.f32.mrf.mxu0
  %v8326 = vpop.f32.mrf.mxu0
  %v8327 = vadd.f32 %v8167, %v8326
  %v8328 = vpop.f32.mrf.mxu0
  %8329 = vmatprep.mubr.bf16.mxu0 0
  %8330 = vmatmul.mubr.bf16.gmra.mxu0 %v8138
  %v8331 = vpop.f32.mrf.mxu0
  %v8332 = vadd.f32 %v8167, %v8331
  %v8333 = vpop.f32.mrf.mxu0
  %v8334 = vpop.f32.mrf.mxu0
  %v8335 = vadd.f32 %v8167, %v8334
  %v8336 = vpop.f32.mrf.mxu0
  %8337 = vmatprep.mubr.bf16.mxu0 0
  %8338 = vmatmul.mubr.bf16.gmra.mxu0 %v8139
  %v8339 = vpop.f32.mrf.mxu0
  %v8340 = vadd.f32 %v8167, %v8339
  %v8341 = vpop.f32.mrf.mxu0
  %v8342 = vpop.f32.mrf.mxu0
  %v8343 = vadd.f32 %v8167, %v8342
  %v8344 = vpop.f32.mrf.mxu0
  %8345 = vmatprep.mubr.bf16.mxu0 0
  %8346 = vmatmul.mubr.bf16.gmra.mxu0 %v8140
  %v8347 = vpop.f32.mrf.mxu0
  %v8348 = vadd.f32 %v8167, %v8347
  %v8349 = vpop.f32.mrf.mxu0
  %v8350 = vpop.f32.mrf.mxu0
  %v8351 = vadd.f32 %v8167, %v8350
  %v8352 = vpop.f32.mrf.mxu0
  %8353 = vmatprep.mubr.bf16.mxu0 0
  %8354 = vmatmul.mubr.bf16.gmra.mxu0 %v8141
  %v8355 = vpop.f32.mrf.mxu0
  %v8356 = vadd.f32 %v8167, %v8355
  %v8357 = vpop.f32.mrf.mxu0
  %v8358 = vpop.f32.mrf.mxu0
  %v8359 = vadd.f32 %v8167, %v8358
  %v8360 = vpop.f32.mrf.mxu0
  %8361 = vmatprep.mubr.bf16.mxu0 0
  %8362 = vmatmul.mubr.bf16.gmra.mxu0 %v8142
  %v8363 = vpop.f32.mrf.mxu0
  %v8364 = vadd.f32 %v8167, %v8363
  %v8365 = vpop.f32.mrf.mxu0
  %v8366 = vpop.f32.mrf.mxu0
  %v8367 = vadd.f32 %v8167, %v8366
  %v8368 = vpop.f32.mrf.mxu0
  %8369 = vmatprep.mubr.bf16.mxu0 0
  %8370 = vmatmul.mubr.bf16.gmra.mxu0 %v8143
  %v8371 = vpop.f32.mrf.mxu0
  %v8372 = vadd.f32 %v8167, %v8371
  %v8373 = vpop.f32.mrf.mxu0
  %v8374 = vpop.f32.mrf.mxu0
  %v8375 = vadd.f32 %v8167, %v8374
  %v8376 = vpop.f32.mrf.mxu0
  %8377 = vdwg.mxu0
  %v8378 = vadd.f32 %v8252, %v8033
  %v8379 = vadd.f32 %v8255, %v8035
  %v8380 = vadd.f32 %v8260, %v8037
  %v8381 = vadd.f32 %v8263, %v8039
  %v8382 = vadd.f32 %v8268, %v8041
  %v8383 = vadd.f32 %v8271, %v8043
  %v8384 = vadd.f32 %v8276, %v8045
  %v8385 = vadd.f32 %v8279, %v8047
  %v8386 = vadd.f32 %v8284, %v8049
  %v8387 = vadd.f32 %v8287, %v8051
  %v8388 = vadd.f32 %v8292, %v8053
  %v8389 = vadd.f32 %v8295, %v8055
  %v8390 = vadd.f32 %v8300, %v8057
  %v8391 = vadd.f32 %v8303, %v8059
  %v8392 = vadd.f32 %v8308, %v8061
  %v8393 = vadd.f32 %v8311, %v8063
  %v8394 = vadd.f32 %v8316, %v8065
  %v8395 = vadd.f32 %v8319, %v8067
  %v8396 = vadd.f32 %v8324, %v8069
  %v8397 = vadd.f32 %v8327, %v8071
  %v8398 = vadd.f32 %v8332, %v8073
  %v8399 = vadd.f32 %v8335, %v8075
  %v8400 = vadd.f32 %v8340, %v8077
  %v8401 = vadd.f32 %v8343, %v8079
  %v8402 = vadd.f32 %v8348, %v8081
  %v8403 = vadd.f32 %v8351, %v8083
  %v8404 = vadd.f32 %v8356, %v8085
  %v8405 = vadd.f32 %v8359, %v8087
  %v8406 = vadd.f32 %v8364, %v8089
  %v8407 = vadd.f32 %v8367, %v8091
  %v8408 = vadd.f32 %v8372, %v8093
  %v8409 = vadd.f32 %v8375, %v8095
  %v8410 = vpack.c.bf16 %v8379, %v8378
  %v8411 = vpack.c.bf16 %v8381, %v8380
  %v8412 = vpack.c.bf16 %v8383, %v8382
  %v8413 = vpack.c.bf16 %v8385, %v8384
  %v8414 = vpack.c.bf16 %v8387, %v8386
  %v8415 = vpack.c.bf16 %v8389, %v8388
  %v8416 = vpack.c.bf16 %v8391, %v8390
  %v8417 = vpack.c.bf16 %v8393, %v8392
  %v8418 = vpack.c.bf16 %v8395, %v8394
  %v8419 = vpack.c.bf16 %v8397, %v8396
  %v8420 = vpack.c.bf16 %v8399, %v8398
  %v8421 = vpack.c.bf16 %v8401, %v8400
  %v8422 = vpack.c.bf16 %v8403, %v8402
  %v8423 = vpack.c.bf16 %v8405, %v8404
  %v8424 = vpack.c.bf16 %v8407, %v8406
  %v8425 = vpack.c.bf16 %v8409, %v8408
  %s8426 = scalar_lea.vmem %s3, 256
  %v8427 = vld [vmem:[%s8426] sm:$0xff]
  %v8428 = vld [vmem:[%s8426 + $0x8] sm:$0xff]
  %v8429 = vld [vmem:[%s8426 + $0x10] sm:$0xff]
  %v8430 = vld [vmem:[%s8426 + $0x18] sm:$0xff]
  %v8431 = vld [vmem:[%s8426 + $0x20] sm:$0xff]
  %v8432 = vld [vmem:[%s8426 + $0x28] sm:$0xff]
  %v8433 = vld [vmem:[%s8426 + $0x30] sm:$0xff]
  %v8434 = vld [vmem:[%s8426 + $0x38] sm:$0xff]
  %v8435 = vld [vmem:[%s8426 + $0x40] sm:$0xff]
  %v8436 = vld [vmem:[%s8426 + $0x48] sm:$0xff]
  %v8437 = vld [vmem:[%s8426 + $0x50] sm:$0xff]
  %v8438 = vld [vmem:[%s8426 + $0x58] sm:$0xff]
  %v8439 = vld [vmem:[%s8426 + $0x60] sm:$0xff]
  %v8440 = vld [vmem:[%s8426 + $0x68] sm:$0xff]
  %v8441 = vld [vmem:[%s8426 + $0x70] sm:$0xff]
  %v8442 = vld [vmem:[%s8426 + $0x78] sm:$0xff]
  %v8459 = vunpack.c.l.b16 %v8427
  %v8460 = vunpack.c.h.b16 %v8427
  %v8461 = vunpack.c.l.b16 %v8428
  %v8462 = vunpack.c.h.b16 %v8428
  %v8463 = vunpack.c.l.b16 %v8429
  %v8464 = vunpack.c.h.b16 %v8429
  %v8465 = vunpack.c.l.b16 %v8430
  %v8466 = vunpack.c.h.b16 %v8430
  %v8467 = vunpack.c.l.b16 %v8431
  %v8468 = vunpack.c.h.b16 %v8431
  %v8469 = vunpack.c.l.b16 %v8432
  %v8470 = vunpack.c.h.b16 %v8432
  %v8471 = vunpack.c.l.b16 %v8433
  %v8472 = vunpack.c.h.b16 %v8433
  %v8473 = vunpack.c.l.b16 %v8434
  %v8474 = vunpack.c.h.b16 %v8434
  %v8475 = vunpack.c.l.b16 %v8435
  %v8476 = vunpack.c.h.b16 %v8435
  %v8477 = vunpack.c.l.b16 %v8436
  %v8478 = vunpack.c.h.b16 %v8436
  %v8479 = vunpack.c.l.b16 %v8437
  %v8480 = vunpack.c.h.b16 %v8437
  %v8481 = vunpack.c.l.b16 %v8438
  %v8482 = vunpack.c.h.b16 %v8438
  %v8483 = vunpack.c.l.b16 %v8439
  %v8484 = vunpack.c.h.b16 %v8439
  %v8485 = vunpack.c.l.b16 %v8440
  %v8486 = vunpack.c.h.b16 %v8440
  %v8487 = vunpack.c.l.b16 %v8441
  %v8488 = vunpack.c.h.b16 %v8441
  %v8489 = vunpack.c.l.b16 %v8442
  %v8490 = vunpack.c.h.b16 %v8442
  %v8491 = vpack.c.b16 %v8461, %v8459
  %v8492 = vpack.c.b16 %v8462, %v8460
  %v8493 = vpack.c.b16 %v8465, %v8463
  %v8494 = vpack.c.b16 %v8466, %v8464
  %v8495 = vpack.c.b16 %v8469, %v8467
  %v8496 = vpack.c.b16 %v8470, %v8468
  %v8497 = vpack.c.b16 %v8473, %v8471
  %v8498 = vpack.c.b16 %v8474, %v8472
  %v8499 = vpack.c.b16 %v8477, %v8475
  %v8500 = vpack.c.b16 %v8478, %v8476
  %v8501 = vpack.c.b16 %v8481, %v8479
  %v8502 = vpack.c.b16 %v8482, %v8480
  %v8503 = vpack.c.b16 %v8485, %v8483
  %v8504 = vpack.c.b16 %v8486, %v8484
  %v8505 = vpack.c.b16 %v8489, %v8487
  %v8506 = vpack.c.b16 %v8490, %v8488
  %8523 = vmatprep.subr.bf16.mxu0 %v8506
  %8524 = vmatpush1.bf16.msra.mxu0 %v8505
  %8525 = vmatprep.subr.bf16.mxu0 %v8504
  %8526 = vmatpush1.bf16.msra.mxu0 %v8503
  %8527 = vmatprep.subr.bf16.mxu0 %v8502
  %8528 = vmatpush1.bf16.msra.mxu0 %v8501
  %8529 = vmatprep.subr.bf16.mxu0 %v8500
  %8530 = vmatpush1.bf16.msra.mxu0 %v8499
  %8531 = vmatprep.subr.bf16.mxu0 %v8498
  %8532 = vmatpush1.bf16.msra.mxu0 %v8497
  %8533 = vmatprep.subr.bf16.mxu0 %v8496
  %8534 = vmatpush1.bf16.msra.mxu0 %v8495
  %8535 = vmatprep.subr.bf16.mxu0 %v8494
  %8536 = vmatpush1.bf16.msra.mxu0 %v8493
  %8537 = vmatprep.subr.bf16.mxu0 %v8492
  %8538 = vmatpush1.bf16.msra.mxu0 %v8491
  %8539 = vmatprep.subr.bf16.mxu0 0
  %8540 = vmatpush2.bf16.msra.mxu0 0
  %8541 = vmatprep.subr.bf16.mxu0 0
  %8542 = vmatpush2.bf16.msra.mxu0 0
  %8543 = vmatprep.subr.bf16.mxu0 0
  %8544 = vmatpush2.bf16.msra.mxu0 0
  %8545 = vmatprep.subr.bf16.mxu0 0
  %8546 = vmatpush2.bf16.msra.mxu0 0
  %8547 = vmatprep.subr.bf16.mxu0 0
  %8548 = vmatpush2.bf16.msra.mxu0 0
  %8549 = vmatprep.subr.bf16.mxu0 0
  %8550 = vmatpush2.bf16.msra.mxu0 0
  %8551 = vmatprep.subr.bf16.mxu0 0
  %8552 = vmatpush2.bf16.msra.mxu0 0
  %8553 = vmatprep.subr.bf16.mxu0 0
  %8554 = vmatpush2.bf16.msra.mxu0 0
  %8555 = vmatprep.mubr.bf16.mxu0 0
  %8556 = vmatmul.mubr.bf16.gmra.mxu0 %v8410
  %v8557 = vpop.f32.mrf.mxu0
  %v8558 = vadd.f32 0.0, %v8557
  %v8559 = vpop.f32.mrf.mxu0
  %v8560 = vadd.f32 0.0, %v8559
  %v8561 = vpop.f32.mrf.mxu0
  %v8562 = vadd.f32 0.0, %v8561
  %v8563 = vpop.f32.mrf.mxu0
  %v8564 = vadd.f32 0.0, %v8563
  %8565 = vmatprep.mubr.bf16.mxu0 0
  %8566 = vmatmul.mubr.bf16.gmra.mxu0 %v8411
  %v8567 = vpop.f32.mrf.mxu0
  %v8568 = vadd.f32 0.0, %v8567
  %v8569 = vpop.f32.mrf.mxu0
  %v8570 = vadd.f32 0.0, %v8569
  %v8571 = vpop.f32.mrf.mxu0
  %v8572 = vadd.f32 0.0, %v8571
  %v8573 = vpop.f32.mrf.mxu0
  %v8574 = vadd.f32 0.0, %v8573
  %8575 = vmatprep.mubr.bf16.mxu0 0
  %8576 = vmatmul.mubr.bf16.gmra.mxu0 %v8412
  %v8577 = vpop.f32.mrf.mxu0
  %v8578 = vadd.f32 0.0, %v8577
  %v8579 = vpop.f32.mrf.mxu0
  %v8580 = vadd.f32 0.0, %v8579
  %v8581 = vpop.f32.mrf.mxu0
  %v8582 = vadd.f32 0.0, %v8581
  %v8583 = vpop.f32.mrf.mxu0
  %v8584 = vadd.f32 0.0, %v8583
  %8585 = vmatprep.mubr.bf16.mxu0 0
  %8586 = vmatmul.mubr.bf16.gmra.mxu0 %v8413
  %v8587 = vpop.f32.mrf.mxu0
  %v8588 = vadd.f32 0.0, %v8587
  %v8589 = vpop.f32.mrf.mxu0
  %v8590 = vadd.f32 0.0, %v8589
  %v8591 = vpop.f32.mrf.mxu0
  %v8592 = vadd.f32 0.0, %v8591
  %v8593 = vpop.f32.mrf.mxu0
  %v8594 = vadd.f32 0.0, %v8593
  %8595 = vmatprep.mubr.bf16.mxu0 0
  %8596 = vmatmul.mubr.bf16.gmra.mxu0 %v8414
  %v8597 = vpop.f32.mrf.mxu0
  %v8598 = vadd.f32 0.0, %v8597
  %v8599 = vpop.f32.mrf.mxu0
  %v8600 = vadd.f32 0.0, %v8599
  %v8601 = vpop.f32.mrf.mxu0
  %v8602 = vadd.f32 0.0, %v8601
  %v8603 = vpop.f32.mrf.mxu0
  %v8604 = vadd.f32 0.0, %v8603
  %8605 = vmatprep.mubr.bf16.mxu0 0
  %8606 = vmatmul.mubr.bf16.gmra.mxu0 %v8415
  %v8607 = vpop.f32.mrf.mxu0
  %v8608 = vadd.f32 0.0, %v8607
  %v8609 = vpop.f32.mrf.mxu0
  %v8610 = vadd.f32 0.0, %v8609
  %v8611 = vpop.f32.mrf.mxu0
  %v8612 = vadd.f32 0.0, %v8611
  %v8613 = vpop.f32.mrf.mxu0
  %v8614 = vadd.f32 0.0, %v8613
  %8615 = vmatprep.mubr.bf16.mxu0 0
  %8616 = vmatmul.mubr.bf16.gmra.mxu0 %v8416
  %v8617 = vpop.f32.mrf.mxu0
  %v8618 = vadd.f32 0.0, %v8617
  %v8619 = vpop.f32.mrf.mxu0
  %v8620 = vadd.f32 0.0, %v8619
  %v8621 = vpop.f32.mrf.mxu0
  %v8622 = vadd.f32 0.0, %v8621
  %v8623 = vpop.f32.mrf.mxu0
  %v8624 = vadd.f32 0.0, %v8623
  %8625 = vmatprep.mubr.bf16.mxu0 0
  %8626 = vmatmul.mubr.bf16.gmra.mxu0 %v8417
  %v8627 = vpop.f32.mrf.mxu0
  %v8628 = vadd.f32 0.0, %v8627
  %v8629 = vpop.f32.mrf.mxu0
  %v8630 = vadd.f32 0.0, %v8629
  %v8631 = vpop.f32.mrf.mxu0
  %v8632 = vadd.f32 0.0, %v8631
  %v8633 = vpop.f32.mrf.mxu0
  %v8634 = vadd.f32 0.0, %v8633
  %8635 = vmatprep.mubr.bf16.mxu0 0
  %8636 = vmatmul.mubr.bf16.gmra.mxu0 %v8418
  %v8637 = vpop.f32.mrf.mxu0
  %v8638 = vadd.f32 0.0, %v8637
  %v8639 = vpop.f32.mrf.mxu0
  %v8640 = vadd.f32 0.0, %v8639
  %v8641 = vpop.f32.mrf.mxu0
  %v8642 = vadd.f32 0.0, %v8641
  %v8643 = vpop.f32.mrf.mxu0
  %v8644 = vadd.f32 0.0, %v8643
  %8645 = vmatprep.mubr.bf16.mxu0 0
  %8646 = vmatmul.mubr.bf16.gmra.mxu0 %v8419
  %v8647 = vpop.f32.mrf.mxu0
  %v8648 = vadd.f32 0.0, %v8647
  %v8649 = vpop.f32.mrf.mxu0
  %v8650 = vadd.f32 0.0, %v8649
  %v8651 = vpop.f32.mrf.mxu0
  %v8652 = vadd.f32 0.0, %v8651
  %v8653 = vpop.f32.mrf.mxu0
  %v8654 = vadd.f32 0.0, %v8653
  %8655 = vmatprep.mubr.bf16.mxu0 0
  %8656 = vmatmul.mubr.bf16.gmra.mxu0 %v8420
  %v8657 = vpop.f32.mrf.mxu0
  %v8658 = vadd.f32 0.0, %v8657
  %v8659 = vpop.f32.mrf.mxu0
  %v8660 = vadd.f32 0.0, %v8659
  %v8661 = vpop.f32.mrf.mxu0
  %v8662 = vadd.f32 0.0, %v8661
  %v8663 = vpop.f32.mrf.mxu0
  %v8664 = vadd.f32 0.0, %v8663
  %8665 = vmatprep.mubr.bf16.mxu0 0
  %8666 = vmatmul.mubr.bf16.gmra.mxu0 %v8421
  %v8667 = vpop.f32.mrf.mxu0
  %v8668 = vadd.f32 0.0, %v8667
  %v8669 = vpop.f32.mrf.mxu0
  %v8670 = vadd.f32 0.0, %v8669
  %v8671 = vpop.f32.mrf.mxu0
  %v8672 = vadd.f32 0.0, %v8671
  %v8673 = vpop.f32.mrf.mxu0
  %v8674 = vadd.f32 0.0, %v8673
  %8675 = vmatprep.mubr.bf16.mxu0 0
  %8676 = vmatmul.mubr.bf16.gmra.mxu0 %v8422
  %v8677 = vpop.f32.mrf.mxu0
  %v8678 = vadd.f32 0.0, %v8677
  %v8679 = vpop.f32.mrf.mxu0
  %v8680 = vadd.f32 0.0, %v8679
  %v8681 = vpop.f32.mrf.mxu0
  %v8682 = vadd.f32 0.0, %v8681
  %v8683 = vpop.f32.mrf.mxu0
  %v8684 = vadd.f32 0.0, %v8683
  %8685 = vmatprep.mubr.bf16.mxu0 0
  %8686 = vmatmul.mubr.bf16.gmra.mxu0 %v8423
  %v8687 = vpop.f32.mrf.mxu0
  %v8688 = vadd.f32 0.0, %v8687
  %v8689 = vpop.f32.mrf.mxu0
  %v8690 = vadd.f32 0.0, %v8689
  %v8691 = vpop.f32.mrf.mxu0
  %v8692 = vadd.f32 0.0, %v8691
  %v8693 = vpop.f32.mrf.mxu0
  %v8694 = vadd.f32 0.0, %v8693
  %8695 = vmatprep.mubr.bf16.mxu0 0
  %8696 = vmatmul.mubr.bf16.gmra.mxu0 %v8424
  %v8697 = vpop.f32.mrf.mxu0
  %v8698 = vadd.f32 0.0, %v8697
  %v8699 = vpop.f32.mrf.mxu0
  %v8700 = vadd.f32 0.0, %v8699
  %v8701 = vpop.f32.mrf.mxu0
  %v8702 = vadd.f32 0.0, %v8701
  %v8703 = vpop.f32.mrf.mxu0
  %v8704 = vadd.f32 0.0, %v8703
  %8705 = vmatprep.mubr.bf16.mxu0 0
  %8706 = vmatmul.mubr.bf16.gmra.mxu0 %v8425
  %v8707 = vpop.f32.mrf.mxu0
  %v8708 = vadd.f32 0.0, %v8707
  %v8709 = vpop.f32.mrf.mxu0
  %v8710 = vadd.f32 0.0, %v8709
  %v8711 = vpop.f32.mrf.mxu0
  %v8712 = vadd.f32 0.0, %v8711
  %v8713 = vpop.f32.mrf.mxu0
  %v8714 = vadd.f32 0.0, %v8713
  %8715 = vdwg.mxu0
  %s8716 = scalar_lea.vmem %s4, 8
  %v8717 = vld [vmem:[%s8716] sm:$0xf]
  %v8720 = vunpack.c.l.s4 1966171168
  %v8721 = vunpack.c.0.s8 %v8720
  %v8722 = vlaneseq
  %v8723 = vshrl.u32 %v8722, 7
  %v8724 = vsub.s32 %v8721, %v8723
  %v8725 = vrot.slane %v8717, %v8724
  %v8726 = vcombine.high %v8725, %v8725
  %v8727 = vlaneseq
  %v8728 = vshrl.u32 %v8727, 7
  %v8729 = vsub.s32 0, %v8728
  %v8730 = vrot.slane %v8725, %v8729
  %v8731 = vlaneseq
  %v8732 = vshrl.u32 %v8731, 7
  %v8733 = vsub.s32 1, %v8732
  %v8734 = vrot.slane %v8725, %v8733
  %v8735 = vlaneseq
  %v8736 = vshrl.u32 %v8735, 7
  %v8737 = vsub.s32 0, %v8736
  %v8738 = vrot.slane %v8726, %v8737
  %v8739 = vlaneseq
  %v8740 = vshrl.u32 %v8739, 7
  %v8741 = vsub.s32 1, %v8740
  %v8742 = vrot.slane %v8726, %v8741
  %v8747 = vadd.f32 %v8558, %v8730
  %v8748 = vadd.f32 %v8560, %v8734
  %v8749 = vadd.f32 %v8562, %v8730
  %v8750 = vadd.f32 %v8564, %v8734
  %v8751 = vadd.f32 %v8568, %v8730
  %v8752 = vadd.f32 %v8570, %v8734
  %v8753 = vadd.f32 %v8572, %v8730
  %v8754 = vadd.f32 %v8574, %v8734
  %v8755 = vadd.f32 %v8578, %v8730
  %v8756 = vadd.f32 %v8580, %v8734
  %v8757 = vadd.f32 %v8582, %v8730
  %v8758 = vadd.f32 %v8584, %v8734
  %v8759 = vadd.f32 %v8588, %v8730
  %v8760 = vadd.f32 %v8590, %v8734
  %v8761 = vadd.f32 %v8592, %v8730
  %v8762 = vadd.f32 %v8594, %v8734
  %v8763 = vadd.f32 %v8598, %v8730
  %v8764 = vadd.f32 %v8600, %v8734
  %v8765 = vadd.f32 %v8602, %v8730
  %v8766 = vadd.f32 %v8604, %v8734
  %v8767 = vadd.f32 %v8608, %v8730
  %v8768 = vadd.f32 %v8610, %v8734
  %v8769 = vadd.f32 %v8612, %v8730
  %v8770 = vadd.f32 %v8614, %v8734
  %v8771 = vadd.f32 %v8618, %v8730
  %v8772 = vadd.f32 %v8620, %v8734
  %v8773 = vadd.f32 %v8622, %v8730
  %v8774 = vadd.f32 %v8624, %v8734
  %v8775 = vadd.f32 %v8628, %v8730
  %v8776 = vadd.f32 %v8630, %v8734
  %v8777 = vadd.f32 %v8632, %v8730
  %v8778 = vadd.f32 %v8634, %v8734
  %v8779 = vadd.f32 %v8638, %v8738
  %v8780 = vadd.f32 %v8640, %v8742
  %v8781 = vadd.f32 %v8642, %v8738
  %v8782 = vadd.f32 %v8644, %v8742
  %v8783 = vadd.f32 %v8648, %v8738
  %v8784 = vadd.f32 %v8650, %v8742
  %v8785 = vadd.f32 %v8652, %v8738
  %v8786 = vadd.f32 %v8654, %v8742
  %v8787 = vadd.f32 %v8658, %v8738
  %v8788 = vadd.f32 %v8660, %v8742
  %v8789 = vadd.f32 %v8662, %v8738
  %v8790 = vadd.f32 %v8664, %v8742
  %v8791 = vadd.f32 %v8668, %v8738
  %v8792 = vadd.f32 %v8670, %v8742
  %v8793 = vadd.f32 %v8672, %v8738
  %v8794 = vadd.f32 %v8674, %v8742
  %v8795 = vadd.f32 %v8678, %v8738
  %v8796 = vadd.f32 %v8680, %v8742
  %v8797 = vadd.f32 %v8682, %v8738
  %v8798 = vadd.f32 %v8684, %v8742
  %v8799 = vadd.f32 %v8688, %v8738
  %v8800 = vadd.f32 %v8690, %v8742
  %v8801 = vadd.f32 %v8692, %v8738
  %v8802 = vadd.f32 %v8694, %v8742
  %v8803 = vadd.f32 %v8698, %v8738
  %v8804 = vadd.f32 %v8700, %v8742
  %v8805 = vadd.f32 %v8702, %v8738
  %v8806 = vadd.f32 %v8704, %v8742
  %v8807 = vadd.f32 %v8708, %v8738
  %v8808 = vadd.f32 %v8710, %v8742
  %v8809 = vadd.f32 %v8712, %v8738
  %v8810 = vadd.f32 %v8714, %v8742
  %v8811 = vmax.f32 %v8747, 0.0
  %v8812 = vmax.f32 %v8749, 0.0
  %v8813 = vmax.f32 %v8751, 0.0
  %v8814 = vmax.f32 %v8753, 0.0
  %v8815 = vmax.f32 %v8755, 0.0
  %v8816 = vmax.f32 %v8757, 0.0
  %v8817 = vmax.f32 %v8759, 0.0
  %v8818 = vmax.f32 %v8761, 0.0
  %v8819 = vmax.f32 %v8763, 0.0
  %v8820 = vmax.f32 %v8765, 0.0
  %v8821 = vmax.f32 %v8767, 0.0
  %v8822 = vmax.f32 %v8769, 0.0
  %v8823 = vmax.f32 %v8771, 0.0
  %v8824 = vmax.f32 %v8773, 0.0
  %v8825 = vmax.f32 %v8775, 0.0
  %v8826 = vmax.f32 %v8777, 0.0
  %v8827 = vmax.f32 %v8779, 0.0
  %v8828 = vmax.f32 %v8781, 0.0
  %v8829 = vmax.f32 %v8783, 0.0
  %v8830 = vmax.f32 %v8785, 0.0
  %v8831 = vmax.f32 %v8787, 0.0
  %v8832 = vmax.f32 %v8789, 0.0
  %v8833 = vmax.f32 %v8791, 0.0
  %v8834 = vmax.f32 %v8793, 0.0
  %v8835 = vmax.f32 %v8795, 0.0
  %v8836 = vmax.f32 %v8797, 0.0
  %v8837 = vmax.f32 %v8799, 0.0
  %v8838 = vmax.f32 %v8801, 0.0
  %v8839 = vmax.f32 %v8803, 0.0
  %v8840 = vmax.f32 %v8805, 0.0
  %v8841 = vmax.f32 %v8807, 0.0
  %v8842 = vmax.f32 %v8809, 0.0
  %v8843 = vpack.c.bf16 %v8812, %v8811
  %v8844 = vpack.c.bf16 %v8814, %v8813
  %v8845 = vpack.c.bf16 %v8816, %v8815
  %v8846 = vpack.c.bf16 %v8818, %v8817
  %v8847 = vpack.c.bf16 %v8820, %v8819
  %v8848 = vpack.c.bf16 %v8822, %v8821
  %v8849 = vpack.c.bf16 %v8824, %v8823
  %v8850 = vpack.c.bf16 %v8826, %v8825
  %v8851 = vpack.c.bf16 %v8828, %v8827
  %v8852 = vpack.c.bf16 %v8830, %v8829
  %v8853 = vpack.c.bf16 %v8832, %v8831
  %v8854 = vpack.c.bf16 %v8834, %v8833
  %v8855 = vpack.c.bf16 %v8836, %v8835
  %v8856 = vpack.c.bf16 %v8838, %v8837
  %v8857 = vpack.c.bf16 %v8840, %v8839
  %v8858 = vpack.c.bf16 %v8842, %v8841
  %s8859 = scalar_lea.vmem %s5, 128
  %v8860 = vld [vmem:[%s8859] sm:$0xf]
  %v8861 = vld [vmem:[%s8859 + $0x4] sm:$0xf]
  %v8862 = vld [vmem:[%s8859 + $0x8] sm:$0xf]
  %v8863 = vld [vmem:[%s8859 + $0xc] sm:$0xf]
  %v8864 = vld [vmem:[%s8859 + $0x10] sm:$0xf]
  %v8865 = vld [vmem:[%s8859 + $0x14] sm:$0xf]
  %v8866 = vld [vmem:[%s8859 + $0x18] sm:$0xf]
  %v8867 = vld [vmem:[%s8859 + $0x1c] sm:$0xf]
  %v8868 = vld [vmem:[%s8859 + $0x20] sm:$0xf]
  %v8869 = vld [vmem:[%s8859 + $0x24] sm:$0xf]
  %v8870 = vld [vmem:[%s8859 + $0x28] sm:$0xf]
  %v8871 = vld [vmem:[%s8859 + $0x2c] sm:$0xf]
  %v8872 = vld [vmem:[%s8859 + $0x30] sm:$0xf]
  %v8873 = vld [vmem:[%s8859 + $0x34] sm:$0xf]
  %v8874 = vld [vmem:[%s8859 + $0x38] sm:$0xf]
  %v8875 = vld [vmem:[%s8859 + $0x3c] sm:$0xf]
  %s8876 = scalar_lea.vmem %s6, 2
  %v8877 = vld [vmem:[%s8876] sm:$0x1]
  %v8879 = vlaneseq
  %v8880 = vshrl.u32 %v8879, 7
  %v8881 = vsub.s32 0, %v8880
  %v8882 = vrot.slane %v8877, %v8881
  %v8900 = vunpack.c.l.b16 %v8860
  %v8901 = vunpack.c.l.b16 %v8861
  %v8902 = vunpack.c.l.b16 %v8862
  %v8903 = vunpack.c.l.b16 %v8863
  %v8904 = vunpack.c.l.b16 %v8864
  %v8905 = vunpack.c.l.b16 %v8865
  %v8906 = vunpack.c.l.b16 %v8866
  %v8907 = vunpack.c.l.b16 %v8867
  %v8908 = vunpack.c.l.b16 %v8868
  %v8909 = vunpack.c.l.b16 %v8869
  %v8910 = vunpack.c.l.b16 %v8870
  %v8911 = vunpack.c.l.b16 %v8871
  %v8912 = vunpack.c.l.b16 %v8872
  %v8913 = vunpack.c.l.b16 %v8873
  %v8914 = vunpack.c.l.b16 %v8874
  %v8915 = vunpack.c.l.b16 %v8875
  %v8916 = vpack.c.b16 %v8901, %v8900
  %v8917 = vpack.c.b16 %v8903, %v8902
  %v8918 = vpack.c.b16 %v8905, %v8904
  %v8919 = vpack.c.b16 %v8907, %v8906
  %v8920 = vpack.c.b16 %v8909, %v8908
  %v8921 = vpack.c.b16 %v8911, %v8910
  %v8922 = vpack.c.b16 %v8913, %v8912
  %v8923 = vpack.c.b16 %v8915, %v8914
  %8932 = vmatprep.subr.bf16.mxu0 0
  %8933 = vmatpush1.bf16.msra.mxu0 %v8923
  %8934 = vmatprep.subr.bf16.mxu0 0
  %8935 = vmatpush1.bf16.msra.mxu0 %v8922
  %8936 = vmatprep.subr.bf16.mxu0 0
  %8937 = vmatpush1.bf16.msra.mxu0 %v8921
  %8938 = vmatprep.subr.bf16.mxu0 0
  %8939 = vmatpush1.bf16.msra.mxu0 %v8920
  %8940 = vmatprep.subr.bf16.mxu0 0
  %8941 = vmatpush1.bf16.msra.mxu0 %v8919
  %8942 = vmatprep.subr.bf16.mxu0 0
  %8943 = vmatpush1.bf16.msra.mxu0 %v8918
  %8944 = vmatprep.subr.bf16.mxu0 0
  %8945 = vmatpush1.bf16.msra.mxu0 %v8917
  %8946 = vmatprep.subr.bf16.mxu0 0
  %8947 = vmatpush1.bf16.msra.mxu0 %v8916
  %8948 = vmatprep.subr.bf16.mxu0 0
  %8949 = vmatpush2.bf16.msra.mxu0 0
  %8950 = vmatprep.subr.bf16.mxu0 0
  %8951 = vmatpush2.bf16.msra.mxu0 0
  %8952 = vmatprep.subr.bf16.mxu0 0
  %8953 = vmatpush2.bf16.msra.mxu0 0
  %8954 = vmatprep.subr.bf16.mxu0 0
  %8955 = vmatpush2.bf16.msra.mxu0 0
  %8956 = vmatprep.subr.bf16.mxu0 0
  %8957 = vmatpush2.bf16.msra.mxu0 0
  %8958 = vmatprep.subr.bf16.mxu0 0
  %8959 = vmatpush2.bf16.msra.mxu0 0
  %8960 = vmatprep.subr.bf16.mxu0 0
  %8961 = vmatpush2.bf16.msra.mxu0 0
  %8962 = vmatprep.subr.bf16.mxu0 0
  %8963 = vmatpush2.bf16.msra.mxu0 0
  %8964 = vmatprep.mubr.bf16.mxu0 0
  %8965 = vmatmul.mubr.bf16.gmra.mxu0 %v8843
  %v8966 = vpop.f32.mrf.mxu0
  %v8967 = vadd.f32 %v8882, %v8966
  %v8968 = vpop.f32.mrf.mxu0
  %v8969 = vpop.f32.mrf.mxu0
  %v8970 = vadd.f32 %v8882, %v8969
  %v8971 = vpop.f32.mrf.mxu0
  %8972 = vmatprep.mubr.bf16.mxu0 0
  %8973 = vmatmul.mubr.bf16.gmra.mxu0 %v8844
  %v8974 = vpop.f32.mrf.mxu0
  %v8975 = vadd.f32 %v8882, %v8974
  %v8976 = vpop.f32.mrf.mxu0
  %v8977 = vpop.f32.mrf.mxu0
  %v8978 = vadd.f32 %v8882, %v8977
  %v8979 = vpop.f32.mrf.mxu0
  %8980 = vmatprep.mubr.bf16.mxu0 0
  %8981 = vmatmul.mubr.bf16.gmra.mxu0 %v8845
  %v8982 = vpop.f32.mrf.mxu0
  %v8983 = vadd.f32 %v8882, %v8982
  %v8984 = vpop.f32.mrf.mxu0
  %v8985 = vpop.f32.mrf.mxu0
  %v8986 = vadd.f32 %v8882, %v8985
  %v8987 = vpop.f32.mrf.mxu0
  %8988 = vmatprep.mubr.bf16.mxu0 0
  %8989 = vmatmul.mubr.bf16.gmra.mxu0 %v8846
  %v8990 = vpop.f32.mrf.mxu0
  %v8991 = vadd.f32 %v8882, %v8990
  %v8992 = vpop.f32.mrf.mxu0
  %v8993 = vpop.f32.mrf.mxu0
  %v8994 = vadd.f32 %v8882, %v8993
  %v8995 = vpop.f32.mrf.mxu0
  %8996 = vmatprep.mubr.bf16.mxu0 0
  %8997 = vmatmul.mubr.bf16.gmra.mxu0 %v8847
  %v8998 = vpop.f32.mrf.mxu0
  %v8999 = vadd.f32 %v8882, %v8998
  %v9000 = vpop.f32.mrf.mxu0
  %v9001 = vpop.f32.mrf.mxu0
  %v9002 = vadd.f32 %v8882, %v9001
  %v9003 = vpop.f32.mrf.mxu0
  %9004 = vmatprep.mubr.bf16.mxu0 0
  %9005 = vmatmul.mubr.bf16.gmra.mxu0 %v8848
  %v9006 = vpop.f32.mrf.mxu0
  %v9007 = vadd.f32 %v8882, %v9006
  %v9008 = vpop.f32.mrf.mxu0
  %v9009 = vpop.f32.mrf.mxu0
  %v9010 = vadd.f32 %v8882, %v9009
  %v9011 = vpop.f32.mrf.mxu0
  %9012 = vmatprep.mubr.bf16.mxu0 0
  %9013 = vmatmul.mubr.bf16.gmra.mxu0 %v8849
  %v9014 = vpop.f32.mrf.mxu0
  %v9015 = vadd.f32 %v8882, %v9014
  %v9016 = vpop.f32.mrf.mxu0
  %v9017 = vpop.f32.mrf.mxu0
  %v9018 = vadd.f32 %v8882, %v9017
  %v9019 = vpop.f32.mrf.mxu0
  %9020 = vmatprep.mubr.bf16.mxu0 0
  %9021 = vmatmul.mubr.bf16.gmra.mxu0 %v8850
  %v9022 = vpop.f32.mrf.mxu0
  %v9023 = vadd.f32 %v8882, %v9022
  %v9024 = vpop.f32.mrf.mxu0
  %v9025 = vpop.f32.mrf.mxu0
  %v9026 = vadd.f32 %v8882, %v9025
  %v9027 = vpop.f32.mrf.mxu0
  %9028 = vmatprep.mubr.bf16.mxu0 0
  %9029 = vmatmul.mubr.bf16.gmra.mxu0 %v8851
  %v9030 = vpop.f32.mrf.mxu0
  %v9031 = vadd.f32 %v8882, %v9030
  %v9032 = vpop.f32.mrf.mxu0
  %v9033 = vpop.f32.mrf.mxu0
  %v9034 = vadd.f32 %v8882, %v9033
  %v9035 = vpop.f32.mrf.mxu0
  %9036 = vmatprep.mubr.bf16.mxu0 0
  %9037 = vmatmul.mubr.bf16.gmra.mxu0 %v8852
  %v9038 = vpop.f32.mrf.mxu0
  %v9039 = vadd.f32 %v8882, %v9038
  %v9040 = vpop.f32.mrf.mxu0
  %v9041 = vpop.f32.mrf.mxu0
  %v9042 = vadd.f32 %v8882, %v9041
  %v9043 = vpop.f32.mrf.mxu0
  %9044 = vmatprep.mubr.bf16.mxu0 0
  %9045 = vmatmul.mubr.bf16.gmra.mxu0 %v8853
  %v9046 = vpop.f32.mrf.mxu0
  %v9047 = vadd.f32 %v8882, %v9046
  %v9048 = vpop.f32.mrf.mxu0
  %v9049 = vpop.f32.mrf.mxu0
  %v9050 = vadd.f32 %v8882, %v9049
  %v9051 = vpop.f32.mrf.mxu0
  %9052 = vmatprep.mubr.bf16.mxu0 0
  %9053 = vmatmul.mubr.bf16.gmra.mxu0 %v8854
  %v9054 = vpop.f32.mrf.mxu0
  %v9055 = vadd.f32 %v8882, %v9054
  %v9056 = vpop.f32.mrf.mxu0
  %v9057 = vpop.f32.mrf.mxu0
  %v9058 = vadd.f32 %v8882, %v9057
  %v9059 = vpop.f32.mrf.mxu0
  %9060 = vmatprep.mubr.bf16.mxu0 0
  %9061 = vmatmul.mubr.bf16.gmra.mxu0 %v8855
  %v9062 = vpop.f32.mrf.mxu0
  %v9063 = vadd.f32 %v8882, %v9062
  %v9064 = vpop.f32.mrf.mxu0
  %v9065 = vpop.f32.mrf.mxu0
  %v9066 = vadd.f32 %v8882, %v9065
  %v9067 = vpop.f32.mrf.mxu0
  %9068 = vmatprep.mubr.bf16.mxu0 0
  %9069 = vmatmul.mubr.bf16.gmra.mxu0 %v8856
  %v9070 = vpop.f32.mrf.mxu0
  %v9071 = vadd.f32 %v8882, %v9070
  %v9072 = vpop.f32.mrf.mxu0
  %v9073 = vpop.f32.mrf.mxu0
  %v9074 = vadd.f32 %v8882, %v9073
  %v9075 = vpop.f32.mrf.mxu0
  %9076 = vmatprep.mubr.bf16.mxu0 0
  %9077 = vmatmul.mubr.bf16.gmra.mxu0 %v8857
  %v9078 = vpop.f32.mrf.mxu0
  %v9079 = vadd.f32 %v8882, %v9078
  %v9080 = vpop.f32.mrf.mxu0
  %v9081 = vpop.f32.mrf.mxu0
  %v9082 = vadd.f32 %v8882, %v9081
  %v9083 = vpop.f32.mrf.mxu0
  %9084 = vmatprep.mubr.bf16.mxu0 0
  %9085 = vmatmul.mubr.bf16.gmra.mxu0 %v8858
  %v9086 = vpop.f32.mrf.mxu0
  %v9087 = vadd.f32 %v8882, %v9086
  %v9088 = vpop.f32.mrf.mxu0
  %v9089 = vpop.f32.mrf.mxu0
  %v9090 = vadd.f32 %v8882, %v9089
  %v9091 = vpop.f32.mrf.mxu0
  %9092 = vdwg.mxu0
  %v9093 = vadd.f32 %v8967, %v8748
  %v9094 = vadd.f32 %v8970, %v8750
  %v9095 = vadd.f32 %v8975, %v8752
  %v9096 = vadd.f32 %v8978, %v8754
  %v9097 = vadd.f32 %v8983, %v8756
  %v9098 = vadd.f32 %v8986, %v8758
  %v9099 = vadd.f32 %v8991, %v8760
  %v9100 = vadd.f32 %v8994, %v8762
  %v9101 = vadd.f32 %v8999, %v8764
  %v9102 = vadd.f32 %v9002, %v8766
  %v9103 = vadd.f32 %v9007, %v8768
  %v9104 = vadd.f32 %v9010, %v8770
  %v9105 = vadd.f32 %v9015, %v8772
  %v9106 = vadd.f32 %v9018, %v8774
  %v9107 = vadd.f32 %v9023, %v8776
  %v9108 = vadd.f32 %v9026, %v8778
  %v9109 = vadd.f32 %v9031, %v8780
  %v9110 = vadd.f32 %v9034, %v8782
  %v9111 = vadd.f32 %v9039, %v8784
  %v9112 = vadd.f32 %v9042, %v8786
  %v9113 = vadd.f32 %v9047, %v8788
  %v9114 = vadd.f32 %v9050, %v8790
  %v9115 = vadd.f32 %v9055, %v8792
  %v9116 = vadd.f32 %v9058, %v8794
  %v9117 = vadd.f32 %v9063, %v8796
  %v9118 = vadd.f32 %v9066, %v8798
  %v9119 = vadd.f32 %v9071, %v8800
  %v9120 = vadd.f32 %v9074, %v8802
  %v9121 = vadd.f32 %v9079, %v8804
  %v9122 = vadd.f32 %v9082, %v8806
  %v9123 = vadd.f32 %v9087, %v8808
  %v9124 = vadd.f32 %v9090, %v8810
  %v9125 = vpack.c.bf16 %v9094, %v9093
  %v9126 = vpack.c.bf16 %v9096, %v9095
  %v9127 = vpack.c.bf16 %v9098, %v9097
  %v9128 = vpack.c.bf16 %v9100, %v9099
  %v9129 = vpack.c.bf16 %v9102, %v9101
  %v9130 = vpack.c.bf16 %v9104, %v9103
  %v9131 = vpack.c.bf16 %v9106, %v9105
  %v9132 = vpack.c.bf16 %v9108, %v9107
  %v9133 = vpack.c.bf16 %v9110, %v9109
  %v9134 = vpack.c.bf16 %v9112, %v9111
  %v9135 = vpack.c.bf16 %v9114, %v9113
  %v9136 = vpack.c.bf16 %v9116, %v9115
  %v9137 = vpack.c.bf16 %v9118, %v9117
  %v9138 = vpack.c.bf16 %v9120, %v9119
  %v9139 = vpack.c.bf16 %v9122, %v9121
  %v9140 = vpack.c.bf16 %v9124, %v9123
  %s9141 = scalar_lea.vmem %s3, 384
  %v9142 = vld [vmem:[%s9141] sm:$0xff]
  %v9143 = vld [vmem:[%s9141 + $0x8] sm:$0xff]
  %v9144 = vld [vmem:[%s9141 + $0x10] sm:$0xff]
  %v9145 = vld [vmem:[%s9141 + $0x18] sm:$0xff]
  %v9146 = vld [vmem:[%s9141 + $0x20] sm:$0xff]
  %v9147 = vld [vmem:[%s9141 + $0x28] sm:$0xff]
  %v9148 = vld [vmem:[%s9141 + $0x30] sm:$0xff]
  %v9149 = vld [vmem:[%s9141 + $0x38] sm:$0xff]
  %v9150 = vld [vmem:[%s9141 + $0x40] sm:$0xff]
  %v9151 = vld [vmem:[%s9141 + $0x48] sm:$0xff]
  %v9152 = vld [vmem:[%s9141 + $0x50] sm:$0xff]
  %v9153 = vld [vmem:[%s9141 + $0x58] sm:$0xff]
  %v9154 = vld [vmem:[%s9141 + $0x60] sm:$0xff]
  %v9155 = vld [vmem:[%s9141 + $0x68] sm:$0xff]
  %v9156 = vld [vmem:[%s9141 + $0x70] sm:$0xff]
  %v9157 = vld [vmem:[%s9141 + $0x78] sm:$0xff]
  %v9174 = vunpack.c.l.b16 %v9142
  %v9175 = vunpack.c.h.b16 %v9142
  %v9176 = vunpack.c.l.b16 %v9143
  %v9177 = vunpack.c.h.b16 %v9143
  %v9178 = vunpack.c.l.b16 %v9144
  %v9179 = vunpack.c.h.b16 %v9144
  %v9180 = vunpack.c.l.b16 %v9145
  %v9181 = vunpack.c.h.b16 %v9145
  %v9182 = vunpack.c.l.b16 %v9146
  %v9183 = vunpack.c.h.b16 %v9146
  %v9184 = vunpack.c.l.b16 %v9147
  %v9185 = vunpack.c.h.b16 %v9147
  %v9186 = vunpack.c.l.b16 %v9148
  %v9187 = vunpack.c.h.b16 %v9148
  %v9188 = vunpack.c.l.b16 %v9149
  %v9189 = vunpack.c.h.b16 %v9149
  %v9190 = vunpack.c.l.b16 %v9150
  %v9191 = vunpack.c.h.b16 %v9150
  %v9192 = vunpack.c.l.b16 %v9151
  %v9193 = vunpack.c.h.b16 %v9151
  %v9194 = vunpack.c.l.b16 %v9152
  %v9195 = vunpack.c.h.b16 %v9152
  %v9196 = vunpack.c.l.b16 %v9153
  %v9197 = vunpack.c.h.b16 %v9153
  %v9198 = vunpack.c.l.b16 %v9154
  %v9199 = vunpack.c.h.b16 %v9154
  %v9200 = vunpack.c.l.b16 %v9155
  %v9201 = vunpack.c.h.b16 %v9155
  %v9202 = vunpack.c.l.b16 %v9156
  %v9203 = vunpack.c.h.b16 %v9156
  %v9204 = vunpack.c.l.b16 %v9157
  %v9205 = vunpack.c.h.b16 %v9157
  %v9206 = vpack.c.b16 %v9176, %v9174
  %v9207 = vpack.c.b16 %v9177, %v9175
  %v9208 = vpack.c.b16 %v9180, %v9178
  %v9209 = vpack.c.b16 %v9181, %v9179
  %v9210 = vpack.c.b16 %v9184, %v9182
  %v9211 = vpack.c.b16 %v9185, %v9183
  %v9212 = vpack.c.b16 %v9188, %v9186
  %v9213 = vpack.c.b16 %v9189, %v9187
  %v9214 = vpack.c.b16 %v9192, %v9190
  %v9215 = vpack.c.b16 %v9193, %v9191
  %v9216 = vpack.c.b16 %v9196, %v9194
  %v9217 = vpack.c.b16 %v9197, %v9195
  %v9218 = vpack.c.b16 %v9200, %v9198
  %v9219 = vpack.c.b16 %v9201, %v9199
  %v9220 = vpack.c.b16 %v9204, %v9202
  %v9221 = vpack.c.b16 %v9205, %v9203
  %9238 = vmatprep.subr.bf16.mxu0 %v9221
  %9239 = vmatpush1.bf16.msra.mxu0 %v9220
  %9240 = vmatprep.subr.bf16.mxu0 %v9219
  %9241 = vmatpush1.bf16.msra.mxu0 %v9218
  %9242 = vmatprep.subr.bf16.mxu0 %v9217
  %9243 = vmatpush1.bf16.msra.mxu0 %v9216
  %9244 = vmatprep.subr.bf16.mxu0 %v9215
  %9245 = vmatpush1.bf16.msra.mxu0 %v9214
  %9246 = vmatprep.subr.bf16.mxu0 %v9213
  %9247 = vmatpush1.bf16.msra.mxu0 %v9212
  %9248 = vmatprep.subr.bf16.mxu0 %v9211
  %9249 = vmatpush1.bf16.msra.mxu0 %v9210
  %9250 = vmatprep.subr.bf16.mxu0 %v9209
  %9251 = vmatpush1.bf16.msra.mxu0 %v9208
  %9252 = vmatprep.subr.bf16.mxu0 %v9207
  %9253 = vmatpush1.bf16.msra.mxu0 %v9206
  %9254 = vmatprep.subr.bf16.mxu0 0
  %9255 = vmatpush2.bf16.msra.mxu0 0
  %9256 = vmatprep.subr.bf16.mxu0 0
  %9257 = vmatpush2.bf16.msra.mxu0 0
  %9258 = vmatprep.subr.bf16.mxu0 0
  %9259 = vmatpush2.bf16.msra.mxu0 0
  %9260 = vmatprep.subr.bf16.mxu0 0
  %9261 = vmatpush2.bf16.msra.mxu0 0
  %9262 = vmatprep.subr.bf16.mxu0 0
  %9263 = vmatpush2.bf16.msra.mxu0 0
  %9264 = vmatprep.subr.bf16.mxu0 0
  %9265 = vmatpush2.bf16.msra.mxu0 0
  %9266 = vmatprep.subr.bf16.mxu0 0
  %9267 = vmatpush2.bf16.msra.mxu0 0
  %9268 = vmatprep.subr.bf16.mxu0 0
  %9269 = vmatpush2.bf16.msra.mxu0 0
  %9270 = vmatprep.mubr.bf16.mxu0 0
  %9271 = vmatmul.mubr.bf16.gmra.mxu0 %v9125
  %v9272 = vpop.f32.mrf.mxu0
  %v9273 = vadd.f32 0.0, %v9272
  %v9274 = vpop.f32.mrf.mxu0
  %v9275 = vadd.f32 0.0, %v9274
  %v9276 = vpop.f32.mrf.mxu0
  %v9277 = vadd.f32 0.0, %v9276
  %v9278 = vpop.f32.mrf.mxu0
  %v9279 = vadd.f32 0.0, %v9278
  %9280 = vmatprep.mubr.bf16.mxu0 0
  %9281 = vmatmul.mubr.bf16.gmra.mxu0 %v9126
  %v9282 = vpop.f32.mrf.mxu0
  %v9283 = vadd.f32 0.0, %v9282
  %v9284 = vpop.f32.mrf.mxu0
  %v9285 = vadd.f32 0.0, %v9284
  %v9286 = vpop.f32.mrf.mxu0
  %v9287 = vadd.f32 0.0, %v9286
  %v9288 = vpop.f32.mrf.mxu0
  %v9289 = vadd.f32 0.0, %v9288
  %9290 = vmatprep.mubr.bf16.mxu0 0
  %9291 = vmatmul.mubr.bf16.gmra.mxu0 %v9127
  %v9292 = vpop.f32.mrf.mxu0
  %v9293 = vadd.f32 0.0, %v9292
  %v9294 = vpop.f32.mrf.mxu0
  %v9295 = vadd.f32 0.0, %v9294
  %v9296 = vpop.f32.mrf.mxu0
  %v9297 = vadd.f32 0.0, %v9296
  %v9298 = vpop.f32.mrf.mxu0
  %v9299 = vadd.f32 0.0, %v9298
  %9300 = vmatprep.mubr.bf16.mxu0 0
  %9301 = vmatmul.mubr.bf16.gmra.mxu0 %v9128
  %v9302 = vpop.f32.mrf.mxu0
  %v9303 = vadd.f32 0.0, %v9302
  %v9304 = vpop.f32.mrf.mxu0
  %v9305 = vadd.f32 0.0, %v9304
  %v9306 = vpop.f32.mrf.mxu0
  %v9307 = vadd.f32 0.0, %v9306
  %v9308 = vpop.f32.mrf.mxu0
  %v9309 = vadd.f32 0.0, %v9308
  %9310 = vmatprep.mubr.bf16.mxu0 0
  %9311 = vmatmul.mubr.bf16.gmra.mxu0 %v9129
  %v9312 = vpop.f32.mrf.mxu0
  %v9313 = vadd.f32 0.0, %v9312
  %v9314 = vpop.f32.mrf.mxu0
  %v9315 = vadd.f32 0.0, %v9314
  %v9316 = vpop.f32.mrf.mxu0
  %v9317 = vadd.f32 0.0, %v9316
  %v9318 = vpop.f32.mrf.mxu0
  %v9319 = vadd.f32 0.0, %v9318
  %9320 = vmatprep.mubr.bf16.mxu0 0
  %9321 = vmatmul.mubr.bf16.gmra.mxu0 %v9130
  %v9322 = vpop.f32.mrf.mxu0
  %v9323 = vadd.f32 0.0, %v9322
  %v9324 = vpop.f32.mrf.mxu0
  %v9325 = vadd.f32 0.0, %v9324
  %v9326 = vpop.f32.mrf.mxu0
  %v9327 = vadd.f32 0.0, %v9326
  %v9328 = vpop.f32.mrf.mxu0
  %v9329 = vadd.f32 0.0, %v9328
  %9330 = vmatprep.mubr.bf16.mxu0 0
  %9331 = vmatmul.mubr.bf16.gmra.mxu0 %v9131
  %v9332 = vpop.f32.mrf.mxu0
  %v9333 = vadd.f32 0.0, %v9332
  %v9334 = vpop.f32.mrf.mxu0
  %v9335 = vadd.f32 0.0, %v9334
  %v9336 = vpop.f32.mrf.mxu0
  %v9337 = vadd.f32 0.0, %v9336
  %v9338 = vpop.f32.mrf.mxu0
  %v9339 = vadd.f32 0.0, %v9338
  %9340 = vmatprep.mubr.bf16.mxu0 0
  %9341 = vmatmul.mubr.bf16.gmra.mxu0 %v9132
  %v9342 = vpop.f32.mrf.mxu0
  %v9343 = vadd.f32 0.0, %v9342
  %v9344 = vpop.f32.mrf.mxu0
  %v9345 = vadd.f32 0.0, %v9344
  %v9346 = vpop.f32.mrf.mxu0
  %v9347 = vadd.f32 0.0, %v9346
  %v9348 = vpop.f32.mrf.mxu0
  %v9349 = vadd.f32 0.0, %v9348
  %9350 = vmatprep.mubr.bf16.mxu0 0
  %9351 = vmatmul.mubr.bf16.gmra.mxu0 %v9133
  %v9352 = vpop.f32.mrf.mxu0
  %v9353 = vadd.f32 0.0, %v9352
  %v9354 = vpop.f32.mrf.mxu0
  %v9355 = vadd.f32 0.0, %v9354
  %v9356 = vpop.f32.mrf.mxu0
  %v9357 = vadd.f32 0.0, %v9356
  %v9358 = vpop.f32.mrf.mxu0
  %v9359 = vadd.f32 0.0, %v9358
  %9360 = vmatprep.mubr.bf16.mxu0 0
  %9361 = vmatmul.mubr.bf16.gmra.mxu0 %v9134
  %v9362 = vpop.f32.mrf.mxu0
  %v9363 = vadd.f32 0.0, %v9362
  %v9364 = vpop.f32.mrf.mxu0
  %v9365 = vadd.f32 0.0, %v9364
  %v9366 = vpop.f32.mrf.mxu0
  %v9367 = vadd.f32 0.0, %v9366
  %v9368 = vpop.f32.mrf.mxu0
  %v9369 = vadd.f32 0.0, %v9368
  %9370 = vmatprep.mubr.bf16.mxu0 0
  %9371 = vmatmul.mubr.bf16.gmra.mxu0 %v9135
  %v9372 = vpop.f32.mrf.mxu0
  %v9373 = vadd.f32 0.0, %v9372
  %v9374 = vpop.f32.mrf.mxu0
  %v9375 = vadd.f32 0.0, %v9374
  %v9376 = vpop.f32.mrf.mxu0
  %v9377 = vadd.f32 0.0, %v9376
  %v9378 = vpop.f32.mrf.mxu0
  %v9379 = vadd.f32 0.0, %v9378
  %9380 = vmatprep.mubr.bf16.mxu0 0
  %9381 = vmatmul.mubr.bf16.gmra.mxu0 %v9136
  %v9382 = vpop.f32.mrf.mxu0
  %v9383 = vadd.f32 0.0, %v9382
  %v9384 = vpop.f32.mrf.mxu0
  %v9385 = vadd.f32 0.0, %v9384
  %v9386 = vpop.f32.mrf.mxu0
  %v9387 = vadd.f32 0.0, %v9386
  %v9388 = vpop.f32.mrf.mxu0
  %v9389 = vadd.f32 0.0, %v9388
  %9390 = vmatprep.mubr.bf16.mxu0 0
  %9391 = vmatmul.mubr.bf16.gmra.mxu0 %v9137
  %v9392 = vpop.f32.mrf.mxu0
  %v9393 = vadd.f32 0.0, %v9392
  %v9394 = vpop.f32.mrf.mxu0
  %v9395 = vadd.f32 0.0, %v9394
  %v9396 = vpop.f32.mrf.mxu0
  %v9397 = vadd.f32 0.0, %v9396
  %v9398 = vpop.f32.mrf.mxu0
  %v9399 = vadd.f32 0.0, %v9398
  %9400 = vmatprep.mubr.bf16.mxu0 0
  %9401 = vmatmul.mubr.bf16.gmra.mxu0 %v9138
  %v9402 = vpop.f32.mrf.mxu0
  %v9403 = vadd.f32 0.0, %v9402
  %v9404 = vpop.f32.mrf.mxu0
  %v9405 = vadd.f32 0.0, %v9404
  %v9406 = vpop.f32.mrf.mxu0
  %v9407 = vadd.f32 0.0, %v9406
  %v9408 = vpop.f32.mrf.mxu0
  %v9409 = vadd.f32 0.0, %v9408
  %9410 = vmatprep.mubr.bf16.mxu0 0
  %9411 = vmatmul.mubr.bf16.gmra.mxu0 %v9139
  %v9412 = vpop.f32.mrf.mxu0
  %v9413 = vadd.f32 0.0, %v9412
  %v9414 = vpop.f32.mrf.mxu0
  %v9415 = vadd.f32 0.0, %v9414
  %v9416 = vpop.f32.mrf.mxu0
  %v9417 = vadd.f32 0.0, %v9416
  %v9418 = vpop.f32.mrf.mxu0
  %v9419 = vadd.f32 0.0, %v9418
  %9420 = vmatprep.mubr.bf16.mxu0 0
  %9421 = vmatmul.mubr.bf16.gmra.mxu0 %v9140
  %v9422 = vpop.f32.mrf.mxu0
  %v9423 = vadd.f32 0.0, %v9422
  %v9424 = vpop.f32.mrf.mxu0
  %v9425 = vadd.f32 0.0, %v9424
  %v9426 = vpop.f32.mrf.mxu0
  %v9427 = vadd.f32 0.0, %v9426
  %v9428 = vpop.f32.mrf.mxu0
  %v9429 = vadd.f32 0.0, %v9428
  %9430 = vdwg.mxu0
  %s9431 = scalar_lea.vmem %s4, 12
  %v9432 = vld [vmem:[%s9431] sm:$0xf]
  %v9435 = vunpack.c.l.s4 1966171168
  %v9436 = vunpack.c.0.s8 %v9435
  %v9437 = vlaneseq
  %v9438 = vshrl.u32 %v9437, 7
  %v9439 = vsub.s32 %v9436, %v9438
  %v9440 = vrot.slane %v9432, %v9439
  %v9441 = vcombine.high %v9440, %v9440
  %v9442 = vlaneseq
  %v9443 = vshrl.u32 %v9442, 7
  %v9444 = vsub.s32 0, %v9443
  %v9445 = vrot.slane %v9440, %v9444
  %v9446 = vlaneseq
  %v9447 = vshrl.u32 %v9446, 7
  %v9448 = vsub.s32 1, %v9447
  %v9449 = vrot.slane %v9440, %v9448
  %v9450 = vlaneseq
  %v9451 = vshrl.u32 %v9450, 7
  %v9452 = vsub.s32 0, %v9451
  %v9453 = vrot.slane %v9441, %v9452
  %v9454 = vlaneseq
  %v9455 = vshrl.u32 %v9454, 7
  %v9456 = vsub.s32 1, %v9455
  %v9457 = vrot.slane %v9441, %v9456
  %v9462 = vadd.f32 %v9273, %v9445
  %v9463 = vadd.f32 %v9275, %v9449
  %v9464 = vadd.f32 %v9277, %v9445
  %v9465 = vadd.f32 %v9279, %v9449
  %v9466 = vadd.f32 %v9283, %v9445
  %v9467 = vadd.f32 %v9285, %v9449
  %v9468 = vadd.f32 %v9287, %v9445
  %v9469 = vadd.f32 %v9289, %v9449
  %v9470 = vadd.f32 %v9293, %v9445
  %v9471 = vadd.f32 %v9295, %v9449
  %v9472 = vadd.f32 %v9297, %v9445
  %v9473 = vadd.f32 %v9299, %v9449
  %v9474 = vadd.f32 %v9303, %v9445
  %v9475 = vadd.f32 %v9305, %v9449
  %v9476 = vadd.f32 %v9307, %v9445
  %v9477 = vadd.f32 %v9309, %v9449
  %v9478 = vadd.f32 %v9313, %v9445
  %v9479 = vadd.f32 %v9315, %v9449
  %v9480 = vadd.f32 %v9317, %v9445
  %v9481 = vadd.f32 %v9319, %v9449
  %v9482 = vadd.f32 %v9323, %v9445
  %v9483 = vadd.f32 %v9325, %v9449
  %v9484 = vadd.f32 %v9327, %v9445
  %v9485 = vadd.f32 %v9329, %v9449
  %v9486 = vadd.f32 %v9333, %v9445
  %v9487 = vadd.f32 %v9335, %v9449
  %v9488 = vadd.f32 %v9337, %v9445
  %v9489 = vadd.f32 %v9339, %v9449
  %v9490 = vadd.f32 %v9343, %v9445
  %v9491 = vadd.f32 %v9345, %v9449
  %v9492 = vadd.f32 %v9347, %v9445
  %v9493 = vadd.f32 %v9349, %v9449
  %v9494 = vadd.f32 %v9353, %v9453
  %v9495 = vadd.f32 %v9355, %v9457
  %v9496 = vadd.f32 %v9357, %v9453
  %v9497 = vadd.f32 %v9359, %v9457
  %v9498 = vadd.f32 %v9363, %v9453
  %v9499 = vadd.f32 %v9365, %v9457
  %v9500 = vadd.f32 %v9367, %v9453
  %v9501 = vadd.f32 %v9369, %v9457
  %v9502 = vadd.f32 %v9373, %v9453
  %v9503 = vadd.f32 %v9375, %v9457
  %v9504 = vadd.f32 %v9377, %v9453
  %v9505 = vadd.f32 %v9379, %v9457
  %v9506 = vadd.f32 %v9383, %v9453
  %v9507 = vadd.f32 %v9385, %v9457
  %v9508 = vadd.f32 %v9387, %v9453
  %v9509 = vadd.f32 %v9389, %v9457
  %v9510 = vadd.f32 %v9393, %v9453
  %v9511 = vadd.f32 %v9395, %v9457
  %v9512 = vadd.f32 %v9397, %v9453
  %v9513 = vadd.f32 %v9399, %v9457
  %v9514 = vadd.f32 %v9403, %v9453
  %v9515 = vadd.f32 %v9405, %v9457
  %v9516 = vadd.f32 %v9407, %v9453
  %v9517 = vadd.f32 %v9409, %v9457
  %v9518 = vadd.f32 %v9413, %v9453
  %v9519 = vadd.f32 %v9415, %v9457
  %v9520 = vadd.f32 %v9417, %v9453
  %v9521 = vadd.f32 %v9419, %v9457
  %v9522 = vadd.f32 %v9423, %v9453
  %v9523 = vadd.f32 %v9425, %v9457
  %v9524 = vadd.f32 %v9427, %v9453
  %v9525 = vadd.f32 %v9429, %v9457
  %v9526 = vmax.f32 %v9462, 0.0
  %v9527 = vmax.f32 %v9464, 0.0
  %v9528 = vmax.f32 %v9466, 0.0
  %v9529 = vmax.f32 %v9468, 0.0
  %v9530 = vmax.f32 %v9470, 0.0
  %v9531 = vmax.f32 %v9472, 0.0
  %v9532 = vmax.f32 %v9474, 0.0
  %v9533 = vmax.f32 %v9476, 0.0
  %v9534 = vmax.f32 %v9478, 0.0
  %v9535 = vmax.f32 %v9480, 0.0
  %v9536 = vmax.f32 %v9482, 0.0
  %v9537 = vmax.f32 %v9484, 0.0
  %v9538 = vmax.f32 %v9486, 0.0
  %v9539 = vmax.f32 %v9488, 0.0
  %v9540 = vmax.f32 %v9490, 0.0
  %v9541 = vmax.f32 %v9492, 0.0
  %v9542 = vmax.f32 %v9494, 0.0
  %v9543 = vmax.f32 %v9496, 0.0
  %v9544 = vmax.f32 %v9498, 0.0
  %v9545 = vmax.f32 %v9500, 0.0
  %v9546 = vmax.f32 %v9502, 0.0
  %v9547 = vmax.f32 %v9504, 0.0
  %v9548 = vmax.f32 %v9506, 0.0
  %v9549 = vmax.f32 %v9508, 0.0
  %v9550 = vmax.f32 %v9510, 0.0
  %v9551 = vmax.f32 %v9512, 0.0
  %v9552 = vmax.f32 %v9514, 0.0
  %v9553 = vmax.f32 %v9516, 0.0
  %v9554 = vmax.f32 %v9518, 0.0
  %v9555 = vmax.f32 %v9520, 0.0
  %v9556 = vmax.f32 %v9522, 0.0
  %v9557 = vmax.f32 %v9524, 0.0
  %v9558 = vpack.c.bf16 %v9527, %v9526
  %v9559 = vpack.c.bf16 %v9529, %v9528
  %v9560 = vpack.c.bf16 %v9531, %v9530
  %v9561 = vpack.c.bf16 %v9533, %v9532
  %v9562 = vpack.c.bf16 %v9535, %v9534
  %v9563 = vpack.c.bf16 %v9537, %v9536
  %v9564 = vpack.c.bf16 %v9539, %v9538
  %v9565 = vpack.c.bf16 %v9541, %v9540
  %v9566 = vpack.c.bf16 %v9543, %v9542
  %v9567 = vpack.c.bf16 %v9545, %v9544
  %v9568 = vpack.c.bf16 %v9547, %v9546
  %v9569 = vpack.c.bf16 %v9549, %v9548
  %v9570 = vpack.c.bf16 %v9551, %v9550
  %v9571 = vpack.c.bf16 %v9553, %v9552
  %v9572 = vpack.c.bf16 %v9555, %v9554
  %v9573 = vpack.c.bf16 %v9557, %v9556
  %s9574 = scalar_lea.vmem %s5, 192
  %v9575 = vld [vmem:[%s9574] sm:$0xf]
  %v9576 = vld [vmem:[%s9574 + $0x4] sm:$0xf]
  %v9577 = vld [vmem:[%s9574 + $0x8] sm:$0xf]
  %v9578 = vld [vmem:[%s9574 + $0xc] sm:$0xf]
  %v9579 = vld [vmem:[%s9574 + $0x10] sm:$0xf]
  %v9580 = vld [vmem:[%s9574 + $0x14] sm:$0xf]
  %v9581 = vld [vmem:[%s9574 + $0x18] sm:$0xf]
  %v9582 = vld [vmem:[%s9574 + $0x1c] sm:$0xf]
  %v9583 = vld [vmem:[%s9574 + $0x20] sm:$0xf]
  %v9584 = vld [vmem:[%s9574 + $0x24] sm:$0xf]
  %v9585 = vld [vmem:[%s9574 + $0x28] sm:$0xf]
  %v9586 = vld [vmem:[%s9574 + $0x2c] sm:$0xf]
  %v9587 = vld [vmem:[%s9574 + $0x30] sm:$0xf]
  %v9588 = vld [vmem:[%s9574 + $0x34] sm:$0xf]
  %v9589 = vld [vmem:[%s9574 + $0x38] sm:$0xf]
  %v9590 = vld [vmem:[%s9574 + $0x3c] sm:$0xf]
  %s9591 = scalar_lea.vmem %s6, 3
  %v9592 = vld [vmem:[%s9591] sm:$0x1]
  %v9594 = vlaneseq
  %v9595 = vshrl.u32 %v9594, 7
  %v9596 = vsub.s32 0, %v9595
  %v9597 = vrot.slane %v9592, %v9596
  %v9615 = vunpack.c.l.b16 %v9575
  %v9616 = vunpack.c.l.b16 %v9576
  %v9617 = vunpack.c.l.b16 %v9577
  %v9618 = vunpack.c.l.b16 %v9578
  %v9619 = vunpack.c.l.b16 %v9579
  %v9620 = vunpack.c.l.b16 %v9580
  %v9621 = vunpack.c.l.b16 %v9581
  %v9622 = vunpack.c.l.b16 %v9582
  %v9623 = vunpack.c.l.b16 %v9583
  %v9624 = vunpack.c.l.b16 %v9584
  %v9625 = vunpack.c.l.b16 %v9585
  %v9626 = vunpack.c.l.b16 %v9586
  %v9627 = vunpack.c.l.b16 %v9587
  %v9628 = vunpack.c.l.b16 %v9588
  %v9629 = vunpack.c.l.b16 %v9589
  %v9630 = vunpack.c.l.b16 %v9590
  %v9631 = vpack.c.b16 %v9616, %v9615
  %v9632 = vpack.c.b16 %v9618, %v9617
  %v9633 = vpack.c.b16 %v9620, %v9619
  %v9634 = vpack.c.b16 %v9622, %v9621
  %v9635 = vpack.c.b16 %v9624, %v9623
  %v9636 = vpack.c.b16 %v9626, %v9625
  %v9637 = vpack.c.b16 %v9628, %v9627
  %v9638 = vpack.c.b16 %v9630, %v9629
  %9647 = vmatprep.subr.bf16.mxu0 0
  %9648 = vmatpush1.bf16.msra.mxu0 %v9638
  %9649 = vmatprep.subr.bf16.mxu0 0
  %9650 = vmatpush1.bf16.msra.mxu0 %v9637
  %9651 = vmatprep.subr.bf16.mxu0 0
  %9652 = vmatpush1.bf16.msra.mxu0 %v9636
  %9653 = vmatprep.subr.bf16.mxu0 0
  %9654 = vmatpush1.bf16.msra.mxu0 %v9635
  %9655 = vmatprep.subr.bf16.mxu0 0
  %9656 = vmatpush1.bf16.msra.mxu0 %v9634
  %9657 = vmatprep.subr.bf16.mxu0 0
  %9658 = vmatpush1.bf16.msra.mxu0 %v9633
  %9659 = vmatprep.subr.bf16.mxu0 0
  %9660 = vmatpush1.bf16.msra.mxu0 %v9632
  %9661 = vmatprep.subr.bf16.mxu0 0
  %9662 = vmatpush1.bf16.msra.mxu0 %v9631
  %9663 = vmatprep.subr.bf16.mxu0 0
  %9664 = vmatpush2.bf16.msra.mxu0 0
  %9665 = vmatprep.subr.bf16.mxu0 0
  %9666 = vmatpush2.bf16.msra.mxu0 0
  %9667 = vmatprep.subr.bf16.mxu0 0
  %9668 = vmatpush2.bf16.msra.mxu0 0
  %9669 = vmatprep.subr.bf16.mxu0 0
  %9670 = vmatpush2.bf16.msra.mxu0 0
  %9671 = vmatprep.subr.bf16.mxu0 0
  %9672 = vmatpush2.bf16.msra.mxu0 0
  %9673 = vmatprep.subr.bf16.mxu0 0
  %9674 = vmatpush2.bf16.msra.mxu0 0
  %9675 = vmatprep.subr.bf16.mxu0 0
  %9676 = vmatpush2.bf16.msra.mxu0 0
  %9677 = vmatprep.subr.bf16.mxu0 0
  %9678 = vmatpush2.bf16.msra.mxu0 0
  %9679 = vmatprep.mubr.bf16.mxu0 0
  %9680 = vmatmul.mubr.bf16.gmra.mxu0 %v9558
  %v9681 = vpop.f32.mrf.mxu0
  %v9682 = vadd.f32 %v9597, %v9681
  %v9683 = vpop.f32.mrf.mxu0
  %v9684 = vpop.f32.mrf.mxu0
  %v9685 = vadd.f32 %v9597, %v9684
  %v9686 = vpop.f32.mrf.mxu0
  %9687 = vmatprep.mubr.bf16.mxu0 0
  %9688 = vmatmul.mubr.bf16.gmra.mxu0 %v9559
  %v9689 = vpop.f32.mrf.mxu0
  %v9690 = vadd.f32 %v9597, %v9689
  %v9691 = vpop.f32.mrf.mxu0
  %v9692 = vpop.f32.mrf.mxu0
  %v9693 = vadd.f32 %v9597, %v9692
  %v9694 = vpop.f32.mrf.mxu0
  %9695 = vmatprep.mubr.bf16.mxu0 0
  %9696 = vmatmul.mubr.bf16.gmra.mxu0 %v9560
  %v9697 = vpop.f32.mrf.mxu0
  %v9698 = vadd.f32 %v9597, %v9697
  %v9699 = vpop.f32.mrf.mxu0
  %v9700 = vpop.f32.mrf.mxu0
  %v9701 = vadd.f32 %v9597, %v9700
  %v9702 = vpop.f32.mrf.mxu0
  %9703 = vmatprep.mubr.bf16.mxu0 0
  %9704 = vmatmul.mubr.bf16.gmra.mxu0 %v9561
  %v9705 = vpop.f32.mrf.mxu0
  %v9706 = vadd.f32 %v9597, %v9705
  %v9707 = vpop.f32.mrf.mxu0
  %v9708 = vpop.f32.mrf.mxu0
  %v9709 = vadd.f32 %v9597, %v9708
  %v9710 = vpop.f32.mrf.mxu0
  %9711 = vmatprep.mubr.bf16.mxu0 0
  %9712 = vmatmul.mubr.bf16.gmra.mxu0 %v9562
  %v9713 = vpop.f32.mrf.mxu0
  %v9714 = vadd.f32 %v9597, %v9713
  %v9715 = vpop.f32.mrf.mxu0
  %v9716 = vpop.f32.mrf.mxu0
  %v9717 = vadd.f32 %v9597, %v9716
  %v9718 = vpop.f32.mrf.mxu0
  %9719 = vmatprep.mubr.bf16.mxu0 0
  %9720 = vmatmul.mubr.bf16.gmra.mxu0 %v9563
  %v9721 = vpop.f32.mrf.mxu0
  %v9722 = vadd.f32 %v9597, %v9721
  %v9723 = vpop.f32.mrf.mxu0
  %v9724 = vpop.f32.mrf.mxu0
  %v9725 = vadd.f32 %v9597, %v9724
  %v9726 = vpop.f32.mrf.mxu0
  %9727 = vmatprep.mubr.bf16.mxu0 0
  %9728 = vmatmul.mubr.bf16.gmra.mxu0 %v9564
  %v9729 = vpop.f32.mrf.mxu0
  %v9730 = vadd.f32 %v9597, %v9729
  %v9731 = vpop.f32.mrf.mxu0
  %v9732 = vpop.f32.mrf.mxu0
  %v9733 = vadd.f32 %v9597, %v9732
  %v9734 = vpop.f32.mrf.mxu0
  %9735 = vmatprep.mubr.bf16.mxu0 0
  %9736 = vmatmul.mubr.bf16.gmra.mxu0 %v9565
  %v9737 = vpop.f32.mrf.mxu0
  %v9738 = vadd.f32 %v9597, %v9737
  %v9739 = vpop.f32.mrf.mxu0
  %v9740 = vpop.f32.mrf.mxu0
  %v9741 = vadd.f32 %v9597, %v9740
  %v9742 = vpop.f32.mrf.mxu0
  %9743 = vmatprep.mubr.bf16.mxu0 0
  %9744 = vmatmul.mubr.bf16.gmra.mxu0 %v9566
  %v9745 = vpop.f32.mrf.mxu0
  %v9746 = vadd.f32 %v9597, %v9745
  %v9747 = vpop.f32.mrf.mxu0
  %v9748 = vpop.f32.mrf.mxu0
  %v9749 = vadd.f32 %v9597, %v9748
  %v9750 = vpop.f32.mrf.mxu0
  %9751 = vmatprep.mubr.bf16.mxu0 0
  %9752 = vmatmul.mubr.bf16.gmra.mxu0 %v9567
  %v9753 = vpop.f32.mrf.mxu0
  %v9754 = vadd.f32 %v9597, %v9753
  %v9755 = vpop.f32.mrf.mxu0
  %v9756 = vpop.f32.mrf.mxu0
  %v9757 = vadd.f32 %v9597, %v9756
  %v9758 = vpop.f32.mrf.mxu0
  %9759 = vmatprep.mubr.bf16.mxu0 0
  %9760 = vmatmul.mubr.bf16.gmra.mxu0 %v9568
  %v9761 = vpop.f32.mrf.mxu0
  %v9762 = vadd.f32 %v9597, %v9761
  %v9763 = vpop.f32.mrf.mxu0
  %v9764 = vpop.f32.mrf.mxu0
  %v9765 = vadd.f32 %v9597, %v9764
  %v9766 = vpop.f32.mrf.mxu0
  %9767 = vmatprep.mubr.bf16.mxu0 0
  %9768 = vmatmul.mubr.bf16.gmra.mxu0 %v9569
  %v9769 = vpop.f32.mrf.mxu0
  %v9770 = vadd.f32 %v9597, %v9769
  %v9771 = vpop.f32.mrf.mxu0
  %v9772 = vpop.f32.mrf.mxu0
  %v9773 = vadd.f32 %v9597, %v9772
  %v9774 = vpop.f32.mrf.mxu0
  %9775 = vmatprep.mubr.bf16.mxu0 0
  %9776 = vmatmul.mubr.bf16.gmra.mxu0 %v9570
  %v9777 = vpop.f32.mrf.mxu0
  %v9778 = vadd.f32 %v9597, %v9777
  %v9779 = vpop.f32.mrf.mxu0
  %v9780 = vpop.f32.mrf.mxu0
  %v9781 = vadd.f32 %v9597, %v9780
  %v9782 = vpop.f32.mrf.mxu0
  %9783 = vmatprep.mubr.bf16.mxu0 0
  %9784 = vmatmul.mubr.bf16.gmra.mxu0 %v9571
  %v9785 = vpop.f32.mrf.mxu0
  %v9786 = vadd.f32 %v9597, %v9785
  %v9787 = vpop.f32.mrf.mxu0
  %v9788 = vpop.f32.mrf.mxu0
  %v9789 = vadd.f32 %v9597, %v9788
  %v9790 = vpop.f32.mrf.mxu0
  %9791 = vmatprep.mubr.bf16.mxu0 0
  %9792 = vmatmul.mubr.bf16.gmra.mxu0 %v9572
  %v9793 = vpop.f32.mrf.mxu0
  %v9794 = vadd.f32 %v9597, %v9793
  %v9795 = vpop.f32.mrf.mxu0
  %v9796 = vpop.f32.mrf.mxu0
  %v9797 = vadd.f32 %v9597, %v9796
  %v9798 = vpop.f32.mrf.mxu0
  %9799 = vmatprep.mubr.bf16.mxu0 0
  %9800 = vmatmul.mubr.bf16.gmra.mxu0 %v9573
  %v9801 = vpop.f32.mrf.mxu0
  %v9802 = vadd.f32 %v9597, %v9801
  %v9803 = vpop.f32.mrf.mxu0
  %v9804 = vpop.f32.mrf.mxu0
  %v9805 = vadd.f32 %v9597, %v9804
  %v9806 = vpop.f32.mrf.mxu0
  %9807 = vdwg.mxu0
  %v9808 = vadd.f32 %v9682, %v9463
  %v9809 = vadd.f32 %v9685, %v9465
  %v9810 = vadd.f32 %v9690, %v9467
  %v9811 = vadd.f32 %v9693, %v9469
  %v9812 = vadd.f32 %v9698, %v9471
  %v9813 = vadd.f32 %v9701, %v9473
  %v9814 = vadd.f32 %v9706, %v9475
  %v9815 = vadd.f32 %v9709, %v9477
  %v9816 = vadd.f32 %v9714, %v9479
  %v9817 = vadd.f32 %v9717, %v9481
  %v9818 = vadd.f32 %v9722, %v9483
  %v9819 = vadd.f32 %v9725, %v9485
  %v9820 = vadd.f32 %v9730, %v9487
  %v9821 = vadd.f32 %v9733, %v9489
  %v9822 = vadd.f32 %v9738, %v9491
  %v9823 = vadd.f32 %v9741, %v9493
  %v9824 = vadd.f32 %v9746, %v9495
  %v9825 = vadd.f32 %v9749, %v9497
  %v9826 = vadd.f32 %v9754, %v9499
  %v9827 = vadd.f32 %v9757, %v9501
  %v9828 = vadd.f32 %v9762, %v9503
  %v9829 = vadd.f32 %v9765, %v9505
  %v9830 = vadd.f32 %v9770, %v9507
  %v9831 = vadd.f32 %v9773, %v9509
  %v9832 = vadd.f32 %v9778, %v9511
  %v9833 = vadd.f32 %v9781, %v9513
  %v9834 = vadd.f32 %v9786, %v9515
  %v9835 = vadd.f32 %v9789, %v9517
  %v9836 = vadd.f32 %v9794, %v9519
  %v9837 = vadd.f32 %v9797, %v9521
  %v9838 = vadd.f32 %v9802, %v9523
  %v9839 = vadd.f32 %v9805, %v9525
  %9840 = vst [vmem:[%s7] sm:$0xff] %v9808
  %9841 = vst [vmem:[%s7 + $0x8] sm:$0xff] %v9809
  %9842 = vst [vmem:[%s7 + $0x10] sm:$0xff] %v9810
  %9843 = vst [vmem:[%s7 + $0x18] sm:$0xff] %v9811
  %9844 = vst [vmem:[%s7 + $0x20] sm:$0xff] %v9812
  %9845 = vst [vmem:[%s7 + $0x28] sm:$0xff] %v9813
  %9846 = vst [vmem:[%s7 + $0x30] sm:$0xff] %v9814
  %9847 = vst [vmem:[%s7 + $0x38] sm:$0xff] %v9815
  %9848 = vst [vmem:[%s7 + $0x40] sm:$0xff] %v9816
  %9849 = vst [vmem:[%s7 + $0x48] sm:$0xff] %v9817
  %9850 = vst [vmem:[%s7 + $0x50] sm:$0xff] %v9818
  %9851 = vst [vmem:[%s7 + $0x58] sm:$0xff] %v9819
  %9852 = vst [vmem:[%s7 + $0x60] sm:$0xff] %v9820
  %9853 = vst [vmem:[%s7 + $0x68] sm:$0xff] %v9821
  %9854 = vst [vmem:[%s7 + $0x70] sm:$0xff] %v9822
  %9855 = vst [vmem:[%s7 + $0x78] sm:$0xff] %v9823
  %9856 = vst [vmem:[%s7 + $0x80] sm:$0xff] %v9824
  %9857 = vst [vmem:[%s7 + $0x88] sm:$0xff] %v9825
  %9858 = vst [vmem:[%s7 + $0x90] sm:$0xff] %v9826
  %9859 = vst [vmem:[%s7 + $0x98] sm:$0xff] %v9827
  %9860 = vst [vmem:[%s7 + $0xa0] sm:$0xff] %v9828
  %9861 = vst [vmem:[%s7 + $0xa8] sm:$0xff] %v9829
  %9862 = vst [vmem:[%s7 + $0xb0] sm:$0xff] %v9830
  %9863 = vst [vmem:[%s7 + $0xb8] sm:$0xff] %v9831
  %9864 = vst [vmem:[%s7 + $0xc0] sm:$0xff] %v9832
  %9865 = vst [vmem:[%s7 + $0xc8] sm:$0xff] %v9833
  %9866 = vst [vmem:[%s7 + $0xd0] sm:$0xff] %v9834
  %9867 = vst [vmem:[%s7 + $0xd8] sm:$0xff] %v9835
  %9868 = vst [vmem:[%s7 + $0xe0] sm:$0xff] %v9836
  %9869 = vst [vmem:[%s7 + $0xe8] sm:$0xff] %v9837
  %9870 = vst [vmem:[%s7 + $0xf0] sm:$0xff] %v9838
  %9871 = vst [vmem:[%s7 + $0xf8] sm:$0xff] %v9839
  // Predicated region
  $region30: #{_decoder_coarse.1} parent=0 // pred_check
    _
  $region31: #{_decoder_coarse.1} parent=0 // pred_check_branch
    %9873 = sbr.rel (0) target = $region33
  $region32: #{_decoder_coarse.1} parent=0 // pred_region
    _
  $region33: #{_decoder_coarse.1} parent=0 // pred_fallthru
    _
  // Predicated region
  $region34: #{_decoder_coarse.1} parent=0 // pred_check
    _
  $region35: #{_decoder_coarse.1} parent=0 // pred_check_branch
    %9875 = sbr.rel (0) target = $region37
  $region36: #{_decoder_coarse.1} parent=0 // pred_region
    _
  $region37: #{_decoder_coarse.1} parent=0 // pred_fallthru
    _

</llo_original>
